<compile_context>
chip_gen: v7x
topology: tpu7x:2x2x1
jax: 0.10.0
libtpu: 0.0.40
codegen_flags: <defaults>
</compile_context>

<pallas_src>
import math

import jax
import jax.numpy as jnp
from jax import lax
from jax.experimental import pallas as pl
from jax.experimental.pallas import tpu as pltpu

D_MODEL = 32
N_HEADS = 4
D_HEAD = D_MODEL // N_HEADS
D_FF = 64
N_LAYERS = 2
LN_EPS = 1e-6
NEG_INF = -1e9


# --------------------------- in-kernel helpers ---------------------------

def _layer_norm(x, a, b):
    # Annotated-transformer LayerNorm: a * (x - mean) / (std + eps) + b with
    # torch.Tensor.std()'s unbiased estimator (ddof = 1). Divide done via EUP reciprocal.
    d = x.shape[-1]
    mean = jnp.mean(x, axis=-1, keepdims=True)
    var = jnp.sum((x - mean) ** 2, axis=-1, keepdims=True) * (1.0 / (d - 1))
    inv = pl.reciprocal(jnp.sqrt(var) + LN_EPS, approx=True)
    return a * (x - mean) * inv + b


def _attention(q, k, v, mask_add, wo, bo):
    # q: (Nq, D) with 1/sqrt(dk) already folded into the Q projection; k, v: (Nk, D);
    # mask_add: (Nq, Nk) additive mask (0 = attend, -1e9 = masked incl. cross-batch blocks
    # of the block-diagonal batch layout); wo: (D, D); bo: (1, D).
    # Heads are contiguous 8-lane column groups; head contexts are concatenated into one
    # lane-dense (Nq, D) tile and hit the output projection with a single MXU push.
    ctxs = []
    for h in range(N_HEADS):
        sl = slice(h * D_HEAD, (h + 1) * D_HEAD)
        s = lax.dot_general(q[:, sl], k[:, sl], (((1,), (1,)), ((), ())),
                            preferred_element_type=jnp.float32)          # (Nq, Nk)
        s = s + mask_add
        s = s - jnp.max(s, axis=-1, keepdims=True)
        p = jnp.exp(s)
        p = p * pl.reciprocal(jnp.sum(p, axis=-1, keepdims=True), approx=True)
        ctxs.append(jnp.dot(p, v[:, sl], preferred_element_type=jnp.float32))
    ctx = jnp.concatenate(ctxs, axis=-1)                                  # (Nq, D)
    return jnp.dot(ctx, wo, preferred_element_type=jnp.float32) + bo


# --------------------------- the single fused kernel ---------------------------
#
# Packed parameter layout (f32):
#  encoder matrix blob W (128,128):  wqkv rows 0:32 cols 0:96 | wo rows 0:32 cols 96:128
#                                    w1 rows 32:64 cols 0:64  | w2 rows 64:128 cols 0:32
#  encoder vector blob V (8,128):    row0: bqkv 0:96, bo 96:128
#                                    row1: b1 0:64, b2 64:96
#                                    row2: ln1_a 0:32, ln1_b 32:64, ln2_a 64:96, ln2_b 96:128
#  decoder matrix blob W (128,128):  s_wqkv r0:32 c0:96 | s_wo r0:32 c96:128
#                                    c_wq r32:64 c0:32 | c_wkv r32:64 c32:96 | c_wo r32:64 c96:128
#                                    w2 r64:128 c0:32  | w1 r64:96 c32:96
#  decoder vector blob V (8,128):    row0: s_bqkv 0:96, s_bo 96:128
#                                    row1: c_bq 0:32, c_bkv 32:96, c_bo 96:128
#                                    row2: b1 0:64, b2 64:96
#                                    row3: ln1_a/ln1_b/ln2_a/ln2_b (32 each)
#                                    row4: ln3_a 0:32, ln3_b 32:64
#  fin (1,128): enc_norm_a 0:32, enc_norm_b 32:64, dec_norm_a 64:96, dec_norm_b 96:128

def _fused_forward_kernel(src_ref, tgt_ref, emask_ref, tmask_ref, xmask_ref,
                          enc_w_ref, enc_v_ref, dec_w_ref, dec_v_ref, fin_ref,
                          o_ref):
    fin = fin_ref[...]

    # -------- encoder stack --------
    x = src_ref[...]                      # (B*Ls, D), fully batched over sublanes
    emask = emask_ref[...]                # (B*Ls, B*Ls)
    for l in range(N_LAYERS):             # tiny static layer count, unrolled at trace time
        W = enc_w_ref[l]                  # (128, 128) packed matrices
        V = enc_v_ref[l]                  # (8, 128)   packed vectors
        # sublayer 1: pre-norm self-attention + residual (fused QKV matmul)
        y = _layer_norm(x, V[2:3, 0:32], V[2:3, 32:64])
        qkv = jnp.dot(y, W[0:32, 0:96], preferred_element_type=jnp.float32) + V[0:1, 0:96]
        x = x + _attention(qkv[:, 0:32], qkv[:, 32:64], qkv[:, 64:96],
                           emask, W[0:32, 96:128], V[0:1, 96:128])
        # sublayer 2: pre-norm feed-forward + residual
        y = _layer_norm(x, V[2:3, 64:96], V[2:3, 96:128])
        h = jnp.maximum(jnp.dot(y, W[32:64, 0:64], preferred_element_type=jnp.float32)
                        + V[1:2, 0:64], 0.0)
        x = x + jnp.dot(h, W[64:128, 0:32], preferred_element_type=jnp.float32) + V[1:2, 64:96]
    mem = _layer_norm(x, fin[0:1, 0:32], fin[0:1, 32:64])       # encoder final LayerNorm

    # -------- decoder stack --------
    x = tgt_ref[...]                      # (B*Lt, D)
    tmask = tmask_ref[...]                # (B*Lt, B*Lt)
    xmask = xmask_ref[...]                # (B*Lt, B*Ls)
    for l in range(N_LAYERS):
        W = dec_w_ref[l]
        V = dec_v_ref[l]
        # sublayer 1: pre-norm masked self-attention + residual
        y = _layer_norm(x, V[3:4, 0:32], V[3:4, 32:64])
        qkv = jnp.dot(y, W[0:32, 0:96], preferred_element_type=jnp.float32) + V[0:1, 0:96]
        x = x + _attention(qkv[:, 0:32], qkv[:, 32:64], qkv[:, 64:96],
                           tmask, W[0:32, 96:128], V[0:1, 96:128])
        # sublayer 2: pre-norm cross-attention over encoder memory + residual
        y = _layer_norm(x, V[3:4, 64:96], V[3:4, 96:128])
        q = jnp.dot(y, W[32:64, 0:32], preferred_element_type=jnp.float32) + V[1:2, 0:32]
        kv = jnp.dot(mem, W[32:64, 32:96], preferred_element_type=jnp.float32) + V[1:2, 32:96]
        x = x + _attention(q, kv[:, 0:32], kv[:, 32:64],
                           xmask, W[32:64, 96:128], V[1:2, 96:128])
        # sublayer 3: pre-norm feed-forward + residual
        y = _layer_norm(x, V[4:5, 0:32], V[4:5, 32:64])
        h = jnp.maximum(jnp.dot(y, W[64:96, 32:96], preferred_element_type=jnp.float32)
                        + V[2:3, 0:64], 0.0)
        x = x + jnp.dot(h, W[64:128, 0:32], preferred_element_type=jnp.float32) + V[2:3, 64:96]

    o_ref[...] = _layer_norm(x, fin[0:1, 64:96], fin[0:1, 96:128])   # decoder final LayerNorm


# --------------------------- pallas_call wrapper & JAX glue ---------------------------

def _full_spec(shape):
    n = len(shape)
    return pl.BlockSpec(shape, lambda i: (0,) * n)


def positional_encoding(max_len, d_model):
    position = jnp.arange(max_len, dtype=jnp.float32)[:, None]
    div_term = jnp.exp(jnp.arange(0, d_model, 2, dtype=jnp.float32)
                       * -(math.log(10000.0) / d_model))
    pe = jnp.zeros((max_len, d_model), jnp.float32)
    pe = pe.at[:, 0::2].set(jnp.sin(position * div_term))
    pe = pe.at[:, 1::2].set(jnp.cos(position * div_term))
    return pe


def _embed(table, tokens, pe):
    # Embeddings: lut(x) * sqrt(d_model), then PositionalEncoding add (eval: no dropout).
    # TODO(synk): embedding gather stays in plain JAX (tiny index-gather; a DMA-gather
    # Pallas kernel is not worth it at this size).
    x = jnp.take(table, tokens, axis=0) * math.sqrt(D_MODEL)
    return x + pe[None, :tokens.shape[1], :]


def _block_diag_additive(mask, B, Lq, Lk):
    # mask: (B, 1 or Lq, Lk) with 1.0 = attend.  Returns an additive (B*Lq, B*Lk) mask:
    # 0 where attention is allowed, -1e9 where masked (including all cross-batch blocks),
    # so attention over the flattened (B*L, D) activations is exact and fully batched.
    add = jnp.where(mask.astype(jnp.float32) > 0.0, 0.0, NEG_INF).astype(jnp.float32)
    add = jnp.broadcast_to(add, (B, Lq, Lk))
    full = jnp.full((B, Lq, B, Lk), NEG_INF, jnp.float32)
    idx = jnp.arange(B)
    full = full.at[idx, :, idx, :].set(add)
    return full.reshape(B * Lq, B * Lk)


def encoder_decoder_forward(fp, src, tgt, src_mask, tgt_mask):
    # Mirrors EncoderDecoder.forward exactly: decode(encode(src, src_mask), src_mask, tgt, tgt_mask)
    B, Ls = src.shape
    _, Lt = tgt.shape
    src_x = _embed(fp['src_emb'], src, fp['pe']).reshape(B * Ls, D_MODEL)
    tgt_x = _embed(fp['tgt_emb'], tgt, fp['pe']).reshape(B * Lt, D_MODEL)
    emask = _block_diag_additive(src_mask, B, Ls, Ls)
    tmask = _block_diag_additive(tgt_mask, B, Lt, Lt)
    xmask = _block_diag_additive(src_mask, B, Lt, Ls)

    args = (src_x, tgt_x, emask, tmask, xmask,
            fp['enc_w'], fp['enc_v'], fp['dec_w'], fp['dec_v'], fp['fin'])
    out = pl.pallas_call(
        _fused_forward_kernel,
        out_shape=jax.ShapeDtypeStruct((B * Lt, D_MODEL), jnp.float32),
        grid=(1,),
        in_specs=[_full_spec(a.shape) for a in args],
        out_specs=_full_spec((B * Lt, D_MODEL)),
        compiler_params=pltpu.CompilerParams(dimension_semantics=("arbitrary",)),
    )(*args)
    return out.reshape(B, Lt, D_MODEL)


# --------------------------- params ---------------------------

def init_params(key, src_vocab, tgt_vocab):
    keys = iter(jax.random.split(key, 256))

    def nk():
        return next(keys)

    def dense(d_in, d_out):
        return {'w': 0.02 * jax.random.normal(nk(), (d_in, d_out), jnp.float32),
                'b': jnp.zeros((d_out,), jnp.float32)}

    def ln():
        return {'a': jnp.ones((D_MODEL,), jnp.float32),
                'b': jnp.zeros((D_MODEL,), jnp.float32)}

    def attn():
        return {'q': dense(D_MODEL, D_MODEL), 'k': dense(D_MODEL, D_MODEL),
                'v': dense(D_MODEL, D_MODEL), 'o': dense(D_MODEL, D_MODEL)}

    def ffp():
        return {'w1': dense(D_MODEL, D_FF), 'w2': dense(D_FF, D_MODEL)}

    return {
        'src_emb': 0.02 * jax.random.normal(nk(), (src_vocab, D_MODEL), jnp.float32),
        'tgt_emb': 0.02 * jax.random.normal(nk(), (tgt_vocab, D_MODEL), jnp.float32),
        'pe': positional_encoding(64, D_MODEL),
        'encoder': [{'self_attn': attn(), 'ff': ffp(), 'ln1': ln(), 'ln2': ln()}
                    for _ in range(N_LAYERS)],
        'enc_norm': ln(),
        'decoder': [{'self_attn': attn(), 'src_attn': attn(), 'ff': ffp(),
                     'ln1': ln(), 'ln2': ln(), 'ln3': ln()}
                    for _ in range(N_LAYERS)],
        'dec_norm': ln(),
        # Part of __init__ but unused by forward (Linear + log_softmax head).
        'generator': dense(D_MODEL, tgt_vocab),
    }


def fuse_params(params):
    """Repack params into the fused single-kernel layout:
       - fold 1/sqrt(dk) into the Q projections (weights + bias)
       - concat Q/K/V (self-attn) and K/V (cross-attn) for single matmuls
       - pack all matrices of each layer into a (128,128) blob and all vectors /
         LayerNorm params into an (8,128) blob; stack layers along a leading dim."""
    scale = 1.0 / math.sqrt(D_HEAD)

    enc_w, enc_v = [], []
    for lyr in params['encoder']:
        a, f = lyr['self_attn'], lyr['ff']
        W = jnp.zeros((128, 128), jnp.float32)
        W = W.at[0:32, 0:96].set(jnp.concatenate(
            [a['q']['w'] * scale, a['k']['w'], a['v']['w']], axis=1))
        W = W.at[0:32, 96:128].set(a['o']['w'])
        W = W.at[32:64, 0:64].set(f['w1']['w'])
        W = W.at[64:128, 0:32].set(f['w2']['w'])
        V = jnp.zeros((8, 128), jnp.float32)
        V = V.at[0, 0:96].set(jnp.concatenate(
            [a['q']['b'] * scale, a['k']['b'], a['v']['b']]))
        V = V.at[0, 96:128].set(a['o']['b'])
        V = V.at[1, 0:64].set(f['w1']['b'])
        V = V.at[1, 64:96].set(f['w2']['b'])
        V = V.at[2, 0:32].set(lyr['ln1']['a'])
        V = V.at[2, 32:64].set(lyr['ln1']['b'])
        V = V.at[2, 64:96].set(lyr['ln2']['a'])
        V = V.at[2, 96:128].set(lyr['ln2']['b'])
        enc_w.append(W)
        enc_v.append(V)

    dec_w, dec_v = [], []
    for lyr in params['decoder']:
        sa, ca, f = lyr['self_attn'], lyr['src_attn'], lyr['ff']
        W = jnp.zeros((128, 128), jnp.float32)
        W = W.at[0:32, 0:96].set(jnp.concatenate(
            [sa['q']['w'] * scale, sa['k']['w'], sa['v']['w']], axis=1))
        W = W.at[0:32, 96:128].set(sa['o']['w'])
        W = W.at[32:64, 0:32].set(ca['q']['w'] * scale)
        W = W.at[32:64, 32:96].set(jnp.concatenate([ca['k']['w'], ca['v']['w']], axis=1))
        W = W.at[32:64, 96:128].set(ca['o']['w'])
        W = W.at[64:128, 0:32].set(f['w2']['w'])
        W = W.at[64:96, 32:96].set(f['w1']['w'])
        V = jnp.zeros((8, 128), jnp.float32)
        V = V.at[0, 0:96].set(jnp.concatenate(
            [sa['q']['b'] * scale, sa['k']['b'], sa['v']['b']]))
        V = V.at[0, 96:128].set(sa['o']['b'])
        V = V.at[1, 0:32].set(ca['q']['b'] * scale)
        V = V.at[1, 32:96].set(jnp.concatenate([ca['k']['b'], ca['v']['b']]))
        V = V.at[1, 96:128].set(ca['o']['b'])
        V = V.at[2, 0:64].set(f['w1']['b'])
        V = V.at[2, 64:96].set(f['w2']['b'])
        V = V.at[3, 0:32].set(lyr['ln1']['a'])
        V = V.at[3, 32:64].set(lyr['ln1']['b'])
        V = V.at[3, 64:96].set(lyr['ln2']['a'])
        V = V.at[3, 96:128].set(lyr['ln2']['b'])
        V = V.at[4, 0:32].set(lyr['ln3']['a'])
        V = V.at[4, 32:64].set(lyr['ln3']['b'])
        dec_w.append(W)
        dec_v.append(V)

    fin = jnp.zeros((1, 128), jnp.float32)
    fin = fin.at[0, 0:32].set(params['enc_norm']['a'])
    fin = fin.at[0, 32:64].set(params['enc_norm']['b'])
    fin = fin.at[0, 64:96].set(params['dec_norm']['a'])
    fin = fin.at[0, 96:128].set(params['dec_norm']['b'])

    return {
        'src_emb': params['src_emb'], 'tgt_emb': params['tgt_emb'], 'pe': params['pe'],
        'enc_w': jnp.stack(enc_w), 'enc_v': jnp.stack(enc_v),
        'dec_w': jnp.stack(dec_w), 'dec_v': jnp.stack(dec_v),
        'fin': fin,
        'generator': params['generator'],   # unused by forward
    }


# --------------------------- main ---------------------------

if __name__ == "__main__":
    key = jax.random.PRNGKey(0)
    k_p, k_src, k_tgt = jax.random.split(key, 3)

    B, Ls, Lt = 2, 8, 8
    SRC_VOCAB = TGT_VOCAB = 16

    params = init_params(k_p, SRC_VOCAB, TGT_VOCAB)
    fused = fuse_params(params)

    src = jax.random.randint(k_src, (B, Ls), 0, SRC_VOCAB)
    tgt = jax.random.randint(k_tgt, (B, Lt), 0, TGT_VOCAB)
    src_mask = jnp.ones((B, 1, Ls), jnp.float32)                        # no padding
    tgt_mask = jnp.broadcast_to(jnp.tril(jnp.ones((Lt, Lt), jnp.float32)),
                                (B, Lt, Lt))                            # subsequent mask

    out = jax.jit(encoder_decoder_forward)(fused, src, tgt, src_mask, tgt_mask)
    out = jax.block_until_ready(out)

    assert out.shape == (B, Lt, D_MODEL), out.shape
    assert bool(jnp.all(jnp.isfinite(out)))
    print("KERNEL_OK")
</pallas_src>

<mosaic_0001>
module attributes {stable_mosaic.version = 11 : i64} {
  func.func @_fused_forward_kernel(%arg0: i32, %arg1: memref<16x32xf32, #tpu.memory_space<vmem>>, %arg2: memref<16x32xf32, #tpu.memory_space<vmem>>, %arg3: memref<16x16xf32, #tpu.memory_space<vmem>>, %arg4: memref<16x16xf32, #tpu.memory_space<vmem>>, %arg5: memref<16x16xf32, #tpu.memory_space<vmem>>, %arg6: memref<2x128x128xf32, #tpu.memory_space<vmem>>, %arg7: memref<2x8x128xf32, #tpu.memory_space<vmem>>, %arg8: memref<2x128x128xf32, #tpu.memory_space<vmem>>, %arg9: memref<2x8x128xf32, #tpu.memory_space<vmem>>, %arg10: memref<1x128xf32, #tpu.memory_space<vmem>>, %arg11: memref<16x32xf32, #tpu.memory_space<vmem>>) attributes {dimension_semantics = [#tpu.dimension_semantics<arbitrary>], iteration_bounds = array<i64: 1>, scalar_prefetch = 0 : i64, scratch_operands = 0 : i64, tpu.core_type = #tpu.core_type<tc>, window_params = [{pipeline_mode = #tpu.pipeline_mode<synchronous>, transform_indices = @transform_0, window_bounds = array<i64: 16, 32>}, {pipeline_mode = #tpu.pipeline_mode<synchronous>, transform_indices = @transform_1, window_bounds = array<i64: 16, 32>}, {pipeline_mode = #tpu.pipeline_mode<synchronous>, transform_indices = @transform_2, window_bounds = array<i64: 16, 16>}, {pipeline_mode = #tpu.pipeline_mode<synchronous>, transform_indices = @transform_3, window_bounds = array<i64: 16, 16>}, {pipeline_mode = #tpu.pipeline_mode<synchronous>, transform_indices = @transform_4, window_bounds = array<i64: 16, 16>}, {pipeline_mode = #tpu.pipeline_mode<synchronous>, transform_indices = @transform_5, window_bounds = array<i64: 2, 128, 128>}, {pipeline_mode = #tpu.pipeline_mode<synchronous>, transform_indices = @transform_6, window_bounds = array<i64: 2, 8, 128>}, {pipeline_mode = #tpu.pipeline_mode<synchronous>, transform_indices = @transform_7, window_bounds = array<i64: 2, 128, 128>}, {pipeline_mode = #tpu.pipeline_mode<synchronous>, transform_indices = @transform_8, window_bounds = array<i64: 2, 8, 128>}, {pipeline_mode = #tpu.pipeline_mode<synchronous>, transform_indices = @transform_9, window_bounds = array<i64: 1, 128>}, {pipeline_mode = #tpu.pipeline_mode<synchronous>, transform_indices = @transform_10, window_bounds = array<i64: 16, 32>}]} {
    %c0 = arith.constant 0 : index
    %c0_0 = arith.constant 0 : index
    %0 = vector.load %arg10[%c0, %c0_0] : memref<1x128xf32, #tpu.memory_space<vmem>>, vector<1x128xf32>
    %c0_1 = arith.constant 0 : index
    %c0_2 = arith.constant 0 : index
    %1 = vector.load %arg1[%c0_1, %c0_2] : memref<16x32xf32, #tpu.memory_space<vmem>>, vector<16x32xf32>
    %c0_3 = arith.constant 0 : index
    %c0_4 = arith.constant 0 : index
    %2 = vector.load %arg3[%c0_3, %c0_4] : memref<16x16xf32, #tpu.memory_space<vmem>>, vector<16x16xf32>
    %c0_5 = arith.constant 0 : index
    %c0_6 = arith.constant 0 : index
    %c0_7 = arith.constant 0 : index
    %3 = vector.load %arg6[%c0_5, %c0_6, %c0_7] : memref<2x128x128xf32, #tpu.memory_space<vmem>>, vector<1x128x128xf32>
    %4 = vector.shape_cast %3 : vector<1x128x128xf32> to vector<128x128xf32>
    %c0_8 = arith.constant 0 : index
    %c0_9 = arith.constant 0 : index
    %c0_10 = arith.constant 0 : index
    %5 = vector.load %arg7[%c0_8, %c0_9, %c0_10] : memref<2x8x128xf32, #tpu.memory_space<vmem>>, vector<1x8x128xf32>
    %6 = vector.shape_cast %5 : vector<1x8x128xf32> to vector<8x128xf32>
    %7 = vector.extract_strided_slice %6 {offsets = [2, 0], sizes = [1, 32], strides = [1, 1]} : vector<8x128xf32> to vector<1x32xf32>
    %8 = vector.extract_strided_slice %6 {offsets = [2, 32], sizes = [1, 32], strides = [1, 1]} : vector<8x128xf32> to vector<1x32xf32>
    %cst = arith.constant dense<0.000000e+00> : vector<16xf32>
    %9 = vector.multi_reduction <add>, %1, %cst [1] : vector<16x32xf32> to vector<16xf32>
    %10 = vector.shape_cast %9 : vector<16xf32> to vector<16x1xf32>
    %cst_11 = arith.constant 3.200000e+01 : f32
    %11 = vector.broadcast %cst_11 : f32 to vector<16x1xf32>
    %12 = arith.divf %10, %11 : vector<16x1xf32>
    %13 = vector.broadcast %12 : vector<16x1xf32> to vector<16x32xf32>
    %14 = arith.subf %1, %13 : vector<16x32xf32>
    %15 = arith.mulf %14, %14 : vector<16x32xf32>
    %cst_12 = arith.constant dense<0.000000e+00> : vector<16xf32>
    %16 = vector.multi_reduction <add>, %15, %cst_12 [1] : vector<16x32xf32> to vector<16xf32>
    %17 = vector.shape_cast %16 : vector<16xf32> to vector<16x1xf32>
    %cst_13 = arith.constant 0.0322580636 : f32
    %18 = vector.broadcast %cst_13 : f32 to vector<16x1xf32>
    %19 = arith.mulf %17, %18 : vector<16x1xf32>
    %20 = math.sqrt %19 : vector<16x1xf32>
    %cst_14 = arith.constant 9.99999997E-7 : f32
    %21 = vector.broadcast %cst_14 : f32 to vector<16x1xf32>
    %22 = arith.addf %20, %21 : vector<16x1xf32>
    %23 = tpu.reciprocal %22 {approx = true} : vector<16x1xf32> -> vector<16x1xf32>
    %24 = vector.broadcast %12 : vector<16x1xf32> to vector<16x32xf32>
    %25 = arith.subf %1, %24 : vector<16x32xf32>
    %26 = vector.broadcast %7 : vector<1x32xf32> to vector<16x32xf32>
    %27 = arith.mulf %26, %25 : vector<16x32xf32>
    %28 = vector.broadcast %23 : vector<16x1xf32> to vector<16x32xf32>
    %29 = arith.mulf %27, %28 : vector<16x32xf32>
    %30 = vector.broadcast %8 : vector<1x32xf32> to vector<16x32xf32>
    %31 = arith.addf %29, %30 : vector<16x32xf32>
    %32 = vector.extract_strided_slice %4 {offsets = [0, 0], sizes = [32, 96], strides = [1, 1]} : vector<128x128xf32> to vector<32x96xf32>
    %cst_15 = arith.constant dense<0.000000e+00> : vector<16x96xf32>
    %33 = tpu.matmul %31, %32, %cst_15 {dimension_numbers = #tpu.dot_dimension_numbers<[1], [0], [0], [1], [0, 0, 1, 1], [], []>} : vector<16x32xf32>, vector<32x96xf32>, vector<16x96xf32> -> vector<16x96xf32>
    %34 = vector.extract_strided_slice %6 {offsets = [0, 0], sizes = [1, 96], strides = [1, 1]} : vector<8x128xf32> to vector<1x96xf32>
    %35 = vector.broadcast %34 : vector<1x96xf32> to vector<16x96xf32>
    %36 = arith.addf %33, %35 : vector<16x96xf32>
    %37 = vector.extract_strided_slice %36 {offsets = [0, 0], sizes = [16, 32], strides = [1, 1]} : vector<16x96xf32> to vector<16x32xf32>
    %38 = vector.extract_strided_slice %36 {offsets = [0, 32], sizes = [16, 32], strides = [1, 1]} : vector<16x96xf32> to vector<16x32xf32>
    %39 = vector.extract_strided_slice %36 {offsets = [0, 64], sizes = [16, 32], strides = [1, 1]} : vector<16x96xf32> to vector<16x32xf32>
    %40 = vector.extract_strided_slice %4 {offsets = [0, 96], sizes = [32, 32], strides = [1, 1]} : vector<128x128xf32> to vector<32x32xf32>
    %41 = vector.extract_strided_slice %6 {offsets = [0, 96], sizes = [1, 32], strides = [1, 1]} : vector<8x128xf32> to vector<1x32xf32>
    %42 = vector.extract_strided_slice %37 {offsets = [0, 0], sizes = [16, 8], strides = [1, 1]} : vector<16x32xf32> to vector<16x8xf32>
    %43 = vector.extract_strided_slice %38 {offsets = [0, 0], sizes = [16, 8], strides = [1, 1]} : vector<16x32xf32> to vector<16x8xf32>
    %cst_16 = arith.constant dense<0.000000e+00> : vector<16x16xf32>
    %44 = tpu.matmul %42, %43, %cst_16 {dimension_numbers = #tpu.dot_dimension_numbers<[1], [1], [0], [0], [0, 0, 1, 0], [], []>} : vector<16x8xf32>, vector<16x8xf32>, vector<16x16xf32> -> vector<16x16xf32>
    %45 = arith.addf %44, %2 : vector<16x16xf32>
    %cst_17 = arith.constant dense<0xFF800000> : vector<16xf32>
    %46 = vector.multi_reduction <maximumf>, %45, %cst_17 [1] : vector<16x16xf32> to vector<16xf32>
    %47 = vector.shape_cast %46 : vector<16xf32> to vector<16x1xf32>
    %48 = vector.broadcast %47 : vector<16x1xf32> to vector<16x16xf32>
    %49 = arith.subf %45, %48 : vector<16x16xf32>
    %50 = math.exp %49 : vector<16x16xf32>
    %cst_18 = arith.constant dense<0.000000e+00> : vector<16xf32>
    %51 = vector.multi_reduction <add>, %50, %cst_18 [1] : vector<16x16xf32> to vector<16xf32>
    %52 = vector.shape_cast %51 : vector<16xf32> to vector<16x1xf32>
    %53 = tpu.reciprocal %52 {approx = true} : vector<16x1xf32> -> vector<16x1xf32>
    %54 = vector.broadcast %53 : vector<16x1xf32> to vector<16x16xf32>
    %55 = arith.mulf %50, %54 : vector<16x16xf32>
    %56 = vector.extract_strided_slice %39 {offsets = [0, 0], sizes = [16, 8], strides = [1, 1]} : vector<16x32xf32> to vector<16x8xf32>
    %cst_19 = arith.constant dense<0.000000e+00> : vector<16x8xf32>
    %57 = tpu.matmul %55, %56, %cst_19 {dimension_numbers = #tpu.dot_dimension_numbers<[1], [0], [0], [1], [0, 0, 1, 1], [], []>} : vector<16x16xf32>, vector<16x8xf32>, vector<16x8xf32> -> vector<16x8xf32>
    %58 = vector.extract_strided_slice %37 {offsets = [0, 8], sizes = [16, 8], strides = [1, 1]} : vector<16x32xf32> to vector<16x8xf32>
    %59 = vector.extract_strided_slice %38 {offsets = [0, 8], sizes = [16, 8], strides = [1, 1]} : vector<16x32xf32> to vector<16x8xf32>
    %cst_20 = arith.constant dense<0.000000e+00> : vector<16x16xf32>
    %60 = tpu.matmul %58, %59, %cst_20 {dimension_numbers = #tpu.dot_dimension_numbers<[1], [1], [0], [0], [0, 0, 1, 0], [], []>} : vector<16x8xf32>, vector<16x8xf32>, vector<16x16xf32> -> vector<16x16xf32>
    %61 = arith.addf %60, %2 : vector<16x16xf32>
    %cst_21 = arith.constant dense<0xFF800000> : vector<16xf32>
    %62 = vector.multi_reduction <maximumf>, %61, %cst_21 [1] : vector<16x16xf32> to vector<16xf32>
    %63 = vector.shape_cast %62 : vector<16xf32> to vector<16x1xf32>
    %64 = vector.broadcast %63 : vector<16x1xf32> to vector<16x16xf32>
    %65 = arith.subf %61, %64 : vector<16x16xf32>
    %66 = math.exp %65 : vector<16x16xf32>
    %cst_22 = arith.constant dense<0.000000e+00> : vector<16xf32>
    %67 = vector.multi_reduction <add>, %66, %cst_22 [1] : vector<16x16xf32> to vector<16xf32>
    %68 = vector.shape_cast %67 : vector<16xf32> to vector<16x1xf32>
    %69 = tpu.reciprocal %68 {approx = true} : vector<16x1xf32> -> vector<16x1xf32>
    %70 = vector.broadcast %69 : vector<16x1xf32> to vector<16x16xf32>
    %71 = arith.mulf %66, %70 : vector<16x16xf32>
    %72 = vector.extract_strided_slice %39 {offsets = [0, 8], sizes = [16, 8], strides = [1, 1]} : vector<16x32xf32> to vector<16x8xf32>
    %cst_23 = arith.constant dense<0.000000e+00> : vector<16x8xf32>
    %73 = tpu.matmul %71, %72, %cst_23 {dimension_numbers = #tpu.dot_dimension_numbers<[1], [0], [0], [1], [0, 0, 1, 1], [], []>} : vector<16x16xf32>, vector<16x8xf32>, vector<16x8xf32> -> vector<16x8xf32>
    %74 = vector.extract_strided_slice %37 {offsets = [0, 16], sizes = [16, 8], strides = [1, 1]} : vector<16x32xf32> to vector<16x8xf32>
    %75 = vector.extract_strided_slice %38 {offsets = [0, 16], sizes = [16, 8], strides = [1, 1]} : vector<16x32xf32> to vector<16x8xf32>
    %cst_24 = arith.constant dense<0.000000e+00> : vector<16x16xf32>
    %76 = tpu.matmul %74, %75, %cst_24 {dimension_numbers = #tpu.dot_dimension_numbers<[1], [1], [0], [0], [0, 0, 1, 0], [], []>} : vector<16x8xf32>, vector<16x8xf32>, vector<16x16xf32> -> vector<16x16xf32>
    %77 = arith.addf %76, %2 : vector<16x16xf32>
    %cst_25 = arith.constant dense<0xFF800000> : vector<16xf32>
    %78 = vector.multi_reduction <maximumf>, %77, %cst_25 [1] : vector<16x16xf32> to vector<16xf32>
    %79 = vector.shape_cast %78 : vector<16xf32> to vector<16x1xf32>
    %80 = vector.broadcast %79 : vector<16x1xf32> to vector<16x16xf32>
    %81 = arith.subf %77, %80 : vector<16x16xf32>
    %82 = math.exp %81 : vector<16x16xf32>
    %cst_26 = arith.constant dense<0.000000e+00> : vector<16xf32>
    %83 = vector.multi_reduction <add>, %82, %cst_26 [1] : vector<16x16xf32> to vector<16xf32>
    %84 = vector.shape_cast %83 : vector<16xf32> to vector<16x1xf32>
    %85 = tpu.reciprocal %84 {approx = true} : vector<16x1xf32> -> vector<16x1xf32>
    %86 = vector.broadcast %85 : vector<16x1xf32> to vector<16x16xf32>
    %87 = arith.mulf %82, %86 : vector<16x16xf32>
    %88 = vector.extract_strided_slice %39 {offsets = [0, 16], sizes = [16, 8], strides = [1, 1]} : vector<16x32xf32> to vector<16x8xf32>
    %cst_27 = arith.constant dense<0.000000e+00> : vector<16x8xf32>
    %89 = tpu.matmul %87, %88, %cst_27 {dimension_numbers = #tpu.dot_dimension_numbers<[1], [0], [0], [1], [0, 0, 1, 1], [], []>} : vector<16x16xf32>, vector<16x8xf32>, vector<16x8xf32> -> vector<16x8xf32>
    %90 = vector.extract_strided_slice %37 {offsets = [0, 24], sizes = [16, 8], strides = [1, 1]} : vector<16x32xf32> to vector<16x8xf32>
    %91 = vector.extract_strided_slice %38 {offsets = [0, 24], sizes = [16, 8], strides = [1, 1]} : vector<16x32xf32> to vector<16x8xf32>
    %cst_28 = arith.constant dense<0.000000e+00> : vector<16x16xf32>
    %92 = tpu.matmul %90, %91, %cst_28 {dimension_numbers = #tpu.dot_dimension_numbers<[1], [1], [0], [0], [0, 0, 1, 0], [], []>} : vector<16x8xf32>, vector<16x8xf32>, vector<16x16xf32> -> vector<16x16xf32>
    %93 = arith.addf %92, %2 : vector<16x16xf32>
    %cst_29 = arith.constant dense<0xFF800000> : vector<16xf32>
    %94 = vector.multi_reduction <maximumf>, %93, %cst_29 [1] : vector<16x16xf32> to vector<16xf32>
    %95 = vector.shape_cast %94 : vector<16xf32> to vector<16x1xf32>
    %96 = vector.broadcast %95 : vector<16x1xf32> to vector<16x16xf32>
    %97 = arith.subf %93, %96 : vector<16x16xf32>
    %98 = math.exp %97 : vector<16x16xf32>
    %cst_30 = arith.constant dense<0.000000e+00> : vector<16xf32>
    %99 = vector.multi_reduction <add>, %98, %cst_30 [1] : vector<16x16xf32> to vector<16xf32>
    %100 = vector.shape_cast %99 : vector<16xf32> to vector<16x1xf32>
    %101 = tpu.reciprocal %100 {approx = true} : vector<16x1xf32> -> vector<16x1xf32>
    %102 = vector.broadcast %101 : vector<16x1xf32> to vector<16x16xf32>
    %103 = arith.mulf %98, %102 : vector<16x16xf32>
    %104 = vector.extract_strided_slice %39 {offsets = [0, 24], sizes = [16, 8], strides = [1, 1]} : vector<16x32xf32> to vector<16x8xf32>
    %cst_31 = arith.constant dense<0.000000e+00> : vector<16x8xf32>
    %105 = tpu.matmul %103, %104, %cst_31 {dimension_numbers = #tpu.dot_dimension_numbers<[1], [0], [0], [1], [0, 0, 1, 1], [], []>} : vector<16x16xf32>, vector<16x8xf32>, vector<16x8xf32> -> vector<16x8xf32>
    %106 = tpu.concatenate %57, %73, %89, %105 in 1 : vector<16x8xf32>, vector<16x8xf32>, vector<16x8xf32>, vector<16x8xf32> -> vector<16x32xf32>
    %cst_32 = arith.constant dense<0.000000e+00> : vector<16x32xf32>
    %107 = tpu.matmul %106, %40, %cst_32 {dimension_numbers = #tpu.dot_dimension_numbers<[1], [0], [0], [1], [0, 0, 1, 1], [], []>} : vector<16x32xf32>, vector<32x32xf32>, vector<16x32xf32> -> vector<16x32xf32>
    %108 = vector.broadcast %41 : vector<1x32xf32> to vector<16x32xf32>
    %109 = arith.addf %107, %108 : vector<16x32xf32>
    %110 = arith.addf %1, %109 : vector<16x32xf32>
    %111 = vector.extract_strided_slice %6 {offsets = [2, 64], sizes = [1, 32], strides = [1, 1]} : vector<8x128xf32> to vector<1x32xf32>
    %112 = vector.extract_strided_slice %6 {offsets = [2, 96], sizes = [1, 32], strides = [1, 1]} : vector<8x128xf32> to vector<1x32xf32>
    %cst_33 = arith.constant dense<0.000000e+00> : vector<16xf32>
    %113 = vector.multi_reduction <add>, %110, %cst_33 [1] : vector<16x32xf32> to vector<16xf32>
    %114 = vector.shape_cast %113 : vector<16xf32> to vector<16x1xf32>
    %cst_34 = arith.constant 3.200000e+01 : f32
    %115 = vector.broadcast %cst_34 : f32 to vector<16x1xf32>
    %116 = arith.divf %114, %115 : vector<16x1xf32>
    %117 = vector.broadcast %116 : vector<16x1xf32> to vector<16x32xf32>
    %118 = arith.subf %110, %117 : vector<16x32xf32>
    %119 = arith.mulf %118, %118 : vector<16x32xf32>
    %cst_35 = arith.constant dense<0.000000e+00> : vector<16xf32>
    %120 = vector.multi_reduction <add>, %119, %cst_35 [1] : vector<16x32xf32> to vector<16xf32>
    %121 = vector.shape_cast %120 : vector<16xf32> to vector<16x1xf32>
    %cst_36 = arith.constant 0.0322580636 : f32
    %122 = vector.broadcast %cst_36 : f32 to vector<16x1xf32>
    %123 = arith.mulf %121, %122 : vector<16x1xf32>
    %124 = math.sqrt %123 : vector<16x1xf32>
    %cst_37 = arith.constant 9.99999997E-7 : f32
    %125 = vector.broadcast %cst_37 : f32 to vector<16x1xf32>
    %126 = arith.addf %124, %125 : vector<16x1xf32>
    %127 = tpu.reciprocal %126 {approx = true} : vector<16x1xf32> -> vector<16x1xf32>
    %128 = vector.broadcast %116 : vector<16x1xf32> to vector<16x32xf32>
    %129 = arith.subf %110, %128 : vector<16x32xf32>
    %130 = vector.broadcast %111 : vector<1x32xf32> to vector<16x32xf32>
    %131 = arith.mulf %130, %129 : vector<16x32xf32>
    %132 = vector.broadcast %127 : vector<16x1xf32> to vector<16x32xf32>
    %133 = arith.mulf %131, %132 : vector<16x32xf32>
    %134 = vector.broadcast %112 : vector<1x32xf32> to vector<16x32xf32>
    %135 = arith.addf %133, %134 : vector<16x32xf32>
    %136 = vector.extract_strided_slice %4 {offsets = [32, 0], sizes = [32, 64], strides = [1, 1]} : vector<128x128xf32> to vector<32x64xf32>
    %cst_38 = arith.constant dense<0.000000e+00> : vector<16x64xf32>
    %137 = tpu.matmul %135, %136, %cst_38 {dimension_numbers = #tpu.dot_dimension_numbers<[1], [0], [0], [1], [0, 0, 1, 1], [], []>} : vector<16x32xf32>, vector<32x64xf32>, vector<16x64xf32> -> vector<16x64xf32>
    %138 = vector.extract_strided_slice %6 {offsets = [1, 0], sizes = [1, 64], strides = [1, 1]} : vector<8x128xf32> to vector<1x64xf32>
    %139 = vector.broadcast %138 : vector<1x64xf32> to vector<16x64xf32>
    %140 = arith.addf %137, %139 : vector<16x64xf32>
    %cst_39 = arith.constant 0.000000e+00 : f32
    %141 = vector.broadcast %cst_39 : f32 to vector<16x64xf32>
    %142 = arith.maximumf %140, %141 : vector<16x64xf32>
    %143 = vector.extract_strided_slice %4 {offsets = [64, 0], sizes = [64, 32], strides = [1, 1]} : vector<128x128xf32> to vector<64x32xf32>
    %cst_40 = arith.constant dense<0.000000e+00> : vector<16x32xf32>
    %144 = tpu.matmul %142, %143, %cst_40 {dimension_numbers = #tpu.dot_dimension_numbers<[1], [0], [0], [1], [0, 0, 1, 1], [], []>} : vector<16x64xf32>, vector<64x32xf32>, vector<16x32xf32> -> vector<16x32xf32>
    %145 = arith.addf %110, %144 : vector<16x32xf32>
    %146 = vector.extract_strided_slice %6 {offsets = [1, 64], sizes = [1, 32], strides = [1, 1]} : vector<8x128xf32> to vector<1x32xf32>
    %147 = vector.broadcast %146 : vector<1x32xf32> to vector<16x32xf32>
    %148 = arith.addf %145, %147 : vector<16x32xf32>
    %c1 = arith.constant 1 : index
    %c0_41 = arith.constant 0 : index
    %c0_42 = arith.constant 0 : index
    %149 = vector.load %arg6[%c1, %c0_41, %c0_42] : memref<2x128x128xf32, #tpu.memory_space<vmem>>, vector<1x128x128xf32>
    %150 = vector.shape_cast %149 : vector<1x128x128xf32> to vector<128x128xf32>
    %c1_43 = arith.constant 1 : index
    %c0_44 = arith.constant 0 : index
    %c0_45 = arith.constant 0 : index
    %151 = vector.load %arg7[%c1_43, %c0_44, %c0_45] : memref<2x8x128xf32, #tpu.memory_space<vmem>>, vector<1x8x128xf32>
    %152 = vector.shape_cast %151 : vector<1x8x128xf32> to vector<8x128xf32>
    %153 = vector.extract_strided_slice %152 {offsets = [2, 0], sizes = [1, 32], strides = [1, 1]} : vector<8x128xf32> to vector<1x32xf32>
    %154 = vector.extract_strided_slice %152 {offsets = [2, 32], sizes = [1, 32], strides = [1, 1]} : vector<8x128xf32> to vector<1x32xf32>
    %cst_46 = arith.constant dense<0.000000e+00> : vector<16xf32>
    %155 = vector.multi_reduction <add>, %148, %cst_46 [1] : vector<16x32xf32> to vector<16xf32>
    %156 = vector.shape_cast %155 : vector<16xf32> to vector<16x1xf32>
    %cst_47 = arith.constant 3.200000e+01 : f32
    %157 = vector.broadcast %cst_47 : f32 to vector<16x1xf32>
    %158 = arith.divf %156, %157 : vector<16x1xf32>
    %159 = vector.broadcast %158 : vector<16x1xf32> to vector<16x32xf32>
    %160 = arith.subf %148, %159 : vector<16x32xf32>
    %161 = arith.mulf %160, %160 : vector<16x32xf32>
    %cst_48 = arith.constant dense<0.000000e+00> : vector<16xf32>
    %162 = vector.multi_reduction <add>, %161, %cst_48 [1] : vector<16x32xf32> to vector<16xf32>
    %163 = vector.shape_cast %162 : vector<16xf32> to vector<16x1xf32>
    %cst_49 = arith.constant 0.0322580636 : f32
    %164 = vector.broadcast %cst_49 : f32 to vector<16x1xf32>
    %165 = arith.mulf %163, %164 : vector<16x1xf32>
    %166 = math.sqrt %165 : vector<16x1xf32>
    %cst_50 = arith.constant 9.99999997E-7 : f32
    %167 = vector.broadcast %cst_50 : f32 to vector<16x1xf32>
    %168 = arith.addf %166, %167 : vector<16x1xf32>
    %169 = tpu.reciprocal %168 {approx = true} : vector<16x1xf32> -> vector<16x1xf32>
    %170 = vector.broadcast %158 : vector<16x1xf32> to vector<16x32xf32>
    %171 = arith.subf %148, %170 : vector<16x32xf32>
    %172 = vector.broadcast %153 : vector<1x32xf32> to vector<16x32xf32>
    %173 = arith.mulf %172, %171 : vector<16x32xf32>
    %174 = vector.broadcast %169 : vector<16x1xf32> to vector<16x32xf32>
    %175 = arith.mulf %173, %174 : vector<16x32xf32>
    %176 = vector.broadcast %154 : vector<1x32xf32> to vector<16x32xf32>
    %177 = arith.addf %175, %176 : vector<16x32xf32>
    %178 = vector.extract_strided_slice %150 {offsets = [0, 0], sizes = [32, 96], strides = [1, 1]} : vector<128x128xf32> to vector<32x96xf32>
    %cst_51 = arith.constant dense<0.000000e+00> : vector<16x96xf32>
    %179 = tpu.matmul %177, %178, %cst_51 {dimension_numbers = #tpu.dot_dimension_numbers<[1], [0], [0], [1], [0, 0, 1, 1], [], []>} : vector<16x32xf32>, vector<32x96xf32>, vector<16x96xf32> -> vector<16x96xf32>
    %180 = vector.extract_strided_slice %152 {offsets = [0, 0], sizes = [1, 96], strides = [1, 1]} : vector<8x128xf32> to vector<1x96xf32>
    %181 = vector.broadcast %180 : vector<1x96xf32> to vector<16x96xf32>
    %182 = arith.addf %179, %181 : vector<16x96xf32>
    %183 = vector.extract_strided_slice %182 {offsets = [0, 0], sizes = [16, 32], strides = [1, 1]} : vector<16x96xf32> to vector<16x32xf32>
    %184 = vector.extract_strided_slice %182 {offsets = [0, 32], sizes = [16, 32], strides = [1, 1]} : vector<16x96xf32> to vector<16x32xf32>
    %185 = vector.extract_strided_slice %182 {offsets = [0, 64], sizes = [16, 32], strides = [1, 1]} : vector<16x96xf32> to vector<16x32xf32>
    %186 = vector.extract_strided_slice %150 {offsets = [0, 96], sizes = [32, 32], strides = [1, 1]} : vector<128x128xf32> to vector<32x32xf32>
    %187 = vector.extract_strided_slice %152 {offsets = [0, 96], sizes = [1, 32], strides = [1, 1]} : vector<8x128xf32> to vector<1x32xf32>
    %188 = vector.extract_strided_slice %183 {offsets = [0, 0], sizes = [16, 8], strides = [1, 1]} : vector<16x32xf32> to vector<16x8xf32>
    %189 = vector.extract_strided_slice %184 {offsets = [0, 0], sizes = [16, 8], strides = [1, 1]} : vector<16x32xf32> to vector<16x8xf32>
    %cst_52 = arith.constant dense<0.000000e+00> : vector<16x16xf32>
    %190 = tpu.matmul %188, %189, %cst_52 {dimension_numbers = #tpu.dot_dimension_numbers<[1], [1], [0], [0], [0, 0, 1, 0], [], []>} : vector<16x8xf32>, vector<16x8xf32>, vector<16x16xf32> -> vector<16x16xf32>
    %191 = arith.addf %190, %2 : vector<16x16xf32>
    %cst_53 = arith.constant dense<0xFF800000> : vector<16xf32>
    %192 = vector.multi_reduction <maximumf>, %191, %cst_53 [1] : vector<16x16xf32> to vector<16xf32>
    %193 = vector.shape_cast %192 : vector<16xf32> to vector<16x1xf32>
    %194 = vector.broadcast %193 : vector<16x1xf32> to vector<16x16xf32>
    %195 = arith.subf %191, %194 : vector<16x16xf32>
    %196 = math.exp %195 : vector<16x16xf32>
    %cst_54 = arith.constant dense<0.000000e+00> : vector<16xf32>
    %197 = vector.multi_reduction <add>, %196, %cst_54 [1] : vector<16x16xf32> to vector<16xf32>
    %198 = vector.shape_cast %197 : vector<16xf32> to vector<16x1xf32>
    %199 = tpu.reciprocal %198 {approx = true} : vector<16x1xf32> -> vector<16x1xf32>
    %200 = vector.broadcast %199 : vector<16x1xf32> to vector<16x16xf32>
    %201 = arith.mulf %196, %200 : vector<16x16xf32>
    %202 = vector.extract_strided_slice %185 {offsets = [0, 0], sizes = [16, 8], strides = [1, 1]} : vector<16x32xf32> to vector<16x8xf32>
    %cst_55 = arith.constant dense<0.000000e+00> : vector<16x8xf32>
    %203 = tpu.matmul %201, %202, %cst_55 {dimension_numbers = #tpu.dot_dimension_numbers<[1], [0], [0], [1], [0, 0, 1, 1], [], []>} : vector<16x16xf32>, vector<16x8xf32>, vector<16x8xf32> -> vector<16x8xf32>
    %204 = vector.extract_strided_slice %183 {offsets = [0, 8], sizes = [16, 8], strides = [1, 1]} : vector<16x32xf32> to vector<16x8xf32>
    %205 = vector.extract_strided_slice %184 {offsets = [0, 8], sizes = [16, 8], strides = [1, 1]} : vector<16x32xf32> to vector<16x8xf32>
    %cst_56 = arith.constant dense<0.000000e+00> : vector<16x16xf32>
    %206 = tpu.matmul %204, %205, %cst_56 {dimension_numbers = #tpu.dot_dimension_numbers<[1], [1], [0], [0], [0, 0, 1, 0], [], []>} : vector<16x8xf32>, vector<16x8xf32>, vector<16x16xf32> -> vector<16x16xf32>
    %207 = arith.addf %206, %2 : vector<16x16xf32>
    %cst_57 = arith.constant dense<0xFF800000> : vector<16xf32>
    %208 = vector.multi_reduction <maximumf>, %207, %cst_57 [1] : vector<16x16xf32> to vector<16xf32>
    %209 = vector.shape_cast %208 : vector<16xf32> to vector<16x1xf32>
    %210 = vector.broadcast %209 : vector<16x1xf32> to vector<16x16xf32>
    %211 = arith.subf %207, %210 : vector<16x16xf32>
    %212 = math.exp %211 : vector<16x16xf32>
    %cst_58 = arith.constant dense<0.000000e+00> : vector<16xf32>
    %213 = vector.multi_reduction <add>, %212, %cst_58 [1] : vector<16x16xf32> to vector<16xf32>
    %214 = vector.shape_cast %213 : vector<16xf32> to vector<16x1xf32>
    %215 = tpu.reciprocal %214 {approx = true} : vector<16x1xf32> -> vector<16x1xf32>
    %216 = vector.broadcast %215 : vector<16x1xf32> to vector<16x16xf32>
    %217 = arith.mulf %212, %216 : vector<16x16xf32>
    %218 = vector.extract_strided_slice %185 {offsets = [0, 8], sizes = [16, 8], strides = [1, 1]} : vector<16x32xf32> to vector<16x8xf32>
    %cst_59 = arith.constant dense<0.000000e+00> : vector<16x8xf32>
    %219 = tpu.matmul %217, %218, %cst_59 {dimension_numbers = #tpu.dot_dimension_numbers<[1], [0], [0], [1], [0, 0, 1, 1], [], []>} : vector<16x16xf32>, vector<16x8xf32>, vector<16x8xf32> -> vector<16x8xf32>
    %220 = vector.extract_strided_slice %183 {offsets = [0, 16], sizes = [16, 8], strides = [1, 1]} : vector<16x32xf32> to vector<16x8xf32>
    %221 = vector.extract_strided_slice %184 {offsets = [0, 16], sizes = [16, 8], strides = [1, 1]} : vector<16x32xf32> to vector<16x8xf32>
    %cst_60 = arith.constant dense<0.000000e+00> : vector<16x16xf32>
    %222 = tpu.matmul %220, %221, %cst_60 {dimension_numbers = #tpu.dot_dimension_numbers<[1], [1], [0], [0], [0, 0, 1, 0], [], []>} : vector<16x8xf32>, vector<16x8xf32>, vector<16x16xf32> -> vector<16x16xf32>
    %223 = arith.addf %222, %2 : vector<16x16xf32>
    %cst_61 = arith.constant dense<0xFF800000> : vector<16xf32>
    %224 = vector.multi_reduction <maximumf>, %223, %cst_61 [1] : vector<16x16xf32> to vector<16xf32>
    %225 = vector.shape_cast %224 : vector<16xf32> to vector<16x1xf32>
    %226 = vector.broadcast %225 : vector<16x1xf32> to vector<16x16xf32>
    %227 = arith.subf %223, %226 : vector<16x16xf32>
    %228 = math.exp %227 : vector<16x16xf32>
    %cst_62 = arith.constant dense<0.000000e+00> : vector<16xf32>
    %229 = vector.multi_reduction <add>, %228, %cst_62 [1] : vector<16x16xf32> to vector<16xf32>
    %230 = vector.shape_cast %229 : vector<16xf32> to vector<16x1xf32>
    %231 = tpu.reciprocal %230 {approx = true} : vector<16x1xf32> -> vector<16x1xf32>
    %232 = vector.broadcast %231 : vector<16x1xf32> to vector<16x16xf32>
    %233 = arith.mulf %228, %232 : vector<16x16xf32>
    %234 = vector.extract_strided_slice %185 {offsets = [0, 16], sizes = [16, 8], strides = [1, 1]} : vector<16x32xf32> to vector<16x8xf32>
    %cst_63 = arith.constant dense<0.000000e+00> : vector<16x8xf32>
    %235 = tpu.matmul %233, %234, %cst_63 {dimension_numbers = #tpu.dot_dimension_numbers<[1], [0], [0], [1], [0, 0, 1, 1], [], []>} : vector<16x16xf32>, vector<16x8xf32>, vector<16x8xf32> -> vector<16x8xf32>
    %236 = vector.extract_strided_slice %183 {offsets = [0, 24], sizes = [16, 8], strides = [1, 1]} : vector<16x32xf32> to vector<16x8xf32>
    %237 = vector.extract_strided_slice %184 {offsets = [0, 24], sizes = [16, 8], strides = [1, 1]} : vector<16x32xf32> to vector<16x8xf32>
    %cst_64 = arith.constant dense<0.000000e+00> : vector<16x16xf32>
    %238 = tpu.matmul %236, %237, %cst_64 {dimension_numbers = #tpu.dot_dimension_numbers<[1], [1], [0], [0], [0, 0, 1, 0], [], []>} : vector<16x8xf32>, vector<16x8xf32>, vector<16x16xf32> -> vector<16x16xf32>
    %239 = arith.addf %238, %2 : vector<16x16xf32>
    %cst_65 = arith.constant dense<0xFF800000> : vector<16xf32>
    %240 = vector.multi_reduction <maximumf>, %239, %cst_65 [1] : vector<16x16xf32> to vector<16xf32>
    %241 = vector.shape_cast %240 : vector<16xf32> to vector<16x1xf32>
    %242 = vector.broadcast %241 : vector<16x1xf32> to vector<16x16xf32>
    %243 = arith.subf %239, %242 : vector<16x16xf32>
    %244 = math.exp %243 : vector<16x16xf32>
    %cst_66 = arith.constant dense<0.000000e+00> : vector<16xf32>
    %245 = vector.multi_reduction <add>, %244, %cst_66 [1] : vector<16x16xf32> to vector<16xf32>
    %246 = vector.shape_cast %245 : vector<16xf32> to vector<16x1xf32>
    %247 = tpu.reciprocal %246 {approx = true} : vector<16x1xf32> -> vector<16x1xf32>
    %248 = vector.broadcast %247 : vector<16x1xf32> to vector<16x16xf32>
    %249 = arith.mulf %244, %248 : vector<16x16xf32>
    %250 = vector.extract_strided_slice %185 {offsets = [0, 24], sizes = [16, 8], strides = [1, 1]} : vector<16x32xf32> to vector<16x8xf32>
    %cst_67 = arith.constant dense<0.000000e+00> : vector<16x8xf32>
    %251 = tpu.matmul %249, %250, %cst_67 {dimension_numbers = #tpu.dot_dimension_numbers<[1], [0], [0], [1], [0, 0, 1, 1], [], []>} : vector<16x16xf32>, vector<16x8xf32>, vector<16x8xf32> -> vector<16x8xf32>
    %252 = tpu.concatenate %203, %219, %235, %251 in 1 : vector<16x8xf32>, vector<16x8xf32>, vector<16x8xf32>, vector<16x8xf32> -> vector<16x32xf32>
    %cst_68 = arith.constant dense<0.000000e+00> : vector<16x32xf32>
    %253 = tpu.matmul %252, %186, %cst_68 {dimension_numbers = #tpu.dot_dimension_numbers<[1], [0], [0], [1], [0, 0, 1, 1], [], []>} : vector<16x32xf32>, vector<32x32xf32>, vector<16x32xf32> -> vector<16x32xf32>
    %254 = vector.broadcast %187 : vector<1x32xf32> to vector<16x32xf32>
    %255 = arith.addf %253, %254 : vector<16x32xf32>
    %256 = arith.addf %148, %255 : vector<16x32xf32>
    %257 = vector.extract_strided_slice %152 {offsets = [2, 64], sizes = [1, 32], strides = [1, 1]} : vector<8x128xf32> to vector<1x32xf32>
    %258 = vector.extract_strided_slice %152 {offsets = [2, 96], sizes = [1, 32], strides = [1, 1]} : vector<8x128xf32> to vector<1x32xf32>
    %cst_69 = arith.constant dense<0.000000e+00> : vector<16xf32>
    %259 = vector.multi_reduction <add>, %256, %cst_69 [1] : vector<16x32xf32> to vector<16xf32>
    %260 = vector.shape_cast %259 : vector<16xf32> to vector<16x1xf32>
    %cst_70 = arith.constant 3.200000e+01 : f32
    %261 = vector.broadcast %cst_70 : f32 to vector<16x1xf32>
    %262 = arith.divf %260, %261 : vector<16x1xf32>
    %263 = vector.broadcast %262 : vector<16x1xf32> to vector<16x32xf32>
    %264 = arith.subf %256, %263 : vector<16x32xf32>
    %265 = arith.mulf %264, %264 : vector<16x32xf32>
    %cst_71 = arith.constant dense<0.000000e+00> : vector<16xf32>
    %266 = vector.multi_reduction <add>, %265, %cst_71 [1] : vector<16x32xf32> to vector<16xf32>
    %267 = vector.shape_cast %266 : vector<16xf32> to vector<16x1xf32>
    %cst_72 = arith.constant 0.0322580636 : f32
    %268 = vector.broadcast %cst_72 : f32 to vector<16x1xf32>
    %269 = arith.mulf %267, %268 : vector<16x1xf32>
    %270 = math.sqrt %269 : vector<16x1xf32>
    %cst_73 = arith.constant 9.99999997E-7 : f32
    %271 = vector.broadcast %cst_73 : f32 to vector<16x1xf32>
    %272 = arith.addf %270, %271 : vector<16x1xf32>
    %273 = tpu.reciprocal %272 {approx = true} : vector<16x1xf32> -> vector<16x1xf32>
    %274 = vector.broadcast %262 : vector<16x1xf32> to vector<16x32xf32>
    %275 = arith.subf %256, %274 : vector<16x32xf32>
    %276 = vector.broadcast %257 : vector<1x32xf32> to vector<16x32xf32>
    %277 = arith.mulf %276, %275 : vector<16x32xf32>
    %278 = vector.broadcast %273 : vector<16x1xf32> to vector<16x32xf32>
    %279 = arith.mulf %277, %278 : vector<16x32xf32>
    %280 = vector.broadcast %258 : vector<1x32xf32> to vector<16x32xf32>
    %281 = arith.addf %279, %280 : vector<16x32xf32>
    %282 = vector.extract_strided_slice %150 {offsets = [32, 0], sizes = [32, 64], strides = [1, 1]} : vector<128x128xf32> to vector<32x64xf32>
    %cst_74 = arith.constant dense<0.000000e+00> : vector<16x64xf32>
    %283 = tpu.matmul %281, %282, %cst_74 {dimension_numbers = #tpu.dot_dimension_numbers<[1], [0], [0], [1], [0, 0, 1, 1], [], []>} : vector<16x32xf32>, vector<32x64xf32>, vector<16x64xf32> -> vector<16x64xf32>
    %284 = vector.extract_strided_slice %152 {offsets = [1, 0], sizes = [1, 64], strides = [1, 1]} : vector<8x128xf32> to vector<1x64xf32>
    %285 = vector.broadcast %284 : vector<1x64xf32> to vector<16x64xf32>
    %286 = arith.addf %283, %285 : vector<16x64xf32>
    %cst_75 = arith.constant 0.000000e+00 : f32
    %287 = vector.broadcast %cst_75 : f32 to vector<16x64xf32>
    %288 = arith.maximumf %286, %287 : vector<16x64xf32>
    %289 = vector.extract_strided_slice %150 {offsets = [64, 0], sizes = [64, 32], strides = [1, 1]} : vector<128x128xf32> to vector<64x32xf32>
    %cst_76 = arith.constant dense<0.000000e+00> : vector<16x32xf32>
    %290 = tpu.matmul %288, %289, %cst_76 {dimension_numbers = #tpu.dot_dimension_numbers<[1], [0], [0], [1], [0, 0, 1, 1], [], []>} : vector<16x64xf32>, vector<64x32xf32>, vector<16x32xf32> -> vector<16x32xf32>
    %291 = arith.addf %256, %290 : vector<16x32xf32>
    %292 = vector.extract_strided_slice %152 {offsets = [1, 64], sizes = [1, 32], strides = [1, 1]} : vector<8x128xf32> to vector<1x32xf32>
    %293 = vector.broadcast %292 : vector<1x32xf32> to vector<16x32xf32>
    %294 = arith.addf %291, %293 : vector<16x32xf32>
    %295 = vector.extract_strided_slice %0 {offsets = [0, 0], sizes = [1, 32], strides = [1, 1]} : vector<1x128xf32> to vector<1x32xf32>
    %296 = vector.extract_strided_slice %0 {offsets = [0, 32], sizes = [1, 32], strides = [1, 1]} : vector<1x128xf32> to vector<1x32xf32>
    %cst_77 = arith.constant dense<0.000000e+00> : vector<16xf32>
    %297 = vector.multi_reduction <add>, %294, %cst_77 [1] : vector<16x32xf32> to vector<16xf32>
    %298 = vector.shape_cast %297 : vector<16xf32> to vector<16x1xf32>
    %cst_78 = arith.constant 3.200000e+01 : f32
    %299 = vector.broadcast %cst_78 : f32 to vector<16x1xf32>
    %300 = arith.divf %298, %299 : vector<16x1xf32>
    %301 = vector.broadcast %300 : vector<16x1xf32> to vector<16x32xf32>
    %302 = arith.subf %294, %301 : vector<16x32xf32>
    %303 = arith.mulf %302, %302 : vector<16x32xf32>
    %cst_79 = arith.constant dense<0.000000e+00> : vector<16xf32>
    %304 = vector.multi_reduction <add>, %303, %cst_79 [1] : vector<16x32xf32> to vector<16xf32>
    %305 = vector.shape_cast %304 : vector<16xf32> to vector<16x1xf32>
    %cst_80 = arith.constant 0.0322580636 : f32
    %306 = vector.broadcast %cst_80 : f32 to vector<16x1xf32>
    %307 = arith.mulf %305, %306 : vector<16x1xf32>
    %308 = math.sqrt %307 : vector<16x1xf32>
    %cst_81 = arith.constant 9.99999997E-7 : f32
    %309 = vector.broadcast %cst_81 : f32 to vector<16x1xf32>
    %310 = arith.addf %308, %309 : vector<16x1xf32>
    %311 = tpu.reciprocal %310 {approx = true} : vector<16x1xf32> -> vector<16x1xf32>
    %312 = vector.broadcast %300 : vector<16x1xf32> to vector<16x32xf32>
    %313 = arith.subf %294, %312 : vector<16x32xf32>
    %314 = vector.broadcast %295 : vector<1x32xf32> to vector<16x32xf32>
    %315 = arith.mulf %314, %313 : vector<16x32xf32>
    %316 = vector.broadcast %311 : vector<16x1xf32> to vector<16x32xf32>
    %317 = arith.mulf %315, %316 : vector<16x32xf32>
    %318 = vector.broadcast %296 : vector<1x32xf32> to vector<16x32xf32>
    %319 = arith.addf %317, %318 : vector<16x32xf32>
    %c0_82 = arith.constant 0 : index
    %c0_83 = arith.constant 0 : index
    %320 = vector.load %arg2[%c0_82, %c0_83] : memref<16x32xf32, #tpu.memory_space<vmem>>, vector<16x32xf32>
    %c0_84 = arith.constant 0 : index
    %c0_85 = arith.constant 0 : index
    %321 = vector.load %arg4[%c0_84, %c0_85] : memref<16x16xf32, #tpu.memory_space<vmem>>, vector<16x16xf32>
    %c0_86 = arith.constant 0 : index
    %c0_87 = arith.constant 0 : index
    %322 = vector.load %arg5[%c0_86, %c0_87] : memref<16x16xf32, #tpu.memory_space<vmem>>, vector<16x16xf32>
    %c0_88 = arith.constant 0 : index
    %c0_89 = arith.constant 0 : index
    %c0_90 = arith.constant 0 : index
    %323 = vector.load %arg8[%c0_88, %c0_89, %c0_90] : memref<2x128x128xf32, #tpu.memory_space<vmem>>, vector<1x128x128xf32>
    %324 = vector.shape_cast %323 : vector<1x128x128xf32> to vector<128x128xf32>
    %c0_91 = arith.constant 0 : index
    %c0_92 = arith.constant 0 : index
    %c0_93 = arith.constant 0 : index
    %325 = vector.load %arg9[%c0_91, %c0_92, %c0_93] : memref<2x8x128xf32, #tpu.memory_space<vmem>>, vector<1x8x128xf32>
    %326 = vector.shape_cast %325 : vector<1x8x128xf32> to vector<8x128xf32>
    %327 = vector.extract_strided_slice %326 {offsets = [3, 0], sizes = [1, 32], strides = [1, 1]} : vector<8x128xf32> to vector<1x32xf32>
    %328 = vector.extract_strided_slice %326 {offsets = [3, 32], sizes = [1, 32], strides = [1, 1]} : vector<8x128xf32> to vector<1x32xf32>
    %cst_94 = arith.constant dense<0.000000e+00> : vector<16xf32>
    %329 = vector.multi_reduction <add>, %320, %cst_94 [1] : vector<16x32xf32> to vector<16xf32>
    %330 = vector.shape_cast %329 : vector<16xf32> to vector<16x1xf32>
    %cst_95 = arith.constant 3.200000e+01 : f32
    %331 = vector.broadcast %cst_95 : f32 to vector<16x1xf32>
    %332 = arith.divf %330, %331 : vector<16x1xf32>
    %333 = vector.broadcast %332 : vector<16x1xf32> to vector<16x32xf32>
    %334 = arith.subf %320, %333 : vector<16x32xf32>
    %335 = arith.mulf %334, %334 : vector<16x32xf32>
    %cst_96 = arith.constant dense<0.000000e+00> : vector<16xf32>
    %336 = vector.multi_reduction <add>, %335, %cst_96 [1] : vector<16x32xf32> to vector<16xf32>
    %337 = vector.shape_cast %336 : vector<16xf32> to vector<16x1xf32>
    %cst_97 = arith.constant 0.0322580636 : f32
    %338 = vector.broadcast %cst_97 : f32 to vector<16x1xf32>
    %339 = arith.mulf %337, %338 : vector<16x1xf32>
    %340 = math.sqrt %339 : vector<16x1xf32>
    %cst_98 = arith.constant 9.99999997E-7 : f32
    %341 = vector.broadcast %cst_98 : f32 to vector<16x1xf32>
    %342 = arith.addf %340, %341 : vector<16x1xf32>
    %343 = tpu.reciprocal %342 {approx = true} : vector<16x1xf32> -> vector<16x1xf32>
    %344 = vector.broadcast %332 : vector<16x1xf32> to vector<16x32xf32>
    %345 = arith.subf %320, %344 : vector<16x32xf32>
    %346 = vector.broadcast %327 : vector<1x32xf32> to vector<16x32xf32>
    %347 = arith.mulf %346, %345 : vector<16x32xf32>
    %348 = vector.broadcast %343 : vector<16x1xf32> to vector<16x32xf32>
    %349 = arith.mulf %347, %348 : vector<16x32xf32>
    %350 = vector.broadcast %328 : vector<1x32xf32> to vector<16x32xf32>
    %351 = arith.addf %349, %350 : vector<16x32xf32>
    %352 = vector.extract_strided_slice %324 {offsets = [0, 0], sizes = [32, 96], strides = [1, 1]} : vector<128x128xf32> to vector<32x96xf32>
    %cst_99 = arith.constant dense<0.000000e+00> : vector<16x96xf32>
    %353 = tpu.matmul %351, %352, %cst_99 {dimension_numbers = #tpu.dot_dimension_numbers<[1], [0], [0], [1], [0, 0, 1, 1], [], []>} : vector<16x32xf32>, vector<32x96xf32>, vector<16x96xf32> -> vector<16x96xf32>
    %354 = vector.extract_strided_slice %326 {offsets = [0, 0], sizes = [1, 96], strides = [1, 1]} : vector<8x128xf32> to vector<1x96xf32>
    %355 = vector.broadcast %354 : vector<1x96xf32> to vector<16x96xf32>
    %356 = arith.addf %353, %355 : vector<16x96xf32>
    %357 = vector.extract_strided_slice %356 {offsets = [0, 0], sizes = [16, 32], strides = [1, 1]} : vector<16x96xf32> to vector<16x32xf32>
    %358 = vector.extract_strided_slice %356 {offsets = [0, 32], sizes = [16, 32], strides = [1, 1]} : vector<16x96xf32> to vector<16x32xf32>
    %359 = vector.extract_strided_slice %356 {offsets = [0, 64], sizes = [16, 32], strides = [1, 1]} : vector<16x96xf32> to vector<16x32xf32>
    %360 = vector.extract_strided_slice %324 {offsets = [0, 96], sizes = [32, 32], strides = [1, 1]} : vector<128x128xf32> to vector<32x32xf32>
    %361 = vector.extract_strided_slice %326 {offsets = [0, 96], sizes = [1, 32], strides = [1, 1]} : vector<8x128xf32> to vector<1x32xf32>
    %362 = vector.extract_strided_slice %357 {offsets = [0, 0], sizes = [16, 8], strides = [1, 1]} : vector<16x32xf32> to vector<16x8xf32>
    %363 = vector.extract_strided_slice %358 {offsets = [0, 0], sizes = [16, 8], strides = [1, 1]} : vector<16x32xf32> to vector<16x8xf32>
    %cst_100 = arith.constant dense<0.000000e+00> : vector<16x16xf32>
    %364 = tpu.matmul %362, %363, %cst_100 {dimension_numbers = #tpu.dot_dimension_numbers<[1], [1], [0], [0], [0, 0, 1, 0], [], []>} : vector<16x8xf32>, vector<16x8xf32>, vector<16x16xf32> -> vector<16x16xf32>
    %365 = arith.addf %364, %321 : vector<16x16xf32>
    %cst_101 = arith.constant dense<0xFF800000> : vector<16xf32>
    %366 = vector.multi_reduction <maximumf>, %365, %cst_101 [1] : vector<16x16xf32> to vector<16xf32>
    %367 = vector.shape_cast %366 : vector<16xf32> to vector<16x1xf32>
    %368 = vector.broadcast %367 : vector<16x1xf32> to vector<16x16xf32>
    %369 = arith.subf %365, %368 : vector<16x16xf32>
    %370 = math.exp %369 : vector<16x16xf32>
    %cst_102 = arith.constant dense<0.000000e+00> : vector<16xf32>
    %371 = vector.multi_reduction <add>, %370, %cst_102 [1] : vector<16x16xf32> to vector<16xf32>
    %372 = vector.shape_cast %371 : vector<16xf32> to vector<16x1xf32>
    %373 = tpu.reciprocal %372 {approx = true} : vector<16x1xf32> -> vector<16x1xf32>
    %374 = vector.broadcast %373 : vector<16x1xf32> to vector<16x16xf32>
    %375 = arith.mulf %370, %374 : vector<16x16xf32>
    %376 = vector.extract_strided_slice %359 {offsets = [0, 0], sizes = [16, 8], strides = [1, 1]} : vector<16x32xf32> to vector<16x8xf32>
    %cst_103 = arith.constant dense<0.000000e+00> : vector<16x8xf32>
    %377 = tpu.matmul %375, %376, %cst_103 {dimension_numbers = #tpu.dot_dimension_numbers<[1], [0], [0], [1], [0, 0, 1, 1], [], []>} : vector<16x16xf32>, vector<16x8xf32>, vector<16x8xf32> -> vector<16x8xf32>
    %378 = vector.extract_strided_slice %357 {offsets = [0, 8], sizes = [16, 8], strides = [1, 1]} : vector<16x32xf32> to vector<16x8xf32>
    %379 = vector.extract_strided_slice %358 {offsets = [0, 8], sizes = [16, 8], strides = [1, 1]} : vector<16x32xf32> to vector<16x8xf32>
    %cst_104 = arith.constant dense<0.000000e+00> : vector<16x16xf32>
    %380 = tpu.matmul %378, %379, %cst_104 {dimension_numbers = #tpu.dot_dimension_numbers<[1], [1], [0], [0], [0, 0, 1, 0], [], []>} : vector<16x8xf32>, vector<16x8xf32>, vector<16x16xf32> -> vector<16x16xf32>
    %381 = arith.addf %380, %321 : vector<16x16xf32>
    %cst_105 = arith.constant dense<0xFF800000> : vector<16xf32>
    %382 = vector.multi_reduction <maximumf>, %381, %cst_105 [1] : vector<16x16xf32> to vector<16xf32>
    %383 = vector.shape_cast %382 : vector<16xf32> to vector<16x1xf32>
    %384 = vector.broadcast %383 : vector<16x1xf32> to vector<16x16xf32>
    %385 = arith.subf %381, %384 : vector<16x16xf32>
    %386 = math.exp %385 : vector<16x16xf32>
    %cst_106 = arith.constant dense<0.000000e+00> : vector<16xf32>
    %387 = vector.multi_reduction <add>, %386, %cst_106 [1] : vector<16x16xf32> to vector<16xf32>
    %388 = vector.shape_cast %387 : vector<16xf32> to vector<16x1xf32>
    %389 = tpu.reciprocal %388 {approx = true} : vector<16x1xf32> -> vector<16x1xf32>
    %390 = vector.broadcast %389 : vector<16x1xf32> to vector<16x16xf32>
    %391 = arith.mulf %386, %390 : vector<16x16xf32>
    %392 = vector.extract_strided_slice %359 {offsets = [0, 8], sizes = [16, 8], strides = [1, 1]} : vector<16x32xf32> to vector<16x8xf32>
    %cst_107 = arith.constant dense<0.000000e+00> : vector<16x8xf32>
    %393 = tpu.matmul %391, %392, %cst_107 {dimension_numbers = #tpu.dot_dimension_numbers<[1], [0], [0], [1], [0, 0, 1, 1], [], []>} : vector<16x16xf32>, vector<16x8xf32>, vector<16x8xf32> -> vector<16x8xf32>
    %394 = vector.extract_strided_slice %357 {offsets = [0, 16], sizes = [16, 8], strides = [1, 1]} : vector<16x32xf32> to vector<16x8xf32>
    %395 = vector.extract_strided_slice %358 {offsets = [0, 16], sizes = [16, 8], strides = [1, 1]} : vector<16x32xf32> to vector<16x8xf32>
    %cst_108 = arith.constant dense<0.000000e+00> : vector<16x16xf32>
    %396 = tpu.matmul %394, %395, %cst_108 {dimension_numbers = #tpu.dot_dimension_numbers<[1], [1], [0], [0], [0, 0, 1, 0], [], []>} : vector<16x8xf32>, vector<16x8xf32>, vector<16x16xf32> -> vector<16x16xf32>
    %397 = arith.addf %396, %321 : vector<16x16xf32>
    %cst_109 = arith.constant dense<0xFF800000> : vector<16xf32>
    %398 = vector.multi_reduction <maximumf>, %397, %cst_109 [1] : vector<16x16xf32> to vector<16xf32>
    %399 = vector.shape_cast %398 : vector<16xf32> to vector<16x1xf32>
    %400 = vector.broadcast %399 : vector<16x1xf32> to vector<16x16xf32>
    %401 = arith.subf %397, %400 : vector<16x16xf32>
    %402 = math.exp %401 : vector<16x16xf32>
    %cst_110 = arith.constant dense<0.000000e+00> : vector<16xf32>
    %403 = vector.multi_reduction <add>, %402, %cst_110 [1] : vector<16x16xf32> to vector<16xf32>
    %404 = vector.shape_cast %403 : vector<16xf32> to vector<16x1xf32>
    %405 = tpu.reciprocal %404 {approx = true} : vector<16x1xf32> -> vector<16x1xf32>
    %406 = vector.broadcast %405 : vector<16x1xf32> to vector<16x16xf32>
    %407 = arith.mulf %402, %406 : vector<16x16xf32>
    %408 = vector.extract_strided_slice %359 {offsets = [0, 16], sizes = [16, 8], strides = [1, 1]} : vector<16x32xf32> to vector<16x8xf32>
    %cst_111 = arith.constant dense<0.000000e+00> : vector<16x8xf32>
    %409 = tpu.matmul %407, %408, %cst_111 {dimension_numbers = #tpu.dot_dimension_numbers<[1], [0], [0], [1], [0, 0, 1, 1], [], []>} : vector<16x16xf32>, vector<16x8xf32>, vector<16x8xf32> -> vector<16x8xf32>
    %410 = vector.extract_strided_slice %357 {offsets = [0, 24], sizes = [16, 8], strides = [1, 1]} : vector<16x32xf32> to vector<16x8xf32>
    %411 = vector.extract_strided_slice %358 {offsets = [0, 24], sizes = [16, 8], strides = [1, 1]} : vector<16x32xf32> to vector<16x8xf32>
    %cst_112 = arith.constant dense<0.000000e+00> : vector<16x16xf32>
    %412 = tpu.matmul %410, %411, %cst_112 {dimension_numbers = #tpu.dot_dimension_numbers<[1], [1], [0], [0], [0, 0, 1, 0], [], []>} : vector<16x8xf32>, vector<16x8xf32>, vector<16x16xf32> -> vector<16x16xf32>
    %413 = arith.addf %412, %321 : vector<16x16xf32>
    %cst_113 = arith.constant dense<0xFF800000> : vector<16xf32>
    %414 = vector.multi_reduction <maximumf>, %413, %cst_113 [1] : vector<16x16xf32> to vector<16xf32>
    %415 = vector.shape_cast %414 : vector<16xf32> to vector<16x1xf32>
    %416 = vector.broadcast %415 : vector<16x1xf32> to vector<16x16xf32>
    %417 = arith.subf %413, %416 : vector<16x16xf32>
    %418 = math.exp %417 : vector<16x16xf32>
    %cst_114 = arith.constant dense<0.000000e+00> : vector<16xf32>
    %419 = vector.multi_reduction <add>, %418, %cst_114 [1] : vector<16x16xf32> to vector<16xf32>
    %420 = vector.shape_cast %419 : vector<16xf32> to vector<16x1xf32>
    %421 = tpu.reciprocal %420 {approx = true} : vector<16x1xf32> -> vector<16x1xf32>
    %422 = vector.broadcast %421 : vector<16x1xf32> to vector<16x16xf32>
    %423 = arith.mulf %418, %422 : vector<16x16xf32>
    %424 = vector.extract_strided_slice %359 {offsets = [0, 24], sizes = [16, 8], strides = [1, 1]} : vector<16x32xf32> to vector<16x8xf32>
    %cst_115 = arith.constant dense<0.000000e+00> : vector<16x8xf32>
    %425 = tpu.matmul %423, %424, %cst_115 {dimension_numbers = #tpu.dot_dimension_numbers<[1], [0], [0], [1], [0, 0, 1, 1], [], []>} : vector<16x16xf32>, vector<16x8xf32>, vector<16x8xf32> -> vector<16x8xf32>
    %426 = tpu.concatenate %377, %393, %409, %425 in 1 : vector<16x8xf32>, vector<16x8xf32>, vector<16x8xf32>, vector<16x8xf32> -> vector<16x32xf32>
    %cst_116 = arith.constant dense<0.000000e+00> : vector<16x32xf32>
    %427 = tpu.matmul %426, %360, %cst_116 {dimension_numbers = #tpu.dot_dimension_numbers<[1], [0], [0], [1], [0, 0, 1, 1], [], []>} : vector<16x32xf32>, vector<32x32xf32>, vector<16x32xf32> -> vector<16x32xf32>
    %428 = vector.broadcast %361 : vector<1x32xf32> to vector<16x32xf32>
    %429 = arith.addf %427, %428 : vector<16x32xf32>
    %430 = arith.addf %320, %429 : vector<16x32xf32>
    %431 = vector.extract_strided_slice %326 {offsets = [3, 64], sizes = [1, 32], strides = [1, 1]} : vector<8x128xf32> to vector<1x32xf32>
    %432 = vector.extract_strided_slice %326 {offsets = [3, 96], sizes = [1, 32], strides = [1, 1]} : vector<8x128xf32> to vector<1x32xf32>
    %cst_117 = arith.constant dense<0.000000e+00> : vector<16xf32>
    %433 = vector.multi_reduction <add>, %430, %cst_117 [1] : vector<16x32xf32> to vector<16xf32>
    %434 = vector.shape_cast %433 : vector<16xf32> to vector<16x1xf32>
    %cst_118 = arith.constant 3.200000e+01 : f32
    %435 = vector.broadcast %cst_118 : f32 to vector<16x1xf32>
    %436 = arith.divf %434, %435 : vector<16x1xf32>
    %437 = vector.broadcast %436 : vector<16x1xf32> to vector<16x32xf32>
    %438 = arith.subf %430, %437 : vector<16x32xf32>
    %439 = arith.mulf %438, %438 : vector<16x32xf32>
    %cst_119 = arith.constant dense<0.000000e+00> : vector<16xf32>
    %440 = vector.multi_reduction <add>, %439, %cst_119 [1] : vector<16x32xf32> to vector<16xf32>
    %441 = vector.shape_cast %440 : vector<16xf32> to vector<16x1xf32>
    %cst_120 = arith.constant 0.0322580636 : f32
    %442 = vector.broadcast %cst_120 : f32 to vector<16x1xf32>
    %443 = arith.mulf %441, %442 : vector<16x1xf32>
    %444 = math.sqrt %443 : vector<16x1xf32>
    %cst_121 = arith.constant 9.99999997E-7 : f32
    %445 = vector.broadcast %cst_121 : f32 to vector<16x1xf32>
    %446 = arith.addf %444, %445 : vector<16x1xf32>
    %447 = tpu.reciprocal %446 {approx = true} : vector<16x1xf32> -> vector<16x1xf32>
    %448 = vector.broadcast %436 : vector<16x1xf32> to vector<16x32xf32>
    %449 = arith.subf %430, %448 : vector<16x32xf32>
    %450 = vector.broadcast %431 : vector<1x32xf32> to vector<16x32xf32>
    %451 = arith.mulf %450, %449 : vector<16x32xf32>
    %452 = vector.broadcast %447 : vector<16x1xf32> to vector<16x32xf32>
    %453 = arith.mulf %451, %452 : vector<16x32xf32>
    %454 = vector.broadcast %432 : vector<1x32xf32> to vector<16x32xf32>
    %455 = arith.addf %453, %454 : vector<16x32xf32>
    %456 = vector.extract_strided_slice %324 {offsets = [32, 0], sizes = [32, 32], strides = [1, 1]} : vector<128x128xf32> to vector<32x32xf32>
    %cst_122 = arith.constant dense<0.000000e+00> : vector<16x32xf32>
    %457 = tpu.matmul %455, %456, %cst_122 {dimension_numbers = #tpu.dot_dimension_numbers<[1], [0], [0], [1], [0, 0, 1, 1], [], []>} : vector<16x32xf32>, vector<32x32xf32>, vector<16x32xf32> -> vector<16x32xf32>
    %458 = vector.extract_strided_slice %326 {offsets = [1, 0], sizes = [1, 32], strides = [1, 1]} : vector<8x128xf32> to vector<1x32xf32>
    %459 = vector.broadcast %458 : vector<1x32xf32> to vector<16x32xf32>
    %460 = arith.addf %457, %459 : vector<16x32xf32>
    %461 = vector.extract_strided_slice %324 {offsets = [32, 32], sizes = [32, 64], strides = [1, 1]} : vector<128x128xf32> to vector<32x64xf32>
    %cst_123 = arith.constant dense<0.000000e+00> : vector<16x64xf32>
    %462 = tpu.matmul %319, %461, %cst_123 {dimension_numbers = #tpu.dot_dimension_numbers<[1], [0], [0], [1], [0, 0, 1, 1], [], []>} : vector<16x32xf32>, vector<32x64xf32>, vector<16x64xf32> -> vector<16x64xf32>
    %463 = vector.extract_strided_slice %326 {offsets = [1, 32], sizes = [1, 64], strides = [1, 1]} : vector<8x128xf32> to vector<1x64xf32>
    %464 = vector.broadcast %463 : vector<1x64xf32> to vector<16x64xf32>
    %465 = arith.addf %462, %464 : vector<16x64xf32>
    %466 = vector.extract_strided_slice %465 {offsets = [0, 0], sizes = [16, 32], strides = [1, 1]} : vector<16x64xf32> to vector<16x32xf32>
    %467 = vector.extract_strided_slice %465 {offsets = [0, 32], sizes = [16, 32], strides = [1, 1]} : vector<16x64xf32> to vector<16x32xf32>
    %468 = vector.extract_strided_slice %324 {offsets = [32, 96], sizes = [32, 32], strides = [1, 1]} : vector<128x128xf32> to vector<32x32xf32>
    %469 = vector.extract_strided_slice %326 {offsets = [1, 96], sizes = [1, 32], strides = [1, 1]} : vector<8x128xf32> to vector<1x32xf32>
    %470 = vector.extract_strided_slice %460 {offsets = [0, 0], sizes = [16, 8], strides = [1, 1]} : vector<16x32xf32> to vector<16x8xf32>
    %471 = vector.extract_strided_slice %466 {offsets = [0, 0], sizes = [16, 8], strides = [1, 1]} : vector<16x32xf32> to vector<16x8xf32>
    %cst_124 = arith.constant dense<0.000000e+00> : vector<16x16xf32>
    %472 = tpu.matmul %470, %471, %cst_124 {dimension_numbers = #tpu.dot_dimension_numbers<[1], [1], [0], [0], [0, 0, 1, 0], [], []>} : vector<16x8xf32>, vector<16x8xf32>, vector<16x16xf32> -> vector<16x16xf32>
    %473 = arith.addf %472, %322 : vector<16x16xf32>
    %cst_125 = arith.constant dense<0xFF800000> : vector<16xf32>
    %474 = vector.multi_reduction <maximumf>, %473, %cst_125 [1] : vector<16x16xf32> to vector<16xf32>
    %475 = vector.shape_cast %474 : vector<16xf32> to vector<16x1xf32>
    %476 = vector.broadcast %475 : vector<16x1xf32> to vector<16x16xf32>
    %477 = arith.subf %473, %476 : vector<16x16xf32>
    %478 = math.exp %477 : vector<16x16xf32>
    %cst_126 = arith.constant dense<0.000000e+00> : vector<16xf32>
    %479 = vector.multi_reduction <add>, %478, %cst_126 [1] : vector<16x16xf32> to vector<16xf32>
    %480 = vector.shape_cast %479 : vector<16xf32> to vector<16x1xf32>
    %481 = tpu.reciprocal %480 {approx = true} : vector<16x1xf32> -> vector<16x1xf32>
    %482 = vector.broadcast %481 : vector<16x1xf32> to vector<16x16xf32>
    %483 = arith.mulf %478, %482 : vector<16x16xf32>
    %484 = vector.extract_strided_slice %467 {offsets = [0, 0], sizes = [16, 8], strides = [1, 1]} : vector<16x32xf32> to vector<16x8xf32>
    %cst_127 = arith.constant dense<0.000000e+00> : vector<16x8xf32>
    %485 = tpu.matmul %483, %484, %cst_127 {dimension_numbers = #tpu.dot_dimension_numbers<[1], [0], [0], [1], [0, 0, 1, 1], [], []>} : vector<16x16xf32>, vector<16x8xf32>, vector<16x8xf32> -> vector<16x8xf32>
    %486 = vector.extract_strided_slice %460 {offsets = [0, 8], sizes = [16, 8], strides = [1, 1]} : vector<16x32xf32> to vector<16x8xf32>
    %487 = vector.extract_strided_slice %466 {offsets = [0, 8], sizes = [16, 8], strides = [1, 1]} : vector<16x32xf32> to vector<16x8xf32>
    %cst_128 = arith.constant dense<0.000000e+00> : vector<16x16xf32>
    %488 = tpu.matmul %486, %487, %cst_128 {dimension_numbers = #tpu.dot_dimension_numbers<[1], [1], [0], [0], [0, 0, 1, 0], [], []>} : vector<16x8xf32>, vector<16x8xf32>, vector<16x16xf32> -> vector<16x16xf32>
    %489 = arith.addf %488, %322 : vector<16x16xf32>
    %cst_129 = arith.constant dense<0xFF800000> : vector<16xf32>
    %490 = vector.multi_reduction <maximumf>, %489, %cst_129 [1] : vector<16x16xf32> to vector<16xf32>
    %491 = vector.shape_cast %490 : vector<16xf32> to vector<16x1xf32>
    %492 = vector.broadcast %491 : vector<16x1xf32> to vector<16x16xf32>
    %493 = arith.subf %489, %492 : vector<16x16xf32>
    %494 = math.exp %493 : vector<16x16xf32>
    %cst_130 = arith.constant dense<0.000000e+00> : vector<16xf32>
    %495 = vector.multi_reduction <add>, %494, %cst_130 [1] : vector<16x16xf32> to vector<16xf32>
    %496 = vector.shape_cast %495 : vector<16xf32> to vector<16x1xf32>
    %497 = tpu.reciprocal %496 {approx = true} : vector<16x1xf32> -> vector<16x1xf32>
    %498 = vector.broadcast %497 : vector<16x1xf32> to vector<16x16xf32>
    %499 = arith.mulf %494, %498 : vector<16x16xf32>
    %500 = vector.extract_strided_slice %467 {offsets = [0, 8], sizes = [16, 8], strides = [1, 1]} : vector<16x32xf32> to vector<16x8xf32>
    %cst_131 = arith.constant dense<0.000000e+00> : vector<16x8xf32>
    %501 = tpu.matmul %499, %500, %cst_131 {dimension_numbers = #tpu.dot_dimension_numbers<[1], [0], [0], [1], [0, 0, 1, 1], [], []>} : vector<16x16xf32>, vector<16x8xf32>, vector<16x8xf32> -> vector<16x8xf32>
    %502 = vector.extract_strided_slice %460 {offsets = [0, 16], sizes = [16, 8], strides = [1, 1]} : vector<16x32xf32> to vector<16x8xf32>
    %503 = vector.extract_strided_slice %466 {offsets = [0, 16], sizes = [16, 8], strides = [1, 1]} : vector<16x32xf32> to vector<16x8xf32>
    %cst_132 = arith.constant dense<0.000000e+00> : vector<16x16xf32>
    %504 = tpu.matmul %502, %503, %cst_132 {dimension_numbers = #tpu.dot_dimension_numbers<[1], [1], [0], [0], [0, 0, 1, 0], [], []>} : vector<16x8xf32>, vector<16x8xf32>, vector<16x16xf32> -> vector<16x16xf32>
    %505 = arith.addf %504, %322 : vector<16x16xf32>
    %cst_133 = arith.constant dense<0xFF800000> : vector<16xf32>
    %506 = vector.multi_reduction <maximumf>, %505, %cst_133 [1] : vector<16x16xf32> to vector<16xf32>
    %507 = vector.shape_cast %506 : vector<16xf32> to vector<16x1xf32>
    %508 = vector.broadcast %507 : vector<16x1xf32> to vector<16x16xf32>
    %509 = arith.subf %505, %508 : vector<16x16xf32>
    %510 = math.exp %509 : vector<16x16xf32>
    %cst_134 = arith.constant dense<0.000000e+00> : vector<16xf32>
    %511 = vector.multi_reduction <add>, %510, %cst_134 [1] : vector<16x16xf32> to vector<16xf32>
    %512 = vector.shape_cast %511 : vector<16xf32> to vector<16x1xf32>
    %513 = tpu.reciprocal %512 {approx = true} : vector<16x1xf32> -> vector<16x1xf32>
    %514 = vector.broadcast %513 : vector<16x1xf32> to vector<16x16xf32>
    %515 = arith.mulf %510, %514 : vector<16x16xf32>
    %516 = vector.extract_strided_slice %467 {offsets = [0, 16], sizes = [16, 8], strides = [1, 1]} : vector<16x32xf32> to vector<16x8xf32>
    %cst_135 = arith.constant dense<0.000000e+00> : vector<16x8xf32>
    %517 = tpu.matmul %515, %516, %cst_135 {dimension_numbers = #tpu.dot_dimension_numbers<[1], [0], [0], [1], [0, 0, 1, 1], [], []>} : vector<16x16xf32>, vector<16x8xf32>, vector<16x8xf32> -> vector<16x8xf32>
    %518 = vector.extract_strided_slice %460 {offsets = [0, 24], sizes = [16, 8], strides = [1, 1]} : vector<16x32xf32> to vector<16x8xf32>
    %519 = vector.extract_strided_slice %466 {offsets = [0, 24], sizes = [16, 8], strides = [1, 1]} : vector<16x32xf32> to vector<16x8xf32>
    %cst_136 = arith.constant dense<0.000000e+00> : vector<16x16xf32>
    %520 = tpu.matmul %518, %519, %cst_136 {dimension_numbers = #tpu.dot_dimension_numbers<[1], [1], [0], [0], [0, 0, 1, 0], [], []>} : vector<16x8xf32>, vector<16x8xf32>, vector<16x16xf32> -> vector<16x16xf32>
    %521 = arith.addf %520, %322 : vector<16x16xf32>
    %cst_137 = arith.constant dense<0xFF800000> : vector<16xf32>
    %522 = vector.multi_reduction <maximumf>, %521, %cst_137 [1] : vector<16x16xf32> to vector<16xf32>
    %523 = vector.shape_cast %522 : vector<16xf32> to vector<16x1xf32>
    %524 = vector.broadcast %523 : vector<16x1xf32> to vector<16x16xf32>
    %525 = arith.subf %521, %524 : vector<16x16xf32>
    %526 = math.exp %525 : vector<16x16xf32>
    %cst_138 = arith.constant dense<0.000000e+00> : vector<16xf32>
    %527 = vector.multi_reduction <add>, %526, %cst_138 [1] : vector<16x16xf32> to vector<16xf32>
    %528 = vector.shape_cast %527 : vector<16xf32> to vector<16x1xf32>
    %529 = tpu.reciprocal %528 {approx = true} : vector<16x1xf32> -> vector<16x1xf32>
    %530 = vector.broadcast %529 : vector<16x1xf32> to vector<16x16xf32>
    %531 = arith.mulf %526, %530 : vector<16x16xf32>
    %532 = vector.extract_strided_slice %467 {offsets = [0, 24], sizes = [16, 8], strides = [1, 1]} : vector<16x32xf32> to vector<16x8xf32>
    %cst_139 = arith.constant dense<0.000000e+00> : vector<16x8xf32>
    %533 = tpu.matmul %531, %532, %cst_139 {dimension_numbers = #tpu.dot_dimension_numbers<[1], [0], [0], [1], [0, 0, 1, 1], [], []>} : vector<16x16xf32>, vector<16x8xf32>, vector<16x8xf32> -> vector<16x8xf32>
    %534 = tpu.concatenate %485, %501, %517, %533 in 1 : vector<16x8xf32>, vector<16x8xf32>, vector<16x8xf32>, vector<16x8xf32> -> vector<16x32xf32>
    %cst_140 = arith.constant dense<0.000000e+00> : vector<16x32xf32>
    %535 = tpu.matmul %534, %468, %cst_140 {dimension_numbers = #tpu.dot_dimension_numbers<[1], [0], [0], [1], [0, 0, 1, 1], [], []>} : vector<16x32xf32>, vector<32x32xf32>, vector<16x32xf32> -> vector<16x32xf32>
    %536 = vector.broadcast %469 : vector<1x32xf32> to vector<16x32xf32>
    %537 = arith.addf %535, %536 : vector<16x32xf32>
    %538 = arith.addf %430, %537 : vector<16x32xf32>
    %539 = vector.extract_strided_slice %326 {offsets = [4, 0], sizes = [1, 32], strides = [1, 1]} : vector<8x128xf32> to vector<1x32xf32>
    %540 = vector.extract_strided_slice %326 {offsets = [4, 32], sizes = [1, 32], strides = [1, 1]} : vector<8x128xf32> to vector<1x32xf32>
    %cst_141 = arith.constant dense<0.000000e+00> : vector<16xf32>
    %541 = vector.multi_reduction <add>, %538, %cst_141 [1] : vector<16x32xf32> to vector<16xf32>
    %542 = vector.shape_cast %541 : vector<16xf32> to vector<16x1xf32>
    %cst_142 = arith.constant 3.200000e+01 : f32
    %543 = vector.broadcast %cst_142 : f32 to vector<16x1xf32>
    %544 = arith.divf %542, %543 : vector<16x1xf32>
    %545 = vector.broadcast %544 : vector<16x1xf32> to vector<16x32xf32>
    %546 = arith.subf %538, %545 : vector<16x32xf32>
    %547 = arith.mulf %546, %546 : vector<16x32xf32>
    %cst_143 = arith.constant dense<0.000000e+00> : vector<16xf32>
    %548 = vector.multi_reduction <add>, %547, %cst_143 [1] : vector<16x32xf32> to vector<16xf32>
    %549 = vector.shape_cast %548 : vector<16xf32> to vector<16x1xf32>
    %cst_144 = arith.constant 0.0322580636 : f32
    %550 = vector.broadcast %cst_144 : f32 to vector<16x1xf32>
    %551 = arith.mulf %549, %550 : vector<16x1xf32>
    %552 = math.sqrt %551 : vector<16x1xf32>
    %cst_145 = arith.constant 9.99999997E-7 : f32
    %553 = vector.broadcast %cst_145 : f32 to vector<16x1xf32>
    %554 = arith.addf %552, %553 : vector<16x1xf32>
    %555 = tpu.reciprocal %554 {approx = true} : vector<16x1xf32> -> vector<16x1xf32>
    %556 = vector.broadcast %544 : vector<16x1xf32> to vector<16x32xf32>
    %557 = arith.subf %538, %556 : vector<16x32xf32>
    %558 = vector.broadcast %539 : vector<1x32xf32> to vector<16x32xf32>
    %559 = arith.mulf %558, %557 : vector<16x32xf32>
    %560 = vector.broadcast %555 : vector<16x1xf32> to vector<16x32xf32>
    %561 = arith.mulf %559, %560 : vector<16x32xf32>
    %562 = vector.broadcast %540 : vector<1x32xf32> to vector<16x32xf32>
    %563 = arith.addf %561, %562 : vector<16x32xf32>
    %564 = vector.extract_strided_slice %324 {offsets = [64, 32], sizes = [32, 64], strides = [1, 1]} : vector<128x128xf32> to vector<32x64xf32>
    %cst_146 = arith.constant dense<0.000000e+00> : vector<16x64xf32>
    %565 = tpu.matmul %563, %564, %cst_146 {dimension_numbers = #tpu.dot_dimension_numbers<[1], [0], [0], [1], [0, 0, 1, 1], [], []>} : vector<16x32xf32>, vector<32x64xf32>, vector<16x64xf32> -> vector<16x64xf32>
    %566 = vector.extract_strided_slice %326 {offsets = [2, 0], sizes = [1, 64], strides = [1, 1]} : vector<8x128xf32> to vector<1x64xf32>
    %567 = vector.broadcast %566 : vector<1x64xf32> to vector<16x64xf32>
    %568 = arith.addf %565, %567 : vector<16x64xf32>
    %cst_147 = arith.constant 0.000000e+00 : f32
    %569 = vector.broadcast %cst_147 : f32 to vector<16x64xf32>
    %570 = arith.maximumf %568, %569 : vector<16x64xf32>
    %571 = vector.extract_strided_slice %324 {offsets = [64, 0], sizes = [64, 32], strides = [1, 1]} : vector<128x128xf32> to vector<64x32xf32>
    %cst_148 = arith.constant dense<0.000000e+00> : vector<16x32xf32>
    %572 = tpu.matmul %570, %571, %cst_148 {dimension_numbers = #tpu.dot_dimension_numbers<[1], [0], [0], [1], [0, 0, 1, 1], [], []>} : vector<16x64xf32>, vector<64x32xf32>, vector<16x32xf32> -> vector<16x32xf32>
    %573 = arith.addf %538, %572 : vector<16x32xf32>
    %574 = vector.extract_strided_slice %326 {offsets = [2, 64], sizes = [1, 32], strides = [1, 1]} : vector<8x128xf32> to vector<1x32xf32>
    %575 = vector.broadcast %574 : vector<1x32xf32> to vector<16x32xf32>
    %576 = arith.addf %573, %575 : vector<16x32xf32>
    %c1_149 = arith.constant 1 : index
    %c0_150 = arith.constant 0 : index
    %c0_151 = arith.constant 0 : index
    %577 = vector.load %arg8[%c1_149, %c0_150, %c0_151] : memref<2x128x128xf32, #tpu.memory_space<vmem>>, vector<1x128x128xf32>
    %578 = vector.shape_cast %577 : vector<1x128x128xf32> to vector<128x128xf32>
    %c1_152 = arith.constant 1 : index
    %c0_153 = arith.constant 0 : index
    %c0_154 = arith.constant 0 : index
    %579 = vector.load %arg9[%c1_152, %c0_153, %c0_154] : memref<2x8x128xf32, #tpu.memory_space<vmem>>, vector<1x8x128xf32>
    %580 = vector.shape_cast %579 : vector<1x8x128xf32> to vector<8x128xf32>
    %581 = vector.extract_strided_slice %580 {offsets = [3, 0], sizes = [1, 32], strides = [1, 1]} : vector<8x128xf32> to vector<1x32xf32>
    %582 = vector.extract_strided_slice %580 {offsets = [3, 32], sizes = [1, 32], strides = [1, 1]} : vector<8x128xf32> to vector<1x32xf32>
    %cst_155 = arith.constant dense<0.000000e+00> : vector<16xf32>
    %583 = vector.multi_reduction <add>, %576, %cst_155 [1] : vector<16x32xf32> to vector<16xf32>
    %584 = vector.shape_cast %583 : vector<16xf32> to vector<16x1xf32>
    %cst_156 = arith.constant 3.200000e+01 : f32
    %585 = vector.broadcast %cst_156 : f32 to vector<16x1xf32>
    %586 = arith.divf %584, %585 : vector<16x1xf32>
    %587 = vector.broadcast %586 : vector<16x1xf32> to vector<16x32xf32>
    %588 = arith.subf %576, %587 : vector<16x32xf32>
    %589 = arith.mulf %588, %588 : vector<16x32xf32>
    %cst_157 = arith.constant dense<0.000000e+00> : vector<16xf32>
    %590 = vector.multi_reduction <add>, %589, %cst_157 [1] : vector<16x32xf32> to vector<16xf32>
    %591 = vector.shape_cast %590 : vector<16xf32> to vector<16x1xf32>
    %cst_158 = arith.constant 0.0322580636 : f32
    %592 = vector.broadcast %cst_158 : f32 to vector<16x1xf32>
    %593 = arith.mulf %591, %592 : vector<16x1xf32>
    %594 = math.sqrt %593 : vector<16x1xf32>
    %cst_159 = arith.constant 9.99999997E-7 : f32
    %595 = vector.broadcast %cst_159 : f32 to vector<16x1xf32>
    %596 = arith.addf %594, %595 : vector<16x1xf32>
    %597 = tpu.reciprocal %596 {approx = true} : vector<16x1xf32> -> vector<16x1xf32>
    %598 = vector.broadcast %586 : vector<16x1xf32> to vector<16x32xf32>
    %599 = arith.subf %576, %598 : vector<16x32xf32>
    %600 = vector.broadcast %581 : vector<1x32xf32> to vector<16x32xf32>
    %601 = arith.mulf %600, %599 : vector<16x32xf32>
    %602 = vector.broadcast %597 : vector<16x1xf32> to vector<16x32xf32>
    %603 = arith.mulf %601, %602 : vector<16x32xf32>
    %604 = vector.broadcast %582 : vector<1x32xf32> to vector<16x32xf32>
    %605 = arith.addf %603, %604 : vector<16x32xf32>
    %606 = vector.extract_strided_slice %578 {offsets = [0, 0], sizes = [32, 96], strides = [1, 1]} : vector<128x128xf32> to vector<32x96xf32>
    %cst_160 = arith.constant dense<0.000000e+00> : vector<16x96xf32>
    %607 = tpu.matmul %605, %606, %cst_160 {dimension_numbers = #tpu.dot_dimension_numbers<[1], [0], [0], [1], [0, 0, 1, 1], [], []>} : vector<16x32xf32>, vector<32x96xf32>, vector<16x96xf32> -> vector<16x96xf32>
    %608 = vector.extract_strided_slice %580 {offsets = [0, 0], sizes = [1, 96], strides = [1, 1]} : vector<8x128xf32> to vector<1x96xf32>
    %609 = vector.broadcast %608 : vector<1x96xf32> to vector<16x96xf32>
    %610 = arith.addf %607, %609 : vector<16x96xf32>
    %611 = vector.extract_strided_slice %610 {offsets = [0, 0], sizes = [16, 32], strides = [1, 1]} : vector<16x96xf32> to vector<16x32xf32>
    %612 = vector.extract_strided_slice %610 {offsets = [0, 32], sizes = [16, 32], strides = [1, 1]} : vector<16x96xf32> to vector<16x32xf32>
    %613 = vector.extract_strided_slice %610 {offsets = [0, 64], sizes = [16, 32], strides = [1, 1]} : vector<16x96xf32> to vector<16x32xf32>
    %614 = vector.extract_strided_slice %578 {offsets = [0, 96], sizes = [32, 32], strides = [1, 1]} : vector<128x128xf32> to vector<32x32xf32>
    %615 = vector.extract_strided_slice %580 {offsets = [0, 96], sizes = [1, 32], strides = [1, 1]} : vector<8x128xf32> to vector<1x32xf32>
    %616 = vector.extract_strided_slice %611 {offsets = [0, 0], sizes = [16, 8], strides = [1, 1]} : vector<16x32xf32> to vector<16x8xf32>
    %617 = vector.extract_strided_slice %612 {offsets = [0, 0], sizes = [16, 8], strides = [1, 1]} : vector<16x32xf32> to vector<16x8xf32>
    %cst_161 = arith.constant dense<0.000000e+00> : vector<16x16xf32>
    %618 = tpu.matmul %616, %617, %cst_161 {dimension_numbers = #tpu.dot_dimension_numbers<[1], [1], [0], [0], [0, 0, 1, 0], [], []>} : vector<16x8xf32>, vector<16x8xf32>, vector<16x16xf32> -> vector<16x16xf32>
    %619 = arith.addf %618, %321 : vector<16x16xf32>
    %cst_162 = arith.constant dense<0xFF800000> : vector<16xf32>
    %620 = vector.multi_reduction <maximumf>, %619, %cst_162 [1] : vector<16x16xf32> to vector<16xf32>
    %621 = vector.shape_cast %620 : vector<16xf32> to vector<16x1xf32>
    %622 = vector.broadcast %621 : vector<16x1xf32> to vector<16x16xf32>
    %623 = arith.subf %619, %622 : vector<16x16xf32>
    %624 = math.exp %623 : vector<16x16xf32>
    %cst_163 = arith.constant dense<0.000000e+00> : vector<16xf32>
    %625 = vector.multi_reduction <add>, %624, %cst_163 [1] : vector<16x16xf32> to vector<16xf32>
    %626 = vector.shape_cast %625 : vector<16xf32> to vector<16x1xf32>
    %627 = tpu.reciprocal %626 {approx = true} : vector<16x1xf32> -> vector<16x1xf32>
    %628 = vector.broadcast %627 : vector<16x1xf32> to vector<16x16xf32>
    %629 = arith.mulf %624, %628 : vector<16x16xf32>
    %630 = vector.extract_strided_slice %613 {offsets = [0, 0], sizes = [16, 8], strides = [1, 1]} : vector<16x32xf32> to vector<16x8xf32>
    %cst_164 = arith.constant dense<0.000000e+00> : vector<16x8xf32>
    %631 = tpu.matmul %629, %630, %cst_164 {dimension_numbers = #tpu.dot_dimension_numbers<[1], [0], [0], [1], [0, 0, 1, 1], [], []>} : vector<16x16xf32>, vector<16x8xf32>, vector<16x8xf32> -> vector<16x8xf32>
    %632 = vector.extract_strided_slice %611 {offsets = [0, 8], sizes = [16, 8], strides = [1, 1]} : vector<16x32xf32> to vector<16x8xf32>
    %633 = vector.extract_strided_slice %612 {offsets = [0, 8], sizes = [16, 8], strides = [1, 1]} : vector<16x32xf32> to vector<16x8xf32>
    %cst_165 = arith.constant dense<0.000000e+00> : vector<16x16xf32>
    %634 = tpu.matmul %632, %633, %cst_165 {dimension_numbers = #tpu.dot_dimension_numbers<[1], [1], [0], [0], [0, 0, 1, 0], [], []>} : vector<16x8xf32>, vector<16x8xf32>, vector<16x16xf32> -> vector<16x16xf32>
    %635 = arith.addf %634, %321 : vector<16x16xf32>
    %cst_166 = arith.constant dense<0xFF800000> : vector<16xf32>
    %636 = vector.multi_reduction <maximumf>, %635, %cst_166 [1] : vector<16x16xf32> to vector<16xf32>
    %637 = vector.shape_cast %636 : vector<16xf32> to vector<16x1xf32>
    %638 = vector.broadcast %637 : vector<16x1xf32> to vector<16x16xf32>
    %639 = arith.subf %635, %638 : vector<16x16xf32>
    %640 = math.exp %639 : vector<16x16xf32>
    %cst_167 = arith.constant dense<0.000000e+00> : vector<16xf32>
    %641 = vector.multi_reduction <add>, %640, %cst_167 [1] : vector<16x16xf32> to vector<16xf32>
    %642 = vector.shape_cast %641 : vector<16xf32> to vector<16x1xf32>
    %643 = tpu.reciprocal %642 {approx = true} : vector<16x1xf32> -> vector<16x1xf32>
    %644 = vector.broadcast %643 : vector<16x1xf32> to vector<16x16xf32>
    %645 = arith.mulf %640, %644 : vector<16x16xf32>
    %646 = vector.extract_strided_slice %613 {offsets = [0, 8], sizes = [16, 8], strides = [1, 1]} : vector<16x32xf32> to vector<16x8xf32>
    %cst_168 = arith.constant dense<0.000000e+00> : vector<16x8xf32>
    %647 = tpu.matmul %645, %646, %cst_168 {dimension_numbers = #tpu.dot_dimension_numbers<[1], [0], [0], [1], [0, 0, 1, 1], [], []>} : vector<16x16xf32>, vector<16x8xf32>, vector<16x8xf32> -> vector<16x8xf32>
    %648 = vector.extract_strided_slice %611 {offsets = [0, 16], sizes = [16, 8], strides = [1, 1]} : vector<16x32xf32> to vector<16x8xf32>
    %649 = vector.extract_strided_slice %612 {offsets = [0, 16], sizes = [16, 8], strides = [1, 1]} : vector<16x32xf32> to vector<16x8xf32>
    %cst_169 = arith.constant dense<0.000000e+00> : vector<16x16xf32>
    %650 = tpu.matmul %648, %649, %cst_169 {dimension_numbers = #tpu.dot_dimension_numbers<[1], [1], [0], [0], [0, 0, 1, 0], [], []>} : vector<16x8xf32>, vector<16x8xf32>, vector<16x16xf32> -> vector<16x16xf32>
    %651 = arith.addf %650, %321 : vector<16x16xf32>
    %cst_170 = arith.constant dense<0xFF800000> : vector<16xf32>
    %652 = vector.multi_reduction <maximumf>, %651, %cst_170 [1] : vector<16x16xf32> to vector<16xf32>
    %653 = vector.shape_cast %652 : vector<16xf32> to vector<16x1xf32>
    %654 = vector.broadcast %653 : vector<16x1xf32> to vector<16x16xf32>
    %655 = arith.subf %651, %654 : vector<16x16xf32>
    %656 = math.exp %655 : vector<16x16xf32>
    %cst_171 = arith.constant dense<0.000000e+00> : vector<16xf32>
    %657 = vector.multi_reduction <add>, %656, %cst_171 [1] : vector<16x16xf32> to vector<16xf32>
    %658 = vector.shape_cast %657 : vector<16xf32> to vector<16x1xf32>
    %659 = tpu.reciprocal %658 {approx = true} : vector<16x1xf32> -> vector<16x1xf32>
    %660 = vector.broadcast %659 : vector<16x1xf32> to vector<16x16xf32>
    %661 = arith.mulf %656, %660 : vector<16x16xf32>
    %662 = vector.extract_strided_slice %613 {offsets = [0, 16], sizes = [16, 8], strides = [1, 1]} : vector<16x32xf32> to vector<16x8xf32>
    %cst_172 = arith.constant dense<0.000000e+00> : vector<16x8xf32>
    %663 = tpu.matmul %661, %662, %cst_172 {dimension_numbers = #tpu.dot_dimension_numbers<[1], [0], [0], [1], [0, 0, 1, 1], [], []>} : vector<16x16xf32>, vector<16x8xf32>, vector<16x8xf32> -> vector<16x8xf32>
    %664 = vector.extract_strided_slice %611 {offsets = [0, 24], sizes = [16, 8], strides = [1, 1]} : vector<16x32xf32> to vector<16x8xf32>
    %665 = vector.extract_strided_slice %612 {offsets = [0, 24], sizes = [16, 8], strides = [1, 1]} : vector<16x32xf32> to vector<16x8xf32>
    %cst_173 = arith.constant dense<0.000000e+00> : vector<16x16xf32>
    %666 = tpu.matmul %664, %665, %cst_173 {dimension_numbers = #tpu.dot_dimension_numbers<[1], [1], [0], [0], [0, 0, 1, 0], [], []>} : vector<16x8xf32>, vector<16x8xf32>, vector<16x16xf32> -> vector<16x16xf32>
    %667 = arith.addf %666, %321 : vector<16x16xf32>
    %cst_174 = arith.constant dense<0xFF800000> : vector<16xf32>
    %668 = vector.multi_reduction <maximumf>, %667, %cst_174 [1] : vector<16x16xf32> to vector<16xf32>
    %669 = vector.shape_cast %668 : vector<16xf32> to vector<16x1xf32>
    %670 = vector.broadcast %669 : vector<16x1xf32> to vector<16x16xf32>
    %671 = arith.subf %667, %670 : vector<16x16xf32>
    %672 = math.exp %671 : vector<16x16xf32>
    %cst_175 = arith.constant dense<0.000000e+00> : vector<16xf32>
    %673 = vector.multi_reduction <add>, %672, %cst_175 [1] : vector<16x16xf32> to vector<16xf32>
    %674 = vector.shape_cast %673 : vector<16xf32> to vector<16x1xf32>
    %675 = tpu.reciprocal %674 {approx = true} : vector<16x1xf32> -> vector<16x1xf32>
    %676 = vector.broadcast %675 : vector<16x1xf32> to vector<16x16xf32>
    %677 = arith.mulf %672, %676 : vector<16x16xf32>
    %678 = vector.extract_strided_slice %613 {offsets = [0, 24], sizes = [16, 8], strides = [1, 1]} : vector<16x32xf32> to vector<16x8xf32>
    %cst_176 = arith.constant dense<0.000000e+00> : vector<16x8xf32>
    %679 = tpu.matmul %677, %678, %cst_176 {dimension_numbers = #tpu.dot_dimension_numbers<[1], [0], [0], [1], [0, 0, 1, 1], [], []>} : vector<16x16xf32>, vector<16x8xf32>, vector<16x8xf32> -> vector<16x8xf32>
    %680 = tpu.concatenate %631, %647, %663, %679 in 1 : vector<16x8xf32>, vector<16x8xf32>, vector<16x8xf32>, vector<16x8xf32> -> vector<16x32xf32>
    %cst_177 = arith.constant dense<0.000000e+00> : vector<16x32xf32>
    %681 = tpu.matmul %680, %614, %cst_177 {dimension_numbers = #tpu.dot_dimension_numbers<[1], [0], [0], [1], [0, 0, 1, 1], [], []>} : vector<16x32xf32>, vector<32x32xf32>, vector<16x32xf32> -> vector<16x32xf32>
    %682 = vector.broadcast %615 : vector<1x32xf32> to vector<16x32xf32>
    %683 = arith.addf %681, %682 : vector<16x32xf32>
    %684 = arith.addf %576, %683 : vector<16x32xf32>
    %685 = vector.extract_strided_slice %580 {offsets = [3, 64], sizes = [1, 32], strides = [1, 1]} : vector<8x128xf32> to vector<1x32xf32>
    %686 = vector.extract_strided_slice %580 {offsets = [3, 96], sizes = [1, 32], strides = [1, 1]} : vector<8x128xf32> to vector<1x32xf32>
    %cst_178 = arith.constant dense<0.000000e+00> : vector<16xf32>
    %687 = vector.multi_reduction <add>, %684, %cst_178 [1] : vector<16x32xf32> to vector<16xf32>
    %688 = vector.shape_cast %687 : vector<16xf32> to vector<16x1xf32>
    %cst_179 = arith.constant 3.200000e+01 : f32
    %689 = vector.broadcast %cst_179 : f32 to vector<16x1xf32>
    %690 = arith.divf %688, %689 : vector<16x1xf32>
    %691 = vector.broadcast %690 : vector<16x1xf32> to vector<16x32xf32>
    %692 = arith.subf %684, %691 : vector<16x32xf32>
    %693 = arith.mulf %692, %692 : vector<16x32xf32>
    %cst_180 = arith.constant dense<0.000000e+00> : vector<16xf32>
    %694 = vector.multi_reduction <add>, %693, %cst_180 [1] : vector<16x32xf32> to vector<16xf32>
    %695 = vector.shape_cast %694 : vector<16xf32> to vector<16x1xf32>
    %cst_181 = arith.constant 0.0322580636 : f32
    %696 = vector.broadcast %cst_181 : f32 to vector<16x1xf32>
    %697 = arith.mulf %695, %696 : vector<16x1xf32>
    %698 = math.sqrt %697 : vector<16x1xf32>
    %cst_182 = arith.constant 9.99999997E-7 : f32
    %699 = vector.broadcast %cst_182 : f32 to vector<16x1xf32>
    %700 = arith.addf %698, %699 : vector<16x1xf32>
    %701 = tpu.reciprocal %700 {approx = true} : vector<16x1xf32> -> vector<16x1xf32>
    %702 = vector.broadcast %690 : vector<16x1xf32> to vector<16x32xf32>
    %703 = arith.subf %684, %702 : vector<16x32xf32>
    %704 = vector.broadcast %685 : vector<1x32xf32> to vector<16x32xf32>
    %705 = arith.mulf %704, %703 : vector<16x32xf32>
    %706 = vector.broadcast %701 : vector<16x1xf32> to vector<16x32xf32>
    %707 = arith.mulf %705, %706 : vector<16x32xf32>
    %708 = vector.broadcast %686 : vector<1x32xf32> to vector<16x32xf32>
    %709 = arith.addf %707, %708 : vector<16x32xf32>
    %710 = vector.extract_strided_slice %578 {offsets = [32, 0], sizes = [32, 32], strides = [1, 1]} : vector<128x128xf32> to vector<32x32xf32>
    %cst_183 = arith.constant dense<0.000000e+00> : vector<16x32xf32>
    %711 = tpu.matmul %709, %710, %cst_183 {dimension_numbers = #tpu.dot_dimension_numbers<[1], [0], [0], [1], [0, 0, 1, 1], [], []>} : vector<16x32xf32>, vector<32x32xf32>, vector<16x32xf32> -> vector<16x32xf32>
    %712 = vector.extract_strided_slice %580 {offsets = [1, 0], sizes = [1, 32], strides = [1, 1]} : vector<8x128xf32> to vector<1x32xf32>
    %713 = vector.broadcast %712 : vector<1x32xf32> to vector<16x32xf32>
    %714 = arith.addf %711, %713 : vector<16x32xf32>
    %715 = vector.extract_strided_slice %578 {offsets = [32, 32], sizes = [32, 64], strides = [1, 1]} : vector<128x128xf32> to vector<32x64xf32>
    %cst_184 = arith.constant dense<0.000000e+00> : vector<16x64xf32>
    %716 = tpu.matmul %319, %715, %cst_184 {dimension_numbers = #tpu.dot_dimension_numbers<[1], [0], [0], [1], [0, 0, 1, 1], [], []>} : vector<16x32xf32>, vector<32x64xf32>, vector<16x64xf32> -> vector<16x64xf32>
    %717 = vector.extract_strided_slice %580 {offsets = [1, 32], sizes = [1, 64], strides = [1, 1]} : vector<8x128xf32> to vector<1x64xf32>
    %718 = vector.broadcast %717 : vector<1x64xf32> to vector<16x64xf32>
    %719 = arith.addf %716, %718 : vector<16x64xf32>
    %720 = vector.extract_strided_slice %719 {offsets = [0, 0], sizes = [16, 32], strides = [1, 1]} : vector<16x64xf32> to vector<16x32xf32>
    %721 = vector.extract_strided_slice %719 {offsets = [0, 32], sizes = [16, 32], strides = [1, 1]} : vector<16x64xf32> to vector<16x32xf32>
    %722 = vector.extract_strided_slice %578 {offsets = [32, 96], sizes = [32, 32], strides = [1, 1]} : vector<128x128xf32> to vector<32x32xf32>
    %723 = vector.extract_strided_slice %580 {offsets = [1, 96], sizes = [1, 32], strides = [1, 1]} : vector<8x128xf32> to vector<1x32xf32>
    %724 = vector.extract_strided_slice %714 {offsets = [0, 0], sizes = [16, 8], strides = [1, 1]} : vector<16x32xf32> to vector<16x8xf32>
    %725 = vector.extract_strided_slice %720 {offsets = [0, 0], sizes = [16, 8], strides = [1, 1]} : vector<16x32xf32> to vector<16x8xf32>
    %cst_185 = arith.constant dense<0.000000e+00> : vector<16x16xf32>
    %726 = tpu.matmul %724, %725, %cst_185 {dimension_numbers = #tpu.dot_dimension_numbers<[1], [1], [0], [0], [0, 0, 1, 0], [], []>} : vector<16x8xf32>, vector<16x8xf32>, vector<16x16xf32> -> vector<16x16xf32>
    %727 = arith.addf %726, %322 : vector<16x16xf32>
    %cst_186 = arith.constant dense<0xFF800000> : vector<16xf32>
    %728 = vector.multi_reduction <maximumf>, %727, %cst_186 [1] : vector<16x16xf32> to vector<16xf32>
    %729 = vector.shape_cast %728 : vector<16xf32> to vector<16x1xf32>
    %730 = vector.broadcast %729 : vector<16x1xf32> to vector<16x16xf32>
    %731 = arith.subf %727, %730 : vector<16x16xf32>
    %732 = math.exp %731 : vector<16x16xf32>
    %cst_187 = arith.constant dense<0.000000e+00> : vector<16xf32>
    %733 = vector.multi_reduction <add>, %732, %cst_187 [1] : vector<16x16xf32> to vector<16xf32>
    %734 = vector.shape_cast %733 : vector<16xf32> to vector<16x1xf32>
    %735 = tpu.reciprocal %734 {approx = true} : vector<16x1xf32> -> vector<16x1xf32>
    %736 = vector.broadcast %735 : vector<16x1xf32> to vector<16x16xf32>
    %737 = arith.mulf %732, %736 : vector<16x16xf32>
    %738 = vector.extract_strided_slice %721 {offsets = [0, 0], sizes = [16, 8], strides = [1, 1]} : vector<16x32xf32> to vector<16x8xf32>
    %cst_188 = arith.constant dense<0.000000e+00> : vector<16x8xf32>
    %739 = tpu.matmul %737, %738, %cst_188 {dimension_numbers = #tpu.dot_dimension_numbers<[1], [0], [0], [1], [0, 0, 1, 1], [], []>} : vector<16x16xf32>, vector<16x8xf32>, vector<16x8xf32> -> vector<16x8xf32>
    %740 = vector.extract_strided_slice %714 {offsets = [0, 8], sizes = [16, 8], strides = [1, 1]} : vector<16x32xf32> to vector<16x8xf32>
    %741 = vector.extract_strided_slice %720 {offsets = [0, 8], sizes = [16, 8], strides = [1, 1]} : vector<16x32xf32> to vector<16x8xf32>
    %cst_189 = arith.constant dense<0.000000e+00> : vector<16x16xf32>
    %742 = tpu.matmul %740, %741, %cst_189 {dimension_numbers = #tpu.dot_dimension_numbers<[1], [1], [0], [0], [0, 0, 1, 0], [], []>} : vector<16x8xf32>, vector<16x8xf32>, vector<16x16xf32> -> vector<16x16xf32>
    %743 = arith.addf %742, %322 : vector<16x16xf32>
    %cst_190 = arith.constant dense<0xFF800000> : vector<16xf32>
    %744 = vector.multi_reduction <maximumf>, %743, %cst_190 [1] : vector<16x16xf32> to vector<16xf32>
    %745 = vector.shape_cast %744 : vector<16xf32> to vector<16x1xf32>
    %746 = vector.broadcast %745 : vector<16x1xf32> to vector<16x16xf32>
    %747 = arith.subf %743, %746 : vector<16x16xf32>
    %748 = math.exp %747 : vector<16x16xf32>
    %cst_191 = arith.constant dense<0.000000e+00> : vector<16xf32>
    %749 = vector.multi_reduction <add>, %748, %cst_191 [1] : vector<16x16xf32> to vector<16xf32>
    %750 = vector.shape_cast %749 : vector<16xf32> to vector<16x1xf32>
    %751 = tpu.reciprocal %750 {approx = true} : vector<16x1xf32> -> vector<16x1xf32>
    %752 = vector.broadcast %751 : vector<16x1xf32> to vector<16x16xf32>
    %753 = arith.mulf %748, %752 : vector<16x16xf32>
    %754 = vector.extract_strided_slice %721 {offsets = [0, 8], sizes = [16, 8], strides = [1, 1]} : vector<16x32xf32> to vector<16x8xf32>
    %cst_192 = arith.constant dense<0.000000e+00> : vector<16x8xf32>
    %755 = tpu.matmul %753, %754, %cst_192 {dimension_numbers = #tpu.dot_dimension_numbers<[1], [0], [0], [1], [0, 0, 1, 1], [], []>} : vector<16x16xf32>, vector<16x8xf32>, vector<16x8xf32> -> vector<16x8xf32>
    %756 = vector.extract_strided_slice %714 {offsets = [0, 16], sizes = [16, 8], strides = [1, 1]} : vector<16x32xf32> to vector<16x8xf32>
    %757 = vector.extract_strided_slice %720 {offsets = [0, 16], sizes = [16, 8], strides = [1, 1]} : vector<16x32xf32> to vector<16x8xf32>
    %cst_193 = arith.constant dense<0.000000e+00> : vector<16x16xf32>
    %758 = tpu.matmul %756, %757, %cst_193 {dimension_numbers = #tpu.dot_dimension_numbers<[1], [1], [0], [0], [0, 0, 1, 0], [], []>} : vector<16x8xf32>, vector<16x8xf32>, vector<16x16xf32> -> vector<16x16xf32>
    %759 = arith.addf %758, %322 : vector<16x16xf32>
    %cst_194 = arith.constant dense<0xFF800000> : vector<16xf32>
    %760 = vector.multi_reduction <maximumf>, %759, %cst_194 [1] : vector<16x16xf32> to vector<16xf32>
    %761 = vector.shape_cast %760 : vector<16xf32> to vector<16x1xf32>
    %762 = vector.broadcast %761 : vector<16x1xf32> to vector<16x16xf32>
    %763 = arith.subf %759, %762 : vector<16x16xf32>
    %764 = math.exp %763 : vector<16x16xf32>
    %cst_195 = arith.constant dense<0.000000e+00> : vector<16xf32>
    %765 = vector.multi_reduction <add>, %764, %cst_195 [1] : vector<16x16xf32> to vector<16xf32>
    %766 = vector.shape_cast %765 : vector<16xf32> to vector<16x1xf32>
    %767 = tpu.reciprocal %766 {approx = true} : vector<16x1xf32> -> vector<16x1xf32>
    %768 = vector.broadcast %767 : vector<16x1xf32> to vector<16x16xf32>
    %769 = arith.mulf %764, %768 : vector<16x16xf32>
    %770 = vector.extract_strided_slice %721 {offsets = [0, 16], sizes = [16, 8], strides = [1, 1]} : vector<16x32xf32> to vector<16x8xf32>
    %cst_196 = arith.constant dense<0.000000e+00> : vector<16x8xf32>
    %771 = tpu.matmul %769, %770, %cst_196 {dimension_numbers = #tpu.dot_dimension_numbers<[1], [0], [0], [1], [0, 0, 1, 1], [], []>} : vector<16x16xf32>, vector<16x8xf32>, vector<16x8xf32> -> vector<16x8xf32>
    %772 = vector.extract_strided_slice %714 {offsets = [0, 24], sizes = [16, 8], strides = [1, 1]} : vector<16x32xf32> to vector<16x8xf32>
    %773 = vector.extract_strided_slice %720 {offsets = [0, 24], sizes = [16, 8], strides = [1, 1]} : vector<16x32xf32> to vector<16x8xf32>
    %cst_197 = arith.constant dense<0.000000e+00> : vector<16x16xf32>
    %774 = tpu.matmul %772, %773, %cst_197 {dimension_numbers = #tpu.dot_dimension_numbers<[1], [1], [0], [0], [0, 0, 1, 0], [], []>} : vector<16x8xf32>, vector<16x8xf32>, vector<16x16xf32> -> vector<16x16xf32>
    %775 = arith.addf %774, %322 : vector<16x16xf32>
    %cst_198 = arith.constant dense<0xFF800000> : vector<16xf32>
    %776 = vector.multi_reduction <maximumf>, %775, %cst_198 [1] : vector<16x16xf32> to vector<16xf32>
    %777 = vector.shape_cast %776 : vector<16xf32> to vector<16x1xf32>
    %778 = vector.broadcast %777 : vector<16x1xf32> to vector<16x16xf32>
    %779 = arith.subf %775, %778 : vector<16x16xf32>
    %780 = math.exp %779 : vector<16x16xf32>
    %cst_199 = arith.constant dense<0.000000e+00> : vector<16xf32>
    %781 = vector.multi_reduction <add>, %780, %cst_199 [1] : vector<16x16xf32> to vector<16xf32>
    %782 = vector.shape_cast %781 : vector<16xf32> to vector<16x1xf32>
    %783 = tpu.reciprocal %782 {approx = true} : vector<16x1xf32> -> vector<16x1xf32>
    %784 = vector.broadcast %783 : vector<16x1xf32> to vector<16x16xf32>
    %785 = arith.mulf %780, %784 : vector<16x16xf32>
    %786 = vector.extract_strided_slice %721 {offsets = [0, 24], sizes = [16, 8], strides = [1, 1]} : vector<16x32xf32> to vector<16x8xf32>
    %cst_200 = arith.constant dense<0.000000e+00> : vector<16x8xf32>
    %787 = tpu.matmul %785, %786, %cst_200 {dimension_numbers = #tpu.dot_dimension_numbers<[1], [0], [0], [1], [0, 0, 1, 1], [], []>} : vector<16x16xf32>, vector<16x8xf32>, vector<16x8xf32> -> vector<16x8xf32>
    %788 = tpu.concatenate %739, %755, %771, %787 in 1 : vector<16x8xf32>, vector<16x8xf32>, vector<16x8xf32>, vector<16x8xf32> -> vector<16x32xf32>
    %cst_201 = arith.constant dense<0.000000e+00> : vector<16x32xf32>
    %789 = tpu.matmul %788, %722, %cst_201 {dimension_numbers = #tpu.dot_dimension_numbers<[1], [0], [0], [1], [0, 0, 1, 1], [], []>} : vector<16x32xf32>, vector<32x32xf32>, vector<16x32xf32> -> vector<16x32xf32>
    %790 = vector.broadcast %723 : vector<1x32xf32> to vector<16x32xf32>
    %791 = arith.addf %789, %790 : vector<16x32xf32>
    %792 = arith.addf %684, %791 : vector<16x32xf32>
    %793 = vector.extract_strided_slice %580 {offsets = [4, 0], sizes = [1, 32], strides = [1, 1]} : vector<8x128xf32> to vector<1x32xf32>
    %794 = vector.extract_strided_slice %580 {offsets = [4, 32], sizes = [1, 32], strides = [1, 1]} : vector<8x128xf32> to vector<1x32xf32>
    %cst_202 = arith.constant dense<0.000000e+00> : vector<16xf32>
    %795 = vector.multi_reduction <add>, %792, %cst_202 [1] : vector<16x32xf32> to vector<16xf32>
    %796 = vector.shape_cast %795 : vector<16xf32> to vector<16x1xf32>
    %cst_203 = arith.constant 3.200000e+01 : f32
    %797 = vector.broadcast %cst_203 : f32 to vector<16x1xf32>
    %798 = arith.divf %796, %797 : vector<16x1xf32>
    %799 = vector.broadcast %798 : vector<16x1xf32> to vector<16x32xf32>
    %800 = arith.subf %792, %799 : vector<16x32xf32>
    %801 = arith.mulf %800, %800 : vector<16x32xf32>
    %cst_204 = arith.constant dense<0.000000e+00> : vector<16xf32>
    %802 = vector.multi_reduction <add>, %801, %cst_204 [1] : vector<16x32xf32> to vector<16xf32>
    %803 = vector.shape_cast %802 : vector<16xf32> to vector<16x1xf32>
    %cst_205 = arith.constant 0.0322580636 : f32
    %804 = vector.broadcast %cst_205 : f32 to vector<16x1xf32>
    %805 = arith.mulf %803, %804 : vector<16x1xf32>
    %806 = math.sqrt %805 : vector<16x1xf32>
    %cst_206 = arith.constant 9.99999997E-7 : f32
    %807 = vector.broadcast %cst_206 : f32 to vector<16x1xf32>
    %808 = arith.addf %806, %807 : vector<16x1xf32>
    %809 = tpu.reciprocal %808 {approx = true} : vector<16x1xf32> -> vector<16x1xf32>
    %810 = vector.broadcast %798 : vector<16x1xf32> to vector<16x32xf32>
    %811 = arith.subf %792, %810 : vector<16x32xf32>
    %812 = vector.broadcast %793 : vector<1x32xf32> to vector<16x32xf32>
    %813 = arith.mulf %812, %811 : vector<16x32xf32>
    %814 = vector.broadcast %809 : vector<16x1xf32> to vector<16x32xf32>
    %815 = arith.mulf %813, %814 : vector<16x32xf32>
    %816 = vector.broadcast %794 : vector<1x32xf32> to vector<16x32xf32>
    %817 = arith.addf %815, %816 : vector<16x32xf32>
    %818 = vector.extract_strided_slice %578 {offsets = [64, 32], sizes = [32, 64], strides = [1, 1]} : vector<128x128xf32> to vector<32x64xf32>
    %cst_207 = arith.constant dense<0.000000e+00> : vector<16x64xf32>
    %819 = tpu.matmul %817, %818, %cst_207 {dimension_numbers = #tpu.dot_dimension_numbers<[1], [0], [0], [1], [0, 0, 1, 1], [], []>} : vector<16x32xf32>, vector<32x64xf32>, vector<16x64xf32> -> vector<16x64xf32>
    %820 = vector.extract_strided_slice %580 {offsets = [2, 0], sizes = [1, 64], strides = [1, 1]} : vector<8x128xf32> to vector<1x64xf32>
    %821 = vector.broadcast %820 : vector<1x64xf32> to vector<16x64xf32>
    %822 = arith.addf %819, %821 : vector<16x64xf32>
    %cst_208 = arith.constant 0.000000e+00 : f32
    %823 = vector.broadcast %cst_208 : f32 to vector<16x64xf32>
    %824 = arith.maximumf %822, %823 : vector<16x64xf32>
    %825 = vector.extract_strided_slice %578 {offsets = [64, 0], sizes = [64, 32], strides = [1, 1]} : vector<128x128xf32> to vector<64x32xf32>
    %cst_209 = arith.constant dense<0.000000e+00> : vector<16x32xf32>
    %826 = tpu.matmul %824, %825, %cst_209 {dimension_numbers = #tpu.dot_dimension_numbers<[1], [0], [0], [1], [0, 0, 1, 1], [], []>} : vector<16x64xf32>, vector<64x32xf32>, vector<16x32xf32> -> vector<16x32xf32>
    %827 = arith.addf %792, %826 : vector<16x32xf32>
    %828 = vector.extract_strided_slice %580 {offsets = [2, 64], sizes = [1, 32], strides = [1, 1]} : vector<8x128xf32> to vector<1x32xf32>
    %829 = vector.broadcast %828 : vector<1x32xf32> to vector<16x32xf32>
    %830 = arith.addf %827, %829 : vector<16x32xf32>
    %831 = vector.extract_strided_slice %0 {offsets = [0, 64], sizes = [1, 32], strides = [1, 1]} : vector<1x128xf32> to vector<1x32xf32>
    %832 = vector.extract_strided_slice %0 {offsets = [0, 96], sizes = [1, 32], strides = [1, 1]} : vector<1x128xf32> to vector<1x32xf32>
    %cst_210 = arith.constant dense<0.000000e+00> : vector<16xf32>
    %833 = vector.multi_reduction <add>, %830, %cst_210 [1] : vector<16x32xf32> to vector<16xf32>
    %834 = vector.shape_cast %833 : vector<16xf32> to vector<16x1xf32>
    %cst_211 = arith.constant 3.200000e+01 : f32
    %835 = vector.broadcast %cst_211 : f32 to vector<16x1xf32>
    %836 = arith.divf %834, %835 : vector<16x1xf32>
    %837 = vector.broadcast %836 : vector<16x1xf32> to vector<16x32xf32>
    %838 = arith.subf %830, %837 : vector<16x32xf32>
    %839 = arith.mulf %838, %838 : vector<16x32xf32>
    %cst_212 = arith.constant dense<0.000000e+00> : vector<16xf32>
    %840 = vector.multi_reduction <add>, %839, %cst_212 [1] : vector<16x32xf32> to vector<16xf32>
    %841 = vector.shape_cast %840 : vector<16xf32> to vector<16x1xf32>
    %cst_213 = arith.constant 0.0322580636 : f32
    %842 = vector.broadcast %cst_213 : f32 to vector<16x1xf32>
    %843 = arith.mulf %841, %842 : vector<16x1xf32>
    %844 = math.sqrt %843 : vector<16x1xf32>
    %cst_214 = arith.constant 9.99999997E-7 : f32
    %845 = vector.broadcast %cst_214 : f32 to vector<16x1xf32>
    %846 = arith.addf %844, %845 : vector<16x1xf32>
    %847 = tpu.reciprocal %846 {approx = true} : vector<16x1xf32> -> vector<16x1xf32>
    %848 = vector.broadcast %836 : vector<16x1xf32> to vector<16x32xf32>
    %849 = arith.subf %830, %848 : vector<16x32xf32>
    %850 = vector.broadcast %831 : vector<1x32xf32> to vector<16x32xf32>
    %851 = arith.mulf %850, %849 : vector<16x32xf32>
    %852 = vector.broadcast %847 : vector<16x1xf32> to vector<16x32xf32>
    %853 = arith.mulf %851, %852 : vector<16x32xf32>
    %854 = vector.broadcast %832 : vector<1x32xf32> to vector<16x32xf32>
    %855 = arith.addf %853, %854 : vector<16x32xf32>
    %c0_215 = arith.constant 0 : index
    %c0_216 = arith.constant 0 : index
    %856 = vector.load %arg11[%c0_215, %c0_216] : memref<16x32xf32, #tpu.memory_space<vmem>>, vector<16x32xf32>
    tpu.vector_store %arg11[%c0_215, %c0_216], %855 {strides = array<i32>} : memref<16x32xf32, #tpu.memory_space<vmem>>, vector<16x32xf32>,
    return
  }
  func.func @transform_0(%arg0: i32) -> (i32, i32) {
    %c0_i32 = arith.constant 0 : i32
    %c0_i32_0 = arith.constant 0 : i32
    %c0_i32_1 = arith.constant 0 : i32
    return %c0_i32, %c0_i32_0 : i32, i32
  }
  func.func @transform_1(%arg0: i32) -> (i32, i32) {
    %c0_i32 = arith.constant 0 : i32
    %c0_i32_0 = arith.constant 0 : i32
    %c0_i32_1 = arith.constant 0 : i32
    return %c0_i32, %c0_i32_0 : i32, i32
  }
  func.func @transform_2(%arg0: i32) -> (i32, i32) {
    %c0_i32 = arith.constant 0 : i32
    %c0_i32_0 = arith.constant 0 : i32
    %c0_i32_1 = arith.constant 0 : i32
    return %c0_i32, %c0_i32_0 : i32, i32
  }
  func.func @transform_3(%arg0: i32) -> (i32, i32) {
    %c0_i32 = arith.constant 0 : i32
    %c0_i32_0 = arith.constant 0 : i32
    %c0_i32_1 = arith.constant 0 : i32
    return %c0_i32, %c0_i32_0 : i32, i32
  }
  func.func @transform_4(%arg0: i32) -> (i32, i32) {
    %c0_i32 = arith.constant 0 : i32
    %c0_i32_0 = arith.constant 0 : i32
    %c0_i32_1 = arith.constant 0 : i32
    return %c0_i32, %c0_i32_0 : i32, i32
  }
  func.func @transform_5(%arg0: i32) -> (i32, i32, i32) {
    %c0_i32 = arith.constant 0 : i32
    %c0_i32_0 = arith.constant 0 : i32
    %c0_i32_1 = arith.constant 0 : i32
    %c0_i32_2 = arith.constant 0 : i32
    return %c0_i32, %c0_i32_0, %c0_i32_1 : i32, i32, i32
  }
  func.func @transform_6(%arg0: i32) -> (i32, i32, i32) {
    %c0_i32 = arith.constant 0 : i32
    %c0_i32_0 = arith.constant 0 : i32
    %c0_i32_1 = arith.constant 0 : i32
    %c0_i32_2 = arith.constant 0 : i32
    return %c0_i32, %c0_i32_0, %c0_i32_1 : i32, i32, i32
  }
  func.func @transform_7(%arg0: i32) -> (i32, i32, i32) {
    %c0_i32 = arith.constant 0 : i32
    %c0_i32_0 = arith.constant 0 : i32
    %c0_i32_1 = arith.constant 0 : i32
    %c0_i32_2 = arith.constant 0 : i32
    return %c0_i32, %c0_i32_0, %c0_i32_1 : i32, i32, i32
  }
  func.func @transform_8(%arg0: i32) -> (i32, i32, i32) {
    %c0_i32 = arith.constant 0 : i32
    %c0_i32_0 = arith.constant 0 : i32
    %c0_i32_1 = arith.constant 0 : i32
    %c0_i32_2 = arith.constant 0 : i32
    return %c0_i32, %c0_i32_0, %c0_i32_1 : i32, i32, i32
  }
  func.func @transform_9(%arg0: i32) -> (i32, i32) {
    %c0_i32 = arith.constant 0 : i32
    %c0_i32_0 = arith.constant 0 : i32
    %c0_i32_1 = arith.constant 0 : i32
    return %c0_i32, %c0_i32_0 : i32, i32
  }
  func.func @transform_10(%arg0: i32) -> (i32, i32) {
    %c0_i32 = arith.constant 0 : i32
    %c0_i32_0 = arith.constant 0 : i32
    %c0_i32_1 = arith.constant 0 : i32
    return %c0_i32, %c0_i32_0 : i32, i32
  }
}

</mosaic_0001>

<llo_original>
// kernel: encoder_decoder_forward.1
$region0: #{encoder_decoder_forward.1}
  #allocation0 [shape = 'u32[]', space=smem, size = 0x4, offset = 0x4, fixed_abs, tag = 'smem constant byte address 0x4 - core index']
  #allocation1 [shape = 'u32[144,128]{1,0:T(1,128)}', space=vmem, size = 0x12000, scoped, tag = 'internal scratch']
  %s0 = inlined_call_operand.vmem [shape: f32[16,32], index: 0, kind: input, shape index: {}]
  %s1 = inlined_call_operand.vmem [shape: f32[16,32], index: 1, kind: input, shape index: {}]
  %s2 = inlined_call_operand.vmem [shape: f32[16,16], index: 2, kind: input, shape index: {}, may-alias: {2,4}]
  %s3 = inlined_call_operand.vmem [shape: f32[16,16], index: 3, kind: input, shape index: {}]
  %s4 = inlined_call_operand.vmem [shape: f32[16,16], index: 4, kind: input, shape index: {}, may-alias: {2,4}]
  %s5 = inlined_call_operand.vmem [shape: f32[2,128,128], index: 5, kind: input, shape index: {}]
  %s6 = inlined_call_operand.vmem [shape: f32[2,8,128], index: 6, kind: input, shape index: {}]
  %s7 = inlined_call_operand.vmem [shape: f32[2,128,128], index: 7, kind: input, shape index: {}]
  %s8 = inlined_call_operand.vmem [shape: f32[2,8,128], index: 8, kind: input, shape index: {}]
  %s9 = inlined_call_operand.vmem [shape: f32[1,128], index: 9, kind: input, shape index: {}]
  %s10 = inlined_call_operand.hbm [shape: f32[16,32], index: 10, kind: output, shape index: {}]
  %s11 = sld [smem:[#allocation0]]
  $region50: #{encoder_decoder_forward.1} parent=0
    _
  %s13 = ssub.s32 1, %s11
  %s14 = scalar_select 0, %s13, %s11
  $region1: #{encoder_decoder_forward.1} parent=0
    #allocation2 [shape = 'u8[8192]{0}', space=vmem, size = 0x2000, scoped, tag = 'output window, operand 0, single buffered']
    #allocation3 [shape = 's32[1]{0}', space=sflag, size = 0x4, scoped, tag = 'scoped memory for encoder_decoder_forward.1']
    %15 = vsyncpa [#allocation3], 0
    // Predicated region
    $region2: #{encoder_decoder_forward.1} parent=1 // pred_check
      _
    $region3: #{encoder_decoder_forward.1} parent=1 // pred_check_branch
      %17 = sbr.rel (0) target = $region5
    $region4: #{encoder_decoder_forward.1} parent=1 // pred_region
      _
    $region5: #{encoder_decoder_forward.1} parent=1 // pred_fallthru
      _
    // Predicated region
    $region6: #{encoder_decoder_forward.1} parent=1 // pred_check
      _
    $region7: #{encoder_decoder_forward.1} parent=1 // pred_check_branch
      %19 = sbr.rel (0) target = $region9
    $region8: #{encoder_decoder_forward.1} parent=1 // pred_region
      _
    $region9: #{encoder_decoder_forward.1} parent=1 // pred_fallthru
      _
    // Predicated region
    $region10: #{encoder_decoder_forward.1} parent=1 // pred_check
      _
    $region11: #{encoder_decoder_forward.1} parent=1 // pred_check_branch
      %21 = sbr.rel (0) target = $region13
    $region12: #{encoder_decoder_forward.1} parent=1 // pred_region
      _
    $region13: #{encoder_decoder_forward.1} parent=1 // pred_fallthru
      _
    // Predicated region
    $region14: #{encoder_decoder_forward.1} parent=1 // pred_check
      _
    $region15: #{encoder_decoder_forward.1} parent=1 // pred_check_branch
      %23 = sbr.rel (0) target = $region17
    $region16: #{encoder_decoder_forward.1} parent=1 // pred_region
      _
    $region17: #{encoder_decoder_forward.1} parent=1 // pred_fallthru
      _
    // Predicated region
    $region18: #{encoder_decoder_forward.1} parent=1 // pred_check
      _
    $region19: #{encoder_decoder_forward.1} parent=1 // pred_check_branch
      %25 = sbr.rel (0) target = $region21
    $region20: #{encoder_decoder_forward.1} parent=1 // pred_region
      _
    $region21: #{encoder_decoder_forward.1} parent=1 // pred_fallthru
      _
    // Predicated region
    $region22: #{encoder_decoder_forward.1} parent=1 // pred_check
      _
    $region23: #{encoder_decoder_forward.1} parent=1 // pred_check_branch
      %27 = sbr.rel (0) target = $region25
    $region24: #{encoder_decoder_forward.1} parent=1 // pred_region
      _
    $region25: #{encoder_decoder_forward.1} parent=1 // pred_fallthru
      _
    // Predicated region
    $region26: #{encoder_decoder_forward.1} parent=1 // pred_check
      _
    $region27: #{encoder_decoder_forward.1} parent=1 // pred_check_branch
      %29 = sbr.rel (0) target = $region29
    $region28: #{encoder_decoder_forward.1} parent=1 // pred_region
      _
    $region29: #{encoder_decoder_forward.1} parent=1 // pred_fallthru
      _
    // Predicated region
    $region30: #{encoder_decoder_forward.1} parent=1 // pred_check
      _
    $region31: #{encoder_decoder_forward.1} parent=1 // pred_check_branch
      %31 = sbr.rel (0) target = $region33
    $region32: #{encoder_decoder_forward.1} parent=1 // pred_region
      _
    $region33: #{encoder_decoder_forward.1} parent=1 // pred_fallthru
      _
    // Predicated region
    $region34: #{encoder_decoder_forward.1} parent=1 // pred_check
      _
    $region35: #{encoder_decoder_forward.1} parent=1 // pred_check_branch
      %33 = sbr.rel (0) target = $region37
    $region36: #{encoder_decoder_forward.1} parent=1 // pred_region
      _
    $region37: #{encoder_decoder_forward.1} parent=1 // pred_fallthru
      _
    // Predicated region
    $region38: #{encoder_decoder_forward.1} parent=1 // pred_check
      _
    $region39: #{encoder_decoder_forward.1} parent=1 // pred_check_branch
      %35 = sbr.rel (0) target = $region41
    $region40: #{encoder_decoder_forward.1} parent=1 // pred_region
      _
    $region41: #{encoder_decoder_forward.1} parent=1 // pred_fallthru
      _
    %v36 = vld [vmem:[%s9] sm:$0x1]
    %v37 = vld [vmem:[%s0] sm:$0xff]
    %v38 = vld [vmem:[%s0 + $0x8] sm:$0xff]
    %v39 = vld [vmem:[%s2] sm:$0xff]
    %v40 = vld [vmem:[%s2 + $0x8] sm:$0xff]
    %v41 = vld [vmem:[%s5] sm:$0xff]
    %v42 = vld [vmem:[%s5 + $0x8] sm:$0xff]
    %v43 = vld [vmem:[%s5 + $0x10] sm:$0xff]
    %v44 = vld [vmem:[%s5 + $0x18] sm:$0xff]
    %v45 = vld [vmem:[%s5 + $0x20] sm:$0xff]
    %v46 = vld [vmem:[%s5 + $0x28] sm:$0xff]
    %v47 = vld [vmem:[%s5 + $0x30] sm:$0xff]
    %v48 = vld [vmem:[%s5 + $0x38] sm:$0xff]
    %v49 = vld [vmem:[%s5 + $0x40] sm:$0xff]
    %v50 = vld [vmem:[%s5 + $0x48] sm:$0xff]
    %v51 = vld [vmem:[%s5 + $0x50] sm:$0xff]
    %v52 = vld [vmem:[%s5 + $0x58] sm:$0xff]
    %v53 = vld [vmem:[%s5 + $0x60] sm:$0xff]
    %v54 = vld [vmem:[%s5 + $0x68] sm:$0xff]
    %v55 = vld [vmem:[%s5 + $0x70] sm:$0xff]
    %v56 = vld [vmem:[%s5 + $0x78] sm:$0xff]
    %v57 = vld [vmem:[%s6] sm:$0xff]
    %vm58 = vcmask 261120
    %v59 = vsel %vm58, %v37, 0.0
    %60 = vadd.xlane.f32.xlu0 %v59
    %v61 = vpop.xlane.xlu0 %60
    %v62 = vsel %vm58, %v38, 0.0
    %63 = vadd.xlane.f32.xlu0 %v62
    %v64 = vpop.xlane.xlu0 %63
    %v65 = vrcp.pop 32.0
    %v66 = vmul.f32 %v61, %v65
    %v67 = vmul.f32 %v64, %v65
    %v68 = vsub.f32 %v37, %v66
    %v69 = vsub.f32 %v38, %v67
    %v70 = vmul.f32 %v68, %v68
    %v71 = vmul.f32 %v69, %v69
    %v72 = vsel %vm58, %v70, 0.0
    %73 = vadd.xlane.f32.xlu0 %v72
    %v74 = vpop.xlane.xlu0 %73
    %v75 = vsel %vm58, %v71, 0.0
    %76 = vadd.xlane.f32.xlu0 %v75
    %v77 = vpop.xlane.xlu0 %76
    %v78 = vmul.f32 %v74, 0.032258064
    %v79 = vmul.f32 %v77, 0.032258064
    %v80 = vrsqrt.pop %v78
    %v81 = vmul.f32 %v78, %v80
    %vm82 = vcmp.eq.f32.partialorder %v78, inf
    %v83 = vsel %vm82, %v78, %v81
    %vm84 = vcmp.eq.f32.partialorder %v78, 0.0
    %v85 = vand.u32 %v78, 2147483648
    %v86 = vsel %vm84, %v85, %v83
    %v87 = vrsqrt.pop %v79
    %v88 = vmul.f32 %v79, %v87
    %vm89 = vcmp.eq.f32.partialorder %v79, inf
    %v90 = vsel %vm89, %v79, %v88
    %vm91 = vcmp.eq.f32.partialorder %v79, 0.0
    %v92 = vand.u32 %v79, 2147483648
    %v93 = vsel %vm91, %v92, %v90
    %v94 = vadd.f32 %v86, 1e-06
    %v95 = vadd.f32 %v93, 1e-06
    %v96 = vrcp.pop %v94
    %v97 = vrcp.pop %v95
    %v98 = vlaneseq
    %v99 = vshrl.u32 %v98, 7
    %v100 = vsub.s32 2, %v99
    %v101 = vrot.slane %v57, %v100
    %v102 = vmul.f32 %v101, %v68
    %v103 = vmul.f32 %v101, %v69
    %v104 = vmul.f32 %v102, %v96
    %v105 = vmul.f32 %v103, %v97
    %107 = vrot.lane.b32.xlu0 %v101, 96
    %v108 = vpop.permute.xlu0 %107
    %v110 = vadd.f32 %v104, %v108
    %v111 = vadd.f32 %v105, %v108
    %v112 = vlaneseq
    %v113 = vshrl.u32 %v112, 7
    %v114 = vsub.s32 0, %v113
    %v115 = vrot.slane %v57, %v114
    %v117 = vsel %vm58, %v110, 0
    %v120 = vsel %vm58, %v111, 0
    %122 = vmatprep.subr.mxu0 0.0
    %123 = vmatpush1.msra.mxu0 %v41
    %124 = vmatprep.subr.mxu0 0.0
    %125 = vmatpush1.msra.mxu0 %v42
    %126 = vmatprep.subr.mxu0 0.0
    %127 = vmatpush1.msra.mxu0 %v43
    %128 = vmatprep.subr.mxu0 0.0
    %129 = vmatpush1.msra.mxu0 %v44
    %130 = vmatprep.subr.mxu0 0.0
    %131 = vmatpush1.msra.mxu0 0.0
    %132 = vmatprep.subr.mxu0 0.0
    %133 = vmatpush1.msra.mxu0 0.0
    %134 = vmatprep.subr.mxu0 0.0
    %135 = vmatpush1.msra.mxu0 0.0
    %136 = vmatprep.subr.mxu0 0.0
    %137 = vmatpush1.msra.mxu0 0.0
    %138 = vmatprep.subr.mxu0 0.0
    %139 = vmatpush1.msra.mxu0 0.0
    %140 = vmatprep.subr.mxu0 0.0
    %141 = vmatpush1.msra.mxu0 0.0
    %142 = vmatprep.subr.mxu0 0.0
    %143 = vmatpush1.msra.mxu0 0.0
    %144 = vmatprep.subr.mxu0 0.0
    %145 = vmatpush1.msra.mxu0 0.0
    %146 = vmatprep.subr.mxu0 0.0
    %147 = vmatpush1.msra.mxu0 0.0
    %148 = vmatprep.subr.mxu0 0.0
    %149 = vmatpush1.msra.mxu0 0.0
    %150 = vmatprep.subr.mxu0 0.0
    %151 = vmatpush1.msra.mxu0 0.0
    %152 = vmatprep.subr.mxu0 0.0
    %153 = vmatpush1.msra.mxu0 0.0
    %154 = vmatprep.subr.mxu0 0.0
    %155 = vmatpush1.msra.mxu0 0.0
    %156 = vmatprep.subr.mxu0 0.0
    %157 = vmatpush1.msra.mxu0 0.0
    %158 = vmatprep.subr.mxu0 0.0
    %159 = vmatpush1.msra.mxu0 0.0
    %160 = vmatprep.subr.mxu0 0.0
    %161 = vmatpush1.msra.mxu0 0.0
    %162 = vmatprep.subr.mxu0 0.0
    %163 = vmatpush1.msra.mxu0 0.0
    %164 = vmatprep.subr.mxu0 0.0
    %165 = vmatpush1.msra.mxu0 0.0
    %166 = vmatprep.subr.mxu0 0.0
    %167 = vmatpush1.msra.mxu0 0.0
    %168 = vmatprep.subr.mxu0 0.0
    %169 = vmatpush1.msra.mxu0 0.0
    %170 = vmatprep.subr.mxu0 0.0
    %171 = vmatpush1.msra.mxu0 0.0
    %172 = vmatprep.subr.mxu0 0.0
    %173 = vmatpush1.msra.mxu0 0.0
    %174 = vmatprep.subr.mxu0 0.0
    %175 = vmatpush1.msra.mxu0 0.0
    %176 = vmatprep.subr.mxu0 0.0
    %177 = vmatpush1.msra.mxu0 0.0
    %178 = vmatprep.subr.mxu0 0.0
    %179 = vmatpush1.msra.mxu0 0.0
    %180 = vmatprep.subr.mxu0 0.0
    %181 = vmatpush1.msra.mxu0 0.0
    %182 = vmatprep.subr.mxu0 0.0
    %183 = vmatpush1.msra.mxu0 0.0
    %184 = vmatprep.subr.mxu0 0.0
    %185 = vmatpush1.msra.mxu0 0.0
    %186 = vmatprep.mubr.f32.mxu0 0.0
    %187 = vmatmul.mubr.f32.gmra.mrb[0].mxu0 %v117
    %v188 = vpop.f32.mrb[0].mxu0
    %v189 = vadd.f32 %v115, %v188
    %v190 = vpop.f32.mrb[0].mxu0
    %191 = vmatprep.mubr.f32.mxu0 0.0
    %192 = vmatmul.mubr.f32.gmra.mrb[0].mxu0 %v120
    %v193 = vpop.f32.mrb[0].mxu0
    %v194 = vadd.f32 %v115, %v193
    %v195 = vpop.f32.mrb[0].mxu0
    %196 = vdwg.mxu0
    %199 = vrot.lane.b32.xlu0 %v189, 96
    %v200 = vpop.permute.xlu0 %199
    %201 = vrot.lane.b32.xlu0 %v194, 96
    %v202 = vpop.permute.xlu0 %201
    %vm203 = vcmask 64512
    %v204 = vsel %vm203, %v189, 0
    %v206 = vsel %vm203, %v194, 0
    %v208 = vsel %vm203, %v200, 0
    %v210 = vsel %vm203, %v202, 0
    %212 = vmatprep.subr.mxu0 0.0
    %213 = vmatpush1.xpose.msra.mxu0 %v208
    %214 = vmatprep.subr.mxu0 0.0
    %215 = vmatpush1.xpose.msra.mxu0 %v210
    %216 = vmatprep.subr.mxu0 0.0
    %217 = vmatpush1.xpose.msra.mxu0 0.0
    %218 = vmatprep.subr.mxu0 0.0
    %219 = vmatpush1.xpose.msra.mxu0 0.0
    %220 = vmatprep.subr.mxu0 0.0
    %221 = vmatpush1.xpose.msra.mxu0 0.0
    %222 = vmatprep.subr.mxu0 0.0
    %223 = vmatpush1.xpose.msra.mxu0 0.0
    %224 = vmatprep.subr.mxu0 0.0
    %225 = vmatpush1.xpose.msra.mxu0 0.0
    %226 = vmatprep.subr.mxu0 0.0
    %227 = vmatpush1.xpose.msra.mxu0 0.0
    %228 = vmatprep.subr.mxu0 0.0
    %229 = vmatpush1.xpose.msra.mxu0 0.0
    %230 = vmatprep.subr.mxu0 0.0
    %231 = vmatpush1.xpose.msra.mxu0 0.0
    %232 = vmatprep.subr.mxu0 0.0
    %233 = vmatpush1.xpose.msra.mxu0 0.0
    %234 = vmatprep.subr.mxu0 0.0
    %235 = vmatpush1.xpose.msra.mxu0 0.0
    %236 = vmatprep.subr.mxu0 0.0
    %237 = vmatpush1.xpose.msra.mxu0 0.0
    %238 = vmatprep.subr.mxu0 0.0
    %239 = vmatpush1.xpose.msra.mxu0 0.0
    %240 = vmatprep.subr.mxu0 0.0
    %241 = vmatpush1.xpose.msra.mxu0 0.0
    %242 = vmatprep.subr.mxu0 0.0
    %243 = vmatpush1.xpose.msra.mxu0 0.0
    %244 = vmatprep.subr.mxu0 0.0
    %245 = vmatpush1.xpose.msra.mxu0 0.0
    %246 = vmatprep.subr.mxu0 0.0
    %247 = vmatpush1.xpose.msra.mxu0 0.0
    %248 = vmatprep.subr.mxu0 0.0
    %249 = vmatpush1.xpose.msra.mxu0 0.0
    %250 = vmatprep.subr.mxu0 0.0
    %251 = vmatpush1.xpose.msra.mxu0 0.0
    %252 = vmatprep.subr.mxu0 0.0
    %253 = vmatpush1.xpose.msra.mxu0 0.0
    %254 = vmatprep.subr.mxu0 0.0
    %255 = vmatpush1.xpose.msra.mxu0 0.0
    %256 = vmatprep.subr.mxu0 0.0
    %257 = vmatpush1.xpose.msra.mxu0 0.0
    %258 = vmatprep.subr.mxu0 0.0
    %259 = vmatpush1.xpose.msra.mxu0 0.0
    %260 = vmatprep.subr.mxu0 0.0
    %261 = vmatpush1.xpose.msra.mxu0 0.0
    %262 = vmatprep.subr.mxu0 0.0
    %263 = vmatpush1.xpose.msra.mxu0 0.0
    %264 = vmatprep.subr.mxu0 0.0
    %265 = vmatpush1.xpose.msra.mxu0 0.0
    %266 = vmatprep.subr.mxu0 0.0
    %267 = vmatpush1.xpose.msra.mxu0 0.0
    %268 = vmatprep.subr.mxu0 0.0
    %269 = vmatpush1.xpose.msra.mxu0 0.0
    %270 = vmatprep.subr.mxu0 0.0
    %271 = vmatpush1.xpose.msra.mxu0 0.0
    %272 = vmatprep.subr.mxu0 0.0
    %273 = vmatpush1.xpose.msra.mxu0 0.0
    %274 = vmatprep.subr.mxu0 0.0
    %275 = vmatpush1.xpose.msra.mxu0 0.0
    %276 = vmatprep.mubr.f32.mxu0 0.0
    %277 = vmatmul.mubr.f32.gmra.mrb[0].mxu0 %v204
    %v278 = vpop.f32.mrb[0].mxu0
    %v279 = vadd.f32 %v39, %v278
    %v280 = vpop.f32.mrb[0].mxu0
    %281 = vmatprep.mubr.f32.mxu0 0.0
    %282 = vmatmul.mubr.f32.gmra.mrb[0].mxu0 %v206
    %v283 = vpop.f32.mrb[0].mxu0
    %v284 = vadd.f32 %v40, %v283
    %v285 = vpop.f32.mrb[0].mxu0
    %286 = vdwg.mxu0
    %vm287 = vcmask 130048
    %v288 = vsel %vm287, %v279, -inf
    %289 = vmax.xlane.f32.xlu0 %v288
    %v290 = vpop.xlane.xlu0 %289
    %v291 = vsel %vm287, %v284, -inf
    %292 = vmax.xlane.f32.xlu0 %v291
    %v293 = vpop.xlane.xlu0 %292
    %v294 = vsub.f32 %v279, %v290
    %v295 = vsub.f32 %v284, %v293
    %v296 = vmul.f32 %v294, 1.442695
    %v297 = vpow.pop %v296
    %v298 = vmul.f32 %v295, 1.442695
    %v299 = vpow.pop %v298
    %v300 = vsel %vm287, %v297, 0.0
    %301 = vadd.xlane.f32.xlu0 %v300
    %v302 = vpop.xlane.xlu0 %301
    %v303 = vsel %vm287, %v299, 0.0
    %304 = vadd.xlane.f32.xlu0 %v303
    %v305 = vpop.xlane.xlu0 %304
    %v306 = vrcp.pop %v302
    %v307 = vrcp.pop %v305
    %v308 = vmul.f32 %v297, %v306
    %v309 = vmul.f32 %v299, %v307
    %310 = vrot.lane.b32.xlu0 %v189, 64
    %v311 = vpop.permute.xlu0 %310
    %312 = vrot.lane.b32.xlu0 %v194, 64
    %v313 = vpop.permute.xlu0 %312
    %v317 = vsel %vm287, %v308, 0
    %v320 = vsel %vm287, %v309, 0
    %322 = vmatprep.subr.mxu0 0.0
    %323 = vmatpush1.msra.mxu0 %v311
    %324 = vmatprep.subr.mxu0 0.0
    %325 = vmatpush1.msra.mxu0 %v313
    %326 = vmatprep.subr.mxu0 0.0
    %327 = vmatpush1.msra.mxu0 0.0
    %328 = vmatprep.subr.mxu0 0.0
    %329 = vmatpush1.msra.mxu0 0.0
    %330 = vmatprep.subr.mxu0 0.0
    %331 = vmatpush1.msra.mxu0 0.0
    %332 = vmatprep.subr.mxu0 0.0
    %333 = vmatpush1.msra.mxu0 0.0
    %334 = vmatprep.subr.mxu0 0.0
    %335 = vmatpush1.msra.mxu0 0.0
    %336 = vmatprep.subr.mxu0 0.0
    %337 = vmatpush1.msra.mxu0 0.0
    %338 = vmatprep.subr.mxu0 0.0
    %339 = vmatpush1.msra.mxu0 0.0
    %340 = vmatprep.subr.mxu0 0.0
    %341 = vmatpush1.msra.mxu0 0.0
    %342 = vmatprep.subr.mxu0 0.0
    %343 = vmatpush1.msra.mxu0 0.0
    %344 = vmatprep.subr.mxu0 0.0
    %345 = vmatpush1.msra.mxu0 0.0
    %346 = vmatprep.subr.mxu0 0.0
    %347 = vmatpush1.msra.mxu0 0.0
    %348 = vmatprep.subr.mxu0 0.0
    %349 = vmatpush1.msra.mxu0 0.0
    %350 = vmatprep.subr.mxu0 0.0
    %351 = vmatpush1.msra.mxu0 0.0
    %352 = vmatprep.subr.mxu0 0.0
    %353 = vmatpush1.msra.mxu0 0.0
    %354 = vmatprep.subr.mxu0 0.0
    %355 = vmatpush1.msra.mxu0 0.0
    %356 = vmatprep.subr.mxu0 0.0
    %357 = vmatpush1.msra.mxu0 0.0
    %358 = vmatprep.subr.mxu0 0.0
    %359 = vmatpush1.msra.mxu0 0.0
    %360 = vmatprep.subr.mxu0 0.0
    %361 = vmatpush1.msra.mxu0 0.0
    %362 = vmatprep.subr.mxu0 0.0
    %363 = vmatpush1.msra.mxu0 0.0
    %364 = vmatprep.subr.mxu0 0.0
    %365 = vmatpush1.msra.mxu0 0.0
    %366 = vmatprep.subr.mxu0 0.0
    %367 = vmatpush1.msra.mxu0 0.0
    %368 = vmatprep.subr.mxu0 0.0
    %369 = vmatpush1.msra.mxu0 0.0
    %370 = vmatprep.subr.mxu0 0.0
    %371 = vmatpush1.msra.mxu0 0.0
    %372 = vmatprep.subr.mxu0 0.0
    %373 = vmatpush1.msra.mxu0 0.0
    %374 = vmatprep.subr.mxu0 0.0
    %375 = vmatpush1.msra.mxu0 0.0
    %376 = vmatprep.subr.mxu0 0.0
    %377 = vmatpush1.msra.mxu0 0.0
    %378 = vmatprep.subr.mxu0 0.0
    %379 = vmatpush1.msra.mxu0 0.0
    %380 = vmatprep.subr.mxu0 0.0
    %381 = vmatpush1.msra.mxu0 0.0
    %382 = vmatprep.subr.mxu0 0.0
    %383 = vmatpush1.msra.mxu0 0.0
    %384 = vmatprep.subr.mxu0 0.0
    %385 = vmatpush1.msra.mxu0 0.0
    %386 = vmatprep.mubr.f32.mxu0 0.0
    %387 = vmatmul.mubr.f32.gmra.mrb[0].mxu0 %v317
    %v388 = vpop.f32.mrb[0].mxu0
    %v389 = vadd.f32 0.0, %v388
    %v390 = vpop.f32.mrb[0].mxu0
    %391 = vmatprep.mubr.f32.mxu0 0.0
    %392 = vmatmul.mubr.f32.gmra.mrb[0].mxu0 %v320
    %v393 = vpop.f32.mrb[0].mxu0
    %v394 = vadd.f32 0.0, %v393
    %v395 = vpop.f32.mrb[0].mxu0
    %396 = vdwg.mxu0
    %397 = vrot.lane.b32.xlu0 %v189, 120
    %v398 = vpop.permute.xlu0 %397
    %399 = vrot.lane.b32.xlu0 %v194, 120
    %v400 = vpop.permute.xlu0 %399
    %401 = vrot.lane.b32.xlu0 %v189, 88
    %v402 = vpop.permute.xlu0 %401
    %403 = vrot.lane.b32.xlu0 %v194, 88
    %v404 = vpop.permute.xlu0 %403
    %v405 = vsel %vm203, %v398, 0
    %v407 = vsel %vm203, %v400, 0
    %v409 = vsel %vm203, %v402, 0
    %v411 = vsel %vm203, %v404, 0
    %413 = vmatprep.subr.mxu0 0.0
    %414 = vmatpush1.xpose.msra.mxu0 %v409
    %415 = vmatprep.subr.mxu0 0.0
    %416 = vmatpush1.xpose.msra.mxu0 %v411
    %417 = vmatprep.subr.mxu0 0.0
    %418 = vmatpush1.xpose.msra.mxu0 0.0
    %419 = vmatprep.subr.mxu0 0.0
    %420 = vmatpush1.xpose.msra.mxu0 0.0
    %421 = vmatprep.subr.mxu0 0.0
    %422 = vmatpush1.xpose.msra.mxu0 0.0
    %423 = vmatprep.subr.mxu0 0.0
    %424 = vmatpush1.xpose.msra.mxu0 0.0
    %425 = vmatprep.subr.mxu0 0.0
    %426 = vmatpush1.xpose.msra.mxu0 0.0
    %427 = vmatprep.subr.mxu0 0.0
    %428 = vmatpush1.xpose.msra.mxu0 0.0
    %429 = vmatprep.subr.mxu0 0.0
    %430 = vmatpush1.xpose.msra.mxu0 0.0
    %431 = vmatprep.subr.mxu0 0.0
    %432 = vmatpush1.xpose.msra.mxu0 0.0
    %433 = vmatprep.subr.mxu0 0.0
    %434 = vmatpush1.xpose.msra.mxu0 0.0
    %435 = vmatprep.subr.mxu0 0.0
    %436 = vmatpush1.xpose.msra.mxu0 0.0
    %437 = vmatprep.subr.mxu0 0.0
    %438 = vmatpush1.xpose.msra.mxu0 0.0
    %439 = vmatprep.subr.mxu0 0.0
    %440 = vmatpush1.xpose.msra.mxu0 0.0
    %441 = vmatprep.subr.mxu0 0.0
    %442 = vmatpush1.xpose.msra.mxu0 0.0
    %443 = vmatprep.subr.mxu0 0.0
    %444 = vmatpush1.xpose.msra.mxu0 0.0
    %445 = vmatprep.subr.mxu0 0.0
    %446 = vmatpush1.xpose.msra.mxu0 0.0
    %447 = vmatprep.subr.mxu0 0.0
    %448 = vmatpush1.xpose.msra.mxu0 0.0
    %449 = vmatprep.subr.mxu0 0.0
    %450 = vmatpush1.xpose.msra.mxu0 0.0
    %451 = vmatprep.subr.mxu0 0.0
    %452 = vmatpush1.xpose.msra.mxu0 0.0
    %453 = vmatprep.subr.mxu0 0.0
    %454 = vmatpush1.xpose.msra.mxu0 0.0
    %455 = vmatprep.subr.mxu0 0.0
    %456 = vmatpush1.xpose.msra.mxu0 0.0
    %457 = vmatprep.subr.mxu0 0.0
    %458 = vmatpush1.xpose.msra.mxu0 0.0
    %459 = vmatprep.subr.mxu0 0.0
    %460 = vmatpush1.xpose.msra.mxu0 0.0
    %461 = vmatprep.subr.mxu0 0.0
    %462 = vmatpush1.xpose.msra.mxu0 0.0
    %463 = vmatprep.subr.mxu0 0.0
    %464 = vmatpush1.xpose.msra.mxu0 0.0
    %465 = vmatprep.subr.mxu0 0.0
    %466 = vmatpush1.xpose.msra.mxu0 0.0
    %467 = vmatprep.subr.mxu0 0.0
    %468 = vmatpush1.xpose.msra.mxu0 0.0
    %469 = vmatprep.subr.mxu0 0.0
    %470 = vmatpush1.xpose.msra.mxu0 0.0
    %471 = vmatprep.subr.mxu0 0.0
    %472 = vmatpush1.xpose.msra.mxu0 0.0
    %473 = vmatprep.subr.mxu0 0.0
    %474 = vmatpush1.xpose.msra.mxu0 0.0
    %475 = vmatprep.subr.mxu0 0.0
    %476 = vmatpush1.xpose.msra.mxu0 0.0
    %477 = vmatprep.mubr.f32.mxu0 0.0
    %478 = vmatmul.mubr.f32.gmra.mrb[0].mxu0 %v405
    %v479 = vpop.f32.mrb[0].mxu0
    %v480 = vadd.f32 %v39, %v479
    %v481 = vpop.f32.mrb[0].mxu0
    %482 = vmatprep.mubr.f32.mxu0 0.0
    %483 = vmatmul.mubr.f32.gmra.mrb[0].mxu0 %v407
    %v484 = vpop.f32.mrb[0].mxu0
    %v485 = vadd.f32 %v40, %v484
    %v486 = vpop.f32.mrb[0].mxu0
    %487 = vdwg.mxu0
    %v488 = vsel %vm287, %v480, -inf
    %489 = vmax.xlane.f32.xlu0 %v488
    %v490 = vpop.xlane.xlu0 %489
    %v491 = vsel %vm287, %v485, -inf
    %492 = vmax.xlane.f32.xlu0 %v491
    %v493 = vpop.xlane.xlu0 %492
    %v494 = vsub.f32 %v480, %v490
    %v495 = vsub.f32 %v485, %v493
    %v496 = vmul.f32 %v494, 1.442695
    %v497 = vpow.pop %v496
    %v498 = vmul.f32 %v495, 1.442695
    %v499 = vpow.pop %v498
    %v500 = vsel %vm287, %v497, 0.0
    %501 = vadd.xlane.f32.xlu0 %v500
    %v502 = vpop.xlane.xlu0 %501
    %v503 = vsel %vm287, %v499, 0.0
    %504 = vadd.xlane.f32.xlu0 %v503
    %v505 = vpop.xlane.xlu0 %504
    %v506 = vrcp.pop %v502
    %v507 = vrcp.pop %v505
    %v508 = vmul.f32 %v497, %v506
    %v509 = vmul.f32 %v499, %v507
    %510 = vrot.lane.b32.xlu0 %v189, 56
    %v511 = vpop.permute.xlu0 %510
    %512 = vrot.lane.b32.xlu0 %v194, 56
    %v513 = vpop.permute.xlu0 %512
    %v517 = vsel %vm287, %v508, 0
    %v520 = vsel %vm287, %v509, 0
    %522 = vmatprep.subr.mxu0 0.0
    %523 = vmatpush1.msra.mxu0 %v511
    %524 = vmatprep.subr.mxu0 0.0
    %525 = vmatpush1.msra.mxu0 %v513
    %526 = vmatprep.subr.mxu0 0.0
    %527 = vmatpush1.msra.mxu0 0.0
    %528 = vmatprep.subr.mxu0 0.0
    %529 = vmatpush1.msra.mxu0 0.0
    %530 = vmatprep.subr.mxu0 0.0
    %531 = vmatpush1.msra.mxu0 0.0
    %532 = vmatprep.subr.mxu0 0.0
    %533 = vmatpush1.msra.mxu0 0.0
    %534 = vmatprep.subr.mxu0 0.0
    %535 = vmatpush1.msra.mxu0 0.0
    %536 = vmatprep.subr.mxu0 0.0
    %537 = vmatpush1.msra.mxu0 0.0
    %538 = vmatprep.subr.mxu0 0.0
    %539 = vmatpush1.msra.mxu0 0.0
    %540 = vmatprep.subr.mxu0 0.0
    %541 = vmatpush1.msra.mxu0 0.0
    %542 = vmatprep.subr.mxu0 0.0
    %543 = vmatpush1.msra.mxu0 0.0
    %544 = vmatprep.subr.mxu0 0.0
    %545 = vmatpush1.msra.mxu0 0.0
    %546 = vmatprep.subr.mxu0 0.0
    %547 = vmatpush1.msra.mxu0 0.0
    %548 = vmatprep.subr.mxu0 0.0
    %549 = vmatpush1.msra.mxu0 0.0
    %550 = vmatprep.subr.mxu0 0.0
    %551 = vmatpush1.msra.mxu0 0.0
    %552 = vmatprep.subr.mxu0 0.0
    %553 = vmatpush1.msra.mxu0 0.0
    %554 = vmatprep.subr.mxu0 0.0
    %555 = vmatpush1.msra.mxu0 0.0
    %556 = vmatprep.subr.mxu0 0.0
    %557 = vmatpush1.msra.mxu0 0.0
    %558 = vmatprep.subr.mxu0 0.0
    %559 = vmatpush1.msra.mxu0 0.0
    %560 = vmatprep.subr.mxu0 0.0
    %561 = vmatpush1.msra.mxu0 0.0
    %562 = vmatprep.subr.mxu0 0.0
    %563 = vmatpush1.msra.mxu0 0.0
    %564 = vmatprep.subr.mxu0 0.0
    %565 = vmatpush1.msra.mxu0 0.0
    %566 = vmatprep.subr.mxu0 0.0
    %567 = vmatpush1.msra.mxu0 0.0
    %568 = vmatprep.subr.mxu0 0.0
    %569 = vmatpush1.msra.mxu0 0.0
    %570 = vmatprep.subr.mxu0 0.0
    %571 = vmatpush1.msra.mxu0 0.0
    %572 = vmatprep.subr.mxu0 0.0
    %573 = vmatpush1.msra.mxu0 0.0
    %574 = vmatprep.subr.mxu0 0.0
    %575 = vmatpush1.msra.mxu0 0.0
    %576 = vmatprep.subr.mxu0 0.0
    %577 = vmatpush1.msra.mxu0 0.0
    %578 = vmatprep.subr.mxu0 0.0
    %579 = vmatpush1.msra.mxu0 0.0
    %580 = vmatprep.subr.mxu0 0.0
    %581 = vmatpush1.msra.mxu0 0.0
    %582 = vmatprep.subr.mxu0 0.0
    %583 = vmatpush1.msra.mxu0 0.0
    %584 = vmatprep.subr.mxu0 0.0
    %585 = vmatpush1.msra.mxu0 0.0
    %586 = vmatprep.mubr.f32.mxu0 0.0
    %587 = vmatmul.mubr.f32.gmra.mrb[0].mxu0 %v517
    %v588 = vpop.f32.mrb[0].mxu0
    %v589 = vadd.f32 0.0, %v588
    %v590 = vpop.f32.mrb[0].mxu0
    %591 = vmatprep.mubr.f32.mxu0 0.0
    %592 = vmatmul.mubr.f32.gmra.mrb[0].mxu0 %v520
    %v593 = vpop.f32.mrb[0].mxu0
    %v594 = vadd.f32 0.0, %v593
    %v595 = vpop.f32.mrb[0].mxu0
    %596 = vdwg.mxu0
    %597 = vrot.lane.b32.xlu0 %v189, 112
    %v598 = vpop.permute.xlu0 %597
    %599 = vrot.lane.b32.xlu0 %v194, 112
    %v600 = vpop.permute.xlu0 %599
    %601 = vrot.lane.b32.xlu0 %v189, 80
    %v602 = vpop.permute.xlu0 %601
    %603 = vrot.lane.b32.xlu0 %v194, 80
    %v604 = vpop.permute.xlu0 %603
    %v605 = vsel %vm203, %v598, 0
    %v607 = vsel %vm203, %v600, 0
    %v609 = vsel %vm203, %v602, 0
    %v611 = vsel %vm203, %v604, 0
    %613 = vmatprep.subr.mxu0 0.0
    %614 = vmatpush1.xpose.msra.mxu0 %v609
    %615 = vmatprep.subr.mxu0 0.0
    %616 = vmatpush1.xpose.msra.mxu0 %v611
    %617 = vmatprep.subr.mxu0 0.0
    %618 = vmatpush1.xpose.msra.mxu0 0.0
    %619 = vmatprep.subr.mxu0 0.0
    %620 = vmatpush1.xpose.msra.mxu0 0.0
    %621 = vmatprep.subr.mxu0 0.0
    %622 = vmatpush1.xpose.msra.mxu0 0.0
    %623 = vmatprep.subr.mxu0 0.0
    %624 = vmatpush1.xpose.msra.mxu0 0.0
    %625 = vmatprep.subr.mxu0 0.0
    %626 = vmatpush1.xpose.msra.mxu0 0.0
    %627 = vmatprep.subr.mxu0 0.0
    %628 = vmatpush1.xpose.msra.mxu0 0.0
    %629 = vmatprep.subr.mxu0 0.0
    %630 = vmatpush1.xpose.msra.mxu0 0.0
    %631 = vmatprep.subr.mxu0 0.0
    %632 = vmatpush1.xpose.msra.mxu0 0.0
    %633 = vmatprep.subr.mxu0 0.0
    %634 = vmatpush1.xpose.msra.mxu0 0.0
    %635 = vmatprep.subr.mxu0 0.0
    %636 = vmatpush1.xpose.msra.mxu0 0.0
    %637 = vmatprep.subr.mxu0 0.0
    %638 = vmatpush1.xpose.msra.mxu0 0.0
    %639 = vmatprep.subr.mxu0 0.0
    %640 = vmatpush1.xpose.msra.mxu0 0.0
    %641 = vmatprep.subr.mxu0 0.0
    %642 = vmatpush1.xpose.msra.mxu0 0.0
    %643 = vmatprep.subr.mxu0 0.0
    %644 = vmatpush1.xpose.msra.mxu0 0.0
    %645 = vmatprep.subr.mxu0 0.0
    %646 = vmatpush1.xpose.msra.mxu0 0.0
    %647 = vmatprep.subr.mxu0 0.0
    %648 = vmatpush1.xpose.msra.mxu0 0.0
    %649 = vmatprep.subr.mxu0 0.0
    %650 = vmatpush1.xpose.msra.mxu0 0.0
    %651 = vmatprep.subr.mxu0 0.0
    %652 = vmatpush1.xpose.msra.mxu0 0.0
    %653 = vmatprep.subr.mxu0 0.0
    %654 = vmatpush1.xpose.msra.mxu0 0.0
    %655 = vmatprep.subr.mxu0 0.0
    %656 = vmatpush1.xpose.msra.mxu0 0.0
    %657 = vmatprep.subr.mxu0 0.0
    %658 = vmatpush1.xpose.msra.mxu0 0.0
    %659 = vmatprep.subr.mxu0 0.0
    %660 = vmatpush1.xpose.msra.mxu0 0.0
    %661 = vmatprep.subr.mxu0 0.0
    %662 = vmatpush1.xpose.msra.mxu0 0.0
    %663 = vmatprep.subr.mxu0 0.0
    %664 = vmatpush1.xpose.msra.mxu0 0.0
    %665 = vmatprep.subr.mxu0 0.0
    %666 = vmatpush1.xpose.msra.mxu0 0.0
    %667 = vmatprep.subr.mxu0 0.0
    %668 = vmatpush1.xpose.msra.mxu0 0.0
    %669 = vmatprep.subr.mxu0 0.0
    %670 = vmatpush1.xpose.msra.mxu0 0.0
    %671 = vmatprep.subr.mxu0 0.0
    %672 = vmatpush1.xpose.msra.mxu0 0.0
    %673 = vmatprep.subr.mxu0 0.0
    %674 = vmatpush1.xpose.msra.mxu0 0.0
    %675 = vmatprep.subr.mxu0 0.0
    %676 = vmatpush1.xpose.msra.mxu0 0.0
    %677 = vmatprep.mubr.f32.mxu0 0.0
    %678 = vmatmul.mubr.f32.gmra.mrb[0].mxu0 %v605
    %v679 = vpop.f32.mrb[0].mxu0
    %v680 = vadd.f32 %v39, %v679
    %v681 = vpop.f32.mrb[0].mxu0
    %682 = vmatprep.mubr.f32.mxu0 0.0
    %683 = vmatmul.mubr.f32.gmra.mrb[0].mxu0 %v607
    %v684 = vpop.f32.mrb[0].mxu0
    %v685 = vadd.f32 %v40, %v684
    %v686 = vpop.f32.mrb[0].mxu0
    %687 = vdwg.mxu0
    %v688 = vsel %vm287, %v680, -inf
    %689 = vmax.xlane.f32.xlu0 %v688
    %v690 = vpop.xlane.xlu0 %689
    %v691 = vsel %vm287, %v685, -inf
    %692 = vmax.xlane.f32.xlu0 %v691
    %v693 = vpop.xlane.xlu0 %692
    %v694 = vsub.f32 %v680, %v690
    %v695 = vsub.f32 %v685, %v693
    %v696 = vmul.f32 %v694, 1.442695
    %v697 = vpow.pop %v696
    %v698 = vmul.f32 %v695, 1.442695
    %v699 = vpow.pop %v698
    %v700 = vsel %vm287, %v697, 0.0
    %701 = vadd.xlane.f32.xlu0 %v700
    %v702 = vpop.xlane.xlu0 %701
    %v703 = vsel %vm287, %v699, 0.0
    %704 = vadd.xlane.f32.xlu0 %v703
    %v705 = vpop.xlane.xlu0 %704
    %v706 = vrcp.pop %v702
    %v707 = vrcp.pop %v705
    %v708 = vmul.f32 %v697, %v706
    %v709 = vmul.f32 %v699, %v707
    %710 = vrot.lane.b32.xlu0 %v189, 48
    %v711 = vpop.permute.xlu0 %710
    %712 = vrot.lane.b32.xlu0 %v194, 48
    %v713 = vpop.permute.xlu0 %712
    %v717 = vsel %vm287, %v708, 0
    %v720 = vsel %vm287, %v709, 0
    %722 = vmatprep.subr.mxu0 0.0
    %723 = vmatpush1.msra.mxu0 %v711
    %724 = vmatprep.subr.mxu0 0.0
    %725 = vmatpush1.msra.mxu0 %v713
    %726 = vmatprep.subr.mxu0 0.0
    %727 = vmatpush1.msra.mxu0 0.0
    %728 = vmatprep.subr.mxu0 0.0
    %729 = vmatpush1.msra.mxu0 0.0
    %730 = vmatprep.subr.mxu0 0.0
    %731 = vmatpush1.msra.mxu0 0.0
    %732 = vmatprep.subr.mxu0 0.0
    %733 = vmatpush1.msra.mxu0 0.0
    %734 = vmatprep.subr.mxu0 0.0
    %735 = vmatpush1.msra.mxu0 0.0
    %736 = vmatprep.subr.mxu0 0.0
    %737 = vmatpush1.msra.mxu0 0.0
    %738 = vmatprep.subr.mxu0 0.0
    %739 = vmatpush1.msra.mxu0 0.0
    %740 = vmatprep.subr.mxu0 0.0
    %741 = vmatpush1.msra.mxu0 0.0
    %742 = vmatprep.subr.mxu0 0.0
    %743 = vmatpush1.msra.mxu0 0.0
    %744 = vmatprep.subr.mxu0 0.0
    %745 = vmatpush1.msra.mxu0 0.0
    %746 = vmatprep.subr.mxu0 0.0
    %747 = vmatpush1.msra.mxu0 0.0
    %748 = vmatprep.subr.mxu0 0.0
    %749 = vmatpush1.msra.mxu0 0.0
    %750 = vmatprep.subr.mxu0 0.0
    %751 = vmatpush1.msra.mxu0 0.0
    %752 = vmatprep.subr.mxu0 0.0
    %753 = vmatpush1.msra.mxu0 0.0
    %754 = vmatprep.subr.mxu0 0.0
    %755 = vmatpush1.msra.mxu0 0.0
    %756 = vmatprep.subr.mxu0 0.0
    %757 = vmatpush1.msra.mxu0 0.0
    %758 = vmatprep.subr.mxu0 0.0
    %759 = vmatpush1.msra.mxu0 0.0
    %760 = vmatprep.subr.mxu0 0.0
    %761 = vmatpush1.msra.mxu0 0.0
    %762 = vmatprep.subr.mxu0 0.0
    %763 = vmatpush1.msra.mxu0 0.0
    %764 = vmatprep.subr.mxu0 0.0
    %765 = vmatpush1.msra.mxu0 0.0
    %766 = vmatprep.subr.mxu0 0.0
    %767 = vmatpush1.msra.mxu0 0.0
    %768 = vmatprep.subr.mxu0 0.0
    %769 = vmatpush1.msra.mxu0 0.0
    %770 = vmatprep.subr.mxu0 0.0
    %771 = vmatpush1.msra.mxu0 0.0
    %772 = vmatprep.subr.mxu0 0.0
    %773 = vmatpush1.msra.mxu0 0.0
    %774 = vmatprep.subr.mxu0 0.0
    %775 = vmatpush1.msra.mxu0 0.0
    %776 = vmatprep.subr.mxu0 0.0
    %777 = vmatpush1.msra.mxu0 0.0
    %778 = vmatprep.subr.mxu0 0.0
    %779 = vmatpush1.msra.mxu0 0.0
    %780 = vmatprep.subr.mxu0 0.0
    %781 = vmatpush1.msra.mxu0 0.0
    %782 = vmatprep.subr.mxu0 0.0
    %783 = vmatpush1.msra.mxu0 0.0
    %784 = vmatprep.subr.mxu0 0.0
    %785 = vmatpush1.msra.mxu0 0.0
    %786 = vmatprep.mubr.f32.mxu0 0.0
    %787 = vmatmul.mubr.f32.gmra.mrb[0].mxu0 %v717
    %v788 = vpop.f32.mrb[0].mxu0
    %v789 = vadd.f32 0.0, %v788
    %v790 = vpop.f32.mrb[0].mxu0
    %791 = vmatprep.mubr.f32.mxu0 0.0
    %792 = vmatmul.mubr.f32.gmra.mrb[0].mxu0 %v720
    %v793 = vpop.f32.mrb[0].mxu0
    %v794 = vadd.f32 0.0, %v793
    %v795 = vpop.f32.mrb[0].mxu0
    %796 = vdwg.mxu0
    %797 = vrot.lane.b32.xlu0 %v189, 104
    %v798 = vpop.permute.xlu0 %797
    %799 = vrot.lane.b32.xlu0 %v194, 104
    %v800 = vpop.permute.xlu0 %799
    %801 = vrot.lane.b32.xlu0 %v189, 72
    %v802 = vpop.permute.xlu0 %801
    %803 = vrot.lane.b32.xlu0 %v194, 72
    %v804 = vpop.permute.xlu0 %803
    %v805 = vsel %vm203, %v798, 0
    %v807 = vsel %vm203, %v800, 0
    %v809 = vsel %vm203, %v802, 0
    %v811 = vsel %vm203, %v804, 0
    %813 = vmatprep.subr.mxu0 0.0
    %814 = vmatpush1.xpose.msra.mxu0 %v809
    %815 = vmatprep.subr.mxu0 0.0
    %816 = vmatpush1.xpose.msra.mxu0 %v811
    %817 = vmatprep.subr.mxu0 0.0
    %818 = vmatpush1.xpose.msra.mxu0 0.0
    %819 = vmatprep.subr.mxu0 0.0
    %820 = vmatpush1.xpose.msra.mxu0 0.0
    %821 = vmatprep.subr.mxu0 0.0
    %822 = vmatpush1.xpose.msra.mxu0 0.0
    %823 = vmatprep.subr.mxu0 0.0
    %824 = vmatpush1.xpose.msra.mxu0 0.0
    %825 = vmatprep.subr.mxu0 0.0
    %826 = vmatpush1.xpose.msra.mxu0 0.0
    %827 = vmatprep.subr.mxu0 0.0
    %828 = vmatpush1.xpose.msra.mxu0 0.0
    %829 = vmatprep.subr.mxu0 0.0
    %830 = vmatpush1.xpose.msra.mxu0 0.0
    %831 = vmatprep.subr.mxu0 0.0
    %832 = vmatpush1.xpose.msra.mxu0 0.0
    %833 = vmatprep.subr.mxu0 0.0
    %834 = vmatpush1.xpose.msra.mxu0 0.0
    %835 = vmatprep.subr.mxu0 0.0
    %836 = vmatpush1.xpose.msra.mxu0 0.0
    %837 = vmatprep.subr.mxu0 0.0
    %838 = vmatpush1.xpose.msra.mxu0 0.0
    %839 = vmatprep.subr.mxu0 0.0
    %840 = vmatpush1.xpose.msra.mxu0 0.0
    %841 = vmatprep.subr.mxu0 0.0
    %842 = vmatpush1.xpose.msra.mxu0 0.0
    %843 = vmatprep.subr.mxu0 0.0
    %844 = vmatpush1.xpose.msra.mxu0 0.0
    %845 = vmatprep.subr.mxu0 0.0
    %846 = vmatpush1.xpose.msra.mxu0 0.0
    %847 = vmatprep.subr.mxu0 0.0
    %848 = vmatpush1.xpose.msra.mxu0 0.0
    %849 = vmatprep.subr.mxu0 0.0
    %850 = vmatpush1.xpose.msra.mxu0 0.0
    %851 = vmatprep.subr.mxu0 0.0
    %852 = vmatpush1.xpose.msra.mxu0 0.0
    %853 = vmatprep.subr.mxu0 0.0
    %854 = vmatpush1.xpose.msra.mxu0 0.0
    %855 = vmatprep.subr.mxu0 0.0
    %856 = vmatpush1.xpose.msra.mxu0 0.0
    %857 = vmatprep.subr.mxu0 0.0
    %858 = vmatpush1.xpose.msra.mxu0 0.0
    %859 = vmatprep.subr.mxu0 0.0
    %860 = vmatpush1.xpose.msra.mxu0 0.0
    %861 = vmatprep.subr.mxu0 0.0
    %862 = vmatpush1.xpose.msra.mxu0 0.0
    %863 = vmatprep.subr.mxu0 0.0
    %864 = vmatpush1.xpose.msra.mxu0 0.0
    %865 = vmatprep.subr.mxu0 0.0
    %866 = vmatpush1.xpose.msra.mxu0 0.0
    %867 = vmatprep.subr.mxu0 0.0
    %868 = vmatpush1.xpose.msra.mxu0 0.0
    %869 = vmatprep.subr.mxu0 0.0
    %870 = vmatpush1.xpose.msra.mxu0 0.0
    %871 = vmatprep.subr.mxu0 0.0
    %872 = vmatpush1.xpose.msra.mxu0 0.0
    %873 = vmatprep.subr.mxu0 0.0
    %874 = vmatpush1.xpose.msra.mxu0 0.0
    %875 = vmatprep.subr.mxu0 0.0
    %876 = vmatpush1.xpose.msra.mxu0 0.0
    %877 = vmatprep.mubr.f32.mxu0 0.0
    %878 = vmatmul.mubr.f32.gmra.mrb[0].mxu0 %v805
    %v879 = vpop.f32.mrb[0].mxu0
    %v880 = vadd.f32 %v39, %v879
    %v881 = vpop.f32.mrb[0].mxu0
    %882 = vmatprep.mubr.f32.mxu0 0.0
    %883 = vmatmul.mubr.f32.gmra.mrb[0].mxu0 %v807
    %v884 = vpop.f32.mrb[0].mxu0
    %v885 = vadd.f32 %v40, %v884
    %v886 = vpop.f32.mrb[0].mxu0
    %887 = vdwg.mxu0
    %v888 = vsel %vm287, %v880, -inf
    %889 = vmax.xlane.f32.xlu0 %v888
    %v890 = vpop.xlane.xlu0 %889
    %v891 = vsel %vm287, %v885, -inf
    %892 = vmax.xlane.f32.xlu0 %v891
    %v893 = vpop.xlane.xlu0 %892
    %v894 = vsub.f32 %v880, %v890
    %v895 = vsub.f32 %v885, %v893
    %v896 = vmul.f32 %v894, 1.442695
    %v897 = vpow.pop %v896
    %v898 = vmul.f32 %v895, 1.442695
    %v899 = vpow.pop %v898
    %v900 = vsel %vm287, %v897, 0.0
    %901 = vadd.xlane.f32.xlu0 %v900
    %v902 = vpop.xlane.xlu0 %901
    %v903 = vsel %vm287, %v899, 0.0
    %904 = vadd.xlane.f32.xlu0 %v903
    %v905 = vpop.xlane.xlu0 %904
    %v906 = vrcp.pop %v902
    %v907 = vrcp.pop %v905
    %v908 = vmul.f32 %v897, %v906
    %v909 = vmul.f32 %v899, %v907
    %910 = vrot.lane.b32.xlu0 %v189, 40
    %v911 = vpop.permute.xlu0 %910
    %912 = vrot.lane.b32.xlu0 %v194, 40
    %v913 = vpop.permute.xlu0 %912
    %v917 = vsel %vm287, %v908, 0
    %v920 = vsel %vm287, %v909, 0
    %922 = vmatprep.subr.mxu0 0.0
    %923 = vmatpush1.msra.mxu0 %v911
    %924 = vmatprep.subr.mxu0 0.0
    %925 = vmatpush1.msra.mxu0 %v913
    %926 = vmatprep.subr.mxu0 0.0
    %927 = vmatpush1.msra.mxu0 0.0
    %928 = vmatprep.subr.mxu0 0.0
    %929 = vmatpush1.msra.mxu0 0.0
    %930 = vmatprep.subr.mxu0 0.0
    %931 = vmatpush1.msra.mxu0 0.0
    %932 = vmatprep.subr.mxu0 0.0
    %933 = vmatpush1.msra.mxu0 0.0
    %934 = vmatprep.subr.mxu0 0.0
    %935 = vmatpush1.msra.mxu0 0.0
    %936 = vmatprep.subr.mxu0 0.0
    %937 = vmatpush1.msra.mxu0 0.0
    %938 = vmatprep.subr.mxu0 0.0
    %939 = vmatpush1.msra.mxu0 0.0
    %940 = vmatprep.subr.mxu0 0.0
    %941 = vmatpush1.msra.mxu0 0.0
    %942 = vmatprep.subr.mxu0 0.0
    %943 = vmatpush1.msra.mxu0 0.0
    %944 = vmatprep.subr.mxu0 0.0
    %945 = vmatpush1.msra.mxu0 0.0
    %946 = vmatprep.subr.mxu0 0.0
    %947 = vmatpush1.msra.mxu0 0.0
    %948 = vmatprep.subr.mxu0 0.0
    %949 = vmatpush1.msra.mxu0 0.0
    %950 = vmatprep.subr.mxu0 0.0
    %951 = vmatpush1.msra.mxu0 0.0
    %952 = vmatprep.subr.mxu0 0.0
    %953 = vmatpush1.msra.mxu0 0.0
    %954 = vmatprep.subr.mxu0 0.0
    %955 = vmatpush1.msra.mxu0 0.0
    %956 = vmatprep.subr.mxu0 0.0
    %957 = vmatpush1.msra.mxu0 0.0
    %958 = vmatprep.subr.mxu0 0.0
    %959 = vmatpush1.msra.mxu0 0.0
    %960 = vmatprep.subr.mxu0 0.0
    %961 = vmatpush1.msra.mxu0 0.0
    %962 = vmatprep.subr.mxu0 0.0
    %963 = vmatpush1.msra.mxu0 0.0
    %964 = vmatprep.subr.mxu0 0.0
    %965 = vmatpush1.msra.mxu0 0.0
    %966 = vmatprep.subr.mxu0 0.0
    %967 = vmatpush1.msra.mxu0 0.0
    %968 = vmatprep.subr.mxu0 0.0
    %969 = vmatpush1.msra.mxu0 0.0
    %970 = vmatprep.subr.mxu0 0.0
    %971 = vmatpush1.msra.mxu0 0.0
    %972 = vmatprep.subr.mxu0 0.0
    %973 = vmatpush1.msra.mxu0 0.0
    %974 = vmatprep.subr.mxu0 0.0
    %975 = vmatpush1.msra.mxu0 0.0
    %976 = vmatprep.subr.mxu0 0.0
    %977 = vmatpush1.msra.mxu0 0.0
    %978 = vmatprep.subr.mxu0 0.0
    %979 = vmatpush1.msra.mxu0 0.0
    %980 = vmatprep.subr.mxu0 0.0
    %981 = vmatpush1.msra.mxu0 0.0
    %982 = vmatprep.subr.mxu0 0.0
    %983 = vmatpush1.msra.mxu0 0.0
    %984 = vmatprep.subr.mxu0 0.0
    %985 = vmatpush1.msra.mxu0 0.0
    %986 = vmatprep.mubr.f32.mxu0 0.0
    %987 = vmatmul.mubr.f32.gmra.mrb[0].mxu0 %v917
    %v988 = vpop.f32.mrb[0].mxu0
    %v989 = vadd.f32 0.0, %v988
    %v990 = vpop.f32.mrb[0].mxu0
    %991 = vmatprep.mubr.f32.mxu0 0.0
    %992 = vmatmul.mubr.f32.gmra.mrb[0].mxu0 %v920
    %v993 = vpop.f32.mrb[0].mxu0
    %v994 = vadd.f32 0.0, %v993
    %v995 = vpop.f32.mrb[0].mxu0
    %996 = vdwg.mxu0
    %999 = vrot.lane.b32.xlu0 %v589, 8
    %v1000 = vpop.permute.xlu0 %999
    %1001 = vrot.lane.b32.xlu0 %v594, 8
    %v1002 = vpop.permute.xlu0 %1001
    %1007 = vrot.lane.b32.xlu0 %v789, 16
    %v1008 = vpop.permute.xlu0 %1007
    %1009 = vrot.lane.b32.xlu0 %v794, 16
    %v1010 = vpop.permute.xlu0 %1009
    %1015 = vrot.lane.b32.xlu0 %v989, 24
    %v1016 = vpop.permute.xlu0 %1015
    %1017 = vrot.lane.b32.xlu0 %v994, 24
    %v1018 = vpop.permute.xlu0 %1017
    %v1021 = vsel %vm203, %v389, %v1000
    %v1022 = vsel %vm203, %v394, %v1002
    %v1023 = vsel %vm287, %v1021, %v1008
    %v1024 = vsel %vm287, %v1022, %v1010
    %vm1025 = vcmask 195584
    %v1026 = vsel %vm1025, %v1023, %v1016
    %v1027 = vsel %vm1025, %v1024, %v1018
    %1032 = vrot.lane.b32.xlu0 %v41, 32
    %v1033 = vpop.permute.xlu0 %1032
    %1034 = vrot.lane.b32.xlu0 %v42, 32
    %v1035 = vpop.permute.xlu0 %1034
    %1036 = vrot.lane.b32.xlu0 %v43, 32
    %v1037 = vpop.permute.xlu0 %1036
    %1038 = vrot.lane.b32.xlu0 %v44, 32
    %v1039 = vpop.permute.xlu0 %1038
    %1045 = vrot.lane.b32.xlu0 %v115, 32
    %v1046 = vpop.permute.xlu0 %1045
    %v1049 = vsel %vm58, %v1026, 0
    %v1052 = vsel %vm58, %v1027, 0
    %1054 = vmatprep.subr.mxu0 0.0
    %1055 = vmatpush1.msra.mxu0 %v1033
    %1056 = vmatprep.subr.mxu0 0.0
    %1057 = vmatpush1.msra.mxu0 %v1035
    %1058 = vmatprep.subr.mxu0 0.0
    %1059 = vmatpush1.msra.mxu0 %v1037
    %1060 = vmatprep.subr.mxu0 0.0
    %1061 = vmatpush1.msra.mxu0 %v1039
    %1062 = vmatprep.subr.mxu0 0.0
    %1063 = vmatpush1.msra.mxu0 0.0
    %1064 = vmatprep.subr.mxu0 0.0
    %1065 = vmatpush1.msra.mxu0 0.0
    %1066 = vmatprep.subr.mxu0 0.0
    %1067 = vmatpush1.msra.mxu0 0.0
    %1068 = vmatprep.subr.mxu0 0.0
    %1069 = vmatpush1.msra.mxu0 0.0
    %1070 = vmatprep.subr.mxu0 0.0
    %1071 = vmatpush1.msra.mxu0 0.0
    %1072 = vmatprep.subr.mxu0 0.0
    %1073 = vmatpush1.msra.mxu0 0.0
    %1074 = vmatprep.subr.mxu0 0.0
    %1075 = vmatpush1.msra.mxu0 0.0
    %1076 = vmatprep.subr.mxu0 0.0
    %1077 = vmatpush1.msra.mxu0 0.0
    %1078 = vmatprep.subr.mxu0 0.0
    %1079 = vmatpush1.msra.mxu0 0.0
    %1080 = vmatprep.subr.mxu0 0.0
    %1081 = vmatpush1.msra.mxu0 0.0
    %1082 = vmatprep.subr.mxu0 0.0
    %1083 = vmatpush1.msra.mxu0 0.0
    %1084 = vmatprep.subr.mxu0 0.0
    %1085 = vmatpush1.msra.mxu0 0.0
    %1086 = vmatprep.subr.mxu0 0.0
    %1087 = vmatpush1.msra.mxu0 0.0
    %1088 = vmatprep.subr.mxu0 0.0
    %1089 = vmatpush1.msra.mxu0 0.0
    %1090 = vmatprep.subr.mxu0 0.0
    %1091 = vmatpush1.msra.mxu0 0.0
    %1092 = vmatprep.subr.mxu0 0.0
    %1093 = vmatpush1.msra.mxu0 0.0
    %1094 = vmatprep.subr.mxu0 0.0
    %1095 = vmatpush1.msra.mxu0 0.0
    %1096 = vmatprep.subr.mxu0 0.0
    %1097 = vmatpush1.msra.mxu0 0.0
    %1098 = vmatprep.subr.mxu0 0.0
    %1099 = vmatpush1.msra.mxu0 0.0
    %1100 = vmatprep.subr.mxu0 0.0
    %1101 = vmatpush1.msra.mxu0 0.0
    %1102 = vmatprep.subr.mxu0 0.0
    %1103 = vmatpush1.msra.mxu0 0.0
    %1104 = vmatprep.subr.mxu0 0.0
    %1105 = vmatpush1.msra.mxu0 0.0
    %1106 = vmatprep.subr.mxu0 0.0
    %1107 = vmatpush1.msra.mxu0 0.0
    %1108 = vmatprep.subr.mxu0 0.0
    %1109 = vmatpush1.msra.mxu0 0.0
    %1110 = vmatprep.subr.mxu0 0.0
    %1111 = vmatpush1.msra.mxu0 0.0
    %1112 = vmatprep.subr.mxu0 0.0
    %1113 = vmatpush1.msra.mxu0 0.0
    %1114 = vmatprep.subr.mxu0 0.0
    %1115 = vmatpush1.msra.mxu0 0.0
    %1116 = vmatprep.subr.mxu0 0.0
    %1117 = vmatpush1.msra.mxu0 0.0
    %1118 = vmatprep.mubr.f32.mxu0 0.0
    %1119 = vmatmul.mubr.f32.gmra.mrb[0].mxu0 %v1049
    %v1120 = vpop.f32.mrb[0].mxu0
    %v1121 = vadd.f32 %v1046, %v1120
    %v1122 = vpop.f32.mrb[0].mxu0
    %1123 = vmatprep.mubr.f32.mxu0 0.0
    %1124 = vmatmul.mubr.f32.gmra.mrb[0].mxu0 %v1052
    %v1125 = vpop.f32.mrb[0].mxu0
    %v1126 = vadd.f32 %v1046, %v1125
    %v1127 = vpop.f32.mrb[0].mxu0
    %1128 = vdwg.mxu0
    %v1129 = vadd.f32 %v37, %v1121
    %v1130 = vadd.f32 %v38, %v1126
    %v1131 = vsel %vm58, %v1129, 0.0
    %1132 = vadd.xlane.f32.xlu0 %v1131
    %v1133 = vpop.xlane.xlu0 %1132
    %v1134 = vsel %vm58, %v1130, 0.0
    %1135 = vadd.xlane.f32.xlu0 %v1134
    %v1136 = vpop.xlane.xlu0 %1135
    %v1137 = vmul.f32 %v1133, %v65
    %v1138 = vmul.f32 %v1136, %v65
    %v1139 = vsub.f32 %v1129, %v1137
    %v1140 = vsub.f32 %v1130, %v1138
    %v1141 = vmul.f32 %v1139, %v1139
    %v1142 = vmul.f32 %v1140, %v1140
    %v1143 = vsel %vm58, %v1141, 0.0
    %1144 = vadd.xlane.f32.xlu0 %v1143
    %v1145 = vpop.xlane.xlu0 %1144
    %v1146 = vsel %vm58, %v1142, 0.0
    %1147 = vadd.xlane.f32.xlu0 %v1146
    %v1148 = vpop.xlane.xlu0 %1147
    %v1149 = vmul.f32 %v1145, 0.032258064
    %v1150 = vmul.f32 %v1148, 0.032258064
    %v1151 = vrsqrt.pop %v1149
    %v1152 = vmul.f32 %v1149, %v1151
    %vm1153 = vcmp.eq.f32.partialorder %v1149, inf
    %v1154 = vsel %vm1153, %v1149, %v1152
    %vm1155 = vcmp.eq.f32.partialorder %v1149, 0.0
    %v1156 = vand.u32 %v1149, 2147483648
    %v1157 = vsel %vm1155, %v1156, %v1154
    %v1158 = vrsqrt.pop %v1150
    %v1159 = vmul.f32 %v1150, %v1158
    %vm1160 = vcmp.eq.f32.partialorder %v1150, inf
    %v1161 = vsel %vm1160, %v1150, %v1159
    %vm1162 = vcmp.eq.f32.partialorder %v1150, 0.0
    %v1163 = vand.u32 %v1150, 2147483648
    %v1164 = vsel %vm1162, %v1163, %v1161
    %v1165 = vadd.f32 %v1157, 1e-06
    %v1166 = vadd.f32 %v1164, 1e-06
    %v1167 = vrcp.pop %v1165
    %v1168 = vrcp.pop %v1166
    %1171 = vrot.lane.b32.xlu0 %v1139, 64
    %v1172 = vpop.permute.xlu0 %1171
    %1173 = vrot.lane.b32.xlu0 %v1140, 64
    %v1174 = vpop.permute.xlu0 %1173
    %v1177 = vmul.f32 %v101, %v1172
    %v1178 = vmul.f32 %v101, %v1174
    %v1179 = vmul.f32 %v1177, %v1167
    %v1180 = vmul.f32 %v1178, %v1168
    %v1181 = vadd.f32 %v1179, %v108
    %v1182 = vadd.f32 %v1180, %v108
    %v1183 = vlaneseq
    %v1184 = vshrl.u32 %v1183, 7
    %v1185 = vsub.s32 1, %v1184
    %v1186 = vrot.slane %v57, %v1185
    %1189 = vrot.lane.b32.xlu0 %v1181, 64
    %v1190 = vpop.permute.xlu0 %1189
    %1191 = vrot.lane.b32.xlu0 %v1182, 64
    %v1192 = vpop.permute.xlu0 %1191
    %v1193 = vsel %vm58, %v1190, 0
    %v1195 = vsel %vm58, %v1192, 0
    %1197 = vmatprep.subr.mxu0 0.0
    %1198 = vmatpush1.msra.mxu0 %v45
    %1199 = vmatprep.subr.mxu0 0.0
    %1200 = vmatpush1.msra.mxu0 %v46
    %1201 = vmatprep.subr.mxu0 0.0
    %1202 = vmatpush1.msra.mxu0 %v47
    %1203 = vmatprep.subr.mxu0 0.0
    %1204 = vmatpush1.msra.mxu0 %v48
    %1205 = vmatprep.subr.mxu0 0.0
    %1206 = vmatpush1.msra.mxu0 0.0
    %1207 = vmatprep.subr.mxu0 0.0
    %1208 = vmatpush1.msra.mxu0 0.0
    %1209 = vmatprep.subr.mxu0 0.0
    %1210 = vmatpush1.msra.mxu0 0.0
    %1211 = vmatprep.subr.mxu0 0.0
    %1212 = vmatpush1.msra.mxu0 0.0
    %1213 = vmatprep.subr.mxu0 0.0
    %1214 = vmatpush1.msra.mxu0 0.0
    %1215 = vmatprep.subr.mxu0 0.0
    %1216 = vmatpush1.msra.mxu0 0.0
    %1217 = vmatprep.subr.mxu0 0.0
    %1218 = vmatpush1.msra.mxu0 0.0
    %1219 = vmatprep.subr.mxu0 0.0
    %1220 = vmatpush1.msra.mxu0 0.0
    %1221 = vmatprep.subr.mxu0 0.0
    %1222 = vmatpush1.msra.mxu0 0.0
    %1223 = vmatprep.subr.mxu0 0.0
    %1224 = vmatpush1.msra.mxu0 0.0
    %1225 = vmatprep.subr.mxu0 0.0
    %1226 = vmatpush1.msra.mxu0 0.0
    %1227 = vmatprep.subr.mxu0 0.0
    %1228 = vmatpush1.msra.mxu0 0.0
    %1229 = vmatprep.subr.mxu0 0.0
    %1230 = vmatpush1.msra.mxu0 0.0
    %1231 = vmatprep.subr.mxu0 0.0
    %1232 = vmatpush1.msra.mxu0 0.0
    %1233 = vmatprep.subr.mxu0 0.0
    %1234 = vmatpush1.msra.mxu0 0.0
    %1235 = vmatprep.subr.mxu0 0.0
    %1236 = vmatpush1.msra.mxu0 0.0
    %1237 = vmatprep.subr.mxu0 0.0
    %1238 = vmatpush1.msra.mxu0 0.0
    %1239 = vmatprep.subr.mxu0 0.0
    %1240 = vmatpush1.msra.mxu0 0.0
    %1241 = vmatprep.subr.mxu0 0.0
    %1242 = vmatpush1.msra.mxu0 0.0
    %1243 = vmatprep.subr.mxu0 0.0
    %1244 = vmatpush1.msra.mxu0 0.0
    %1245 = vmatprep.subr.mxu0 0.0
    %1246 = vmatpush1.msra.mxu0 0.0
    %1247 = vmatprep.subr.mxu0 0.0
    %1248 = vmatpush1.msra.mxu0 0.0
    %1249 = vmatprep.subr.mxu0 0.0
    %1250 = vmatpush1.msra.mxu0 0.0
    %1251 = vmatprep.subr.mxu0 0.0
    %1252 = vmatpush1.msra.mxu0 0.0
    %1253 = vmatprep.subr.mxu0 0.0
    %1254 = vmatpush1.msra.mxu0 0.0
    %1255 = vmatprep.subr.mxu0 0.0
    %1256 = vmatpush1.msra.mxu0 0.0
    %1257 = vmatprep.subr.mxu0 0.0
    %1258 = vmatpush1.msra.mxu0 0.0
    %1259 = vmatprep.subr.mxu0 0.0
    %1260 = vmatpush1.msra.mxu0 0.0
    %1261 = vmatprep.mubr.f32.mxu0 0.0
    %1262 = vmatmul.mubr.f32.gmra.mrb[0].mxu0 %v1193
    %v1263 = vpop.f32.mrb[0].mxu0
    %v1264 = vadd.f32 %v1186, %v1263
    %v1265 = vpop.f32.mrb[0].mxu0
    %1266 = vmatprep.mubr.f32.mxu0 0.0
    %1267 = vmatmul.mubr.f32.gmra.mrb[0].mxu0 %v1195
    %v1268 = vpop.f32.mrb[0].mxu0
    %v1269 = vadd.f32 %v1186, %v1268
    %v1270 = vpop.f32.mrb[0].mxu0
    %1271 = vdwg.mxu0
    %v1272 = vmax.f32 %v1264, 0.0
    %v1273 = vmax.f32 %v1269, 0.0
    %vm1274 = vcmask 523264
    %v1276 = vsel %vm1274, %v1272, 0
    %v1279 = vsel %vm1274, %v1273, 0
    %1281 = vmatprep.subr.mxu0 0.0
    %1282 = vmatpush1.msra.mxu0 %v49
    %1283 = vmatprep.subr.mxu0 0.0
    %1284 = vmatpush1.msra.mxu0 %v50
    %1285 = vmatprep.subr.mxu0 0.0
    %1286 = vmatpush1.msra.mxu0 %v51
    %1287 = vmatprep.subr.mxu0 0.0
    %1288 = vmatpush1.msra.mxu0 %v52
    %1289 = vmatprep.subr.mxu0 0.0
    %1290 = vmatpush1.msra.mxu0 %v53
    %1291 = vmatprep.subr.mxu0 0.0
    %1292 = vmatpush1.msra.mxu0 %v54
    %1293 = vmatprep.subr.mxu0 0.0
    %1294 = vmatpush1.msra.mxu0 %v55
    %1295 = vmatprep.subr.mxu0 0.0
    %1296 = vmatpush1.msra.mxu0 %v56
    %1297 = vmatprep.subr.mxu0 0.0
    %1298 = vmatpush1.msra.mxu0 0.0
    %1299 = vmatprep.subr.mxu0 0.0
    %1300 = vmatpush1.msra.mxu0 0.0
    %1301 = vmatprep.subr.mxu0 0.0
    %1302 = vmatpush1.msra.mxu0 0.0
    %1303 = vmatprep.subr.mxu0 0.0
    %1304 = vmatpush1.msra.mxu0 0.0
    %1305 = vmatprep.subr.mxu0 0.0
    %1306 = vmatpush1.msra.mxu0 0.0
    %1307 = vmatprep.subr.mxu0 0.0
    %1308 = vmatpush1.msra.mxu0 0.0
    %1309 = vmatprep.subr.mxu0 0.0
    %1310 = vmatpush1.msra.mxu0 0.0
    %1311 = vmatprep.subr.mxu0 0.0
    %1312 = vmatpush1.msra.mxu0 0.0
    %1313 = vmatprep.subr.mxu0 0.0
    %1314 = vmatpush1.msra.mxu0 0.0
    %1315 = vmatprep.subr.mxu0 0.0
    %1316 = vmatpush1.msra.mxu0 0.0
    %1317 = vmatprep.subr.mxu0 0.0
    %1318 = vmatpush1.msra.mxu0 0.0
    %1319 = vmatprep.subr.mxu0 0.0
    %1320 = vmatpush1.msra.mxu0 0.0
    %1321 = vmatprep.subr.mxu0 0.0
    %1322 = vmatpush1.msra.mxu0 0.0
    %1323 = vmatprep.subr.mxu0 0.0
    %1324 = vmatpush1.msra.mxu0 0.0
    %1325 = vmatprep.subr.mxu0 0.0
    %1326 = vmatpush1.msra.mxu0 0.0
    %1327 = vmatprep.subr.mxu0 0.0
    %1328 = vmatpush1.msra.mxu0 0.0
    %1329 = vmatprep.subr.mxu0 0.0
    %1330 = vmatpush1.msra.mxu0 0.0
    %1331 = vmatprep.subr.mxu0 0.0
    %1332 = vmatpush1.msra.mxu0 0.0
    %1333 = vmatprep.subr.mxu0 0.0
    %1334 = vmatpush1.msra.mxu0 0.0
    %1335 = vmatprep.subr.mxu0 0.0
    %1336 = vmatpush1.msra.mxu0 0.0
    %1337 = vmatprep.subr.mxu0 0.0
    %1338 = vmatpush1.msra.mxu0 0.0
    %1339 = vmatprep.subr.mxu0 0.0
    %1340 = vmatpush1.msra.mxu0 0.0
    %1341 = vmatprep.subr.mxu0 0.0
    %1342 = vmatpush1.msra.mxu0 0.0
    %1343 = vmatprep.subr.mxu0 0.0
    %1344 = vmatpush1.msra.mxu0 0.0
    %1345 = vmatprep.mubr.f32.mxu0 0.0
    %1346 = vmatmul.mubr.f32.gmra.mrb[0].mxu0 %v1276
    %v1347 = vpop.f32.mrb[0].mxu0
    %v1348 = vadd.f32 0.0, %v1347
    %v1349 = vpop.f32.mrb[0].mxu0
    %1350 = vmatprep.mubr.f32.mxu0 0.0
    %1351 = vmatmul.mubr.f32.gmra.mrb[0].mxu0 %v1279
    %v1352 = vpop.f32.mrb[0].mxu0
    %v1353 = vadd.f32 0.0, %v1352
    %v1354 = vpop.f32.mrb[0].mxu0
    %1355 = vdwg.mxu0
    %v1356 = vadd.f32 %v1129, %v1348
    %v1357 = vadd.f32 %v1130, %v1353
    %1359 = vrot.lane.b32.xlu0 %v1186, 64
    %v1360 = vpop.permute.xlu0 %1359
    %v1362 = vadd.f32 %v1356, %v1360
    %v1363 = vadd.f32 %v1357, %v1360
    %s1364 = scalar_lea.vmem %s5, 128
    %v1365 = vld [vmem:[%s1364] sm:$0xff]
    %v1366 = vld [vmem:[%s1364 + $0x8] sm:$0xff]
    %v1367 = vld [vmem:[%s1364 + $0x10] sm:$0xff]
    %v1368 = vld [vmem:[%s1364 + $0x18] sm:$0xff]
    %v1369 = vld [vmem:[%s1364 + $0x20] sm:$0xff]
    %v1370 = vld [vmem:[%s1364 + $0x28] sm:$0xff]
    %v1371 = vld [vmem:[%s1364 + $0x30] sm:$0xff]
    %v1372 = vld [vmem:[%s1364 + $0x38] sm:$0xff]
    %v1373 = vld [vmem:[%s1364 + $0x40] sm:$0xff]
    %v1374 = vld [vmem:[%s1364 + $0x48] sm:$0xff]
    %v1375 = vld [vmem:[%s1364 + $0x50] sm:$0xff]
    %v1376 = vld [vmem:[%s1364 + $0x58] sm:$0xff]
    %v1377 = vld [vmem:[%s1364 + $0x60] sm:$0xff]
    %v1378 = vld [vmem:[%s1364 + $0x68] sm:$0xff]
    %v1379 = vld [vmem:[%s1364 + $0x70] sm:$0xff]
    %v1380 = vld [vmem:[%s1364 + $0x78] sm:$0xff]
    %s1381 = scalar_lea.vmem %s6, 8
    %v1382 = vld [vmem:[%s1381] sm:$0xff]
    %v1383 = vsel %vm58, %v1362, 0.0
    %1384 = vadd.xlane.f32.xlu0 %v1383
    %v1385 = vpop.xlane.xlu0 %1384
    %v1386 = vsel %vm58, %v1363, 0.0
    %1387 = vadd.xlane.f32.xlu0 %v1386
    %v1388 = vpop.xlane.xlu0 %1387
    %v1389 = vmul.f32 %v1385, %v65
    %v1390 = vmul.f32 %v1388, %v65
    %v1391 = vsub.f32 %v1362, %v1389
    %v1392 = vsub.f32 %v1363, %v1390
    %v1393 = vmul.f32 %v1391, %v1391
    %v1394 = vmul.f32 %v1392, %v1392
    %v1395 = vsel %vm58, %v1393, 0.0
    %1396 = vadd.xlane.f32.xlu0 %v1395
    %v1397 = vpop.xlane.xlu0 %1396
    %v1398 = vsel %vm58, %v1394, 0.0
    %1399 = vadd.xlane.f32.xlu0 %v1398
    %v1400 = vpop.xlane.xlu0 %1399
    %v1401 = vmul.f32 %v1397, 0.032258064
    %v1402 = vmul.f32 %v1400, 0.032258064
    %v1403 = vrsqrt.pop %v1401
    %v1404 = vmul.f32 %v1401, %v1403
    %vm1405 = vcmp.eq.f32.partialorder %v1401, inf
    %v1406 = vsel %vm1405, %v1401, %v1404
    %vm1407 = vcmp.eq.f32.partialorder %v1401, 0.0
    %v1408 = vand.u32 %v1401, 2147483648
    %v1409 = vsel %vm1407, %v1408, %v1406
    %v1410 = vrsqrt.pop %v1402
    %v1411 = vmul.f32 %v1402, %v1410
    %vm1412 = vcmp.eq.f32.partialorder %v1402, inf
    %v1413 = vsel %vm1412, %v1402, %v1411
    %vm1414 = vcmp.eq.f32.partialorder %v1402, 0.0
    %v1415 = vand.u32 %v1402, 2147483648
    %v1416 = vsel %vm1414, %v1415, %v1413
    %v1417 = vadd.f32 %v1409, 1e-06
    %v1418 = vadd.f32 %v1416, 1e-06
    %v1419 = vrcp.pop %v1417
    %v1420 = vrcp.pop %v1418
    %v1421 = vlaneseq
    %v1422 = vshrl.u32 %v1421, 7
    %v1423 = vsub.s32 2, %v1422
    %v1424 = vrot.slane %v1382, %v1423
    %v1425 = vmul.f32 %v1424, %v1391
    %v1426 = vmul.f32 %v1424, %v1392
    %v1427 = vmul.f32 %v1425, %v1419
    %v1428 = vmul.f32 %v1426, %v1420
    %1430 = vrot.lane.b32.xlu0 %v1424, 96
    %v1431 = vpop.permute.xlu0 %1430
    %v1433 = vadd.f32 %v1427, %v1431
    %v1434 = vadd.f32 %v1428, %v1431
    %v1435 = vlaneseq
    %v1436 = vshrl.u32 %v1435, 7
    %v1437 = vsub.s32 0, %v1436
    %v1438 = vrot.slane %v1382, %v1437
    %v1440 = vsel %vm58, %v1433, 0
    %v1443 = vsel %vm58, %v1434, 0
    %1445 = vmatprep.subr.mxu0 0.0
    %1446 = vmatpush1.msra.mxu0 %v1365
    %1447 = vmatprep.subr.mxu0 0.0
    %1448 = vmatpush1.msra.mxu0 %v1366
    %1449 = vmatprep.subr.mxu0 0.0
    %1450 = vmatpush1.msra.mxu0 %v1367
    %1451 = vmatprep.subr.mxu0 0.0
    %1452 = vmatpush1.msra.mxu0 %v1368
    %1453 = vmatprep.subr.mxu0 0.0
    %1454 = vmatpush1.msra.mxu0 0.0
    %1455 = vmatprep.subr.mxu0 0.0
    %1456 = vmatpush1.msra.mxu0 0.0
    %1457 = vmatprep.subr.mxu0 0.0
    %1458 = vmatpush1.msra.mxu0 0.0
    %1459 = vmatprep.subr.mxu0 0.0
    %1460 = vmatpush1.msra.mxu0 0.0
    %1461 = vmatprep.subr.mxu0 0.0
    %1462 = vmatpush1.msra.mxu0 0.0
    %1463 = vmatprep.subr.mxu0 0.0
    %1464 = vmatpush1.msra.mxu0 0.0
    %1465 = vmatprep.subr.mxu0 0.0
    %1466 = vmatpush1.msra.mxu0 0.0
    %1467 = vmatprep.subr.mxu0 0.0
    %1468 = vmatpush1.msra.mxu0 0.0
    %1469 = vmatprep.subr.mxu0 0.0
    %1470 = vmatpush1.msra.mxu0 0.0
    %1471 = vmatprep.subr.mxu0 0.0
    %1472 = vmatpush1.msra.mxu0 0.0
    %1473 = vmatprep.subr.mxu0 0.0
    %1474 = vmatpush1.msra.mxu0 0.0
    %1475 = vmatprep.subr.mxu0 0.0
    %1476 = vmatpush1.msra.mxu0 0.0
    %1477 = vmatprep.subr.mxu0 0.0
    %1478 = vmatpush1.msra.mxu0 0.0
    %1479 = vmatprep.subr.mxu0 0.0
    %1480 = vmatpush1.msra.mxu0 0.0
    %1481 = vmatprep.subr.mxu0 0.0
    %1482 = vmatpush1.msra.mxu0 0.0
    %1483 = vmatprep.subr.mxu0 0.0
    %1484 = vmatpush1.msra.mxu0 0.0
    %1485 = vmatprep.subr.mxu0 0.0
    %1486 = vmatpush1.msra.mxu0 0.0
    %1487 = vmatprep.subr.mxu0 0.0
    %1488 = vmatpush1.msra.mxu0 0.0
    %1489 = vmatprep.subr.mxu0 0.0
    %1490 = vmatpush1.msra.mxu0 0.0
    %1491 = vmatprep.subr.mxu0 0.0
    %1492 = vmatpush1.msra.mxu0 0.0
    %1493 = vmatprep.subr.mxu0 0.0
    %1494 = vmatpush1.msra.mxu0 0.0
    %1495 = vmatprep.subr.mxu0 0.0
    %1496 = vmatpush1.msra.mxu0 0.0
    %1497 = vmatprep.subr.mxu0 0.0
    %1498 = vmatpush1.msra.mxu0 0.0
    %1499 = vmatprep.subr.mxu0 0.0
    %1500 = vmatpush1.msra.mxu0 0.0
    %1501 = vmatprep.subr.mxu0 0.0
    %1502 = vmatpush1.msra.mxu0 0.0
    %1503 = vmatprep.subr.mxu0 0.0
    %1504 = vmatpush1.msra.mxu0 0.0
    %1505 = vmatprep.subr.mxu0 0.0
    %1506 = vmatpush1.msra.mxu0 0.0
    %1507 = vmatprep.subr.mxu0 0.0
    %1508 = vmatpush1.msra.mxu0 0.0
    %1509 = vmatprep.mubr.f32.mxu0 0.0
    %1510 = vmatmul.mubr.f32.gmra.mrb[0].mxu0 %v1440
    %v1511 = vpop.f32.mrb[0].mxu0
    %v1512 = vadd.f32 %v1438, %v1511
    %v1513 = vpop.f32.mrb[0].mxu0
    %1514 = vmatprep.mubr.f32.mxu0 0.0
    %1515 = vmatmul.mubr.f32.gmra.mrb[0].mxu0 %v1443
    %v1516 = vpop.f32.mrb[0].mxu0
    %v1517 = vadd.f32 %v1438, %v1516
    %v1518 = vpop.f32.mrb[0].mxu0
    %1519 = vdwg.mxu0
    %1522 = vrot.lane.b32.xlu0 %v1512, 96
    %v1523 = vpop.permute.xlu0 %1522
    %1524 = vrot.lane.b32.xlu0 %v1517, 96
    %v1525 = vpop.permute.xlu0 %1524
    %v1526 = vsel %vm203, %v1512, 0
    %v1528 = vsel %vm203, %v1517, 0
    %v1530 = vsel %vm203, %v1523, 0
    %v1532 = vsel %vm203, %v1525, 0
    %1534 = vmatprep.subr.mxu0 0.0
    %1535 = vmatpush1.xpose.msra.mxu0 %v1530
    %1536 = vmatprep.subr.mxu0 0.0
    %1537 = vmatpush1.xpose.msra.mxu0 %v1532
    %1538 = vmatprep.subr.mxu0 0.0
    %1539 = vmatpush1.xpose.msra.mxu0 0.0
    %1540 = vmatprep.subr.mxu0 0.0
    %1541 = vmatpush1.xpose.msra.mxu0 0.0
    %1542 = vmatprep.subr.mxu0 0.0
    %1543 = vmatpush1.xpose.msra.mxu0 0.0
    %1544 = vmatprep.subr.mxu0 0.0
    %1545 = vmatpush1.xpose.msra.mxu0 0.0
    %1546 = vmatprep.subr.mxu0 0.0
    %1547 = vmatpush1.xpose.msra.mxu0 0.0
    %1548 = vmatprep.subr.mxu0 0.0
    %1549 = vmatpush1.xpose.msra.mxu0 0.0
    %1550 = vmatprep.subr.mxu0 0.0
    %1551 = vmatpush1.xpose.msra.mxu0 0.0
    %1552 = vmatprep.subr.mxu0 0.0
    %1553 = vmatpush1.xpose.msra.mxu0 0.0
    %1554 = vmatprep.subr.mxu0 0.0
    %1555 = vmatpush1.xpose.msra.mxu0 0.0
    %1556 = vmatprep.subr.mxu0 0.0
    %1557 = vmatpush1.xpose.msra.mxu0 0.0
    %1558 = vmatprep.subr.mxu0 0.0
    %1559 = vmatpush1.xpose.msra.mxu0 0.0
    %1560 = vmatprep.subr.mxu0 0.0
    %1561 = vmatpush1.xpose.msra.mxu0 0.0
    %1562 = vmatprep.subr.mxu0 0.0
    %1563 = vmatpush1.xpose.msra.mxu0 0.0
    %1564 = vmatprep.subr.mxu0 0.0
    %1565 = vmatpush1.xpose.msra.mxu0 0.0
    %1566 = vmatprep.subr.mxu0 0.0
    %1567 = vmatpush1.xpose.msra.mxu0 0.0
    %1568 = vmatprep.subr.mxu0 0.0
    %1569 = vmatpush1.xpose.msra.mxu0 0.0
    %1570 = vmatprep.subr.mxu0 0.0
    %1571 = vmatpush1.xpose.msra.mxu0 0.0
    %1572 = vmatprep.subr.mxu0 0.0
    %1573 = vmatpush1.xpose.msra.mxu0 0.0
    %1574 = vmatprep.subr.mxu0 0.0
    %1575 = vmatpush1.xpose.msra.mxu0 0.0
    %1576 = vmatprep.subr.mxu0 0.0
    %1577 = vmatpush1.xpose.msra.mxu0 0.0
    %1578 = vmatprep.subr.mxu0 0.0
    %1579 = vmatpush1.xpose.msra.mxu0 0.0
    %1580 = vmatprep.subr.mxu0 0.0
    %1581 = vmatpush1.xpose.msra.mxu0 0.0
    %1582 = vmatprep.subr.mxu0 0.0
    %1583 = vmatpush1.xpose.msra.mxu0 0.0
    %1584 = vmatprep.subr.mxu0 0.0
    %1585 = vmatpush1.xpose.msra.mxu0 0.0
    %1586 = vmatprep.subr.mxu0 0.0
    %1587 = vmatpush1.xpose.msra.mxu0 0.0
    %1588 = vmatprep.subr.mxu0 0.0
    %1589 = vmatpush1.xpose.msra.mxu0 0.0
    %1590 = vmatprep.subr.mxu0 0.0
    %1591 = vmatpush1.xpose.msra.mxu0 0.0
    %1592 = vmatprep.subr.mxu0 0.0
    %1593 = vmatpush1.xpose.msra.mxu0 0.0
    %1594 = vmatprep.subr.mxu0 0.0
    %1595 = vmatpush1.xpose.msra.mxu0 0.0
    %1596 = vmatprep.subr.mxu0 0.0
    %1597 = vmatpush1.xpose.msra.mxu0 0.0
    %1598 = vmatprep.mubr.f32.mxu0 0.0
    %1599 = vmatmul.mubr.f32.gmra.mrb[0].mxu0 %v1526
    %v1600 = vpop.f32.mrb[0].mxu0
    %v1601 = vadd.f32 %v39, %v1600
    %v1602 = vpop.f32.mrb[0].mxu0
    %1603 = vmatprep.mubr.f32.mxu0 0.0
    %1604 = vmatmul.mubr.f32.gmra.mrb[0].mxu0 %v1528
    %v1605 = vpop.f32.mrb[0].mxu0
    %v1606 = vadd.f32 %v40, %v1605
    %v1607 = vpop.f32.mrb[0].mxu0
    %1608 = vdwg.mxu0
    %v1609 = vsel %vm287, %v1601, -inf
    %1610 = vmax.xlane.f32.xlu0 %v1609
    %v1611 = vpop.xlane.xlu0 %1610
    %v1612 = vsel %vm287, %v1606, -inf
    %1613 = vmax.xlane.f32.xlu0 %v1612
    %v1614 = vpop.xlane.xlu0 %1613
    %v1615 = vsub.f32 %v1601, %v1611
    %v1616 = vsub.f32 %v1606, %v1614
    %v1617 = vmul.f32 %v1615, 1.442695
    %v1618 = vpow.pop %v1617
    %v1619 = vmul.f32 %v1616, 1.442695
    %v1620 = vpow.pop %v1619
    %v1621 = vsel %vm287, %v1618, 0.0
    %1622 = vadd.xlane.f32.xlu0 %v1621
    %v1623 = vpop.xlane.xlu0 %1622
    %v1624 = vsel %vm287, %v1620, 0.0
    %1625 = vadd.xlane.f32.xlu0 %v1624
    %v1626 = vpop.xlane.xlu0 %1625
    %v1627 = vrcp.pop %v1623
    %v1628 = vrcp.pop %v1626
    %v1629 = vmul.f32 %v1618, %v1627
    %v1630 = vmul.f32 %v1620, %v1628
    %1631 = vrot.lane.b32.xlu0 %v1512, 64
    %v1632 = vpop.permute.xlu0 %1631
    %1633 = vrot.lane.b32.xlu0 %v1517, 64
    %v1634 = vpop.permute.xlu0 %1633
    %v1638 = vsel %vm287, %v1629, 0
    %v1641 = vsel %vm287, %v1630, 0
    %1643 = vmatprep.subr.mxu0 0.0
    %1644 = vmatpush1.msra.mxu0 %v1632
    %1645 = vmatprep.subr.mxu0 0.0
    %1646 = vmatpush1.msra.mxu0 %v1634
    %1647 = vmatprep.subr.mxu0 0.0
    %1648 = vmatpush1.msra.mxu0 0.0
    %1649 = vmatprep.subr.mxu0 0.0
    %1650 = vmatpush1.msra.mxu0 0.0
    %1651 = vmatprep.subr.mxu0 0.0
    %1652 = vmatpush1.msra.mxu0 0.0
    %1653 = vmatprep.subr.mxu0 0.0
    %1654 = vmatpush1.msra.mxu0 0.0
    %1655 = vmatprep.subr.mxu0 0.0
    %1656 = vmatpush1.msra.mxu0 0.0
    %1657 = vmatprep.subr.mxu0 0.0
    %1658 = vmatpush1.msra.mxu0 0.0
    %1659 = vmatprep.subr.mxu0 0.0
    %1660 = vmatpush1.msra.mxu0 0.0
    %1661 = vmatprep.subr.mxu0 0.0
    %1662 = vmatpush1.msra.mxu0 0.0
    %1663 = vmatprep.subr.mxu0 0.0
    %1664 = vmatpush1.msra.mxu0 0.0
    %1665 = vmatprep.subr.mxu0 0.0
    %1666 = vmatpush1.msra.mxu0 0.0
    %1667 = vmatprep.subr.mxu0 0.0
    %1668 = vmatpush1.msra.mxu0 0.0
    %1669 = vmatprep.subr.mxu0 0.0
    %1670 = vmatpush1.msra.mxu0 0.0
    %1671 = vmatprep.subr.mxu0 0.0
    %1672 = vmatpush1.msra.mxu0 0.0
    %1673 = vmatprep.subr.mxu0 0.0
    %1674 = vmatpush1.msra.mxu0 0.0
    %1675 = vmatprep.subr.mxu0 0.0
    %1676 = vmatpush1.msra.mxu0 0.0
    %1677 = vmatprep.subr.mxu0 0.0
    %1678 = vmatpush1.msra.mxu0 0.0
    %1679 = vmatprep.subr.mxu0 0.0
    %1680 = vmatpush1.msra.mxu0 0.0
    %1681 = vmatprep.subr.mxu0 0.0
    %1682 = vmatpush1.msra.mxu0 0.0
    %1683 = vmatprep.subr.mxu0 0.0
    %1684 = vmatpush1.msra.mxu0 0.0
    %1685 = vmatprep.subr.mxu0 0.0
    %1686 = vmatpush1.msra.mxu0 0.0
    %1687 = vmatprep.subr.mxu0 0.0
    %1688 = vmatpush1.msra.mxu0 0.0
    %1689 = vmatprep.subr.mxu0 0.0
    %1690 = vmatpush1.msra.mxu0 0.0
    %1691 = vmatprep.subr.mxu0 0.0
    %1692 = vmatpush1.msra.mxu0 0.0
    %1693 = vmatprep.subr.mxu0 0.0
    %1694 = vmatpush1.msra.mxu0 0.0
    %1695 = vmatprep.subr.mxu0 0.0
    %1696 = vmatpush1.msra.mxu0 0.0
    %1697 = vmatprep.subr.mxu0 0.0
    %1698 = vmatpush1.msra.mxu0 0.0
    %1699 = vmatprep.subr.mxu0 0.0
    %1700 = vmatpush1.msra.mxu0 0.0
    %1701 = vmatprep.subr.mxu0 0.0
    %1702 = vmatpush1.msra.mxu0 0.0
    %1703 = vmatprep.subr.mxu0 0.0
    %1704 = vmatpush1.msra.mxu0 0.0
    %1705 = vmatprep.subr.mxu0 0.0
    %1706 = vmatpush1.msra.mxu0 0.0
    %1707 = vmatprep.mubr.f32.mxu0 0.0
    %1708 = vmatmul.mubr.f32.gmra.mrb[0].mxu0 %v1638
    %v1709 = vpop.f32.mrb[0].mxu0
    %v1710 = vadd.f32 0.0, %v1709
    %v1711 = vpop.f32.mrb[0].mxu0
    %1712 = vmatprep.mubr.f32.mxu0 0.0
    %1713 = vmatmul.mubr.f32.gmra.mrb[0].mxu0 %v1641
    %v1714 = vpop.f32.mrb[0].mxu0
    %v1715 = vadd.f32 0.0, %v1714
    %v1716 = vpop.f32.mrb[0].mxu0
    %1717 = vdwg.mxu0
    %1718 = vrot.lane.b32.xlu0 %v1512, 120
    %v1719 = vpop.permute.xlu0 %1718
    %1720 = vrot.lane.b32.xlu0 %v1517, 120
    %v1721 = vpop.permute.xlu0 %1720
    %1722 = vrot.lane.b32.xlu0 %v1512, 88
    %v1723 = vpop.permute.xlu0 %1722
    %1724 = vrot.lane.b32.xlu0 %v1517, 88
    %v1725 = vpop.permute.xlu0 %1724
    %v1726 = vsel %vm203, %v1719, 0
    %v1728 = vsel %vm203, %v1721, 0
    %v1730 = vsel %vm203, %v1723, 0
    %v1732 = vsel %vm203, %v1725, 0
    %1734 = vmatprep.subr.mxu0 0.0
    %1735 = vmatpush1.xpose.msra.mxu0 %v1730
    %1736 = vmatprep.subr.mxu0 0.0
    %1737 = vmatpush1.xpose.msra.mxu0 %v1732
    %1738 = vmatprep.subr.mxu0 0.0
    %1739 = vmatpush1.xpose.msra.mxu0 0.0
    %1740 = vmatprep.subr.mxu0 0.0
    %1741 = vmatpush1.xpose.msra.mxu0 0.0
    %1742 = vmatprep.subr.mxu0 0.0
    %1743 = vmatpush1.xpose.msra.mxu0 0.0
    %1744 = vmatprep.subr.mxu0 0.0
    %1745 = vmatpush1.xpose.msra.mxu0 0.0
    %1746 = vmatprep.subr.mxu0 0.0
    %1747 = vmatpush1.xpose.msra.mxu0 0.0
    %1748 = vmatprep.subr.mxu0 0.0
    %1749 = vmatpush1.xpose.msra.mxu0 0.0
    %1750 = vmatprep.subr.mxu0 0.0
    %1751 = vmatpush1.xpose.msra.mxu0 0.0
    %1752 = vmatprep.subr.mxu0 0.0
    %1753 = vmatpush1.xpose.msra.mxu0 0.0
    %1754 = vmatprep.subr.mxu0 0.0
    %1755 = vmatpush1.xpose.msra.mxu0 0.0
    %1756 = vmatprep.subr.mxu0 0.0
    %1757 = vmatpush1.xpose.msra.mxu0 0.0
    %1758 = vmatprep.subr.mxu0 0.0
    %1759 = vmatpush1.xpose.msra.mxu0 0.0
    %1760 = vmatprep.subr.mxu0 0.0
    %1761 = vmatpush1.xpose.msra.mxu0 0.0
    %1762 = vmatprep.subr.mxu0 0.0
    %1763 = vmatpush1.xpose.msra.mxu0 0.0
    %1764 = vmatprep.subr.mxu0 0.0
    %1765 = vmatpush1.xpose.msra.mxu0 0.0
    %1766 = vmatprep.subr.mxu0 0.0
    %1767 = vmatpush1.xpose.msra.mxu0 0.0
    %1768 = vmatprep.subr.mxu0 0.0
    %1769 = vmatpush1.xpose.msra.mxu0 0.0
    %1770 = vmatprep.subr.mxu0 0.0
    %1771 = vmatpush1.xpose.msra.mxu0 0.0
    %1772 = vmatprep.subr.mxu0 0.0
    %1773 = vmatpush1.xpose.msra.mxu0 0.0
    %1774 = vmatprep.subr.mxu0 0.0
    %1775 = vmatpush1.xpose.msra.mxu0 0.0
    %1776 = vmatprep.subr.mxu0 0.0
    %1777 = vmatpush1.xpose.msra.mxu0 0.0
    %1778 = vmatprep.subr.mxu0 0.0
    %1779 = vmatpush1.xpose.msra.mxu0 0.0
    %1780 = vmatprep.subr.mxu0 0.0
    %1781 = vmatpush1.xpose.msra.mxu0 0.0
    %1782 = vmatprep.subr.mxu0 0.0
    %1783 = vmatpush1.xpose.msra.mxu0 0.0
    %1784 = vmatprep.subr.mxu0 0.0
    %1785 = vmatpush1.xpose.msra.mxu0 0.0
    %1786 = vmatprep.subr.mxu0 0.0
    %1787 = vmatpush1.xpose.msra.mxu0 0.0
    %1788 = vmatprep.subr.mxu0 0.0
    %1789 = vmatpush1.xpose.msra.mxu0 0.0
    %1790 = vmatprep.subr.mxu0 0.0
    %1791 = vmatpush1.xpose.msra.mxu0 0.0
    %1792 = vmatprep.subr.mxu0 0.0
    %1793 = vmatpush1.xpose.msra.mxu0 0.0
    %1794 = vmatprep.subr.mxu0 0.0
    %1795 = vmatpush1.xpose.msra.mxu0 0.0
    %1796 = vmatprep.subr.mxu0 0.0
    %1797 = vmatpush1.xpose.msra.mxu0 0.0
    %1798 = vmatprep.mubr.f32.mxu0 0.0
    %1799 = vmatmul.mubr.f32.gmra.mrb[0].mxu0 %v1726
    %v1800 = vpop.f32.mrb[0].mxu0
    %v1801 = vadd.f32 %v39, %v1800
    %v1802 = vpop.f32.mrb[0].mxu0
    %1803 = vmatprep.mubr.f32.mxu0 0.0
    %1804 = vmatmul.mubr.f32.gmra.mrb[0].mxu0 %v1728
    %v1805 = vpop.f32.mrb[0].mxu0
    %v1806 = vadd.f32 %v40, %v1805
    %v1807 = vpop.f32.mrb[0].mxu0
    %1808 = vdwg.mxu0
    %v1809 = vsel %vm287, %v1801, -inf
    %1810 = vmax.xlane.f32.xlu0 %v1809
    %v1811 = vpop.xlane.xlu0 %1810
    %v1812 = vsel %vm287, %v1806, -inf
    %1813 = vmax.xlane.f32.xlu0 %v1812
    %v1814 = vpop.xlane.xlu0 %1813
    %v1815 = vsub.f32 %v1801, %v1811
    %v1816 = vsub.f32 %v1806, %v1814
    %v1817 = vmul.f32 %v1815, 1.442695
    %v1818 = vpow.pop %v1817
    %v1819 = vmul.f32 %v1816, 1.442695
    %v1820 = vpow.pop %v1819
    %v1821 = vsel %vm287, %v1818, 0.0
    %1822 = vadd.xlane.f32.xlu0 %v1821
    %v1823 = vpop.xlane.xlu0 %1822
    %v1824 = vsel %vm287, %v1820, 0.0
    %1825 = vadd.xlane.f32.xlu0 %v1824
    %v1826 = vpop.xlane.xlu0 %1825
    %v1827 = vrcp.pop %v1823
    %v1828 = vrcp.pop %v1826
    %v1829 = vmul.f32 %v1818, %v1827
    %v1830 = vmul.f32 %v1820, %v1828
    %1831 = vrot.lane.b32.xlu0 %v1512, 56
    %v1832 = vpop.permute.xlu0 %1831
    %1833 = vrot.lane.b32.xlu0 %v1517, 56
    %v1834 = vpop.permute.xlu0 %1833
    %v1838 = vsel %vm287, %v1829, 0
    %v1841 = vsel %vm287, %v1830, 0
    %1843 = vmatprep.subr.mxu0 0.0
    %1844 = vmatpush1.msra.mxu0 %v1832
    %1845 = vmatprep.subr.mxu0 0.0
    %1846 = vmatpush1.msra.mxu0 %v1834
    %1847 = vmatprep.subr.mxu0 0.0
    %1848 = vmatpush1.msra.mxu0 0.0
    %1849 = vmatprep.subr.mxu0 0.0
    %1850 = vmatpush1.msra.mxu0 0.0
    %1851 = vmatprep.subr.mxu0 0.0
    %1852 = vmatpush1.msra.mxu0 0.0
    %1853 = vmatprep.subr.mxu0 0.0
    %1854 = vmatpush1.msra.mxu0 0.0
    %1855 = vmatprep.subr.mxu0 0.0
    %1856 = vmatpush1.msra.mxu0 0.0
    %1857 = vmatprep.subr.mxu0 0.0
    %1858 = vmatpush1.msra.mxu0 0.0
    %1859 = vmatprep.subr.mxu0 0.0
    %1860 = vmatpush1.msra.mxu0 0.0
    %1861 = vmatprep.subr.mxu0 0.0
    %1862 = vmatpush1.msra.mxu0 0.0
    %1863 = vmatprep.subr.mxu0 0.0
    %1864 = vmatpush1.msra.mxu0 0.0
    %1865 = vmatprep.subr.mxu0 0.0
    %1866 = vmatpush1.msra.mxu0 0.0
    %1867 = vmatprep.subr.mxu0 0.0
    %1868 = vmatpush1.msra.mxu0 0.0
    %1869 = vmatprep.subr.mxu0 0.0
    %1870 = vmatpush1.msra.mxu0 0.0
    %1871 = vmatprep.subr.mxu0 0.0
    %1872 = vmatpush1.msra.mxu0 0.0
    %1873 = vmatprep.subr.mxu0 0.0
    %1874 = vmatpush1.msra.mxu0 0.0
    %1875 = vmatprep.subr.mxu0 0.0
    %1876 = vmatpush1.msra.mxu0 0.0
    %1877 = vmatprep.subr.mxu0 0.0
    %1878 = vmatpush1.msra.mxu0 0.0
    %1879 = vmatprep.subr.mxu0 0.0
    %1880 = vmatpush1.msra.mxu0 0.0
    %1881 = vmatprep.subr.mxu0 0.0
    %1882 = vmatpush1.msra.mxu0 0.0
    %1883 = vmatprep.subr.mxu0 0.0
    %1884 = vmatpush1.msra.mxu0 0.0
    %1885 = vmatprep.subr.mxu0 0.0
    %1886 = vmatpush1.msra.mxu0 0.0
    %1887 = vmatprep.subr.mxu0 0.0
    %1888 = vmatpush1.msra.mxu0 0.0
    %1889 = vmatprep.subr.mxu0 0.0
    %1890 = vmatpush1.msra.mxu0 0.0
    %1891 = vmatprep.subr.mxu0 0.0
    %1892 = vmatpush1.msra.mxu0 0.0
    %1893 = vmatprep.subr.mxu0 0.0
    %1894 = vmatpush1.msra.mxu0 0.0
    %1895 = vmatprep.subr.mxu0 0.0
    %1896 = vmatpush1.msra.mxu0 0.0
    %1897 = vmatprep.subr.mxu0 0.0
    %1898 = vmatpush1.msra.mxu0 0.0
    %1899 = vmatprep.subr.mxu0 0.0
    %1900 = vmatpush1.msra.mxu0 0.0
    %1901 = vmatprep.subr.mxu0 0.0
    %1902 = vmatpush1.msra.mxu0 0.0
    %1903 = vmatprep.subr.mxu0 0.0
    %1904 = vmatpush1.msra.mxu0 0.0
    %1905 = vmatprep.subr.mxu0 0.0
    %1906 = vmatpush1.msra.mxu0 0.0
    %1907 = vmatprep.mubr.f32.mxu0 0.0
    %1908 = vmatmul.mubr.f32.gmra.mrb[0].mxu0 %v1838
    %v1909 = vpop.f32.mrb[0].mxu0
    %v1910 = vadd.f32 0.0, %v1909
    %v1911 = vpop.f32.mrb[0].mxu0
    %1912 = vmatprep.mubr.f32.mxu0 0.0
    %1913 = vmatmul.mubr.f32.gmra.mrb[0].mxu0 %v1841
    %v1914 = vpop.f32.mrb[0].mxu0
    %v1915 = vadd.f32 0.0, %v1914
    %v1916 = vpop.f32.mrb[0].mxu0
    %1917 = vdwg.mxu0
    %1918 = vrot.lane.b32.xlu0 %v1512, 112
    %v1919 = vpop.permute.xlu0 %1918
    %1920 = vrot.lane.b32.xlu0 %v1517, 112
    %v1921 = vpop.permute.xlu0 %1920
    %1922 = vrot.lane.b32.xlu0 %v1512, 80
    %v1923 = vpop.permute.xlu0 %1922
    %1924 = vrot.lane.b32.xlu0 %v1517, 80
    %v1925 = vpop.permute.xlu0 %1924
    %v1926 = vsel %vm203, %v1919, 0
    %v1928 = vsel %vm203, %v1921, 0
    %v1930 = vsel %vm203, %v1923, 0
    %v1932 = vsel %vm203, %v1925, 0
    %1934 = vmatprep.subr.mxu0 0.0
    %1935 = vmatpush1.xpose.msra.mxu0 %v1930
    %1936 = vmatprep.subr.mxu0 0.0
    %1937 = vmatpush1.xpose.msra.mxu0 %v1932
    %1938 = vmatprep.subr.mxu0 0.0
    %1939 = vmatpush1.xpose.msra.mxu0 0.0
    %1940 = vmatprep.subr.mxu0 0.0
    %1941 = vmatpush1.xpose.msra.mxu0 0.0
    %1942 = vmatprep.subr.mxu0 0.0
    %1943 = vmatpush1.xpose.msra.mxu0 0.0
    %1944 = vmatprep.subr.mxu0 0.0
    %1945 = vmatpush1.xpose.msra.mxu0 0.0
    %1946 = vmatprep.subr.mxu0 0.0
    %1947 = vmatpush1.xpose.msra.mxu0 0.0
    %1948 = vmatprep.subr.mxu0 0.0
    %1949 = vmatpush1.xpose.msra.mxu0 0.0
    %1950 = vmatprep.subr.mxu0 0.0
    %1951 = vmatpush1.xpose.msra.mxu0 0.0
    %1952 = vmatprep.subr.mxu0 0.0
    %1953 = vmatpush1.xpose.msra.mxu0 0.0
    %1954 = vmatprep.subr.mxu0 0.0
    %1955 = vmatpush1.xpose.msra.mxu0 0.0
    %1956 = vmatprep.subr.mxu0 0.0
    %1957 = vmatpush1.xpose.msra.mxu0 0.0
    %1958 = vmatprep.subr.mxu0 0.0
    %1959 = vmatpush1.xpose.msra.mxu0 0.0
    %1960 = vmatprep.subr.mxu0 0.0
    %1961 = vmatpush1.xpose.msra.mxu0 0.0
    %1962 = vmatprep.subr.mxu0 0.0
    %1963 = vmatpush1.xpose.msra.mxu0 0.0
    %1964 = vmatprep.subr.mxu0 0.0
    %1965 = vmatpush1.xpose.msra.mxu0 0.0
    %1966 = vmatprep.subr.mxu0 0.0
    %1967 = vmatpush1.xpose.msra.mxu0 0.0
    %1968 = vmatprep.subr.mxu0 0.0
    %1969 = vmatpush1.xpose.msra.mxu0 0.0
    %1970 = vmatprep.subr.mxu0 0.0
    %1971 = vmatpush1.xpose.msra.mxu0 0.0
    %1972 = vmatprep.subr.mxu0 0.0
    %1973 = vmatpush1.xpose.msra.mxu0 0.0
    %1974 = vmatprep.subr.mxu0 0.0
    %1975 = vmatpush1.xpose.msra.mxu0 0.0
    %1976 = vmatprep.subr.mxu0 0.0
    %1977 = vmatpush1.xpose.msra.mxu0 0.0
    %1978 = vmatprep.subr.mxu0 0.0
    %1979 = vmatpush1.xpose.msra.mxu0 0.0
    %1980 = vmatprep.subr.mxu0 0.0
    %1981 = vmatpush1.xpose.msra.mxu0 0.0
    %1982 = vmatprep.subr.mxu0 0.0
    %1983 = vmatpush1.xpose.msra.mxu0 0.0
    %1984 = vmatprep.subr.mxu0 0.0
    %1985 = vmatpush1.xpose.msra.mxu0 0.0
    %1986 = vmatprep.subr.mxu0 0.0
    %1987 = vmatpush1.xpose.msra.mxu0 0.0
    %1988 = vmatprep.subr.mxu0 0.0
    %1989 = vmatpush1.xpose.msra.mxu0 0.0
    %1990 = vmatprep.subr.mxu0 0.0
    %1991 = vmatpush1.xpose.msra.mxu0 0.0
    %1992 = vmatprep.subr.mxu0 0.0
    %1993 = vmatpush1.xpose.msra.mxu0 0.0
    %1994 = vmatprep.subr.mxu0 0.0
    %1995 = vmatpush1.xpose.msra.mxu0 0.0
    %1996 = vmatprep.subr.mxu0 0.0
    %1997 = vmatpush1.xpose.msra.mxu0 0.0
    %1998 = vmatprep.mubr.f32.mxu0 0.0
    %1999 = vmatmul.mubr.f32.gmra.mrb[0].mxu0 %v1926
    %v2000 = vpop.f32.mrb[0].mxu0
    %v2001 = vadd.f32 %v39, %v2000
    %v2002 = vpop.f32.mrb[0].mxu0
    %2003 = vmatprep.mubr.f32.mxu0 0.0
    %2004 = vmatmul.mubr.f32.gmra.mrb[0].mxu0 %v1928
    %v2005 = vpop.f32.mrb[0].mxu0
    %v2006 = vadd.f32 %v40, %v2005
    %v2007 = vpop.f32.mrb[0].mxu0
    %2008 = vdwg.mxu0
    %v2009 = vsel %vm287, %v2001, -inf
    %2010 = vmax.xlane.f32.xlu0 %v2009
    %v2011 = vpop.xlane.xlu0 %2010
    %v2012 = vsel %vm287, %v2006, -inf
    %2013 = vmax.xlane.f32.xlu0 %v2012
    %v2014 = vpop.xlane.xlu0 %2013
    %v2015 = vsub.f32 %v2001, %v2011
    %v2016 = vsub.f32 %v2006, %v2014
    %v2017 = vmul.f32 %v2015, 1.442695
    %v2018 = vpow.pop %v2017
    %v2019 = vmul.f32 %v2016, 1.442695
    %v2020 = vpow.pop %v2019
    %v2021 = vsel %vm287, %v2018, 0.0
    %2022 = vadd.xlane.f32.xlu0 %v2021
    %v2023 = vpop.xlane.xlu0 %2022
    %v2024 = vsel %vm287, %v2020, 0.0
    %2025 = vadd.xlane.f32.xlu0 %v2024
    %v2026 = vpop.xlane.xlu0 %2025
    %v2027 = vrcp.pop %v2023
    %v2028 = vrcp.pop %v2026
    %v2029 = vmul.f32 %v2018, %v2027
    %v2030 = vmul.f32 %v2020, %v2028
    %2031 = vrot.lane.b32.xlu0 %v1512, 48
    %v2032 = vpop.permute.xlu0 %2031
    %2033 = vrot.lane.b32.xlu0 %v1517, 48
    %v2034 = vpop.permute.xlu0 %2033
    %v2038 = vsel %vm287, %v2029, 0
    %v2041 = vsel %vm287, %v2030, 0
    %2043 = vmatprep.subr.mxu0 0.0
    %2044 = vmatpush1.msra.mxu0 %v2032
    %2045 = vmatprep.subr.mxu0 0.0
    %2046 = vmatpush1.msra.mxu0 %v2034
    %2047 = vmatprep.subr.mxu0 0.0
    %2048 = vmatpush1.msra.mxu0 0.0
    %2049 = vmatprep.subr.mxu0 0.0
    %2050 = vmatpush1.msra.mxu0 0.0
    %2051 = vmatprep.subr.mxu0 0.0
    %2052 = vmatpush1.msra.mxu0 0.0
    %2053 = vmatprep.subr.mxu0 0.0
    %2054 = vmatpush1.msra.mxu0 0.0
    %2055 = vmatprep.subr.mxu0 0.0
    %2056 = vmatpush1.msra.mxu0 0.0
    %2057 = vmatprep.subr.mxu0 0.0
    %2058 = vmatpush1.msra.mxu0 0.0
    %2059 = vmatprep.subr.mxu0 0.0
    %2060 = vmatpush1.msra.mxu0 0.0
    %2061 = vmatprep.subr.mxu0 0.0
    %2062 = vmatpush1.msra.mxu0 0.0
    %2063 = vmatprep.subr.mxu0 0.0
    %2064 = vmatpush1.msra.mxu0 0.0
    %2065 = vmatprep.subr.mxu0 0.0
    %2066 = vmatpush1.msra.mxu0 0.0
    %2067 = vmatprep.subr.mxu0 0.0
    %2068 = vmatpush1.msra.mxu0 0.0
    %2069 = vmatprep.subr.mxu0 0.0
    %2070 = vmatpush1.msra.mxu0 0.0
    %2071 = vmatprep.subr.mxu0 0.0
    %2072 = vmatpush1.msra.mxu0 0.0
    %2073 = vmatprep.subr.mxu0 0.0
    %2074 = vmatpush1.msra.mxu0 0.0
    %2075 = vmatprep.subr.mxu0 0.0
    %2076 = vmatpush1.msra.mxu0 0.0
    %2077 = vmatprep.subr.mxu0 0.0
    %2078 = vmatpush1.msra.mxu0 0.0
    %2079 = vmatprep.subr.mxu0 0.0
    %2080 = vmatpush1.msra.mxu0 0.0
    %2081 = vmatprep.subr.mxu0 0.0
    %2082 = vmatpush1.msra.mxu0 0.0
    %2083 = vmatprep.subr.mxu0 0.0
    %2084 = vmatpush1.msra.mxu0 0.0
    %2085 = vmatprep.subr.mxu0 0.0
    %2086 = vmatpush1.msra.mxu0 0.0
    %2087 = vmatprep.subr.mxu0 0.0
    %2088 = vmatpush1.msra.mxu0 0.0
    %2089 = vmatprep.subr.mxu0 0.0
    %2090 = vmatpush1.msra.mxu0 0.0
    %2091 = vmatprep.subr.mxu0 0.0
    %2092 = vmatpush1.msra.mxu0 0.0
    %2093 = vmatprep.subr.mxu0 0.0
    %2094 = vmatpush1.msra.mxu0 0.0
    %2095 = vmatprep.subr.mxu0 0.0
    %2096 = vmatpush1.msra.mxu0 0.0
    %2097 = vmatprep.subr.mxu0 0.0
    %2098 = vmatpush1.msra.mxu0 0.0
    %2099 = vmatprep.subr.mxu0 0.0
    %2100 = vmatpush1.msra.mxu0 0.0
    %2101 = vmatprep.subr.mxu0 0.0
    %2102 = vmatpush1.msra.mxu0 0.0
    %2103 = vmatprep.subr.mxu0 0.0
    %2104 = vmatpush1.msra.mxu0 0.0
    %2105 = vmatprep.subr.mxu0 0.0
    %2106 = vmatpush1.msra.mxu0 0.0
    %2107 = vmatprep.mubr.f32.mxu0 0.0
    %2108 = vmatmul.mubr.f32.gmra.mrb[0].mxu0 %v2038
    %v2109 = vpop.f32.mrb[0].mxu0
    %v2110 = vadd.f32 0.0, %v2109
    %v2111 = vpop.f32.mrb[0].mxu0
    %2112 = vmatprep.mubr.f32.mxu0 0.0
    %2113 = vmatmul.mubr.f32.gmra.mrb[0].mxu0 %v2041
    %v2114 = vpop.f32.mrb[0].mxu0
    %v2115 = vadd.f32 0.0, %v2114
    %v2116 = vpop.f32.mrb[0].mxu0
    %2117 = vdwg.mxu0
    %2118 = vrot.lane.b32.xlu0 %v1512, 104
    %v2119 = vpop.permute.xlu0 %2118
    %2120 = vrot.lane.b32.xlu0 %v1517, 104
    %v2121 = vpop.permute.xlu0 %2120
    %2122 = vrot.lane.b32.xlu0 %v1512, 72
    %v2123 = vpop.permute.xlu0 %2122
    %2124 = vrot.lane.b32.xlu0 %v1517, 72
    %v2125 = vpop.permute.xlu0 %2124
    %v2126 = vsel %vm203, %v2119, 0
    %v2128 = vsel %vm203, %v2121, 0
    %v2130 = vsel %vm203, %v2123, 0
    %v2132 = vsel %vm203, %v2125, 0
    %2134 = vmatprep.subr.mxu0 0.0
    %2135 = vmatpush1.xpose.msra.mxu0 %v2130
    %2136 = vmatprep.subr.mxu0 0.0
    %2137 = vmatpush1.xpose.msra.mxu0 %v2132
    %2138 = vmatprep.subr.mxu0 0.0
    %2139 = vmatpush1.xpose.msra.mxu0 0.0
    %2140 = vmatprep.subr.mxu0 0.0
    %2141 = vmatpush1.xpose.msra.mxu0 0.0
    %2142 = vmatprep.subr.mxu0 0.0
    %2143 = vmatpush1.xpose.msra.mxu0 0.0
    %2144 = vmatprep.subr.mxu0 0.0
    %2145 = vmatpush1.xpose.msra.mxu0 0.0
    %2146 = vmatprep.subr.mxu0 0.0
    %2147 = vmatpush1.xpose.msra.mxu0 0.0
    %2148 = vmatprep.subr.mxu0 0.0
    %2149 = vmatpush1.xpose.msra.mxu0 0.0
    %2150 = vmatprep.subr.mxu0 0.0
    %2151 = vmatpush1.xpose.msra.mxu0 0.0
    %2152 = vmatprep.subr.mxu0 0.0
    %2153 = vmatpush1.xpose.msra.mxu0 0.0
    %2154 = vmatprep.subr.mxu0 0.0
    %2155 = vmatpush1.xpose.msra.mxu0 0.0
    %2156 = vmatprep.subr.mxu0 0.0
    %2157 = vmatpush1.xpose.msra.mxu0 0.0
    %2158 = vmatprep.subr.mxu0 0.0
    %2159 = vmatpush1.xpose.msra.mxu0 0.0
    %2160 = vmatprep.subr.mxu0 0.0
    %2161 = vmatpush1.xpose.msra.mxu0 0.0
    %2162 = vmatprep.subr.mxu0 0.0
    %2163 = vmatpush1.xpose.msra.mxu0 0.0
    %2164 = vmatprep.subr.mxu0 0.0
    %2165 = vmatpush1.xpose.msra.mxu0 0.0
    %2166 = vmatprep.subr.mxu0 0.0
    %2167 = vmatpush1.xpose.msra.mxu0 0.0
    %2168 = vmatprep.subr.mxu0 0.0
    %2169 = vmatpush1.xpose.msra.mxu0 0.0
    %2170 = vmatprep.subr.mxu0 0.0
    %2171 = vmatpush1.xpose.msra.mxu0 0.0
    %2172 = vmatprep.subr.mxu0 0.0
    %2173 = vmatpush1.xpose.msra.mxu0 0.0
    %2174 = vmatprep.subr.mxu0 0.0
    %2175 = vmatpush1.xpose.msra.mxu0 0.0
    %2176 = vmatprep.subr.mxu0 0.0
    %2177 = vmatpush1.xpose.msra.mxu0 0.0
    %2178 = vmatprep.subr.mxu0 0.0
    %2179 = vmatpush1.xpose.msra.mxu0 0.0
    %2180 = vmatprep.subr.mxu0 0.0
    %2181 = vmatpush1.xpose.msra.mxu0 0.0
    %2182 = vmatprep.subr.mxu0 0.0
    %2183 = vmatpush1.xpose.msra.mxu0 0.0
    %2184 = vmatprep.subr.mxu0 0.0
    %2185 = vmatpush1.xpose.msra.mxu0 0.0
    %2186 = vmatprep.subr.mxu0 0.0
    %2187 = vmatpush1.xpose.msra.mxu0 0.0
    %2188 = vmatprep.subr.mxu0 0.0
    %2189 = vmatpush1.xpose.msra.mxu0 0.0
    %2190 = vmatprep.subr.mxu0 0.0
    %2191 = vmatpush1.xpose.msra.mxu0 0.0
    %2192 = vmatprep.subr.mxu0 0.0
    %2193 = vmatpush1.xpose.msra.mxu0 0.0
    %2194 = vmatprep.subr.mxu0 0.0
    %2195 = vmatpush1.xpose.msra.mxu0 0.0
    %2196 = vmatprep.subr.mxu0 0.0
    %2197 = vmatpush1.xpose.msra.mxu0 0.0
    %2198 = vmatprep.mubr.f32.mxu0 0.0
    %2199 = vmatmul.mubr.f32.gmra.mrb[0].mxu0 %v2126
    %v2200 = vpop.f32.mrb[0].mxu0
    %v2201 = vadd.f32 %v39, %v2200
    %v2202 = vpop.f32.mrb[0].mxu0
    %2203 = vmatprep.mubr.f32.mxu0 0.0
    %2204 = vmatmul.mubr.f32.gmra.mrb[0].mxu0 %v2128
    %v2205 = vpop.f32.mrb[0].mxu0
    %v2206 = vadd.f32 %v40, %v2205
    %v2207 = vpop.f32.mrb[0].mxu0
    %2208 = vdwg.mxu0
    %v2209 = vsel %vm287, %v2201, -inf
    %2210 = vmax.xlane.f32.xlu0 %v2209
    %v2211 = vpop.xlane.xlu0 %2210
    %v2212 = vsel %vm287, %v2206, -inf
    %2213 = vmax.xlane.f32.xlu0 %v2212
    %v2214 = vpop.xlane.xlu0 %2213
    %v2215 = vsub.f32 %v2201, %v2211
    %v2216 = vsub.f32 %v2206, %v2214
    %v2217 = vmul.f32 %v2215, 1.442695
    %v2218 = vpow.pop %v2217
    %v2219 = vmul.f32 %v2216, 1.442695
    %v2220 = vpow.pop %v2219
    %v2221 = vsel %vm287, %v2218, 0.0
    %2222 = vadd.xlane.f32.xlu0 %v2221
    %v2223 = vpop.xlane.xlu0 %2222
    %v2224 = vsel %vm287, %v2220, 0.0
    %2225 = vadd.xlane.f32.xlu0 %v2224
    %v2226 = vpop.xlane.xlu0 %2225
    %v2227 = vrcp.pop %v2223
    %v2228 = vrcp.pop %v2226
    %v2229 = vmul.f32 %v2218, %v2227
    %v2230 = vmul.f32 %v2220, %v2228
    %2231 = vrot.lane.b32.xlu0 %v1512, 40
    %v2232 = vpop.permute.xlu0 %2231
    %2233 = vrot.lane.b32.xlu0 %v1517, 40
    %v2234 = vpop.permute.xlu0 %2233
    %v2238 = vsel %vm287, %v2229, 0
    %v2241 = vsel %vm287, %v2230, 0
    %2243 = vmatprep.subr.mxu0 0.0
    %2244 = vmatpush1.msra.mxu0 %v2232
    %2245 = vmatprep.subr.mxu0 0.0
    %2246 = vmatpush1.msra.mxu0 %v2234
    %2247 = vmatprep.subr.mxu0 0.0
    %2248 = vmatpush1.msra.mxu0 0.0
    %2249 = vmatprep.subr.mxu0 0.0
    %2250 = vmatpush1.msra.mxu0 0.0
    %2251 = vmatprep.subr.mxu0 0.0
    %2252 = vmatpush1.msra.mxu0 0.0
    %2253 = vmatprep.subr.mxu0 0.0
    %2254 = vmatpush1.msra.mxu0 0.0
    %2255 = vmatprep.subr.mxu0 0.0
    %2256 = vmatpush1.msra.mxu0 0.0
    %2257 = vmatprep.subr.mxu0 0.0
    %2258 = vmatpush1.msra.mxu0 0.0
    %2259 = vmatprep.subr.mxu0 0.0
    %2260 = vmatpush1.msra.mxu0 0.0
    %2261 = vmatprep.subr.mxu0 0.0
    %2262 = vmatpush1.msra.mxu0 0.0
    %2263 = vmatprep.subr.mxu0 0.0
    %2264 = vmatpush1.msra.mxu0 0.0
    %2265 = vmatprep.subr.mxu0 0.0
    %2266 = vmatpush1.msra.mxu0 0.0
    %2267 = vmatprep.subr.mxu0 0.0
    %2268 = vmatpush1.msra.mxu0 0.0
    %2269 = vmatprep.subr.mxu0 0.0
    %2270 = vmatpush1.msra.mxu0 0.0
    %2271 = vmatprep.subr.mxu0 0.0
    %2272 = vmatpush1.msra.mxu0 0.0
    %2273 = vmatprep.subr.mxu0 0.0
    %2274 = vmatpush1.msra.mxu0 0.0
    %2275 = vmatprep.subr.mxu0 0.0
    %2276 = vmatpush1.msra.mxu0 0.0
    %2277 = vmatprep.subr.mxu0 0.0
    %2278 = vmatpush1.msra.mxu0 0.0
    %2279 = vmatprep.subr.mxu0 0.0
    %2280 = vmatpush1.msra.mxu0 0.0
    %2281 = vmatprep.subr.mxu0 0.0
    %2282 = vmatpush1.msra.mxu0 0.0
    %2283 = vmatprep.subr.mxu0 0.0
    %2284 = vmatpush1.msra.mxu0 0.0
    %2285 = vmatprep.subr.mxu0 0.0
    %2286 = vmatpush1.msra.mxu0 0.0
    %2287 = vmatprep.subr.mxu0 0.0
    %2288 = vmatpush1.msra.mxu0 0.0
    %2289 = vmatprep.subr.mxu0 0.0
    %2290 = vmatpush1.msra.mxu0 0.0
    %2291 = vmatprep.subr.mxu0 0.0
    %2292 = vmatpush1.msra.mxu0 0.0
    %2293 = vmatprep.subr.mxu0 0.0
    %2294 = vmatpush1.msra.mxu0 0.0
    %2295 = vmatprep.subr.mxu0 0.0
    %2296 = vmatpush1.msra.mxu0 0.0
    %2297 = vmatprep.subr.mxu0 0.0
    %2298 = vmatpush1.msra.mxu0 0.0
    %2299 = vmatprep.subr.mxu0 0.0
    %2300 = vmatpush1.msra.mxu0 0.0
    %2301 = vmatprep.subr.mxu0 0.0
    %2302 = vmatpush1.msra.mxu0 0.0
    %2303 = vmatprep.subr.mxu0 0.0
    %2304 = vmatpush1.msra.mxu0 0.0
    %2305 = vmatprep.subr.mxu0 0.0
    %2306 = vmatpush1.msra.mxu0 0.0
    %2307 = vmatprep.mubr.f32.mxu0 0.0
    %2308 = vmatmul.mubr.f32.gmra.mrb[0].mxu0 %v2238
    %v2309 = vpop.f32.mrb[0].mxu0
    %v2310 = vadd.f32 0.0, %v2309
    %v2311 = vpop.f32.mrb[0].mxu0
    %2312 = vmatprep.mubr.f32.mxu0 0.0
    %2313 = vmatmul.mubr.f32.gmra.mrb[0].mxu0 %v2241
    %v2314 = vpop.f32.mrb[0].mxu0
    %v2315 = vadd.f32 0.0, %v2314
    %v2316 = vpop.f32.mrb[0].mxu0
    %2317 = vdwg.mxu0
    %2320 = vrot.lane.b32.xlu0 %v1910, 8
    %v2321 = vpop.permute.xlu0 %2320
    %2322 = vrot.lane.b32.xlu0 %v1915, 8
    %v2323 = vpop.permute.xlu0 %2322
    %2328 = vrot.lane.b32.xlu0 %v2110, 16
    %v2329 = vpop.permute.xlu0 %2328
    %2330 = vrot.lane.b32.xlu0 %v2115, 16
    %v2331 = vpop.permute.xlu0 %2330
    %2336 = vrot.lane.b32.xlu0 %v2310, 24
    %v2337 = vpop.permute.xlu0 %2336
    %2338 = vrot.lane.b32.xlu0 %v2315, 24
    %v2339 = vpop.permute.xlu0 %2338
    %v2342 = vsel %vm203, %v1710, %v2321
    %v2343 = vsel %vm203, %v1715, %v2323
    %v2344 = vsel %vm287, %v2342, %v2329
    %v2345 = vsel %vm287, %v2343, %v2331
    %v2346 = vsel %vm1025, %v2344, %v2337
    %v2347 = vsel %vm1025, %v2345, %v2339
    %2352 = vrot.lane.b32.xlu0 %v1365, 32
    %v2353 = vpop.permute.xlu0 %2352
    %2354 = vrot.lane.b32.xlu0 %v1366, 32
    %v2355 = vpop.permute.xlu0 %2354
    %2356 = vrot.lane.b32.xlu0 %v1367, 32
    %v2357 = vpop.permute.xlu0 %2356
    %2358 = vrot.lane.b32.xlu0 %v1368, 32
    %v2359 = vpop.permute.xlu0 %2358
    %2365 = vrot.lane.b32.xlu0 %v1438, 32
    %v2366 = vpop.permute.xlu0 %2365
    %v2369 = vsel %vm58, %v2346, 0
    %v2372 = vsel %vm58, %v2347, 0
    %2374 = vmatprep.subr.mxu0 0.0
    %2375 = vmatpush1.msra.mxu0 %v2353
    %2376 = vmatprep.subr.mxu0 0.0
    %2377 = vmatpush1.msra.mxu0 %v2355
    %2378 = vmatprep.subr.mxu0 0.0
    %2379 = vmatpush1.msra.mxu0 %v2357
    %2380 = vmatprep.subr.mxu0 0.0
    %2381 = vmatpush1.msra.mxu0 %v2359
    %2382 = vmatprep.subr.mxu0 0.0
    %2383 = vmatpush1.msra.mxu0 0.0
    %2384 = vmatprep.subr.mxu0 0.0
    %2385 = vmatpush1.msra.mxu0 0.0
    %2386 = vmatprep.subr.mxu0 0.0
    %2387 = vmatpush1.msra.mxu0 0.0
    %2388 = vmatprep.subr.mxu0 0.0
    %2389 = vmatpush1.msra.mxu0 0.0
    %2390 = vmatprep.subr.mxu0 0.0
    %2391 = vmatpush1.msra.mxu0 0.0
    %2392 = vmatprep.subr.mxu0 0.0
    %2393 = vmatpush1.msra.mxu0 0.0
    %2394 = vmatprep.subr.mxu0 0.0
    %2395 = vmatpush1.msra.mxu0 0.0
    %2396 = vmatprep.subr.mxu0 0.0
    %2397 = vmatpush1.msra.mxu0 0.0
    %2398 = vmatprep.subr.mxu0 0.0
    %2399 = vmatpush1.msra.mxu0 0.0
    %2400 = vmatprep.subr.mxu0 0.0
    %2401 = vmatpush1.msra.mxu0 0.0
    %2402 = vmatprep.subr.mxu0 0.0
    %2403 = vmatpush1.msra.mxu0 0.0
    %2404 = vmatprep.subr.mxu0 0.0
    %2405 = vmatpush1.msra.mxu0 0.0
    %2406 = vmatprep.subr.mxu0 0.0
    %2407 = vmatpush1.msra.mxu0 0.0
    %2408 = vmatprep.subr.mxu0 0.0
    %2409 = vmatpush1.msra.mxu0 0.0
    %2410 = vmatprep.subr.mxu0 0.0
    %2411 = vmatpush1.msra.mxu0 0.0
    %2412 = vmatprep.subr.mxu0 0.0
    %2413 = vmatpush1.msra.mxu0 0.0
    %2414 = vmatprep.subr.mxu0 0.0
    %2415 = vmatpush1.msra.mxu0 0.0
    %2416 = vmatprep.subr.mxu0 0.0
    %2417 = vmatpush1.msra.mxu0 0.0
    %2418 = vmatprep.subr.mxu0 0.0
    %2419 = vmatpush1.msra.mxu0 0.0
    %2420 = vmatprep.subr.mxu0 0.0
    %2421 = vmatpush1.msra.mxu0 0.0
    %2422 = vmatprep.subr.mxu0 0.0
    %2423 = vmatpush1.msra.mxu0 0.0
    %2424 = vmatprep.subr.mxu0 0.0
    %2425 = vmatpush1.msra.mxu0 0.0
    %2426 = vmatprep.subr.mxu0 0.0
    %2427 = vmatpush1.msra.mxu0 0.0
    %2428 = vmatprep.subr.mxu0 0.0
    %2429 = vmatpush1.msra.mxu0 0.0
    %2430 = vmatprep.subr.mxu0 0.0
    %2431 = vmatpush1.msra.mxu0 0.0
    %2432 = vmatprep.subr.mxu0 0.0
    %2433 = vmatpush1.msra.mxu0 0.0
    %2434 = vmatprep.subr.mxu0 0.0
    %2435 = vmatpush1.msra.mxu0 0.0
    %2436 = vmatprep.subr.mxu0 0.0
    %2437 = vmatpush1.msra.mxu0 0.0
    %2438 = vmatprep.mubr.f32.mxu0 0.0
    %2439 = vmatmul.mubr.f32.gmra.mrb[0].mxu0 %v2369
    %v2440 = vpop.f32.mrb[0].mxu0
    %v2441 = vadd.f32 %v2366, %v2440
    %v2442 = vpop.f32.mrb[0].mxu0
    %2443 = vmatprep.mubr.f32.mxu0 0.0
    %2444 = vmatmul.mubr.f32.gmra.mrb[0].mxu0 %v2372
    %v2445 = vpop.f32.mrb[0].mxu0
    %v2446 = vadd.f32 %v2366, %v2445
    %v2447 = vpop.f32.mrb[0].mxu0
    %2448 = vdwg.mxu0
    %v2449 = vadd.f32 %v1362, %v2441
    %v2450 = vadd.f32 %v1363, %v2446
    %v2451 = vsel %vm58, %v2449, 0.0
    %2452 = vadd.xlane.f32.xlu0 %v2451
    %v2453 = vpop.xlane.xlu0 %2452
    %v2454 = vsel %vm58, %v2450, 0.0
    %2455 = vadd.xlane.f32.xlu0 %v2454
    %v2456 = vpop.xlane.xlu0 %2455
    %v2457 = vmul.f32 %v2453, %v65
    %v2458 = vmul.f32 %v2456, %v65
    %v2459 = vsub.f32 %v2449, %v2457
    %v2460 = vsub.f32 %v2450, %v2458
    %v2461 = vmul.f32 %v2459, %v2459
    %v2462 = vmul.f32 %v2460, %v2460
    %v2463 = vsel %vm58, %v2461, 0.0
    %2464 = vadd.xlane.f32.xlu0 %v2463
    %v2465 = vpop.xlane.xlu0 %2464
    %v2466 = vsel %vm58, %v2462, 0.0
    %2467 = vadd.xlane.f32.xlu0 %v2466
    %v2468 = vpop.xlane.xlu0 %2467
    %v2469 = vmul.f32 %v2465, 0.032258064
    %v2470 = vmul.f32 %v2468, 0.032258064
    %v2471 = vrsqrt.pop %v2469
    %v2472 = vmul.f32 %v2469, %v2471
    %vm2473 = vcmp.eq.f32.partialorder %v2469, inf
    %v2474 = vsel %vm2473, %v2469, %v2472
    %vm2475 = vcmp.eq.f32.partialorder %v2469, 0.0
    %v2476 = vand.u32 %v2469, 2147483648
    %v2477 = vsel %vm2475, %v2476, %v2474
    %v2478 = vrsqrt.pop %v2470
    %v2479 = vmul.f32 %v2470, %v2478
    %vm2480 = vcmp.eq.f32.partialorder %v2470, inf
    %v2481 = vsel %vm2480, %v2470, %v2479
    %vm2482 = vcmp.eq.f32.partialorder %v2470, 0.0
    %v2483 = vand.u32 %v2470, 2147483648
    %v2484 = vsel %vm2482, %v2483, %v2481
    %v2485 = vadd.f32 %v2477, 1e-06
    %v2486 = vadd.f32 %v2484, 1e-06
    %v2487 = vrcp.pop %v2485
    %v2488 = vrcp.pop %v2486
    %2491 = vrot.lane.b32.xlu0 %v2459, 64
    %v2492 = vpop.permute.xlu0 %2491
    %2493 = vrot.lane.b32.xlu0 %v2460, 64
    %v2494 = vpop.permute.xlu0 %2493
    %v2497 = vmul.f32 %v1424, %v2492
    %v2498 = vmul.f32 %v1424, %v2494
    %v2499 = vmul.f32 %v2497, %v2487
    %v2500 = vmul.f32 %v2498, %v2488
    %v2501 = vadd.f32 %v2499, %v1431
    %v2502 = vadd.f32 %v2500, %v1431
    %v2503 = vlaneseq
    %v2504 = vshrl.u32 %v2503, 7
    %v2505 = vsub.s32 1, %v2504
    %v2506 = vrot.slane %v1382, %v2505
    %2509 = vrot.lane.b32.xlu0 %v2501, 64
    %v2510 = vpop.permute.xlu0 %2509
    %2511 = vrot.lane.b32.xlu0 %v2502, 64
    %v2512 = vpop.permute.xlu0 %2511
    %v2513 = vsel %vm58, %v2510, 0
    %v2515 = vsel %vm58, %v2512, 0
    %2517 = vmatprep.subr.mxu0 0.0
    %2518 = vmatpush1.msra.mxu0 %v1369
    %2519 = vmatprep.subr.mxu0 0.0
    %2520 = vmatpush1.msra.mxu0 %v1370
    %2521 = vmatprep.subr.mxu0 0.0
    %2522 = vmatpush1.msra.mxu0 %v1371
    %2523 = vmatprep.subr.mxu0 0.0
    %2524 = vmatpush1.msra.mxu0 %v1372
    %2525 = vmatprep.subr.mxu0 0.0
    %2526 = vmatpush1.msra.mxu0 0.0
    %2527 = vmatprep.subr.mxu0 0.0
    %2528 = vmatpush1.msra.mxu0 0.0
    %2529 = vmatprep.subr.mxu0 0.0
    %2530 = vmatpush1.msra.mxu0 0.0
    %2531 = vmatprep.subr.mxu0 0.0
    %2532 = vmatpush1.msra.mxu0 0.0
    %2533 = vmatprep.subr.mxu0 0.0
    %2534 = vmatpush1.msra.mxu0 0.0
    %2535 = vmatprep.subr.mxu0 0.0
    %2536 = vmatpush1.msra.mxu0 0.0
    %2537 = vmatprep.subr.mxu0 0.0
    %2538 = vmatpush1.msra.mxu0 0.0
    %2539 = vmatprep.subr.mxu0 0.0
    %2540 = vmatpush1.msra.mxu0 0.0
    %2541 = vmatprep.subr.mxu0 0.0
    %2542 = vmatpush1.msra.mxu0 0.0
    %2543 = vmatprep.subr.mxu0 0.0
    %2544 = vmatpush1.msra.mxu0 0.0
    %2545 = vmatprep.subr.mxu0 0.0
    %2546 = vmatpush1.msra.mxu0 0.0
    %2547 = vmatprep.subr.mxu0 0.0
    %2548 = vmatpush1.msra.mxu0 0.0
    %2549 = vmatprep.subr.mxu0 0.0
    %2550 = vmatpush1.msra.mxu0 0.0
    %2551 = vmatprep.subr.mxu0 0.0
    %2552 = vmatpush1.msra.mxu0 0.0
    %2553 = vmatprep.subr.mxu0 0.0
    %2554 = vmatpush1.msra.mxu0 0.0
    %2555 = vmatprep.subr.mxu0 0.0
    %2556 = vmatpush1.msra.mxu0 0.0
    %2557 = vmatprep.subr.mxu0 0.0
    %2558 = vmatpush1.msra.mxu0 0.0
    %2559 = vmatprep.subr.mxu0 0.0
    %2560 = vmatpush1.msra.mxu0 0.0
    %2561 = vmatprep.subr.mxu0 0.0
    %2562 = vmatpush1.msra.mxu0 0.0
    %2563 = vmatprep.subr.mxu0 0.0
    %2564 = vmatpush1.msra.mxu0 0.0
    %2565 = vmatprep.subr.mxu0 0.0
    %2566 = vmatpush1.msra.mxu0 0.0
    %2567 = vmatprep.subr.mxu0 0.0
    %2568 = vmatpush1.msra.mxu0 0.0
    %2569 = vmatprep.subr.mxu0 0.0
    %2570 = vmatpush1.msra.mxu0 0.0
    %2571 = vmatprep.subr.mxu0 0.0
    %2572 = vmatpush1.msra.mxu0 0.0
    %2573 = vmatprep.subr.mxu0 0.0
    %2574 = vmatpush1.msra.mxu0 0.0
    %2575 = vmatprep.subr.mxu0 0.0
    %2576 = vmatpush1.msra.mxu0 0.0
    %2577 = vmatprep.subr.mxu0 0.0
    %2578 = vmatpush1.msra.mxu0 0.0
    %2579 = vmatprep.subr.mxu0 0.0
    %2580 = vmatpush1.msra.mxu0 0.0
    %2581 = vmatprep.mubr.f32.mxu0 0.0
    %2582 = vmatmul.mubr.f32.gmra.mrb[0].mxu0 %v2513
    %v2583 = vpop.f32.mrb[0].mxu0
    %v2584 = vadd.f32 %v2506, %v2583
    %v2585 = vpop.f32.mrb[0].mxu0
    %2586 = vmatprep.mubr.f32.mxu0 0.0
    %2587 = vmatmul.mubr.f32.gmra.mrb[0].mxu0 %v2515
    %v2588 = vpop.f32.mrb[0].mxu0
    %v2589 = vadd.f32 %v2506, %v2588
    %v2590 = vpop.f32.mrb[0].mxu0
    %2591 = vdwg.mxu0
    %v2592 = vmax.f32 %v2584, 0.0
    %v2593 = vmax.f32 %v2589, 0.0
    %v2595 = vsel %vm1274, %v2592, 0
    %v2598 = vsel %vm1274, %v2593, 0
    %2600 = vmatprep.subr.mxu0 0.0
    %2601 = vmatpush1.msra.mxu0 %v1373
    %2602 = vmatprep.subr.mxu0 0.0
    %2603 = vmatpush1.msra.mxu0 %v1374
    %2604 = vmatprep.subr.mxu0 0.0
    %2605 = vmatpush1.msra.mxu0 %v1375
    %2606 = vmatprep.subr.mxu0 0.0
    %2607 = vmatpush1.msra.mxu0 %v1376
    %2608 = vmatprep.subr.mxu0 0.0
    %2609 = vmatpush1.msra.mxu0 %v1377
    %2610 = vmatprep.subr.mxu0 0.0
    %2611 = vmatpush1.msra.mxu0 %v1378
    %2612 = vmatprep.subr.mxu0 0.0
    %2613 = vmatpush1.msra.mxu0 %v1379
    %2614 = vmatprep.subr.mxu0 0.0
    %2615 = vmatpush1.msra.mxu0 %v1380
    %2616 = vmatprep.subr.mxu0 0.0
    %2617 = vmatpush1.msra.mxu0 0.0
    %2618 = vmatprep.subr.mxu0 0.0
    %2619 = vmatpush1.msra.mxu0 0.0
    %2620 = vmatprep.subr.mxu0 0.0
    %2621 = vmatpush1.msra.mxu0 0.0
    %2622 = vmatprep.subr.mxu0 0.0
    %2623 = vmatpush1.msra.mxu0 0.0
    %2624 = vmatprep.subr.mxu0 0.0
    %2625 = vmatpush1.msra.mxu0 0.0
    %2626 = vmatprep.subr.mxu0 0.0
    %2627 = vmatpush1.msra.mxu0 0.0
    %2628 = vmatprep.subr.mxu0 0.0
    %2629 = vmatpush1.msra.mxu0 0.0
    %2630 = vmatprep.subr.mxu0 0.0
    %2631 = vmatpush1.msra.mxu0 0.0
    %2632 = vmatprep.subr.mxu0 0.0
    %2633 = vmatpush1.msra.mxu0 0.0
    %2634 = vmatprep.subr.mxu0 0.0
    %2635 = vmatpush1.msra.mxu0 0.0
    %2636 = vmatprep.subr.mxu0 0.0
    %2637 = vmatpush1.msra.mxu0 0.0
    %2638 = vmatprep.subr.mxu0 0.0
    %2639 = vmatpush1.msra.mxu0 0.0
    %2640 = vmatprep.subr.mxu0 0.0
    %2641 = vmatpush1.msra.mxu0 0.0
    %2642 = vmatprep.subr.mxu0 0.0
    %2643 = vmatpush1.msra.mxu0 0.0
    %2644 = vmatprep.subr.mxu0 0.0
    %2645 = vmatpush1.msra.mxu0 0.0
    %2646 = vmatprep.subr.mxu0 0.0
    %2647 = vmatpush1.msra.mxu0 0.0
    %2648 = vmatprep.subr.mxu0 0.0
    %2649 = vmatpush1.msra.mxu0 0.0
    %2650 = vmatprep.subr.mxu0 0.0
    %2651 = vmatpush1.msra.mxu0 0.0
    %2652 = vmatprep.subr.mxu0 0.0
    %2653 = vmatpush1.msra.mxu0 0.0
    %2654 = vmatprep.subr.mxu0 0.0
    %2655 = vmatpush1.msra.mxu0 0.0
    %2656 = vmatprep.subr.mxu0 0.0
    %2657 = vmatpush1.msra.mxu0 0.0
    %2658 = vmatprep.subr.mxu0 0.0
    %2659 = vmatpush1.msra.mxu0 0.0
    %2660 = vmatprep.subr.mxu0 0.0
    %2661 = vmatpush1.msra.mxu0 0.0
    %2662 = vmatprep.subr.mxu0 0.0
    %2663 = vmatpush1.msra.mxu0 0.0
    %2664 = vmatprep.mubr.f32.mxu0 0.0
    %2665 = vmatmul.mubr.f32.gmra.mrb[0].mxu0 %v2595
    %v2666 = vpop.f32.mrb[0].mxu0
    %v2667 = vadd.f32 0.0, %v2666
    %v2668 = vpop.f32.mrb[0].mxu0
    %2669 = vmatprep.mubr.f32.mxu0 0.0
    %2670 = vmatmul.mubr.f32.gmra.mrb[0].mxu0 %v2598
    %v2671 = vpop.f32.mrb[0].mxu0
    %v2672 = vadd.f32 0.0, %v2671
    %v2673 = vpop.f32.mrb[0].mxu0
    %2674 = vdwg.mxu0
    %v2675 = vadd.f32 %v2449, %v2667
    %v2676 = vadd.f32 %v2450, %v2672
    %2678 = vrot.lane.b32.xlu0 %v2506, 64
    %v2679 = vpop.permute.xlu0 %2678
    %v2681 = vadd.f32 %v2675, %v2679
    %v2682 = vadd.f32 %v2676, %v2679
    %v2683 = vsel %vm58, %v2681, 0.0
    %2684 = vadd.xlane.f32.xlu0 %v2683
    %v2685 = vpop.xlane.xlu0 %2684
    %v2686 = vsel %vm58, %v2682, 0.0
    %2687 = vadd.xlane.f32.xlu0 %v2686
    %v2688 = vpop.xlane.xlu0 %2687
    %v2689 = vmul.f32 %v2685, %v65
    %v2690 = vmul.f32 %v2688, %v65
    %v2691 = vsub.f32 %v2681, %v2689
    %v2692 = vsub.f32 %v2682, %v2690
    %v2693 = vmul.f32 %v2691, %v2691
    %v2694 = vmul.f32 %v2692, %v2692
    %v2695 = vsel %vm58, %v2693, 0.0
    %2696 = vadd.xlane.f32.xlu0 %v2695
    %v2697 = vpop.xlane.xlu0 %2696
    %v2698 = vsel %vm58, %v2694, 0.0
    %2699 = vadd.xlane.f32.xlu0 %v2698
    %v2700 = vpop.xlane.xlu0 %2699
    %v2701 = vmul.f32 %v2697, 0.032258064
    %v2702 = vmul.f32 %v2700, 0.032258064
    %v2703 = vrsqrt.pop %v2701
    %v2704 = vmul.f32 %v2701, %v2703
    %vm2705 = vcmp.eq.f32.partialorder %v2701, inf
    %v2706 = vsel %vm2705, %v2701, %v2704
    %vm2707 = vcmp.eq.f32.partialorder %v2701, 0.0
    %v2708 = vand.u32 %v2701, 2147483648
    %v2709 = vsel %vm2707, %v2708, %v2706
    %v2710 = vrsqrt.pop %v2702
    %v2711 = vmul.f32 %v2702, %v2710
    %vm2712 = vcmp.eq.f32.partialorder %v2702, inf
    %v2713 = vsel %vm2712, %v2702, %v2711
    %vm2714 = vcmp.eq.f32.partialorder %v2702, 0.0
    %v2715 = vand.u32 %v2702, 2147483648
    %v2716 = vsel %vm2714, %v2715, %v2713
    %v2717 = vadd.f32 %v2709, 1e-06
    %v2718 = vadd.f32 %v2716, 1e-06
    %v2719 = vrcp.pop %v2717
    %v2720 = vrcp.pop %v2718
    %v2722 = vlaneseq
    %v2723 = vshrl.u32 %v2722, 7
    %v2724 = vsub.s32 0, %v2723
    %v2725 = vrot.slane %v36, %v2724
    %v2727 = vmul.f32 %v2725, %v2691
    %v2728 = vmul.f32 %v2725, %v2692
    %v2729 = vmul.f32 %v2727, %v2719
    %v2730 = vmul.f32 %v2728, %v2720
    %2731 = vrot.lane.b32.xlu0 %v2725, 96
    %v2732 = vpop.permute.xlu0 %2731
    %v2734 = vadd.f32 %v2729, %v2732
    %v2735 = vadd.f32 %v2730, %v2732
    %v2736 = vld [vmem:[%s1] sm:$0xff]
    %v2737 = vld [vmem:[%s1 + $0x8] sm:$0xff]
    %v2738 = vld [vmem:[%s3] sm:$0xff]
    %v2739 = vld [vmem:[%s3 + $0x8] sm:$0xff]
    %v2740 = vld [vmem:[%s4] sm:$0xff]
    %v2741 = vld [vmem:[%s4 + $0x8] sm:$0xff]
    %v2742 = vld [vmem:[%s7] sm:$0xff]
    %v2743 = vld [vmem:[%s7 + $0x8] sm:$0xff]
    %v2744 = vld [vmem:[%s7 + $0x10] sm:$0xff]
    %v2745 = vld [vmem:[%s7 + $0x18] sm:$0xff]
    %v2746 = vld [vmem:[%s7 + $0x20] sm:$0xff]
    %v2747 = vld [vmem:[%s7 + $0x28] sm:$0xff]
    %v2748 = vld [vmem:[%s7 + $0x30] sm:$0xff]
    %v2749 = vld [vmem:[%s7 + $0x38] sm:$0xff]
    %v2750 = vld [vmem:[%s7 + $0x40] sm:$0xff]
    %v2751 = vld [vmem:[%s7 + $0x48] sm:$0xff]
    %v2752 = vld [vmem:[%s7 + $0x50] sm:$0xff]
    %v2753 = vld [vmem:[%s7 + $0x58] sm:$0xff]
    %v2754 = vld [vmem:[%s7 + $0x60] sm:$0xff]
    %v2755 = vld [vmem:[%s7 + $0x68] sm:$0xff]
    %v2756 = vld [vmem:[%s7 + $0x70] sm:$0xff]
    %v2757 = vld [vmem:[%s7 + $0x78] sm:$0xff]
    %v2758 = vld [vmem:[%s8] sm:$0xff]
    %v2759 = vsel %vm58, %v2736, 0.0
    %2760 = vadd.xlane.f32.xlu0 %v2759
    %v2761 = vpop.xlane.xlu0 %2760
    %v2762 = vsel %vm58, %v2737, 0.0
    %2763 = vadd.xlane.f32.xlu0 %v2762
    %v2764 = vpop.xlane.xlu0 %2763
    %v2765 = vmul.f32 %v2761, %v65
    %v2766 = vmul.f32 %v2764, %v65
    %v2767 = vsub.f32 %v2736, %v2765
    %v2768 = vsub.f32 %v2737, %v2766
    %v2769 = vmul.f32 %v2767, %v2767
    %v2770 = vmul.f32 %v2768, %v2768
    %v2771 = vsel %vm58, %v2769, 0.0
    %2772 = vadd.xlane.f32.xlu0 %v2771
    %v2773 = vpop.xlane.xlu0 %2772
    %v2774 = vsel %vm58, %v2770, 0.0
    %2775 = vadd.xlane.f32.xlu0 %v2774
    %v2776 = vpop.xlane.xlu0 %2775
    %v2777 = vmul.f32 %v2773, 0.032258064
    %v2778 = vmul.f32 %v2776, 0.032258064
    %v2779 = vrsqrt.pop %v2777
    %v2780 = vmul.f32 %v2777, %v2779
    %vm2781 = vcmp.eq.f32.partialorder %v2777, inf
    %v2782 = vsel %vm2781, %v2777, %v2780
    %vm2783 = vcmp.eq.f32.partialorder %v2777, 0.0
    %v2784 = vand.u32 %v2777, 2147483648
    %v2785 = vsel %vm2783, %v2784, %v2782
    %v2786 = vrsqrt.pop %v2778
    %v2787 = vmul.f32 %v2778, %v2786
    %vm2788 = vcmp.eq.f32.partialorder %v2778, inf
    %v2789 = vsel %vm2788, %v2778, %v2787
    %vm2790 = vcmp.eq.f32.partialorder %v2778, 0.0
    %v2791 = vand.u32 %v2778, 2147483648
    %v2792 = vsel %vm2790, %v2791, %v2789
    %v2793 = vadd.f32 %v2785, 1e-06
    %v2794 = vadd.f32 %v2792, 1e-06
    %v2795 = vrcp.pop %v2793
    %v2796 = vrcp.pop %v2794
    %v2797 = vlaneseq
    %v2798 = vshrl.u32 %v2797, 7
    %v2799 = vsub.s32 3, %v2798
    %v2800 = vrot.slane %v2758, %v2799
    %v2801 = vmul.f32 %v2800, %v2767
    %v2802 = vmul.f32 %v2800, %v2768
    %v2803 = vmul.f32 %v2801, %v2795
    %v2804 = vmul.f32 %v2802, %v2796
    %2806 = vrot.lane.b32.xlu0 %v2800, 96
    %v2807 = vpop.permute.xlu0 %2806
    %v2809 = vadd.f32 %v2803, %v2807
    %v2810 = vadd.f32 %v2804, %v2807
    %v2811 = vlaneseq
    %v2812 = vshrl.u32 %v2811, 7
    %v2813 = vsub.s32 0, %v2812
    %v2814 = vrot.slane %v2758, %v2813
    %v2816 = vsel %vm58, %v2809, 0
    %v2819 = vsel %vm58, %v2810, 0
    %2821 = vmatprep.subr.mxu0 0.0
    %2822 = vmatpush1.msra.mxu0 %v2742
    %2823 = vmatprep.subr.mxu0 0.0
    %2824 = vmatpush1.msra.mxu0 %v2743
    %2825 = vmatprep.subr.mxu0 0.0
    %2826 = vmatpush1.msra.mxu0 %v2744
    %2827 = vmatprep.subr.mxu0 0.0
    %2828 = vmatpush1.msra.mxu0 %v2745
    %2829 = vmatprep.subr.mxu0 0.0
    %2830 = vmatpush1.msra.mxu0 0.0
    %2831 = vmatprep.subr.mxu0 0.0
    %2832 = vmatpush1.msra.mxu0 0.0
    %2833 = vmatprep.subr.mxu0 0.0
    %2834 = vmatpush1.msra.mxu0 0.0
    %2835 = vmatprep.subr.mxu0 0.0
    %2836 = vmatpush1.msra.mxu0 0.0
    %2837 = vmatprep.subr.mxu0 0.0
    %2838 = vmatpush1.msra.mxu0 0.0
    %2839 = vmatprep.subr.mxu0 0.0
    %2840 = vmatpush1.msra.mxu0 0.0
    %2841 = vmatprep.subr.mxu0 0.0
    %2842 = vmatpush1.msra.mxu0 0.0
    %2843 = vmatprep.subr.mxu0 0.0
    %2844 = vmatpush1.msra.mxu0 0.0
    %2845 = vmatprep.subr.mxu0 0.0
    %2846 = vmatpush1.msra.mxu0 0.0
    %2847 = vmatprep.subr.mxu0 0.0
    %2848 = vmatpush1.msra.mxu0 0.0
    %2849 = vmatprep.subr.mxu0 0.0
    %2850 = vmatpush1.msra.mxu0 0.0
    %2851 = vmatprep.subr.mxu0 0.0
    %2852 = vmatpush1.msra.mxu0 0.0
    %2853 = vmatprep.subr.mxu0 0.0
    %2854 = vmatpush1.msra.mxu0 0.0
    %2855 = vmatprep.subr.mxu0 0.0
    %2856 = vmatpush1.msra.mxu0 0.0
    %2857 = vmatprep.subr.mxu0 0.0
    %2858 = vmatpush1.msra.mxu0 0.0
    %2859 = vmatprep.subr.mxu0 0.0
    %2860 = vmatpush1.msra.mxu0 0.0
    %2861 = vmatprep.subr.mxu0 0.0
    %2862 = vmatpush1.msra.mxu0 0.0
    %2863 = vmatprep.subr.mxu0 0.0
    %2864 = vmatpush1.msra.mxu0 0.0
    %2865 = vmatprep.subr.mxu0 0.0
    %2866 = vmatpush1.msra.mxu0 0.0
    %2867 = vmatprep.subr.mxu0 0.0
    %2868 = vmatpush1.msra.mxu0 0.0
    %2869 = vmatprep.subr.mxu0 0.0
    %2870 = vmatpush1.msra.mxu0 0.0
    %2871 = vmatprep.subr.mxu0 0.0
    %2872 = vmatpush1.msra.mxu0 0.0
    %2873 = vmatprep.subr.mxu0 0.0
    %2874 = vmatpush1.msra.mxu0 0.0
    %2875 = vmatprep.subr.mxu0 0.0
    %2876 = vmatpush1.msra.mxu0 0.0
    %2877 = vmatprep.subr.mxu0 0.0
    %2878 = vmatpush1.msra.mxu0 0.0
    %2879 = vmatprep.subr.mxu0 0.0
    %2880 = vmatpush1.msra.mxu0 0.0
    %2881 = vmatprep.subr.mxu0 0.0
    %2882 = vmatpush1.msra.mxu0 0.0
    %2883 = vmatprep.subr.mxu0 0.0
    %2884 = vmatpush1.msra.mxu0 0.0
    %2885 = vmatprep.mubr.f32.mxu0 0.0
    %2886 = vmatmul.mubr.f32.gmra.mrb[0].mxu0 %v2816
    %v2887 = vpop.f32.mrb[0].mxu0
    %v2888 = vadd.f32 %v2814, %v2887
    %v2889 = vpop.f32.mrb[0].mxu0
    %2890 = vmatprep.mubr.f32.mxu0 0.0
    %2891 = vmatmul.mubr.f32.gmra.mrb[0].mxu0 %v2819
    %v2892 = vpop.f32.mrb[0].mxu0
    %v2893 = vadd.f32 %v2814, %v2892
    %v2894 = vpop.f32.mrb[0].mxu0
    %2895 = vdwg.mxu0
    %2898 = vrot.lane.b32.xlu0 %v2888, 96
    %v2899 = vpop.permute.xlu0 %2898
    %2900 = vrot.lane.b32.xlu0 %v2893, 96
    %v2901 = vpop.permute.xlu0 %2900
    %v2902 = vsel %vm203, %v2888, 0
    %v2904 = vsel %vm203, %v2893, 0
    %v2906 = vsel %vm203, %v2899, 0
    %v2908 = vsel %vm203, %v2901, 0
    %2910 = vmatprep.subr.mxu0 0.0
    %2911 = vmatpush1.xpose.msra.mxu0 %v2906
    %2912 = vmatprep.subr.mxu0 0.0
    %2913 = vmatpush1.xpose.msra.mxu0 %v2908
    %2914 = vmatprep.subr.mxu0 0.0
    %2915 = vmatpush1.xpose.msra.mxu0 0.0
    %2916 = vmatprep.subr.mxu0 0.0
    %2917 = vmatpush1.xpose.msra.mxu0 0.0
    %2918 = vmatprep.subr.mxu0 0.0
    %2919 = vmatpush1.xpose.msra.mxu0 0.0
    %2920 = vmatprep.subr.mxu0 0.0
    %2921 = vmatpush1.xpose.msra.mxu0 0.0
    %2922 = vmatprep.subr.mxu0 0.0
    %2923 = vmatpush1.xpose.msra.mxu0 0.0
    %2924 = vmatprep.subr.mxu0 0.0
    %2925 = vmatpush1.xpose.msra.mxu0 0.0
    %2926 = vmatprep.subr.mxu0 0.0
    %2927 = vmatpush1.xpose.msra.mxu0 0.0
    %2928 = vmatprep.subr.mxu0 0.0
    %2929 = vmatpush1.xpose.msra.mxu0 0.0
    %2930 = vmatprep.subr.mxu0 0.0
    %2931 = vmatpush1.xpose.msra.mxu0 0.0
    %2932 = vmatprep.subr.mxu0 0.0
    %2933 = vmatpush1.xpose.msra.mxu0 0.0
    %2934 = vmatprep.subr.mxu0 0.0
    %2935 = vmatpush1.xpose.msra.mxu0 0.0
    %2936 = vmatprep.subr.mxu0 0.0
    %2937 = vmatpush1.xpose.msra.mxu0 0.0
    %2938 = vmatprep.subr.mxu0 0.0
    %2939 = vmatpush1.xpose.msra.mxu0 0.0
    %2940 = vmatprep.subr.mxu0 0.0
    %2941 = vmatpush1.xpose.msra.mxu0 0.0
    %2942 = vmatprep.subr.mxu0 0.0
    %2943 = vmatpush1.xpose.msra.mxu0 0.0
    %2944 = vmatprep.subr.mxu0 0.0
    %2945 = vmatpush1.xpose.msra.mxu0 0.0
    %2946 = vmatprep.subr.mxu0 0.0
    %2947 = vmatpush1.xpose.msra.mxu0 0.0
    %2948 = vmatprep.subr.mxu0 0.0
    %2949 = vmatpush1.xpose.msra.mxu0 0.0
    %2950 = vmatprep.subr.mxu0 0.0
    %2951 = vmatpush1.xpose.msra.mxu0 0.0
    %2952 = vmatprep.subr.mxu0 0.0
    %2953 = vmatpush1.xpose.msra.mxu0 0.0
    %2954 = vmatprep.subr.mxu0 0.0
    %2955 = vmatpush1.xpose.msra.mxu0 0.0
    %2956 = vmatprep.subr.mxu0 0.0
    %2957 = vmatpush1.xpose.msra.mxu0 0.0
    %2958 = vmatprep.subr.mxu0 0.0
    %2959 = vmatpush1.xpose.msra.mxu0 0.0
    %2960 = vmatprep.subr.mxu0 0.0
    %2961 = vmatpush1.xpose.msra.mxu0 0.0
    %2962 = vmatprep.subr.mxu0 0.0
    %2963 = vmatpush1.xpose.msra.mxu0 0.0
    %2964 = vmatprep.subr.mxu0 0.0
    %2965 = vmatpush1.xpose.msra.mxu0 0.0
    %2966 = vmatprep.subr.mxu0 0.0
    %2967 = vmatpush1.xpose.msra.mxu0 0.0
    %2968 = vmatprep.subr.mxu0 0.0
    %2969 = vmatpush1.xpose.msra.mxu0 0.0
    %2970 = vmatprep.subr.mxu0 0.0
    %2971 = vmatpush1.xpose.msra.mxu0 0.0
    %2972 = vmatprep.subr.mxu0 0.0
    %2973 = vmatpush1.xpose.msra.mxu0 0.0
    %2974 = vmatprep.mubr.f32.mxu0 0.0
    %2975 = vmatmul.mubr.f32.gmra.mrb[0].mxu0 %v2902
    %v2976 = vpop.f32.mrb[0].mxu0
    %v2977 = vadd.f32 %v2738, %v2976
    %v2978 = vpop.f32.mrb[0].mxu0
    %2979 = vmatprep.mubr.f32.mxu0 0.0
    %2980 = vmatmul.mubr.f32.gmra.mrb[0].mxu0 %v2904
    %v2981 = vpop.f32.mrb[0].mxu0
    %v2982 = vadd.f32 %v2739, %v2981
    %v2983 = vpop.f32.mrb[0].mxu0
    %2984 = vdwg.mxu0
    %v2985 = vsel %vm287, %v2977, -inf
    %2986 = vmax.xlane.f32.xlu0 %v2985
    %v2987 = vpop.xlane.xlu0 %2986
    %v2988 = vsel %vm287, %v2982, -inf
    %2989 = vmax.xlane.f32.xlu0 %v2988
    %v2990 = vpop.xlane.xlu0 %2989
    %v2991 = vsub.f32 %v2977, %v2987
    %v2992 = vsub.f32 %v2982, %v2990
    %v2993 = vmul.f32 %v2991, 1.442695
    %v2994 = vpow.pop %v2993
    %v2995 = vmul.f32 %v2992, 1.442695
    %v2996 = vpow.pop %v2995
    %v2997 = vsel %vm287, %v2994, 0.0
    %2998 = vadd.xlane.f32.xlu0 %v2997
    %v2999 = vpop.xlane.xlu0 %2998
    %v3000 = vsel %vm287, %v2996, 0.0
    %3001 = vadd.xlane.f32.xlu0 %v3000
    %v3002 = vpop.xlane.xlu0 %3001
    %v3003 = vrcp.pop %v2999
    %v3004 = vrcp.pop %v3002
    %v3005 = vmul.f32 %v2994, %v3003
    %v3006 = vmul.f32 %v2996, %v3004
    %3007 = vrot.lane.b32.xlu0 %v2888, 64
    %v3008 = vpop.permute.xlu0 %3007
    %3009 = vrot.lane.b32.xlu0 %v2893, 64
    %v3010 = vpop.permute.xlu0 %3009
    %v3014 = vsel %vm287, %v3005, 0
    %v3017 = vsel %vm287, %v3006, 0
    %3019 = vmatprep.subr.mxu0 0.0
    %3020 = vmatpush1.msra.mxu0 %v3008
    %3021 = vmatprep.subr.mxu0 0.0
    %3022 = vmatpush1.msra.mxu0 %v3010
    %3023 = vmatprep.subr.mxu0 0.0
    %3024 = vmatpush1.msra.mxu0 0.0
    %3025 = vmatprep.subr.mxu0 0.0
    %3026 = vmatpush1.msra.mxu0 0.0
    %3027 = vmatprep.subr.mxu0 0.0
    %3028 = vmatpush1.msra.mxu0 0.0
    %3029 = vmatprep.subr.mxu0 0.0
    %3030 = vmatpush1.msra.mxu0 0.0
    %3031 = vmatprep.subr.mxu0 0.0
    %3032 = vmatpush1.msra.mxu0 0.0
    %3033 = vmatprep.subr.mxu0 0.0
    %3034 = vmatpush1.msra.mxu0 0.0
    %3035 = vmatprep.subr.mxu0 0.0
    %3036 = vmatpush1.msra.mxu0 0.0
    %3037 = vmatprep.subr.mxu0 0.0
    %3038 = vmatpush1.msra.mxu0 0.0
    %3039 = vmatprep.subr.mxu0 0.0
    %3040 = vmatpush1.msra.mxu0 0.0
    %3041 = vmatprep.subr.mxu0 0.0
    %3042 = vmatpush1.msra.mxu0 0.0
    %3043 = vmatprep.subr.mxu0 0.0
    %3044 = vmatpush1.msra.mxu0 0.0
    %3045 = vmatprep.subr.mxu0 0.0
    %3046 = vmatpush1.msra.mxu0 0.0
    %3047 = vmatprep.subr.mxu0 0.0
    %3048 = vmatpush1.msra.mxu0 0.0
    %3049 = vmatprep.subr.mxu0 0.0
    %3050 = vmatpush1.msra.mxu0 0.0
    %3051 = vmatprep.subr.mxu0 0.0
    %3052 = vmatpush1.msra.mxu0 0.0
    %3053 = vmatprep.subr.mxu0 0.0
    %3054 = vmatpush1.msra.mxu0 0.0
    %3055 = vmatprep.subr.mxu0 0.0
    %3056 = vmatpush1.msra.mxu0 0.0
    %3057 = vmatprep.subr.mxu0 0.0
    %3058 = vmatpush1.msra.mxu0 0.0
    %3059 = vmatprep.subr.mxu0 0.0
    %3060 = vmatpush1.msra.mxu0 0.0
    %3061 = vmatprep.subr.mxu0 0.0
    %3062 = vmatpush1.msra.mxu0 0.0
    %3063 = vmatprep.subr.mxu0 0.0
    %3064 = vmatpush1.msra.mxu0 0.0
    %3065 = vmatprep.subr.mxu0 0.0
    %3066 = vmatpush1.msra.mxu0 0.0
    %3067 = vmatprep.subr.mxu0 0.0
    %3068 = vmatpush1.msra.mxu0 0.0
    %3069 = vmatprep.subr.mxu0 0.0
    %3070 = vmatpush1.msra.mxu0 0.0
    %3071 = vmatprep.subr.mxu0 0.0
    %3072 = vmatpush1.msra.mxu0 0.0
    %3073 = vmatprep.subr.mxu0 0.0
    %3074 = vmatpush1.msra.mxu0 0.0
    %3075 = vmatprep.subr.mxu0 0.0
    %3076 = vmatpush1.msra.mxu0 0.0
    %3077 = vmatprep.subr.mxu0 0.0
    %3078 = vmatpush1.msra.mxu0 0.0
    %3079 = vmatprep.subr.mxu0 0.0
    %3080 = vmatpush1.msra.mxu0 0.0
    %3081 = vmatprep.subr.mxu0 0.0
    %3082 = vmatpush1.msra.mxu0 0.0
    %3083 = vmatprep.mubr.f32.mxu0 0.0
    %3084 = vmatmul.mubr.f32.gmra.mrb[0].mxu0 %v3014
    %v3085 = vpop.f32.mrb[0].mxu0
    %v3086 = vadd.f32 0.0, %v3085
    %v3087 = vpop.f32.mrb[0].mxu0
    %3088 = vmatprep.mubr.f32.mxu0 0.0
    %3089 = vmatmul.mubr.f32.gmra.mrb[0].mxu0 %v3017
    %v3090 = vpop.f32.mrb[0].mxu0
    %v3091 = vadd.f32 0.0, %v3090
    %v3092 = vpop.f32.mrb[0].mxu0
    %3093 = vdwg.mxu0
    %3094 = vrot.lane.b32.xlu0 %v2888, 120
    %v3095 = vpop.permute.xlu0 %3094
    %3096 = vrot.lane.b32.xlu0 %v2893, 120
    %v3097 = vpop.permute.xlu0 %3096
    %3098 = vrot.lane.b32.xlu0 %v2888, 88
    %v3099 = vpop.permute.xlu0 %3098
    %3100 = vrot.lane.b32.xlu0 %v2893, 88
    %v3101 = vpop.permute.xlu0 %3100
    %v3102 = vsel %vm203, %v3095, 0
    %v3104 = vsel %vm203, %v3097, 0
    %v3106 = vsel %vm203, %v3099, 0
    %v3108 = vsel %vm203, %v3101, 0
    %3110 = vmatprep.subr.mxu0 0.0
    %3111 = vmatpush1.xpose.msra.mxu0 %v3106
    %3112 = vmatprep.subr.mxu0 0.0
    %3113 = vmatpush1.xpose.msra.mxu0 %v3108
    %3114 = vmatprep.subr.mxu0 0.0
    %3115 = vmatpush1.xpose.msra.mxu0 0.0
    %3116 = vmatprep.subr.mxu0 0.0
    %3117 = vmatpush1.xpose.msra.mxu0 0.0
    %3118 = vmatprep.subr.mxu0 0.0
    %3119 = vmatpush1.xpose.msra.mxu0 0.0
    %3120 = vmatprep.subr.mxu0 0.0
    %3121 = vmatpush1.xpose.msra.mxu0 0.0
    %3122 = vmatprep.subr.mxu0 0.0
    %3123 = vmatpush1.xpose.msra.mxu0 0.0
    %3124 = vmatprep.subr.mxu0 0.0
    %3125 = vmatpush1.xpose.msra.mxu0 0.0
    %3126 = vmatprep.subr.mxu0 0.0
    %3127 = vmatpush1.xpose.msra.mxu0 0.0
    %3128 = vmatprep.subr.mxu0 0.0
    %3129 = vmatpush1.xpose.msra.mxu0 0.0
    %3130 = vmatprep.subr.mxu0 0.0
    %3131 = vmatpush1.xpose.msra.mxu0 0.0
    %3132 = vmatprep.subr.mxu0 0.0
    %3133 = vmatpush1.xpose.msra.mxu0 0.0
    %3134 = vmatprep.subr.mxu0 0.0
    %3135 = vmatpush1.xpose.msra.mxu0 0.0
    %3136 = vmatprep.subr.mxu0 0.0
    %3137 = vmatpush1.xpose.msra.mxu0 0.0
    %3138 = vmatprep.subr.mxu0 0.0
    %3139 = vmatpush1.xpose.msra.mxu0 0.0
    %3140 = vmatprep.subr.mxu0 0.0
    %3141 = vmatpush1.xpose.msra.mxu0 0.0
    %3142 = vmatprep.subr.mxu0 0.0
    %3143 = vmatpush1.xpose.msra.mxu0 0.0
    %3144 = vmatprep.subr.mxu0 0.0
    %3145 = vmatpush1.xpose.msra.mxu0 0.0
    %3146 = vmatprep.subr.mxu0 0.0
    %3147 = vmatpush1.xpose.msra.mxu0 0.0
    %3148 = vmatprep.subr.mxu0 0.0
    %3149 = vmatpush1.xpose.msra.mxu0 0.0
    %3150 = vmatprep.subr.mxu0 0.0
    %3151 = vmatpush1.xpose.msra.mxu0 0.0
    %3152 = vmatprep.subr.mxu0 0.0
    %3153 = vmatpush1.xpose.msra.mxu0 0.0
    %3154 = vmatprep.subr.mxu0 0.0
    %3155 = vmatpush1.xpose.msra.mxu0 0.0
    %3156 = vmatprep.subr.mxu0 0.0
    %3157 = vmatpush1.xpose.msra.mxu0 0.0
    %3158 = vmatprep.subr.mxu0 0.0
    %3159 = vmatpush1.xpose.msra.mxu0 0.0
    %3160 = vmatprep.subr.mxu0 0.0
    %3161 = vmatpush1.xpose.msra.mxu0 0.0
    %3162 = vmatprep.subr.mxu0 0.0
    %3163 = vmatpush1.xpose.msra.mxu0 0.0
    %3164 = vmatprep.subr.mxu0 0.0
    %3165 = vmatpush1.xpose.msra.mxu0 0.0
    %3166 = vmatprep.subr.mxu0 0.0
    %3167 = vmatpush1.xpose.msra.mxu0 0.0
    %3168 = vmatprep.subr.mxu0 0.0
    %3169 = vmatpush1.xpose.msra.mxu0 0.0
    %3170 = vmatprep.subr.mxu0 0.0
    %3171 = vmatpush1.xpose.msra.mxu0 0.0
    %3172 = vmatprep.subr.mxu0 0.0
    %3173 = vmatpush1.xpose.msra.mxu0 0.0
    %3174 = vmatprep.mubr.f32.mxu0 0.0
    %3175 = vmatmul.mubr.f32.gmra.mrb[0].mxu0 %v3102
    %v3176 = vpop.f32.mrb[0].mxu0
    %v3177 = vadd.f32 %v2738, %v3176
    %v3178 = vpop.f32.mrb[0].mxu0
    %3179 = vmatprep.mubr.f32.mxu0 0.0
    %3180 = vmatmul.mubr.f32.gmra.mrb[0].mxu0 %v3104
    %v3181 = vpop.f32.mrb[0].mxu0
    %v3182 = vadd.f32 %v2739, %v3181
    %v3183 = vpop.f32.mrb[0].mxu0
    %3184 = vdwg.mxu0
    %v3185 = vsel %vm287, %v3177, -inf
    %3186 = vmax.xlane.f32.xlu0 %v3185
    %v3187 = vpop.xlane.xlu0 %3186
    %v3188 = vsel %vm287, %v3182, -inf
    %3189 = vmax.xlane.f32.xlu0 %v3188
    %v3190 = vpop.xlane.xlu0 %3189
    %v3191 = vsub.f32 %v3177, %v3187
    %v3192 = vsub.f32 %v3182, %v3190
    %v3193 = vmul.f32 %v3191, 1.442695
    %v3194 = vpow.pop %v3193
    %v3195 = vmul.f32 %v3192, 1.442695
    %v3196 = vpow.pop %v3195
    %v3197 = vsel %vm287, %v3194, 0.0
    %3198 = vadd.xlane.f32.xlu0 %v3197
    %v3199 = vpop.xlane.xlu0 %3198
    %v3200 = vsel %vm287, %v3196, 0.0
    %3201 = vadd.xlane.f32.xlu0 %v3200
    %v3202 = vpop.xlane.xlu0 %3201
    %v3203 = vrcp.pop %v3199
    %v3204 = vrcp.pop %v3202
    %v3205 = vmul.f32 %v3194, %v3203
    %v3206 = vmul.f32 %v3196, %v3204
    %3207 = vrot.lane.b32.xlu0 %v2888, 56
    %v3208 = vpop.permute.xlu0 %3207
    %3209 = vrot.lane.b32.xlu0 %v2893, 56
    %v3210 = vpop.permute.xlu0 %3209
    %v3214 = vsel %vm287, %v3205, 0
    %v3217 = vsel %vm287, %v3206, 0
    %3219 = vmatprep.subr.mxu0 0.0
    %3220 = vmatpush1.msra.mxu0 %v3208
    %3221 = vmatprep.subr.mxu0 0.0
    %3222 = vmatpush1.msra.mxu0 %v3210
    %3223 = vmatprep.subr.mxu0 0.0
    %3224 = vmatpush1.msra.mxu0 0.0
    %3225 = vmatprep.subr.mxu0 0.0
    %3226 = vmatpush1.msra.mxu0 0.0
    %3227 = vmatprep.subr.mxu0 0.0
    %3228 = vmatpush1.msra.mxu0 0.0
    %3229 = vmatprep.subr.mxu0 0.0
    %3230 = vmatpush1.msra.mxu0 0.0
    %3231 = vmatprep.subr.mxu0 0.0
    %3232 = vmatpush1.msra.mxu0 0.0
    %3233 = vmatprep.subr.mxu0 0.0
    %3234 = vmatpush1.msra.mxu0 0.0
    %3235 = vmatprep.subr.mxu0 0.0
    %3236 = vmatpush1.msra.mxu0 0.0
    %3237 = vmatprep.subr.mxu0 0.0
    %3238 = vmatpush1.msra.mxu0 0.0
    %3239 = vmatprep.subr.mxu0 0.0
    %3240 = vmatpush1.msra.mxu0 0.0
    %3241 = vmatprep.subr.mxu0 0.0
    %3242 = vmatpush1.msra.mxu0 0.0
    %3243 = vmatprep.subr.mxu0 0.0
    %3244 = vmatpush1.msra.mxu0 0.0
    %3245 = vmatprep.subr.mxu0 0.0
    %3246 = vmatpush1.msra.mxu0 0.0
    %3247 = vmatprep.subr.mxu0 0.0
    %3248 = vmatpush1.msra.mxu0 0.0
    %3249 = vmatprep.subr.mxu0 0.0
    %3250 = vmatpush1.msra.mxu0 0.0
    %3251 = vmatprep.subr.mxu0 0.0
    %3252 = vmatpush1.msra.mxu0 0.0
    %3253 = vmatprep.subr.mxu0 0.0
    %3254 = vmatpush1.msra.mxu0 0.0
    %3255 = vmatprep.subr.mxu0 0.0
    %3256 = vmatpush1.msra.mxu0 0.0
    %3257 = vmatprep.subr.mxu0 0.0
    %3258 = vmatpush1.msra.mxu0 0.0
    %3259 = vmatprep.subr.mxu0 0.0
    %3260 = vmatpush1.msra.mxu0 0.0
    %3261 = vmatprep.subr.mxu0 0.0
    %3262 = vmatpush1.msra.mxu0 0.0
    %3263 = vmatprep.subr.mxu0 0.0
    %3264 = vmatpush1.msra.mxu0 0.0
    %3265 = vmatprep.subr.mxu0 0.0
    %3266 = vmatpush1.msra.mxu0 0.0
    %3267 = vmatprep.subr.mxu0 0.0
    %3268 = vmatpush1.msra.mxu0 0.0
    %3269 = vmatprep.subr.mxu0 0.0
    %3270 = vmatpush1.msra.mxu0 0.0
    %3271 = vmatprep.subr.mxu0 0.0
    %3272 = vmatpush1.msra.mxu0 0.0
    %3273 = vmatprep.subr.mxu0 0.0
    %3274 = vmatpush1.msra.mxu0 0.0
    %3275 = vmatprep.subr.mxu0 0.0
    %3276 = vmatpush1.msra.mxu0 0.0
    %3277 = vmatprep.subr.mxu0 0.0
    %3278 = vmatpush1.msra.mxu0 0.0
    %3279 = vmatprep.subr.mxu0 0.0
    %3280 = vmatpush1.msra.mxu0 0.0
    %3281 = vmatprep.subr.mxu0 0.0
    %3282 = vmatpush1.msra.mxu0 0.0
    %3283 = vmatprep.mubr.f32.mxu0 0.0
    %3284 = vmatmul.mubr.f32.gmra.mrb[0].mxu0 %v3214
    %v3285 = vpop.f32.mrb[0].mxu0
    %v3286 = vadd.f32 0.0, %v3285
    %v3287 = vpop.f32.mrb[0].mxu0
    %3288 = vmatprep.mubr.f32.mxu0 0.0
    %3289 = vmatmul.mubr.f32.gmra.mrb[0].mxu0 %v3217
    %v3290 = vpop.f32.mrb[0].mxu0
    %v3291 = vadd.f32 0.0, %v3290
    %v3292 = vpop.f32.mrb[0].mxu0
    %3293 = vdwg.mxu0
    %3294 = vrot.lane.b32.xlu0 %v2888, 112
    %v3295 = vpop.permute.xlu0 %3294
    %3296 = vrot.lane.b32.xlu0 %v2893, 112
    %v3297 = vpop.permute.xlu0 %3296
    %3298 = vrot.lane.b32.xlu0 %v2888, 80
    %v3299 = vpop.permute.xlu0 %3298
    %3300 = vrot.lane.b32.xlu0 %v2893, 80
    %v3301 = vpop.permute.xlu0 %3300
    %v3302 = vsel %vm203, %v3295, 0
    %v3304 = vsel %vm203, %v3297, 0
    %v3306 = vsel %vm203, %v3299, 0
    %v3308 = vsel %vm203, %v3301, 0
    %3310 = vmatprep.subr.mxu0 0.0
    %3311 = vmatpush1.xpose.msra.mxu0 %v3306
    %3312 = vmatprep.subr.mxu0 0.0
    %3313 = vmatpush1.xpose.msra.mxu0 %v3308
    %3314 = vmatprep.subr.mxu0 0.0
    %3315 = vmatpush1.xpose.msra.mxu0 0.0
    %3316 = vmatprep.subr.mxu0 0.0
    %3317 = vmatpush1.xpose.msra.mxu0 0.0
    %3318 = vmatprep.subr.mxu0 0.0
    %3319 = vmatpush1.xpose.msra.mxu0 0.0
    %3320 = vmatprep.subr.mxu0 0.0
    %3321 = vmatpush1.xpose.msra.mxu0 0.0
    %3322 = vmatprep.subr.mxu0 0.0
    %3323 = vmatpush1.xpose.msra.mxu0 0.0
    %3324 = vmatprep.subr.mxu0 0.0
    %3325 = vmatpush1.xpose.msra.mxu0 0.0
    %3326 = vmatprep.subr.mxu0 0.0
    %3327 = vmatpush1.xpose.msra.mxu0 0.0
    %3328 = vmatprep.subr.mxu0 0.0
    %3329 = vmatpush1.xpose.msra.mxu0 0.0
    %3330 = vmatprep.subr.mxu0 0.0
    %3331 = vmatpush1.xpose.msra.mxu0 0.0
    %3332 = vmatprep.subr.mxu0 0.0
    %3333 = vmatpush1.xpose.msra.mxu0 0.0
    %3334 = vmatprep.subr.mxu0 0.0
    %3335 = vmatpush1.xpose.msra.mxu0 0.0
    %3336 = vmatprep.subr.mxu0 0.0
    %3337 = vmatpush1.xpose.msra.mxu0 0.0
    %3338 = vmatprep.subr.mxu0 0.0
    %3339 = vmatpush1.xpose.msra.mxu0 0.0
    %3340 = vmatprep.subr.mxu0 0.0
    %3341 = vmatpush1.xpose.msra.mxu0 0.0
    %3342 = vmatprep.subr.mxu0 0.0
    %3343 = vmatpush1.xpose.msra.mxu0 0.0
    %3344 = vmatprep.subr.mxu0 0.0
    %3345 = vmatpush1.xpose.msra.mxu0 0.0
    %3346 = vmatprep.subr.mxu0 0.0
    %3347 = vmatpush1.xpose.msra.mxu0 0.0
    %3348 = vmatprep.subr.mxu0 0.0
    %3349 = vmatpush1.xpose.msra.mxu0 0.0
    %3350 = vmatprep.subr.mxu0 0.0
    %3351 = vmatpush1.xpose.msra.mxu0 0.0
    %3352 = vmatprep.subr.mxu0 0.0
    %3353 = vmatpush1.xpose.msra.mxu0 0.0
    %3354 = vmatprep.subr.mxu0 0.0
    %3355 = vmatpush1.xpose.msra.mxu0 0.0
    %3356 = vmatprep.subr.mxu0 0.0
    %3357 = vmatpush1.xpose.msra.mxu0 0.0
    %3358 = vmatprep.subr.mxu0 0.0
    %3359 = vmatpush1.xpose.msra.mxu0 0.0
    %3360 = vmatprep.subr.mxu0 0.0
    %3361 = vmatpush1.xpose.msra.mxu0 0.0
    %3362 = vmatprep.subr.mxu0 0.0
    %3363 = vmatpush1.xpose.msra.mxu0 0.0
    %3364 = vmatprep.subr.mxu0 0.0
    %3365 = vmatpush1.xpose.msra.mxu0 0.0
    %3366 = vmatprep.subr.mxu0 0.0
    %3367 = vmatpush1.xpose.msra.mxu0 0.0
    %3368 = vmatprep.subr.mxu0 0.0
    %3369 = vmatpush1.xpose.msra.mxu0 0.0
    %3370 = vmatprep.subr.mxu0 0.0
    %3371 = vmatpush1.xpose.msra.mxu0 0.0
    %3372 = vmatprep.subr.mxu0 0.0
    %3373 = vmatpush1.xpose.msra.mxu0 0.0
    %3374 = vmatprep.mubr.f32.mxu0 0.0
    %3375 = vmatmul.mubr.f32.gmra.mrb[0].mxu0 %v3302
    %v3376 = vpop.f32.mrb[0].mxu0
    %v3377 = vadd.f32 %v2738, %v3376
    %v3378 = vpop.f32.mrb[0].mxu0
    %3379 = vmatprep.mubr.f32.mxu0 0.0
    %3380 = vmatmul.mubr.f32.gmra.mrb[0].mxu0 %v3304
    %v3381 = vpop.f32.mrb[0].mxu0
    %v3382 = vadd.f32 %v2739, %v3381
    %v3383 = vpop.f32.mrb[0].mxu0
    %3384 = vdwg.mxu0
    %v3385 = vsel %vm287, %v3377, -inf
    %3386 = vmax.xlane.f32.xlu0 %v3385
    %v3387 = vpop.xlane.xlu0 %3386
    %v3388 = vsel %vm287, %v3382, -inf
    %3389 = vmax.xlane.f32.xlu0 %v3388
    %v3390 = vpop.xlane.xlu0 %3389
    %v3391 = vsub.f32 %v3377, %v3387
    %v3392 = vsub.f32 %v3382, %v3390
    %v3393 = vmul.f32 %v3391, 1.442695
    %v3394 = vpow.pop %v3393
    %v3395 = vmul.f32 %v3392, 1.442695
    %v3396 = vpow.pop %v3395
    %v3397 = vsel %vm287, %v3394, 0.0
    %3398 = vadd.xlane.f32.xlu0 %v3397
    %v3399 = vpop.xlane.xlu0 %3398
    %v3400 = vsel %vm287, %v3396, 0.0
    %3401 = vadd.xlane.f32.xlu0 %v3400
    %v3402 = vpop.xlane.xlu0 %3401
    %v3403 = vrcp.pop %v3399
    %v3404 = vrcp.pop %v3402
    %v3405 = vmul.f32 %v3394, %v3403
    %v3406 = vmul.f32 %v3396, %v3404
    %3407 = vrot.lane.b32.xlu0 %v2888, 48
    %v3408 = vpop.permute.xlu0 %3407
    %3409 = vrot.lane.b32.xlu0 %v2893, 48
    %v3410 = vpop.permute.xlu0 %3409
    %v3414 = vsel %vm287, %v3405, 0
    %v3417 = vsel %vm287, %v3406, 0
    %3419 = vmatprep.subr.mxu0 0.0
    %3420 = vmatpush1.msra.mxu0 %v3408
    %3421 = vmatprep.subr.mxu0 0.0
    %3422 = vmatpush1.msra.mxu0 %v3410
    %3423 = vmatprep.subr.mxu0 0.0
    %3424 = vmatpush1.msra.mxu0 0.0
    %3425 = vmatprep.subr.mxu0 0.0
    %3426 = vmatpush1.msra.mxu0 0.0
    %3427 = vmatprep.subr.mxu0 0.0
    %3428 = vmatpush1.msra.mxu0 0.0
    %3429 = vmatprep.subr.mxu0 0.0
    %3430 = vmatpush1.msra.mxu0 0.0
    %3431 = vmatprep.subr.mxu0 0.0
    %3432 = vmatpush1.msra.mxu0 0.0
    %3433 = vmatprep.subr.mxu0 0.0
    %3434 = vmatpush1.msra.mxu0 0.0
    %3435 = vmatprep.subr.mxu0 0.0
    %3436 = vmatpush1.msra.mxu0 0.0
    %3437 = vmatprep.subr.mxu0 0.0
    %3438 = vmatpush1.msra.mxu0 0.0
    %3439 = vmatprep.subr.mxu0 0.0
    %3440 = vmatpush1.msra.mxu0 0.0
    %3441 = vmatprep.subr.mxu0 0.0
    %3442 = vmatpush1.msra.mxu0 0.0
    %3443 = vmatprep.subr.mxu0 0.0
    %3444 = vmatpush1.msra.mxu0 0.0
    %3445 = vmatprep.subr.mxu0 0.0
    %3446 = vmatpush1.msra.mxu0 0.0
    %3447 = vmatprep.subr.mxu0 0.0
    %3448 = vmatpush1.msra.mxu0 0.0
    %3449 = vmatprep.subr.mxu0 0.0
    %3450 = vmatpush1.msra.mxu0 0.0
    %3451 = vmatprep.subr.mxu0 0.0
    %3452 = vmatpush1.msra.mxu0 0.0
    %3453 = vmatprep.subr.mxu0 0.0
    %3454 = vmatpush1.msra.mxu0 0.0
    %3455 = vmatprep.subr.mxu0 0.0
    %3456 = vmatpush1.msra.mxu0 0.0
    %3457 = vmatprep.subr.mxu0 0.0
    %3458 = vmatpush1.msra.mxu0 0.0
    %3459 = vmatprep.subr.mxu0 0.0
    %3460 = vmatpush1.msra.mxu0 0.0
    %3461 = vmatprep.subr.mxu0 0.0
    %3462 = vmatpush1.msra.mxu0 0.0
    %3463 = vmatprep.subr.mxu0 0.0
    %3464 = vmatpush1.msra.mxu0 0.0
    %3465 = vmatprep.subr.mxu0 0.0
    %3466 = vmatpush1.msra.mxu0 0.0
    %3467 = vmatprep.subr.mxu0 0.0
    %3468 = vmatpush1.msra.mxu0 0.0
    %3469 = vmatprep.subr.mxu0 0.0
    %3470 = vmatpush1.msra.mxu0 0.0
    %3471 = vmatprep.subr.mxu0 0.0
    %3472 = vmatpush1.msra.mxu0 0.0
    %3473 = vmatprep.subr.mxu0 0.0
    %3474 = vmatpush1.msra.mxu0 0.0
    %3475 = vmatprep.subr.mxu0 0.0
    %3476 = vmatpush1.msra.mxu0 0.0
    %3477 = vmatprep.subr.mxu0 0.0
    %3478 = vmatpush1.msra.mxu0 0.0
    %3479 = vmatprep.subr.mxu0 0.0
    %3480 = vmatpush1.msra.mxu0 0.0
    %3481 = vmatprep.subr.mxu0 0.0
    %3482 = vmatpush1.msra.mxu0 0.0
    %3483 = vmatprep.mubr.f32.mxu0 0.0
    %3484 = vmatmul.mubr.f32.gmra.mrb[0].mxu0 %v3414
    %v3485 = vpop.f32.mrb[0].mxu0
    %v3486 = vadd.f32 0.0, %v3485
    %v3487 = vpop.f32.mrb[0].mxu0
    %3488 = vmatprep.mubr.f32.mxu0 0.0
    %3489 = vmatmul.mubr.f32.gmra.mrb[0].mxu0 %v3417
    %v3490 = vpop.f32.mrb[0].mxu0
    %v3491 = vadd.f32 0.0, %v3490
    %v3492 = vpop.f32.mrb[0].mxu0
    %3493 = vdwg.mxu0
    %3494 = vrot.lane.b32.xlu0 %v2888, 104
    %v3495 = vpop.permute.xlu0 %3494
    %3496 = vrot.lane.b32.xlu0 %v2893, 104
    %v3497 = vpop.permute.xlu0 %3496
    %3498 = vrot.lane.b32.xlu0 %v2888, 72
    %v3499 = vpop.permute.xlu0 %3498
    %3500 = vrot.lane.b32.xlu0 %v2893, 72
    %v3501 = vpop.permute.xlu0 %3500
    %v3502 = vsel %vm203, %v3495, 0
    %v3504 = vsel %vm203, %v3497, 0
    %v3506 = vsel %vm203, %v3499, 0
    %v3508 = vsel %vm203, %v3501, 0
    %3510 = vmatprep.subr.mxu0 0.0
    %3511 = vmatpush1.xpose.msra.mxu0 %v3506
    %3512 = vmatprep.subr.mxu0 0.0
    %3513 = vmatpush1.xpose.msra.mxu0 %v3508
    %3514 = vmatprep.subr.mxu0 0.0
    %3515 = vmatpush1.xpose.msra.mxu0 0.0
    %3516 = vmatprep.subr.mxu0 0.0
    %3517 = vmatpush1.xpose.msra.mxu0 0.0
    %3518 = vmatprep.subr.mxu0 0.0
    %3519 = vmatpush1.xpose.msra.mxu0 0.0
    %3520 = vmatprep.subr.mxu0 0.0
    %3521 = vmatpush1.xpose.msra.mxu0 0.0
    %3522 = vmatprep.subr.mxu0 0.0
    %3523 = vmatpush1.xpose.msra.mxu0 0.0
    %3524 = vmatprep.subr.mxu0 0.0
    %3525 = vmatpush1.xpose.msra.mxu0 0.0
    %3526 = vmatprep.subr.mxu0 0.0
    %3527 = vmatpush1.xpose.msra.mxu0 0.0
    %3528 = vmatprep.subr.mxu0 0.0
    %3529 = vmatpush1.xpose.msra.mxu0 0.0
    %3530 = vmatprep.subr.mxu0 0.0
    %3531 = vmatpush1.xpose.msra.mxu0 0.0
    %3532 = vmatprep.subr.mxu0 0.0
    %3533 = vmatpush1.xpose.msra.mxu0 0.0
    %3534 = vmatprep.subr.mxu0 0.0
    %3535 = vmatpush1.xpose.msra.mxu0 0.0
    %3536 = vmatprep.subr.mxu0 0.0
    %3537 = vmatpush1.xpose.msra.mxu0 0.0
    %3538 = vmatprep.subr.mxu0 0.0
    %3539 = vmatpush1.xpose.msra.mxu0 0.0
    %3540 = vmatprep.subr.mxu0 0.0
    %3541 = vmatpush1.xpose.msra.mxu0 0.0
    %3542 = vmatprep.subr.mxu0 0.0
    %3543 = vmatpush1.xpose.msra.mxu0 0.0
    %3544 = vmatprep.subr.mxu0 0.0
    %3545 = vmatpush1.xpose.msra.mxu0 0.0
    %3546 = vmatprep.subr.mxu0 0.0
    %3547 = vmatpush1.xpose.msra.mxu0 0.0
    %3548 = vmatprep.subr.mxu0 0.0
    %3549 = vmatpush1.xpose.msra.mxu0 0.0
    %3550 = vmatprep.subr.mxu0 0.0
    %3551 = vmatpush1.xpose.msra.mxu0 0.0
    %3552 = vmatprep.subr.mxu0 0.0
    %3553 = vmatpush1.xpose.msra.mxu0 0.0
    %3554 = vmatprep.subr.mxu0 0.0
    %3555 = vmatpush1.xpose.msra.mxu0 0.0
    %3556 = vmatprep.subr.mxu0 0.0
    %3557 = vmatpush1.xpose.msra.mxu0 0.0
    %3558 = vmatprep.subr.mxu0 0.0
    %3559 = vmatpush1.xpose.msra.mxu0 0.0
    %3560 = vmatprep.subr.mxu0 0.0
    %3561 = vmatpush1.xpose.msra.mxu0 0.0
    %3562 = vmatprep.subr.mxu0 0.0
    %3563 = vmatpush1.xpose.msra.mxu0 0.0
    %3564 = vmatprep.subr.mxu0 0.0
    %3565 = vmatpush1.xpose.msra.mxu0 0.0
    %3566 = vmatprep.subr.mxu0 0.0
    %3567 = vmatpush1.xpose.msra.mxu0 0.0
    %3568 = vmatprep.subr.mxu0 0.0
    %3569 = vmatpush1.xpose.msra.mxu0 0.0
    %3570 = vmatprep.subr.mxu0 0.0
    %3571 = vmatpush1.xpose.msra.mxu0 0.0
    %3572 = vmatprep.subr.mxu0 0.0
    %3573 = vmatpush1.xpose.msra.mxu0 0.0
    %3574 = vmatprep.mubr.f32.mxu0 0.0
    %3575 = vmatmul.mubr.f32.gmra.mrb[0].mxu0 %v3502
    %v3576 = vpop.f32.mrb[0].mxu0
    %v3577 = vadd.f32 %v2738, %v3576
    %v3578 = vpop.f32.mrb[0].mxu0
    %3579 = vmatprep.mubr.f32.mxu0 0.0
    %3580 = vmatmul.mubr.f32.gmra.mrb[0].mxu0 %v3504
    %v3581 = vpop.f32.mrb[0].mxu0
    %v3582 = vadd.f32 %v2739, %v3581
    %v3583 = vpop.f32.mrb[0].mxu0
    %3584 = vdwg.mxu0
    %v3585 = vsel %vm287, %v3577, -inf
    %3586 = vmax.xlane.f32.xlu0 %v3585
    %v3587 = vpop.xlane.xlu0 %3586
    %v3588 = vsel %vm287, %v3582, -inf
    %3589 = vmax.xlane.f32.xlu0 %v3588
    %v3590 = vpop.xlane.xlu0 %3589
    %v3591 = vsub.f32 %v3577, %v3587
    %v3592 = vsub.f32 %v3582, %v3590
    %v3593 = vmul.f32 %v3591, 1.442695
    %v3594 = vpow.pop %v3593
    %v3595 = vmul.f32 %v3592, 1.442695
    %v3596 = vpow.pop %v3595
    %v3597 = vsel %vm287, %v3594, 0.0
    %3598 = vadd.xlane.f32.xlu0 %v3597
    %v3599 = vpop.xlane.xlu0 %3598
    %v3600 = vsel %vm287, %v3596, 0.0
    %3601 = vadd.xlane.f32.xlu0 %v3600
    %v3602 = vpop.xlane.xlu0 %3601
    %v3603 = vrcp.pop %v3599
    %v3604 = vrcp.pop %v3602
    %v3605 = vmul.f32 %v3594, %v3603
    %v3606 = vmul.f32 %v3596, %v3604
    %3607 = vrot.lane.b32.xlu0 %v2888, 40
    %v3608 = vpop.permute.xlu0 %3607
    %3609 = vrot.lane.b32.xlu0 %v2893, 40
    %v3610 = vpop.permute.xlu0 %3609
    %v3614 = vsel %vm287, %v3605, 0
    %v3617 = vsel %vm287, %v3606, 0
    %3619 = vmatprep.subr.mxu0 0.0
    %3620 = vmatpush1.msra.mxu0 %v3608
    %3621 = vmatprep.subr.mxu0 0.0
    %3622 = vmatpush1.msra.mxu0 %v3610
    %3623 = vmatprep.subr.mxu0 0.0
    %3624 = vmatpush1.msra.mxu0 0.0
    %3625 = vmatprep.subr.mxu0 0.0
    %3626 = vmatpush1.msra.mxu0 0.0
    %3627 = vmatprep.subr.mxu0 0.0
    %3628 = vmatpush1.msra.mxu0 0.0
    %3629 = vmatprep.subr.mxu0 0.0
    %3630 = vmatpush1.msra.mxu0 0.0
    %3631 = vmatprep.subr.mxu0 0.0
    %3632 = vmatpush1.msra.mxu0 0.0
    %3633 = vmatprep.subr.mxu0 0.0
    %3634 = vmatpush1.msra.mxu0 0.0
    %3635 = vmatprep.subr.mxu0 0.0
    %3636 = vmatpush1.msra.mxu0 0.0
    %3637 = vmatprep.subr.mxu0 0.0
    %3638 = vmatpush1.msra.mxu0 0.0
    %3639 = vmatprep.subr.mxu0 0.0
    %3640 = vmatpush1.msra.mxu0 0.0
    %3641 = vmatprep.subr.mxu0 0.0
    %3642 = vmatpush1.msra.mxu0 0.0
    %3643 = vmatprep.subr.mxu0 0.0
    %3644 = vmatpush1.msra.mxu0 0.0
    %3645 = vmatprep.subr.mxu0 0.0
    %3646 = vmatpush1.msra.mxu0 0.0
    %3647 = vmatprep.subr.mxu0 0.0
    %3648 = vmatpush1.msra.mxu0 0.0
    %3649 = vmatprep.subr.mxu0 0.0
    %3650 = vmatpush1.msra.mxu0 0.0
    %3651 = vmatprep.subr.mxu0 0.0
    %3652 = vmatpush1.msra.mxu0 0.0
    %3653 = vmatprep.subr.mxu0 0.0
    %3654 = vmatpush1.msra.mxu0 0.0
    %3655 = vmatprep.subr.mxu0 0.0
    %3656 = vmatpush1.msra.mxu0 0.0
    %3657 = vmatprep.subr.mxu0 0.0
    %3658 = vmatpush1.msra.mxu0 0.0
    %3659 = vmatprep.subr.mxu0 0.0
    %3660 = vmatpush1.msra.mxu0 0.0
    %3661 = vmatprep.subr.mxu0 0.0
    %3662 = vmatpush1.msra.mxu0 0.0
    %3663 = vmatprep.subr.mxu0 0.0
    %3664 = vmatpush1.msra.mxu0 0.0
    %3665 = vmatprep.subr.mxu0 0.0
    %3666 = vmatpush1.msra.mxu0 0.0
    %3667 = vmatprep.subr.mxu0 0.0
    %3668 = vmatpush1.msra.mxu0 0.0
    %3669 = vmatprep.subr.mxu0 0.0
    %3670 = vmatpush1.msra.mxu0 0.0
    %3671 = vmatprep.subr.mxu0 0.0
    %3672 = vmatpush1.msra.mxu0 0.0
    %3673 = vmatprep.subr.mxu0 0.0
    %3674 = vmatpush1.msra.mxu0 0.0
    %3675 = vmatprep.subr.mxu0 0.0
    %3676 = vmatpush1.msra.mxu0 0.0
    %3677 = vmatprep.subr.mxu0 0.0
    %3678 = vmatpush1.msra.mxu0 0.0
    %3679 = vmatprep.subr.mxu0 0.0
    %3680 = vmatpush1.msra.mxu0 0.0
    %3681 = vmatprep.subr.mxu0 0.0
    %3682 = vmatpush1.msra.mxu0 0.0
    %3683 = vmatprep.mubr.f32.mxu0 0.0
    %3684 = vmatmul.mubr.f32.gmra.mrb[0].mxu0 %v3614
    %v3685 = vpop.f32.mrb[0].mxu0
    %v3686 = vadd.f32 0.0, %v3685
    %v3687 = vpop.f32.mrb[0].mxu0
    %3688 = vmatprep.mubr.f32.mxu0 0.0
    %3689 = vmatmul.mubr.f32.gmra.mrb[0].mxu0 %v3617
    %v3690 = vpop.f32.mrb[0].mxu0
    %v3691 = vadd.f32 0.0, %v3690
    %v3692 = vpop.f32.mrb[0].mxu0
    %3693 = vdwg.mxu0
    %3696 = vrot.lane.b32.xlu0 %v3286, 8
    %v3697 = vpop.permute.xlu0 %3696
    %3698 = vrot.lane.b32.xlu0 %v3291, 8
    %v3699 = vpop.permute.xlu0 %3698
    %3704 = vrot.lane.b32.xlu0 %v3486, 16
    %v3705 = vpop.permute.xlu0 %3704
    %3706 = vrot.lane.b32.xlu0 %v3491, 16
    %v3707 = vpop.permute.xlu0 %3706
    %3712 = vrot.lane.b32.xlu0 %v3686, 24
    %v3713 = vpop.permute.xlu0 %3712
    %3714 = vrot.lane.b32.xlu0 %v3691, 24
    %v3715 = vpop.permute.xlu0 %3714
    %v3718 = vsel %vm203, %v3086, %v3697
    %v3719 = vsel %vm203, %v3091, %v3699
    %v3720 = vsel %vm287, %v3718, %v3705
    %v3721 = vsel %vm287, %v3719, %v3707
    %v3722 = vsel %vm1025, %v3720, %v3713
    %v3723 = vsel %vm1025, %v3721, %v3715
    %3728 = vrot.lane.b32.xlu0 %v2742, 32
    %v3729 = vpop.permute.xlu0 %3728
    %3730 = vrot.lane.b32.xlu0 %v2743, 32
    %v3731 = vpop.permute.xlu0 %3730
    %3732 = vrot.lane.b32.xlu0 %v2744, 32
    %v3733 = vpop.permute.xlu0 %3732
    %3734 = vrot.lane.b32.xlu0 %v2745, 32
    %v3735 = vpop.permute.xlu0 %3734
    %3741 = vrot.lane.b32.xlu0 %v2814, 32
    %v3742 = vpop.permute.xlu0 %3741
    %v3745 = vsel %vm58, %v3722, 0
    %v3748 = vsel %vm58, %v3723, 0
    %3750 = vmatprep.subr.mxu0 0.0
    %3751 = vmatpush1.msra.mxu0 %v3729
    %3752 = vmatprep.subr.mxu0 0.0
    %3753 = vmatpush1.msra.mxu0 %v3731
    %3754 = vmatprep.subr.mxu0 0.0
    %3755 = vmatpush1.msra.mxu0 %v3733
    %3756 = vmatprep.subr.mxu0 0.0
    %3757 = vmatpush1.msra.mxu0 %v3735
    %3758 = vmatprep.subr.mxu0 0.0
    %3759 = vmatpush1.msra.mxu0 0.0
    %3760 = vmatprep.subr.mxu0 0.0
    %3761 = vmatpush1.msra.mxu0 0.0
    %3762 = vmatprep.subr.mxu0 0.0
    %3763 = vmatpush1.msra.mxu0 0.0
    %3764 = vmatprep.subr.mxu0 0.0
    %3765 = vmatpush1.msra.mxu0 0.0
    %3766 = vmatprep.subr.mxu0 0.0
    %3767 = vmatpush1.msra.mxu0 0.0
    %3768 = vmatprep.subr.mxu0 0.0
    %3769 = vmatpush1.msra.mxu0 0.0
    %3770 = vmatprep.subr.mxu0 0.0
    %3771 = vmatpush1.msra.mxu0 0.0
    %3772 = vmatprep.subr.mxu0 0.0
    %3773 = vmatpush1.msra.mxu0 0.0
    %3774 = vmatprep.subr.mxu0 0.0
    %3775 = vmatpush1.msra.mxu0 0.0
    %3776 = vmatprep.subr.mxu0 0.0
    %3777 = vmatpush1.msra.mxu0 0.0
    %3778 = vmatprep.subr.mxu0 0.0
    %3779 = vmatpush1.msra.mxu0 0.0
    %3780 = vmatprep.subr.mxu0 0.0
    %3781 = vmatpush1.msra.mxu0 0.0
    %3782 = vmatprep.subr.mxu0 0.0
    %3783 = vmatpush1.msra.mxu0 0.0
    %3784 = vmatprep.subr.mxu0 0.0
    %3785 = vmatpush1.msra.mxu0 0.0
    %3786 = vmatprep.subr.mxu0 0.0
    %3787 = vmatpush1.msra.mxu0 0.0
    %3788 = vmatprep.subr.mxu0 0.0
    %3789 = vmatpush1.msra.mxu0 0.0
    %3790 = vmatprep.subr.mxu0 0.0
    %3791 = vmatpush1.msra.mxu0 0.0
    %3792 = vmatprep.subr.mxu0 0.0
    %3793 = vmatpush1.msra.mxu0 0.0
    %3794 = vmatprep.subr.mxu0 0.0
    %3795 = vmatpush1.msra.mxu0 0.0
    %3796 = vmatprep.subr.mxu0 0.0
    %3797 = vmatpush1.msra.mxu0 0.0
    %3798 = vmatprep.subr.mxu0 0.0
    %3799 = vmatpush1.msra.mxu0 0.0
    %3800 = vmatprep.subr.mxu0 0.0
    %3801 = vmatpush1.msra.mxu0 0.0
    %3802 = vmatprep.subr.mxu0 0.0
    %3803 = vmatpush1.msra.mxu0 0.0
    %3804 = vmatprep.subr.mxu0 0.0
    %3805 = vmatpush1.msra.mxu0 0.0
    %3806 = vmatprep.subr.mxu0 0.0
    %3807 = vmatpush1.msra.mxu0 0.0
    %3808 = vmatprep.subr.mxu0 0.0
    %3809 = vmatpush1.msra.mxu0 0.0
    %3810 = vmatprep.subr.mxu0 0.0
    %3811 = vmatpush1.msra.mxu0 0.0
    %3812 = vmatprep.subr.mxu0 0.0
    %3813 = vmatpush1.msra.mxu0 0.0
    %3814 = vmatprep.mubr.f32.mxu0 0.0
    %3815 = vmatmul.mubr.f32.gmra.mrb[0].mxu0 %v3745
    %v3816 = vpop.f32.mrb[0].mxu0
    %v3817 = vadd.f32 %v3742, %v3816
    %v3818 = vpop.f32.mrb[0].mxu0
    %3819 = vmatprep.mubr.f32.mxu0 0.0
    %3820 = vmatmul.mubr.f32.gmra.mrb[0].mxu0 %v3748
    %v3821 = vpop.f32.mrb[0].mxu0
    %v3822 = vadd.f32 %v3742, %v3821
    %v3823 = vpop.f32.mrb[0].mxu0
    %3824 = vdwg.mxu0
    %v3825 = vadd.f32 %v2736, %v3817
    %v3826 = vadd.f32 %v2737, %v3822
    %v3827 = vsel %vm58, %v3825, 0.0
    %3828 = vadd.xlane.f32.xlu0 %v3827
    %v3829 = vpop.xlane.xlu0 %3828
    %v3830 = vsel %vm58, %v3826, 0.0
    %3831 = vadd.xlane.f32.xlu0 %v3830
    %v3832 = vpop.xlane.xlu0 %3831
    %v3833 = vmul.f32 %v3829, %v65
    %v3834 = vmul.f32 %v3832, %v65
    %v3835 = vsub.f32 %v3825, %v3833
    %v3836 = vsub.f32 %v3826, %v3834
    %v3837 = vmul.f32 %v3835, %v3835
    %v3838 = vmul.f32 %v3836, %v3836
    %v3839 = vsel %vm58, %v3837, 0.0
    %3840 = vadd.xlane.f32.xlu0 %v3839
    %v3841 = vpop.xlane.xlu0 %3840
    %v3842 = vsel %vm58, %v3838, 0.0
    %3843 = vadd.xlane.f32.xlu0 %v3842
    %v3844 = vpop.xlane.xlu0 %3843
    %v3845 = vmul.f32 %v3841, 0.032258064
    %v3846 = vmul.f32 %v3844, 0.032258064
    %v3847 = vrsqrt.pop %v3845
    %v3848 = vmul.f32 %v3845, %v3847
    %vm3849 = vcmp.eq.f32.partialorder %v3845, inf
    %v3850 = vsel %vm3849, %v3845, %v3848
    %vm3851 = vcmp.eq.f32.partialorder %v3845, 0.0
    %v3852 = vand.u32 %v3845, 2147483648
    %v3853 = vsel %vm3851, %v3852, %v3850
    %v3854 = vrsqrt.pop %v3846
    %v3855 = vmul.f32 %v3846, %v3854
    %vm3856 = vcmp.eq.f32.partialorder %v3846, inf
    %v3857 = vsel %vm3856, %v3846, %v3855
    %vm3858 = vcmp.eq.f32.partialorder %v3846, 0.0
    %v3859 = vand.u32 %v3846, 2147483648
    %v3860 = vsel %vm3858, %v3859, %v3857
    %v3861 = vadd.f32 %v3853, 1e-06
    %v3862 = vadd.f32 %v3860, 1e-06
    %v3863 = vrcp.pop %v3861
    %v3864 = vrcp.pop %v3862
    %3867 = vrot.lane.b32.xlu0 %v3835, 64
    %v3868 = vpop.permute.xlu0 %3867
    %3869 = vrot.lane.b32.xlu0 %v3836, 64
    %v3870 = vpop.permute.xlu0 %3869
    %v3873 = vmul.f32 %v2800, %v3868
    %v3874 = vmul.f32 %v2800, %v3870
    %v3875 = vmul.f32 %v3873, %v3863
    %v3876 = vmul.f32 %v3874, %v3864
    %v3877 = vadd.f32 %v3875, %v2807
    %v3878 = vadd.f32 %v3876, %v2807
    %v3879 = vlaneseq
    %v3880 = vshrl.u32 %v3879, 7
    %v3881 = vsub.s32 1, %v3880
    %v3882 = vrot.slane %v2758, %v3881
    %3885 = vrot.lane.b32.xlu0 %v3877, 64
    %v3886 = vpop.permute.xlu0 %3885
    %3887 = vrot.lane.b32.xlu0 %v3878, 64
    %v3888 = vpop.permute.xlu0 %3887
    %v3889 = vsel %vm58, %v3886, 0
    %v3891 = vsel %vm58, %v3888, 0
    %3893 = vmatprep.subr.mxu0 0.0
    %3894 = vmatpush1.msra.mxu0 %v2746
    %3895 = vmatprep.subr.mxu0 0.0
    %3896 = vmatpush1.msra.mxu0 %v2747
    %3897 = vmatprep.subr.mxu0 0.0
    %3898 = vmatpush1.msra.mxu0 %v2748
    %3899 = vmatprep.subr.mxu0 0.0
    %3900 = vmatpush1.msra.mxu0 %v2749
    %3901 = vmatprep.subr.mxu0 0.0
    %3902 = vmatpush1.msra.mxu0 0.0
    %3903 = vmatprep.subr.mxu0 0.0
    %3904 = vmatpush1.msra.mxu0 0.0
    %3905 = vmatprep.subr.mxu0 0.0
    %3906 = vmatpush1.msra.mxu0 0.0
    %3907 = vmatprep.subr.mxu0 0.0
    %3908 = vmatpush1.msra.mxu0 0.0
    %3909 = vmatprep.subr.mxu0 0.0
    %3910 = vmatpush1.msra.mxu0 0.0
    %3911 = vmatprep.subr.mxu0 0.0
    %3912 = vmatpush1.msra.mxu0 0.0
    %3913 = vmatprep.subr.mxu0 0.0
    %3914 = vmatpush1.msra.mxu0 0.0
    %3915 = vmatprep.subr.mxu0 0.0
    %3916 = vmatpush1.msra.mxu0 0.0
    %3917 = vmatprep.subr.mxu0 0.0
    %3918 = vmatpush1.msra.mxu0 0.0
    %3919 = vmatprep.subr.mxu0 0.0
    %3920 = vmatpush1.msra.mxu0 0.0
    %3921 = vmatprep.subr.mxu0 0.0
    %3922 = vmatpush1.msra.mxu0 0.0
    %3923 = vmatprep.subr.mxu0 0.0
    %3924 = vmatpush1.msra.mxu0 0.0
    %3925 = vmatprep.subr.mxu0 0.0
    %3926 = vmatpush1.msra.mxu0 0.0
    %3927 = vmatprep.subr.mxu0 0.0
    %3928 = vmatpush1.msra.mxu0 0.0
    %3929 = vmatprep.subr.mxu0 0.0
    %3930 = vmatpush1.msra.mxu0 0.0
    %3931 = vmatprep.subr.mxu0 0.0
    %3932 = vmatpush1.msra.mxu0 0.0
    %3933 = vmatprep.subr.mxu0 0.0
    %3934 = vmatpush1.msra.mxu0 0.0
    %3935 = vmatprep.subr.mxu0 0.0
    %3936 = vmatpush1.msra.mxu0 0.0
    %3937 = vmatprep.subr.mxu0 0.0
    %3938 = vmatpush1.msra.mxu0 0.0
    %3939 = vmatprep.subr.mxu0 0.0
    %3940 = vmatpush1.msra.mxu0 0.0
    %3941 = vmatprep.subr.mxu0 0.0
    %3942 = vmatpush1.msra.mxu0 0.0
    %3943 = vmatprep.subr.mxu0 0.0
    %3944 = vmatpush1.msra.mxu0 0.0
    %3945 = vmatprep.subr.mxu0 0.0
    %3946 = vmatpush1.msra.mxu0 0.0
    %3947 = vmatprep.subr.mxu0 0.0
    %3948 = vmatpush1.msra.mxu0 0.0
    %3949 = vmatprep.subr.mxu0 0.0
    %3950 = vmatpush1.msra.mxu0 0.0
    %3951 = vmatprep.subr.mxu0 0.0
    %3952 = vmatpush1.msra.mxu0 0.0
    %3953 = vmatprep.subr.mxu0 0.0
    %3954 = vmatpush1.msra.mxu0 0.0
    %3955 = vmatprep.subr.mxu0 0.0
    %3956 = vmatpush1.msra.mxu0 0.0
    %3957 = vmatprep.mubr.f32.mxu0 0.0
    %3958 = vmatmul.mubr.f32.gmra.mrb[0].mxu0 %v3889
    %v3959 = vpop.f32.mrb[0].mxu0
    %v3960 = vadd.f32 %v3882, %v3959
    %v3961 = vpop.f32.mrb[0].mxu0
    %3962 = vmatprep.mubr.f32.mxu0 0.0
    %3963 = vmatmul.mubr.f32.gmra.mrb[0].mxu0 %v3891
    %v3964 = vpop.f32.mrb[0].mxu0
    %v3965 = vadd.f32 %v3882, %v3964
    %v3966 = vpop.f32.mrb[0].mxu0
    %3967 = vdwg.mxu0
    %3972 = vrot.lane.b32.xlu0 %v2746, 96
    %v3973 = vpop.permute.xlu0 %3972
    %3974 = vrot.lane.b32.xlu0 %v2747, 96
    %v3975 = vpop.permute.xlu0 %3974
    %3976 = vrot.lane.b32.xlu0 %v2748, 96
    %v3977 = vpop.permute.xlu0 %3976
    %3978 = vrot.lane.b32.xlu0 %v2749, 96
    %v3979 = vpop.permute.xlu0 %3978
    %3985 = vrot.lane.b32.xlu0 %v3882, 96
    %v3986 = vpop.permute.xlu0 %3985
    %v3989 = vsel %vm58, %v2734, 0
    %v3992 = vsel %vm58, %v2735, 0
    %3994 = vmatprep.subr.mxu0 0.0
    %3995 = vmatpush1.msra.mxu0 %v3973
    %3996 = vmatprep.subr.mxu0 0.0
    %3997 = vmatpush1.msra.mxu0 %v3975
    %3998 = vmatprep.subr.mxu0 0.0
    %3999 = vmatpush1.msra.mxu0 %v3977
    %4000 = vmatprep.subr.mxu0 0.0
    %4001 = vmatpush1.msra.mxu0 %v3979
    %4002 = vmatprep.subr.mxu0 0.0
    %4003 = vmatpush1.msra.mxu0 0.0
    %4004 = vmatprep.subr.mxu0 0.0
    %4005 = vmatpush1.msra.mxu0 0.0
    %4006 = vmatprep.subr.mxu0 0.0
    %4007 = vmatpush1.msra.mxu0 0.0
    %4008 = vmatprep.subr.mxu0 0.0
    %4009 = vmatpush1.msra.mxu0 0.0
    %4010 = vmatprep.subr.mxu0 0.0
    %4011 = vmatpush1.msra.mxu0 0.0
    %4012 = vmatprep.subr.mxu0 0.0
    %4013 = vmatpush1.msra.mxu0 0.0
    %4014 = vmatprep.subr.mxu0 0.0
    %4015 = vmatpush1.msra.mxu0 0.0
    %4016 = vmatprep.subr.mxu0 0.0
    %4017 = vmatpush1.msra.mxu0 0.0
    %4018 = vmatprep.subr.mxu0 0.0
    %4019 = vmatpush1.msra.mxu0 0.0
    %4020 = vmatprep.subr.mxu0 0.0
    %4021 = vmatpush1.msra.mxu0 0.0
    %4022 = vmatprep.subr.mxu0 0.0
    %4023 = vmatpush1.msra.mxu0 0.0
    %4024 = vmatprep.subr.mxu0 0.0
    %4025 = vmatpush1.msra.mxu0 0.0
    %4026 = vmatprep.subr.mxu0 0.0
    %4027 = vmatpush1.msra.mxu0 0.0
    %4028 = vmatprep.subr.mxu0 0.0
    %4029 = vmatpush1.msra.mxu0 0.0
    %4030 = vmatprep.subr.mxu0 0.0
    %4031 = vmatpush1.msra.mxu0 0.0
    %4032 = vmatprep.subr.mxu0 0.0
    %4033 = vmatpush1.msra.mxu0 0.0
    %4034 = vmatprep.subr.mxu0 0.0
    %4035 = vmatpush1.msra.mxu0 0.0
    %4036 = vmatprep.subr.mxu0 0.0
    %4037 = vmatpush1.msra.mxu0 0.0
    %4038 = vmatprep.subr.mxu0 0.0
    %4039 = vmatpush1.msra.mxu0 0.0
    %4040 = vmatprep.subr.mxu0 0.0
    %4041 = vmatpush1.msra.mxu0 0.0
    %4042 = vmatprep.subr.mxu0 0.0
    %4043 = vmatpush1.msra.mxu0 0.0
    %4044 = vmatprep.subr.mxu0 0.0
    %4045 = vmatpush1.msra.mxu0 0.0
    %4046 = vmatprep.subr.mxu0 0.0
    %4047 = vmatpush1.msra.mxu0 0.0
    %4048 = vmatprep.subr.mxu0 0.0
    %4049 = vmatpush1.msra.mxu0 0.0
    %4050 = vmatprep.subr.mxu0 0.0
    %4051 = vmatpush1.msra.mxu0 0.0
    %4052 = vmatprep.subr.mxu0 0.0
    %4053 = vmatpush1.msra.mxu0 0.0
    %4054 = vmatprep.subr.mxu0 0.0
    %4055 = vmatpush1.msra.mxu0 0.0
    %4056 = vmatprep.subr.mxu0 0.0
    %4057 = vmatpush1.msra.mxu0 0.0
    %4058 = vmatprep.mubr.f32.mxu0 0.0
    %4059 = vmatmul.mubr.f32.gmra.mrb[0].mxu0 %v3989
    %v4060 = vpop.f32.mrb[0].mxu0
    %v4061 = vadd.f32 %v3986, %v4060
    %v4062 = vpop.f32.mrb[0].mxu0
    %4063 = vmatprep.mubr.f32.mxu0 0.0
    %4064 = vmatmul.mubr.f32.gmra.mrb[0].mxu0 %v3992
    %v4065 = vpop.f32.mrb[0].mxu0
    %v4066 = vadd.f32 %v3986, %v4065
    %v4067 = vpop.f32.mrb[0].mxu0
    %4068 = vdwg.mxu0
    %v4070 = vsel %vm203, %v3960, 0
    %v4073 = vsel %vm203, %v3965, 0
    %v4076 = vsel %vm203, %v4061, 0
    %v4079 = vsel %vm203, %v4066, 0
    %4081 = vmatprep.subr.mxu0 0.0
    %4082 = vmatpush1.xpose.msra.mxu0 %v4076
    %4083 = vmatprep.subr.mxu0 0.0
    %4084 = vmatpush1.xpose.msra.mxu0 %v4079
    %4085 = vmatprep.subr.mxu0 0.0
    %4086 = vmatpush1.xpose.msra.mxu0 0.0
    %4087 = vmatprep.subr.mxu0 0.0
    %4088 = vmatpush1.xpose.msra.mxu0 0.0
    %4089 = vmatprep.subr.mxu0 0.0
    %4090 = vmatpush1.xpose.msra.mxu0 0.0
    %4091 = vmatprep.subr.mxu0 0.0
    %4092 = vmatpush1.xpose.msra.mxu0 0.0
    %4093 = vmatprep.subr.mxu0 0.0
    %4094 = vmatpush1.xpose.msra.mxu0 0.0
    %4095 = vmatprep.subr.mxu0 0.0
    %4096 = vmatpush1.xpose.msra.mxu0 0.0
    %4097 = vmatprep.subr.mxu0 0.0
    %4098 = vmatpush1.xpose.msra.mxu0 0.0
    %4099 = vmatprep.subr.mxu0 0.0
    %4100 = vmatpush1.xpose.msra.mxu0 0.0
    %4101 = vmatprep.subr.mxu0 0.0
    %4102 = vmatpush1.xpose.msra.mxu0 0.0
    %4103 = vmatprep.subr.mxu0 0.0
    %4104 = vmatpush1.xpose.msra.mxu0 0.0
    %4105 = vmatprep.subr.mxu0 0.0
    %4106 = vmatpush1.xpose.msra.mxu0 0.0
    %4107 = vmatprep.subr.mxu0 0.0
    %4108 = vmatpush1.xpose.msra.mxu0 0.0
    %4109 = vmatprep.subr.mxu0 0.0
    %4110 = vmatpush1.xpose.msra.mxu0 0.0
    %4111 = vmatprep.subr.mxu0 0.0
    %4112 = vmatpush1.xpose.msra.mxu0 0.0
    %4113 = vmatprep.subr.mxu0 0.0
    %4114 = vmatpush1.xpose.msra.mxu0 0.0
    %4115 = vmatprep.subr.mxu0 0.0
    %4116 = vmatpush1.xpose.msra.mxu0 0.0
    %4117 = vmatprep.subr.mxu0 0.0
    %4118 = vmatpush1.xpose.msra.mxu0 0.0
    %4119 = vmatprep.subr.mxu0 0.0
    %4120 = vmatpush1.xpose.msra.mxu0 0.0
    %4121 = vmatprep.subr.mxu0 0.0
    %4122 = vmatpush1.xpose.msra.mxu0 0.0
    %4123 = vmatprep.subr.mxu0 0.0
    %4124 = vmatpush1.xpose.msra.mxu0 0.0
    %4125 = vmatprep.subr.mxu0 0.0
    %4126 = vmatpush1.xpose.msra.mxu0 0.0
    %4127 = vmatprep.subr.mxu0 0.0
    %4128 = vmatpush1.xpose.msra.mxu0 0.0
    %4129 = vmatprep.subr.mxu0 0.0
    %4130 = vmatpush1.xpose.msra.mxu0 0.0
    %4131 = vmatprep.subr.mxu0 0.0
    %4132 = vmatpush1.xpose.msra.mxu0 0.0
    %4133 = vmatprep.subr.mxu0 0.0
    %4134 = vmatpush1.xpose.msra.mxu0 0.0
    %4135 = vmatprep.subr.mxu0 0.0
    %4136 = vmatpush1.xpose.msra.mxu0 0.0
    %4137 = vmatprep.subr.mxu0 0.0
    %4138 = vmatpush1.xpose.msra.mxu0 0.0
    %4139 = vmatprep.subr.mxu0 0.0
    %4140 = vmatpush1.xpose.msra.mxu0 0.0
    %4141 = vmatprep.subr.mxu0 0.0
    %4142 = vmatpush1.xpose.msra.mxu0 0.0
    %4143 = vmatprep.subr.mxu0 0.0
    %4144 = vmatpush1.xpose.msra.mxu0 0.0
    %4145 = vmatprep.mubr.f32.mxu0 0.0
    %4146 = vmatmul.mubr.f32.gmra.mrb[0].mxu0 %v4070
    %v4147 = vpop.f32.mrb[0].mxu0
    %v4148 = vadd.f32 %v2740, %v4147
    %v4149 = vpop.f32.mrb[0].mxu0
    %4150 = vmatprep.mubr.f32.mxu0 0.0
    %4151 = vmatmul.mubr.f32.gmra.mrb[0].mxu0 %v4073
    %v4152 = vpop.f32.mrb[0].mxu0
    %v4153 = vadd.f32 %v2741, %v4152
    %v4154 = vpop.f32.mrb[0].mxu0
    %4155 = vdwg.mxu0
    %v4156 = vsel %vm287, %v4148, -inf
    %4157 = vmax.xlane.f32.xlu0 %v4156
    %v4158 = vpop.xlane.xlu0 %4157
    %v4159 = vsel %vm287, %v4153, -inf
    %4160 = vmax.xlane.f32.xlu0 %v4159
    %v4161 = vpop.xlane.xlu0 %4160
    %v4162 = vsub.f32 %v4148, %v4158
    %v4163 = vsub.f32 %v4153, %v4161
    %v4164 = vmul.f32 %v4162, 1.442695
    %v4165 = vpow.pop %v4164
    %v4166 = vmul.f32 %v4163, 1.442695
    %v4167 = vpow.pop %v4166
    %v4168 = vsel %vm287, %v4165, 0.0
    %4169 = vadd.xlane.f32.xlu0 %v4168
    %v4170 = vpop.xlane.xlu0 %4169
    %v4171 = vsel %vm287, %v4167, 0.0
    %4172 = vadd.xlane.f32.xlu0 %v4171
    %v4173 = vpop.xlane.xlu0 %4172
    %v4174 = vrcp.pop %v4170
    %v4175 = vrcp.pop %v4173
    %v4176 = vmul.f32 %v4165, %v4174
    %v4177 = vmul.f32 %v4167, %v4175
    %4178 = vrot.lane.b32.xlu0 %v4061, 96
    %v4179 = vpop.permute.xlu0 %4178
    %4180 = vrot.lane.b32.xlu0 %v4066, 96
    %v4181 = vpop.permute.xlu0 %4180
    %v4185 = vsel %vm287, %v4176, 0
    %v4188 = vsel %vm287, %v4177, 0
    %4190 = vmatprep.subr.mxu0 0.0
    %4191 = vmatpush1.msra.mxu0 %v4179
    %4192 = vmatprep.subr.mxu0 0.0
    %4193 = vmatpush1.msra.mxu0 %v4181
    %4194 = vmatprep.subr.mxu0 0.0
    %4195 = vmatpush1.msra.mxu0 0.0
    %4196 = vmatprep.subr.mxu0 0.0
    %4197 = vmatpush1.msra.mxu0 0.0
    %4198 = vmatprep.subr.mxu0 0.0
    %4199 = vmatpush1.msra.mxu0 0.0
    %4200 = vmatprep.subr.mxu0 0.0
    %4201 = vmatpush1.msra.mxu0 0.0
    %4202 = vmatprep.subr.mxu0 0.0
    %4203 = vmatpush1.msra.mxu0 0.0
    %4204 = vmatprep.subr.mxu0 0.0
    %4205 = vmatpush1.msra.mxu0 0.0
    %4206 = vmatprep.subr.mxu0 0.0
    %4207 = vmatpush1.msra.mxu0 0.0
    %4208 = vmatprep.subr.mxu0 0.0
    %4209 = vmatpush1.msra.mxu0 0.0
    %4210 = vmatprep.subr.mxu0 0.0
    %4211 = vmatpush1.msra.mxu0 0.0
    %4212 = vmatprep.subr.mxu0 0.0
    %4213 = vmatpush1.msra.mxu0 0.0
    %4214 = vmatprep.subr.mxu0 0.0
    %4215 = vmatpush1.msra.mxu0 0.0
    %4216 = vmatprep.subr.mxu0 0.0
    %4217 = vmatpush1.msra.mxu0 0.0
    %4218 = vmatprep.subr.mxu0 0.0
    %4219 = vmatpush1.msra.mxu0 0.0
    %4220 = vmatprep.subr.mxu0 0.0
    %4221 = vmatpush1.msra.mxu0 0.0
    %4222 = vmatprep.subr.mxu0 0.0
    %4223 = vmatpush1.msra.mxu0 0.0
    %4224 = vmatprep.subr.mxu0 0.0
    %4225 = vmatpush1.msra.mxu0 0.0
    %4226 = vmatprep.subr.mxu0 0.0
    %4227 = vmatpush1.msra.mxu0 0.0
    %4228 = vmatprep.subr.mxu0 0.0
    %4229 = vmatpush1.msra.mxu0 0.0
    %4230 = vmatprep.subr.mxu0 0.0
    %4231 = vmatpush1.msra.mxu0 0.0
    %4232 = vmatprep.subr.mxu0 0.0
    %4233 = vmatpush1.msra.mxu0 0.0
    %4234 = vmatprep.subr.mxu0 0.0
    %4235 = vmatpush1.msra.mxu0 0.0
    %4236 = vmatprep.subr.mxu0 0.0
    %4237 = vmatpush1.msra.mxu0 0.0
    %4238 = vmatprep.subr.mxu0 0.0
    %4239 = vmatpush1.msra.mxu0 0.0
    %4240 = vmatprep.subr.mxu0 0.0
    %4241 = vmatpush1.msra.mxu0 0.0
    %4242 = vmatprep.subr.mxu0 0.0
    %4243 = vmatpush1.msra.mxu0 0.0
    %4244 = vmatprep.subr.mxu0 0.0
    %4245 = vmatpush1.msra.mxu0 0.0
    %4246 = vmatprep.subr.mxu0 0.0
    %4247 = vmatpush1.msra.mxu0 0.0
    %4248 = vmatprep.subr.mxu0 0.0
    %4249 = vmatpush1.msra.mxu0 0.0
    %4250 = vmatprep.subr.mxu0 0.0
    %4251 = vmatpush1.msra.mxu0 0.0
    %4252 = vmatprep.subr.mxu0 0.0
    %4253 = vmatpush1.msra.mxu0 0.0
    %4254 = vmatprep.mubr.f32.mxu0 0.0
    %4255 = vmatmul.mubr.f32.gmra.mrb[0].mxu0 %v4185
    %v4256 = vpop.f32.mrb[0].mxu0
    %v4257 = vadd.f32 0.0, %v4256
    %v4258 = vpop.f32.mrb[0].mxu0
    %4259 = vmatprep.mubr.f32.mxu0 0.0
    %4260 = vmatmul.mubr.f32.gmra.mrb[0].mxu0 %v4188
    %v4261 = vpop.f32.mrb[0].mxu0
    %v4262 = vadd.f32 0.0, %v4261
    %v4263 = vpop.f32.mrb[0].mxu0
    %4264 = vdwg.mxu0
    %4265 = vrot.lane.b32.xlu0 %v3960, 120
    %v4266 = vpop.permute.xlu0 %4265
    %4267 = vrot.lane.b32.xlu0 %v3965, 120
    %v4268 = vpop.permute.xlu0 %4267
    %4269 = vrot.lane.b32.xlu0 %v4061, 120
    %v4270 = vpop.permute.xlu0 %4269
    %4271 = vrot.lane.b32.xlu0 %v4066, 120
    %v4272 = vpop.permute.xlu0 %4271
    %v4273 = vsel %vm203, %v4266, 0
    %v4275 = vsel %vm203, %v4268, 0
    %v4277 = vsel %vm203, %v4270, 0
    %v4279 = vsel %vm203, %v4272, 0
    %4281 = vmatprep.subr.mxu0 0.0
    %4282 = vmatpush1.xpose.msra.mxu0 %v4277
    %4283 = vmatprep.subr.mxu0 0.0
    %4284 = vmatpush1.xpose.msra.mxu0 %v4279
    %4285 = vmatprep.subr.mxu0 0.0
    %4286 = vmatpush1.xpose.msra.mxu0 0.0
    %4287 = vmatprep.subr.mxu0 0.0
    %4288 = vmatpush1.xpose.msra.mxu0 0.0
    %4289 = vmatprep.subr.mxu0 0.0
    %4290 = vmatpush1.xpose.msra.mxu0 0.0
    %4291 = vmatprep.subr.mxu0 0.0
    %4292 = vmatpush1.xpose.msra.mxu0 0.0
    %4293 = vmatprep.subr.mxu0 0.0
    %4294 = vmatpush1.xpose.msra.mxu0 0.0
    %4295 = vmatprep.subr.mxu0 0.0
    %4296 = vmatpush1.xpose.msra.mxu0 0.0
    %4297 = vmatprep.subr.mxu0 0.0
    %4298 = vmatpush1.xpose.msra.mxu0 0.0
    %4299 = vmatprep.subr.mxu0 0.0
    %4300 = vmatpush1.xpose.msra.mxu0 0.0
    %4301 = vmatprep.subr.mxu0 0.0
    %4302 = vmatpush1.xpose.msra.mxu0 0.0
    %4303 = vmatprep.subr.mxu0 0.0
    %4304 = vmatpush1.xpose.msra.mxu0 0.0
    %4305 = vmatprep.subr.mxu0 0.0
    %4306 = vmatpush1.xpose.msra.mxu0 0.0
    %4307 = vmatprep.subr.mxu0 0.0
    %4308 = vmatpush1.xpose.msra.mxu0 0.0
    %4309 = vmatprep.subr.mxu0 0.0
    %4310 = vmatpush1.xpose.msra.mxu0 0.0
    %4311 = vmatprep.subr.mxu0 0.0
    %4312 = vmatpush1.xpose.msra.mxu0 0.0
    %4313 = vmatprep.subr.mxu0 0.0
    %4314 = vmatpush1.xpose.msra.mxu0 0.0
    %4315 = vmatprep.subr.mxu0 0.0
    %4316 = vmatpush1.xpose.msra.mxu0 0.0
    %4317 = vmatprep.subr.mxu0 0.0
    %4318 = vmatpush1.xpose.msra.mxu0 0.0
    %4319 = vmatprep.subr.mxu0 0.0
    %4320 = vmatpush1.xpose.msra.mxu0 0.0
    %4321 = vmatprep.subr.mxu0 0.0
    %4322 = vmatpush1.xpose.msra.mxu0 0.0
    %4323 = vmatprep.subr.mxu0 0.0
    %4324 = vmatpush1.xpose.msra.mxu0 0.0
    %4325 = vmatprep.subr.mxu0 0.0
    %4326 = vmatpush1.xpose.msra.mxu0 0.0
    %4327 = vmatprep.subr.mxu0 0.0
    %4328 = vmatpush1.xpose.msra.mxu0 0.0
    %4329 = vmatprep.subr.mxu0 0.0
    %4330 = vmatpush1.xpose.msra.mxu0 0.0
    %4331 = vmatprep.subr.mxu0 0.0
    %4332 = vmatpush1.xpose.msra.mxu0 0.0
    %4333 = vmatprep.subr.mxu0 0.0
    %4334 = vmatpush1.xpose.msra.mxu0 0.0
    %4335 = vmatprep.subr.mxu0 0.0
    %4336 = vmatpush1.xpose.msra.mxu0 0.0
    %4337 = vmatprep.subr.mxu0 0.0
    %4338 = vmatpush1.xpose.msra.mxu0 0.0
    %4339 = vmatprep.subr.mxu0 0.0
    %4340 = vmatpush1.xpose.msra.mxu0 0.0
    %4341 = vmatprep.subr.mxu0 0.0
    %4342 = vmatpush1.xpose.msra.mxu0 0.0
    %4343 = vmatprep.subr.mxu0 0.0
    %4344 = vmatpush1.xpose.msra.mxu0 0.0
    %4345 = vmatprep.mubr.f32.mxu0 0.0
    %4346 = vmatmul.mubr.f32.gmra.mrb[0].mxu0 %v4273
    %v4347 = vpop.f32.mrb[0].mxu0
    %v4348 = vadd.f32 %v2740, %v4347
    %v4349 = vpop.f32.mrb[0].mxu0
    %4350 = vmatprep.mubr.f32.mxu0 0.0
    %4351 = vmatmul.mubr.f32.gmra.mrb[0].mxu0 %v4275
    %v4352 = vpop.f32.mrb[0].mxu0
    %v4353 = vadd.f32 %v2741, %v4352
    %v4354 = vpop.f32.mrb[0].mxu0
    %4355 = vdwg.mxu0
    %v4356 = vsel %vm287, %v4348, -inf
    %4357 = vmax.xlane.f32.xlu0 %v4356
    %v4358 = vpop.xlane.xlu0 %4357
    %v4359 = vsel %vm287, %v4353, -inf
    %4360 = vmax.xlane.f32.xlu0 %v4359
    %v4361 = vpop.xlane.xlu0 %4360
    %v4362 = vsub.f32 %v4348, %v4358
    %v4363 = vsub.f32 %v4353, %v4361
    %v4364 = vmul.f32 %v4362, 1.442695
    %v4365 = vpow.pop %v4364
    %v4366 = vmul.f32 %v4363, 1.442695
    %v4367 = vpow.pop %v4366
    %v4368 = vsel %vm287, %v4365, 0.0
    %4369 = vadd.xlane.f32.xlu0 %v4368
    %v4370 = vpop.xlane.xlu0 %4369
    %v4371 = vsel %vm287, %v4367, 0.0
    %4372 = vadd.xlane.f32.xlu0 %v4371
    %v4373 = vpop.xlane.xlu0 %4372
    %v4374 = vrcp.pop %v4370
    %v4375 = vrcp.pop %v4373
    %v4376 = vmul.f32 %v4365, %v4374
    %v4377 = vmul.f32 %v4367, %v4375
    %4378 = vrot.lane.b32.xlu0 %v4061, 88
    %v4379 = vpop.permute.xlu0 %4378
    %4380 = vrot.lane.b32.xlu0 %v4066, 88
    %v4381 = vpop.permute.xlu0 %4380
    %v4385 = vsel %vm287, %v4376, 0
    %v4388 = vsel %vm287, %v4377, 0
    %4390 = vmatprep.subr.mxu0 0.0
    %4391 = vmatpush1.msra.mxu0 %v4379
    %4392 = vmatprep.subr.mxu0 0.0
    %4393 = vmatpush1.msra.mxu0 %v4381
    %4394 = vmatprep.subr.mxu0 0.0
    %4395 = vmatpush1.msra.mxu0 0.0
    %4396 = vmatprep.subr.mxu0 0.0
    %4397 = vmatpush1.msra.mxu0 0.0
    %4398 = vmatprep.subr.mxu0 0.0
    %4399 = vmatpush1.msra.mxu0 0.0
    %4400 = vmatprep.subr.mxu0 0.0
    %4401 = vmatpush1.msra.mxu0 0.0
    %4402 = vmatprep.subr.mxu0 0.0
    %4403 = vmatpush1.msra.mxu0 0.0
    %4404 = vmatprep.subr.mxu0 0.0
    %4405 = vmatpush1.msra.mxu0 0.0
    %4406 = vmatprep.subr.mxu0 0.0
    %4407 = vmatpush1.msra.mxu0 0.0
    %4408 = vmatprep.subr.mxu0 0.0
    %4409 = vmatpush1.msra.mxu0 0.0
    %4410 = vmatprep.subr.mxu0 0.0
    %4411 = vmatpush1.msra.mxu0 0.0
    %4412 = vmatprep.subr.mxu0 0.0
    %4413 = vmatpush1.msra.mxu0 0.0
    %4414 = vmatprep.subr.mxu0 0.0
    %4415 = vmatpush1.msra.mxu0 0.0
    %4416 = vmatprep.subr.mxu0 0.0
    %4417 = vmatpush1.msra.mxu0 0.0
    %4418 = vmatprep.subr.mxu0 0.0
    %4419 = vmatpush1.msra.mxu0 0.0
    %4420 = vmatprep.subr.mxu0 0.0
    %4421 = vmatpush1.msra.mxu0 0.0
    %4422 = vmatprep.subr.mxu0 0.0
    %4423 = vmatpush1.msra.mxu0 0.0
    %4424 = vmatprep.subr.mxu0 0.0
    %4425 = vmatpush1.msra.mxu0 0.0
    %4426 = vmatprep.subr.mxu0 0.0
    %4427 = vmatpush1.msra.mxu0 0.0
    %4428 = vmatprep.subr.mxu0 0.0
    %4429 = vmatpush1.msra.mxu0 0.0
    %4430 = vmatprep.subr.mxu0 0.0
    %4431 = vmatpush1.msra.mxu0 0.0
    %4432 = vmatprep.subr.mxu0 0.0
    %4433 = vmatpush1.msra.mxu0 0.0
    %4434 = vmatprep.subr.mxu0 0.0
    %4435 = vmatpush1.msra.mxu0 0.0
    %4436 = vmatprep.subr.mxu0 0.0
    %4437 = vmatpush1.msra.mxu0 0.0
    %4438 = vmatprep.subr.mxu0 0.0
    %4439 = vmatpush1.msra.mxu0 0.0
    %4440 = vmatprep.subr.mxu0 0.0
    %4441 = vmatpush1.msra.mxu0 0.0
    %4442 = vmatprep.subr.mxu0 0.0
    %4443 = vmatpush1.msra.mxu0 0.0
    %4444 = vmatprep.subr.mxu0 0.0
    %4445 = vmatpush1.msra.mxu0 0.0
    %4446 = vmatprep.subr.mxu0 0.0
    %4447 = vmatpush1.msra.mxu0 0.0
    %4448 = vmatprep.subr.mxu0 0.0
    %4449 = vmatpush1.msra.mxu0 0.0
    %4450 = vmatprep.subr.mxu0 0.0
    %4451 = vmatpush1.msra.mxu0 0.0
    %4452 = vmatprep.subr.mxu0 0.0
    %4453 = vmatpush1.msra.mxu0 0.0
    %4454 = vmatprep.mubr.f32.mxu0 0.0
    %4455 = vmatmul.mubr.f32.gmra.mrb[0].mxu0 %v4385
    %v4456 = vpop.f32.mrb[0].mxu0
    %v4457 = vadd.f32 0.0, %v4456
    %v4458 = vpop.f32.mrb[0].mxu0
    %4459 = vmatprep.mubr.f32.mxu0 0.0
    %4460 = vmatmul.mubr.f32.gmra.mrb[0].mxu0 %v4388
    %v4461 = vpop.f32.mrb[0].mxu0
    %v4462 = vadd.f32 0.0, %v4461
    %v4463 = vpop.f32.mrb[0].mxu0
    %4464 = vdwg.mxu0
    %4465 = vrot.lane.b32.xlu0 %v3960, 112
    %v4466 = vpop.permute.xlu0 %4465
    %4467 = vrot.lane.b32.xlu0 %v3965, 112
    %v4468 = vpop.permute.xlu0 %4467
    %4469 = vrot.lane.b32.xlu0 %v4061, 112
    %v4470 = vpop.permute.xlu0 %4469
    %4471 = vrot.lane.b32.xlu0 %v4066, 112
    %v4472 = vpop.permute.xlu0 %4471
    %v4473 = vsel %vm203, %v4466, 0
    %v4475 = vsel %vm203, %v4468, 0
    %v4477 = vsel %vm203, %v4470, 0
    %v4479 = vsel %vm203, %v4472, 0
    %4481 = vmatprep.subr.mxu0 0.0
    %4482 = vmatpush1.xpose.msra.mxu0 %v4477
    %4483 = vmatprep.subr.mxu0 0.0
    %4484 = vmatpush1.xpose.msra.mxu0 %v4479
    %4485 = vmatprep.subr.mxu0 0.0
    %4486 = vmatpush1.xpose.msra.mxu0 0.0
    %4487 = vmatprep.subr.mxu0 0.0
    %4488 = vmatpush1.xpose.msra.mxu0 0.0
    %4489 = vmatprep.subr.mxu0 0.0
    %4490 = vmatpush1.xpose.msra.mxu0 0.0
    %4491 = vmatprep.subr.mxu0 0.0
    %4492 = vmatpush1.xpose.msra.mxu0 0.0
    %4493 = vmatprep.subr.mxu0 0.0
    %4494 = vmatpush1.xpose.msra.mxu0 0.0
    %4495 = vmatprep.subr.mxu0 0.0
    %4496 = vmatpush1.xpose.msra.mxu0 0.0
    %4497 = vmatprep.subr.mxu0 0.0
    %4498 = vmatpush1.xpose.msra.mxu0 0.0
    %4499 = vmatprep.subr.mxu0 0.0
    %4500 = vmatpush1.xpose.msra.mxu0 0.0
    %4501 = vmatprep.subr.mxu0 0.0
    %4502 = vmatpush1.xpose.msra.mxu0 0.0
    %4503 = vmatprep.subr.mxu0 0.0
    %4504 = vmatpush1.xpose.msra.mxu0 0.0
    %4505 = vmatprep.subr.mxu0 0.0
    %4506 = vmatpush1.xpose.msra.mxu0 0.0
    %4507 = vmatprep.subr.mxu0 0.0
    %4508 = vmatpush1.xpose.msra.mxu0 0.0
    %4509 = vmatprep.subr.mxu0 0.0
    %4510 = vmatpush1.xpose.msra.mxu0 0.0
    %4511 = vmatprep.subr.mxu0 0.0
    %4512 = vmatpush1.xpose.msra.mxu0 0.0
    %4513 = vmatprep.subr.mxu0 0.0
    %4514 = vmatpush1.xpose.msra.mxu0 0.0
    %4515 = vmatprep.subr.mxu0 0.0
    %4516 = vmatpush1.xpose.msra.mxu0 0.0
    %4517 = vmatprep.subr.mxu0 0.0
    %4518 = vmatpush1.xpose.msra.mxu0 0.0
    %4519 = vmatprep.subr.mxu0 0.0
    %4520 = vmatpush1.xpose.msra.mxu0 0.0
    %4521 = vmatprep.subr.mxu0 0.0
    %4522 = vmatpush1.xpose.msra.mxu0 0.0
    %4523 = vmatprep.subr.mxu0 0.0
    %4524 = vmatpush1.xpose.msra.mxu0 0.0
    %4525 = vmatprep.subr.mxu0 0.0
    %4526 = vmatpush1.xpose.msra.mxu0 0.0
    %4527 = vmatprep.subr.mxu0 0.0
    %4528 = vmatpush1.xpose.msra.mxu0 0.0
    %4529 = vmatprep.subr.mxu0 0.0
    %4530 = vmatpush1.xpose.msra.mxu0 0.0
    %4531 = vmatprep.subr.mxu0 0.0
    %4532 = vmatpush1.xpose.msra.mxu0 0.0
    %4533 = vmatprep.subr.mxu0 0.0
    %4534 = vmatpush1.xpose.msra.mxu0 0.0
    %4535 = vmatprep.subr.mxu0 0.0
    %4536 = vmatpush1.xpose.msra.mxu0 0.0
    %4537 = vmatprep.subr.mxu0 0.0
    %4538 = vmatpush1.xpose.msra.mxu0 0.0
    %4539 = vmatprep.subr.mxu0 0.0
    %4540 = vmatpush1.xpose.msra.mxu0 0.0
    %4541 = vmatprep.subr.mxu0 0.0
    %4542 = vmatpush1.xpose.msra.mxu0 0.0
    %4543 = vmatprep.subr.mxu0 0.0
    %4544 = vmatpush1.xpose.msra.mxu0 0.0
    %4545 = vmatprep.mubr.f32.mxu0 0.0
    %4546 = vmatmul.mubr.f32.gmra.mrb[0].mxu0 %v4473
    %v4547 = vpop.f32.mrb[0].mxu0
    %v4548 = vadd.f32 %v2740, %v4547
    %v4549 = vpop.f32.mrb[0].mxu0
    %4550 = vmatprep.mubr.f32.mxu0 0.0
    %4551 = vmatmul.mubr.f32.gmra.mrb[0].mxu0 %v4475
    %v4552 = vpop.f32.mrb[0].mxu0
    %v4553 = vadd.f32 %v2741, %v4552
    %v4554 = vpop.f32.mrb[0].mxu0
    %4555 = vdwg.mxu0
    %v4556 = vsel %vm287, %v4548, -inf
    %4557 = vmax.xlane.f32.xlu0 %v4556
    %v4558 = vpop.xlane.xlu0 %4557
    %v4559 = vsel %vm287, %v4553, -inf
    %4560 = vmax.xlane.f32.xlu0 %v4559
    %v4561 = vpop.xlane.xlu0 %4560
    %v4562 = vsub.f32 %v4548, %v4558
    %v4563 = vsub.f32 %v4553, %v4561
    %v4564 = vmul.f32 %v4562, 1.442695
    %v4565 = vpow.pop %v4564
    %v4566 = vmul.f32 %v4563, 1.442695
    %v4567 = vpow.pop %v4566
    %v4568 = vsel %vm287, %v4565, 0.0
    %4569 = vadd.xlane.f32.xlu0 %v4568
    %v4570 = vpop.xlane.xlu0 %4569
    %v4571 = vsel %vm287, %v4567, 0.0
    %4572 = vadd.xlane.f32.xlu0 %v4571
    %v4573 = vpop.xlane.xlu0 %4572
    %v4574 = vrcp.pop %v4570
    %v4575 = vrcp.pop %v4573
    %v4576 = vmul.f32 %v4565, %v4574
    %v4577 = vmul.f32 %v4567, %v4575
    %4578 = vrot.lane.b32.xlu0 %v4061, 80
    %v4579 = vpop.permute.xlu0 %4578
    %4580 = vrot.lane.b32.xlu0 %v4066, 80
    %v4581 = vpop.permute.xlu0 %4580
    %v4585 = vsel %vm287, %v4576, 0
    %v4588 = vsel %vm287, %v4577, 0
    %4590 = vmatprep.subr.mxu0 0.0
    %4591 = vmatpush1.msra.mxu0 %v4579
    %4592 = vmatprep.subr.mxu0 0.0
    %4593 = vmatpush1.msra.mxu0 %v4581
    %4594 = vmatprep.subr.mxu0 0.0
    %4595 = vmatpush1.msra.mxu0 0.0
    %4596 = vmatprep.subr.mxu0 0.0
    %4597 = vmatpush1.msra.mxu0 0.0
    %4598 = vmatprep.subr.mxu0 0.0
    %4599 = vmatpush1.msra.mxu0 0.0
    %4600 = vmatprep.subr.mxu0 0.0
    %4601 = vmatpush1.msra.mxu0 0.0
    %4602 = vmatprep.subr.mxu0 0.0
    %4603 = vmatpush1.msra.mxu0 0.0
    %4604 = vmatprep.subr.mxu0 0.0
    %4605 = vmatpush1.msra.mxu0 0.0
    %4606 = vmatprep.subr.mxu0 0.0
    %4607 = vmatpush1.msra.mxu0 0.0
    %4608 = vmatprep.subr.mxu0 0.0
    %4609 = vmatpush1.msra.mxu0 0.0
    %4610 = vmatprep.subr.mxu0 0.0
    %4611 = vmatpush1.msra.mxu0 0.0
    %4612 = vmatprep.subr.mxu0 0.0
    %4613 = vmatpush1.msra.mxu0 0.0
    %4614 = vmatprep.subr.mxu0 0.0
    %4615 = vmatpush1.msra.mxu0 0.0
    %4616 = vmatprep.subr.mxu0 0.0
    %4617 = vmatpush1.msra.mxu0 0.0
    %4618 = vmatprep.subr.mxu0 0.0
    %4619 = vmatpush1.msra.mxu0 0.0
    %4620 = vmatprep.subr.mxu0 0.0
    %4621 = vmatpush1.msra.mxu0 0.0
    %4622 = vmatprep.subr.mxu0 0.0
    %4623 = vmatpush1.msra.mxu0 0.0
    %4624 = vmatprep.subr.mxu0 0.0
    %4625 = vmatpush1.msra.mxu0 0.0
    %4626 = vmatprep.subr.mxu0 0.0
    %4627 = vmatpush1.msra.mxu0 0.0
    %4628 = vmatprep.subr.mxu0 0.0
    %4629 = vmatpush1.msra.mxu0 0.0
    %4630 = vmatprep.subr.mxu0 0.0
    %4631 = vmatpush1.msra.mxu0 0.0
    %4632 = vmatprep.subr.mxu0 0.0
    %4633 = vmatpush1.msra.mxu0 0.0
    %4634 = vmatprep.subr.mxu0 0.0
    %4635 = vmatpush1.msra.mxu0 0.0
    %4636 = vmatprep.subr.mxu0 0.0
    %4637 = vmatpush1.msra.mxu0 0.0
    %4638 = vmatprep.subr.mxu0 0.0
    %4639 = vmatpush1.msra.mxu0 0.0
    %4640 = vmatprep.subr.mxu0 0.0
    %4641 = vmatpush1.msra.mxu0 0.0
    %4642 = vmatprep.subr.mxu0 0.0
    %4643 = vmatpush1.msra.mxu0 0.0
    %4644 = vmatprep.subr.mxu0 0.0
    %4645 = vmatpush1.msra.mxu0 0.0
    %4646 = vmatprep.subr.mxu0 0.0
    %4647 = vmatpush1.msra.mxu0 0.0
    %4648 = vmatprep.subr.mxu0 0.0
    %4649 = vmatpush1.msra.mxu0 0.0
    %4650 = vmatprep.subr.mxu0 0.0
    %4651 = vmatpush1.msra.mxu0 0.0
    %4652 = vmatprep.subr.mxu0 0.0
    %4653 = vmatpush1.msra.mxu0 0.0
    %4654 = vmatprep.mubr.f32.mxu0 0.0
    %4655 = vmatmul.mubr.f32.gmra.mrb[0].mxu0 %v4585
    %v4656 = vpop.f32.mrb[0].mxu0
    %v4657 = vadd.f32 0.0, %v4656
    %v4658 = vpop.f32.mrb[0].mxu0
    %4659 = vmatprep.mubr.f32.mxu0 0.0
    %4660 = vmatmul.mubr.f32.gmra.mrb[0].mxu0 %v4588
    %v4661 = vpop.f32.mrb[0].mxu0
    %v4662 = vadd.f32 0.0, %v4661
    %v4663 = vpop.f32.mrb[0].mxu0
    %4664 = vdwg.mxu0
    %4665 = vrot.lane.b32.xlu0 %v3960, 104
    %v4666 = vpop.permute.xlu0 %4665
    %4667 = vrot.lane.b32.xlu0 %v3965, 104
    %v4668 = vpop.permute.xlu0 %4667
    %4669 = vrot.lane.b32.xlu0 %v4061, 104
    %v4670 = vpop.permute.xlu0 %4669
    %4671 = vrot.lane.b32.xlu0 %v4066, 104
    %v4672 = vpop.permute.xlu0 %4671
    %v4673 = vsel %vm203, %v4666, 0
    %v4675 = vsel %vm203, %v4668, 0
    %v4677 = vsel %vm203, %v4670, 0
    %v4679 = vsel %vm203, %v4672, 0
    %4681 = vmatprep.subr.mxu0 0.0
    %4682 = vmatpush1.xpose.msra.mxu0 %v4677
    %4683 = vmatprep.subr.mxu0 0.0
    %4684 = vmatpush1.xpose.msra.mxu0 %v4679
    %4685 = vmatprep.subr.mxu0 0.0
    %4686 = vmatpush1.xpose.msra.mxu0 0.0
    %4687 = vmatprep.subr.mxu0 0.0
    %4688 = vmatpush1.xpose.msra.mxu0 0.0
    %4689 = vmatprep.subr.mxu0 0.0
    %4690 = vmatpush1.xpose.msra.mxu0 0.0
    %4691 = vmatprep.subr.mxu0 0.0
    %4692 = vmatpush1.xpose.msra.mxu0 0.0
    %4693 = vmatprep.subr.mxu0 0.0
    %4694 = vmatpush1.xpose.msra.mxu0 0.0
    %4695 = vmatprep.subr.mxu0 0.0
    %4696 = vmatpush1.xpose.msra.mxu0 0.0
    %4697 = vmatprep.subr.mxu0 0.0
    %4698 = vmatpush1.xpose.msra.mxu0 0.0
    %4699 = vmatprep.subr.mxu0 0.0
    %4700 = vmatpush1.xpose.msra.mxu0 0.0
    %4701 = vmatprep.subr.mxu0 0.0
    %4702 = vmatpush1.xpose.msra.mxu0 0.0
    %4703 = vmatprep.subr.mxu0 0.0
    %4704 = vmatpush1.xpose.msra.mxu0 0.0
    %4705 = vmatprep.subr.mxu0 0.0
    %4706 = vmatpush1.xpose.msra.mxu0 0.0
    %4707 = vmatprep.subr.mxu0 0.0
    %4708 = vmatpush1.xpose.msra.mxu0 0.0
    %4709 = vmatprep.subr.mxu0 0.0
    %4710 = vmatpush1.xpose.msra.mxu0 0.0
    %4711 = vmatprep.subr.mxu0 0.0
    %4712 = vmatpush1.xpose.msra.mxu0 0.0
    %4713 = vmatprep.subr.mxu0 0.0
    %4714 = vmatpush1.xpose.msra.mxu0 0.0
    %4715 = vmatprep.subr.mxu0 0.0
    %4716 = vmatpush1.xpose.msra.mxu0 0.0
    %4717 = vmatprep.subr.mxu0 0.0
    %4718 = vmatpush1.xpose.msra.mxu0 0.0
    %4719 = vmatprep.subr.mxu0 0.0
    %4720 = vmatpush1.xpose.msra.mxu0 0.0
    %4721 = vmatprep.subr.mxu0 0.0
    %4722 = vmatpush1.xpose.msra.mxu0 0.0
    %4723 = vmatprep.subr.mxu0 0.0
    %4724 = vmatpush1.xpose.msra.mxu0 0.0
    %4725 = vmatprep.subr.mxu0 0.0
    %4726 = vmatpush1.xpose.msra.mxu0 0.0
    %4727 = vmatprep.subr.mxu0 0.0
    %4728 = vmatpush1.xpose.msra.mxu0 0.0
    %4729 = vmatprep.subr.mxu0 0.0
    %4730 = vmatpush1.xpose.msra.mxu0 0.0
    %4731 = vmatprep.subr.mxu0 0.0
    %4732 = vmatpush1.xpose.msra.mxu0 0.0
    %4733 = vmatprep.subr.mxu0 0.0
    %4734 = vmatpush1.xpose.msra.mxu0 0.0
    %4735 = vmatprep.subr.mxu0 0.0
    %4736 = vmatpush1.xpose.msra.mxu0 0.0
    %4737 = vmatprep.subr.mxu0 0.0
    %4738 = vmatpush1.xpose.msra.mxu0 0.0
    %4739 = vmatprep.subr.mxu0 0.0
    %4740 = vmatpush1.xpose.msra.mxu0 0.0
    %4741 = vmatprep.subr.mxu0 0.0
    %4742 = vmatpush1.xpose.msra.mxu0 0.0
    %4743 = vmatprep.subr.mxu0 0.0
    %4744 = vmatpush1.xpose.msra.mxu0 0.0
    %4745 = vmatprep.mubr.f32.mxu0 0.0
    %4746 = vmatmul.mubr.f32.gmra.mrb[0].mxu0 %v4673
    %v4747 = vpop.f32.mrb[0].mxu0
    %v4748 = vadd.f32 %v2740, %v4747
    %v4749 = vpop.f32.mrb[0].mxu0
    %4750 = vmatprep.mubr.f32.mxu0 0.0
    %4751 = vmatmul.mubr.f32.gmra.mrb[0].mxu0 %v4675
    %v4752 = vpop.f32.mrb[0].mxu0
    %v4753 = vadd.f32 %v2741, %v4752
    %v4754 = vpop.f32.mrb[0].mxu0
    %4755 = vdwg.mxu0
    %v4756 = vsel %vm287, %v4748, -inf
    %4757 = vmax.xlane.f32.xlu0 %v4756
    %v4758 = vpop.xlane.xlu0 %4757
    %v4759 = vsel %vm287, %v4753, -inf
    %4760 = vmax.xlane.f32.xlu0 %v4759
    %v4761 = vpop.xlane.xlu0 %4760
    %v4762 = vsub.f32 %v4748, %v4758
    %v4763 = vsub.f32 %v4753, %v4761
    %v4764 = vmul.f32 %v4762, 1.442695
    %v4765 = vpow.pop %v4764
    %v4766 = vmul.f32 %v4763, 1.442695
    %v4767 = vpow.pop %v4766
    %v4768 = vsel %vm287, %v4765, 0.0
    %4769 = vadd.xlane.f32.xlu0 %v4768
    %v4770 = vpop.xlane.xlu0 %4769
    %v4771 = vsel %vm287, %v4767, 0.0
    %4772 = vadd.xlane.f32.xlu0 %v4771
    %v4773 = vpop.xlane.xlu0 %4772
    %v4774 = vrcp.pop %v4770
    %v4775 = vrcp.pop %v4773
    %v4776 = vmul.f32 %v4765, %v4774
    %v4777 = vmul.f32 %v4767, %v4775
    %4778 = vrot.lane.b32.xlu0 %v4061, 72
    %v4779 = vpop.permute.xlu0 %4778
    %4780 = vrot.lane.b32.xlu0 %v4066, 72
    %v4781 = vpop.permute.xlu0 %4780
    %v4785 = vsel %vm287, %v4776, 0
    %v4788 = vsel %vm287, %v4777, 0
    %4790 = vmatprep.subr.mxu0 0.0
    %4791 = vmatpush1.msra.mxu0 %v4779
    %4792 = vmatprep.subr.mxu0 0.0
    %4793 = vmatpush1.msra.mxu0 %v4781
    %4794 = vmatprep.subr.mxu0 0.0
    %4795 = vmatpush1.msra.mxu0 0.0
    %4796 = vmatprep.subr.mxu0 0.0
    %4797 = vmatpush1.msra.mxu0 0.0
    %4798 = vmatprep.subr.mxu0 0.0
    %4799 = vmatpush1.msra.mxu0 0.0
    %4800 = vmatprep.subr.mxu0 0.0
    %4801 = vmatpush1.msra.mxu0 0.0
    %4802 = vmatprep.subr.mxu0 0.0
    %4803 = vmatpush1.msra.mxu0 0.0
    %4804 = vmatprep.subr.mxu0 0.0
    %4805 = vmatpush1.msra.mxu0 0.0
    %4806 = vmatprep.subr.mxu0 0.0
    %4807 = vmatpush1.msra.mxu0 0.0
    %4808 = vmatprep.subr.mxu0 0.0
    %4809 = vmatpush1.msra.mxu0 0.0
    %4810 = vmatprep.subr.mxu0 0.0
    %4811 = vmatpush1.msra.mxu0 0.0
    %4812 = vmatprep.subr.mxu0 0.0
    %4813 = vmatpush1.msra.mxu0 0.0
    %4814 = vmatprep.subr.mxu0 0.0
    %4815 = vmatpush1.msra.mxu0 0.0
    %4816 = vmatprep.subr.mxu0 0.0
    %4817 = vmatpush1.msra.mxu0 0.0
    %4818 = vmatprep.subr.mxu0 0.0
    %4819 = vmatpush1.msra.mxu0 0.0
    %4820 = vmatprep.subr.mxu0 0.0
    %4821 = vmatpush1.msra.mxu0 0.0
    %4822 = vmatprep.subr.mxu0 0.0
    %4823 = vmatpush1.msra.mxu0 0.0
    %4824 = vmatprep.subr.mxu0 0.0
    %4825 = vmatpush1.msra.mxu0 0.0
    %4826 = vmatprep.subr.mxu0 0.0
    %4827 = vmatpush1.msra.mxu0 0.0
    %4828 = vmatprep.subr.mxu0 0.0
    %4829 = vmatpush1.msra.mxu0 0.0
    %4830 = vmatprep.subr.mxu0 0.0
    %4831 = vmatpush1.msra.mxu0 0.0
    %4832 = vmatprep.subr.mxu0 0.0
    %4833 = vmatpush1.msra.mxu0 0.0
    %4834 = vmatprep.subr.mxu0 0.0
    %4835 = vmatpush1.msra.mxu0 0.0
    %4836 = vmatprep.subr.mxu0 0.0
    %4837 = vmatpush1.msra.mxu0 0.0
    %4838 = vmatprep.subr.mxu0 0.0
    %4839 = vmatpush1.msra.mxu0 0.0
    %4840 = vmatprep.subr.mxu0 0.0
    %4841 = vmatpush1.msra.mxu0 0.0
    %4842 = vmatprep.subr.mxu0 0.0
    %4843 = vmatpush1.msra.mxu0 0.0
    %4844 = vmatprep.subr.mxu0 0.0
    %4845 = vmatpush1.msra.mxu0 0.0
    %4846 = vmatprep.subr.mxu0 0.0
    %4847 = vmatpush1.msra.mxu0 0.0
    %4848 = vmatprep.subr.mxu0 0.0
    %4849 = vmatpush1.msra.mxu0 0.0
    %4850 = vmatprep.subr.mxu0 0.0
    %4851 = vmatpush1.msra.mxu0 0.0
    %4852 = vmatprep.subr.mxu0 0.0
    %4853 = vmatpush1.msra.mxu0 0.0
    %4854 = vmatprep.mubr.f32.mxu0 0.0
    %4855 = vmatmul.mubr.f32.gmra.mrb[0].mxu0 %v4785
    %v4856 = vpop.f32.mrb[0].mxu0
    %v4857 = vadd.f32 0.0, %v4856
    %v4858 = vpop.f32.mrb[0].mxu0
    %4859 = vmatprep.mubr.f32.mxu0 0.0
    %4860 = vmatmul.mubr.f32.gmra.mrb[0].mxu0 %v4788
    %v4861 = vpop.f32.mrb[0].mxu0
    %v4862 = vadd.f32 0.0, %v4861
    %v4863 = vpop.f32.mrb[0].mxu0
    %4864 = vdwg.mxu0
    %4867 = vrot.lane.b32.xlu0 %v4457, 8
    %v4868 = vpop.permute.xlu0 %4867
    %4869 = vrot.lane.b32.xlu0 %v4462, 8
    %v4870 = vpop.permute.xlu0 %4869
    %4875 = vrot.lane.b32.xlu0 %v4657, 16
    %v4876 = vpop.permute.xlu0 %4875
    %4877 = vrot.lane.b32.xlu0 %v4662, 16
    %v4878 = vpop.permute.xlu0 %4877
    %4883 = vrot.lane.b32.xlu0 %v4857, 24
    %v4884 = vpop.permute.xlu0 %4883
    %4885 = vrot.lane.b32.xlu0 %v4862, 24
    %v4886 = vpop.permute.xlu0 %4885
    %v4889 = vsel %vm203, %v4257, %v4868
    %v4890 = vsel %vm203, %v4262, %v4870
    %v4891 = vsel %vm287, %v4889, %v4876
    %v4892 = vsel %vm287, %v4890, %v4878
    %v4893 = vsel %vm1025, %v4891, %v4884
    %v4894 = vsel %vm1025, %v4892, %v4886
    %4895 = vrot.lane.b32.xlu0 %v2746, 32
    %v4896 = vpop.permute.xlu0 %4895
    %4897 = vrot.lane.b32.xlu0 %v2747, 32
    %v4898 = vpop.permute.xlu0 %4897
    %4899 = vrot.lane.b32.xlu0 %v2748, 32
    %v4900 = vpop.permute.xlu0 %4899
    %4901 = vrot.lane.b32.xlu0 %v2749, 32
    %v4902 = vpop.permute.xlu0 %4901
    %4907 = vrot.lane.b32.xlu0 %v3882, 32
    %v4908 = vpop.permute.xlu0 %4907
    %v4911 = vsel %vm58, %v4893, 0
    %v4914 = vsel %vm58, %v4894, 0
    %4916 = vmatprep.subr.mxu0 0.0
    %4917 = vmatpush1.msra.mxu0 %v4896
    %4918 = vmatprep.subr.mxu0 0.0
    %4919 = vmatpush1.msra.mxu0 %v4898
    %4920 = vmatprep.subr.mxu0 0.0
    %4921 = vmatpush1.msra.mxu0 %v4900
    %4922 = vmatprep.subr.mxu0 0.0
    %4923 = vmatpush1.msra.mxu0 %v4902
    %4924 = vmatprep.subr.mxu0 0.0
    %4925 = vmatpush1.msra.mxu0 0.0
    %4926 = vmatprep.subr.mxu0 0.0
    %4927 = vmatpush1.msra.mxu0 0.0
    %4928 = vmatprep.subr.mxu0 0.0
    %4929 = vmatpush1.msra.mxu0 0.0
    %4930 = vmatprep.subr.mxu0 0.0
    %4931 = vmatpush1.msra.mxu0 0.0
    %4932 = vmatprep.subr.mxu0 0.0
    %4933 = vmatpush1.msra.mxu0 0.0
    %4934 = vmatprep.subr.mxu0 0.0
    %4935 = vmatpush1.msra.mxu0 0.0
    %4936 = vmatprep.subr.mxu0 0.0
    %4937 = vmatpush1.msra.mxu0 0.0
    %4938 = vmatprep.subr.mxu0 0.0
    %4939 = vmatpush1.msra.mxu0 0.0
    %4940 = vmatprep.subr.mxu0 0.0
    %4941 = vmatpush1.msra.mxu0 0.0
    %4942 = vmatprep.subr.mxu0 0.0
    %4943 = vmatpush1.msra.mxu0 0.0
    %4944 = vmatprep.subr.mxu0 0.0
    %4945 = vmatpush1.msra.mxu0 0.0
    %4946 = vmatprep.subr.mxu0 0.0
    %4947 = vmatpush1.msra.mxu0 0.0
    %4948 = vmatprep.subr.mxu0 0.0
    %4949 = vmatpush1.msra.mxu0 0.0
    %4950 = vmatprep.subr.mxu0 0.0
    %4951 = vmatpush1.msra.mxu0 0.0
    %4952 = vmatprep.subr.mxu0 0.0
    %4953 = vmatpush1.msra.mxu0 0.0
    %4954 = vmatprep.subr.mxu0 0.0
    %4955 = vmatpush1.msra.mxu0 0.0
    %4956 = vmatprep.subr.mxu0 0.0
    %4957 = vmatpush1.msra.mxu0 0.0
    %4958 = vmatprep.subr.mxu0 0.0
    %4959 = vmatpush1.msra.mxu0 0.0
    %4960 = vmatprep.subr.mxu0 0.0
    %4961 = vmatpush1.msra.mxu0 0.0
    %4962 = vmatprep.subr.mxu0 0.0
    %4963 = vmatpush1.msra.mxu0 0.0
    %4964 = vmatprep.subr.mxu0 0.0
    %4965 = vmatpush1.msra.mxu0 0.0
    %4966 = vmatprep.subr.mxu0 0.0
    %4967 = vmatpush1.msra.mxu0 0.0
    %4968 = vmatprep.subr.mxu0 0.0
    %4969 = vmatpush1.msra.mxu0 0.0
    %4970 = vmatprep.subr.mxu0 0.0
    %4971 = vmatpush1.msra.mxu0 0.0
    %4972 = vmatprep.subr.mxu0 0.0
    %4973 = vmatpush1.msra.mxu0 0.0
    %4974 = vmatprep.subr.mxu0 0.0
    %4975 = vmatpush1.msra.mxu0 0.0
    %4976 = vmatprep.subr.mxu0 0.0
    %4977 = vmatpush1.msra.mxu0 0.0
    %4978 = vmatprep.subr.mxu0 0.0
    %4979 = vmatpush1.msra.mxu0 0.0
    %4980 = vmatprep.mubr.f32.mxu0 0.0
    %4981 = vmatmul.mubr.f32.gmra.mrb[0].mxu0 %v4911
    %v4982 = vpop.f32.mrb[0].mxu0
    %v4983 = vadd.f32 %v4908, %v4982
    %v4984 = vpop.f32.mrb[0].mxu0
    %4985 = vmatprep.mubr.f32.mxu0 0.0
    %4986 = vmatmul.mubr.f32.gmra.mrb[0].mxu0 %v4914
    %v4987 = vpop.f32.mrb[0].mxu0
    %v4988 = vadd.f32 %v4908, %v4987
    %v4989 = vpop.f32.mrb[0].mxu0
    %4990 = vdwg.mxu0
    %v4991 = vadd.f32 %v3825, %v4983
    %v4992 = vadd.f32 %v3826, %v4988
    %v4993 = vsel %vm58, %v4991, 0.0
    %4994 = vadd.xlane.f32.xlu0 %v4993
    %v4995 = vpop.xlane.xlu0 %4994
    %v4996 = vsel %vm58, %v4992, 0.0
    %4997 = vadd.xlane.f32.xlu0 %v4996
    %v4998 = vpop.xlane.xlu0 %4997
    %v4999 = vmul.f32 %v4995, %v65
    %v5000 = vmul.f32 %v4998, %v65
    %v5001 = vsub.f32 %v4991, %v4999
    %v5002 = vsub.f32 %v4992, %v5000
    %v5003 = vmul.f32 %v5001, %v5001
    %v5004 = vmul.f32 %v5002, %v5002
    %v5005 = vsel %vm58, %v5003, 0.0
    %5006 = vadd.xlane.f32.xlu0 %v5005
    %v5007 = vpop.xlane.xlu0 %5006
    %v5008 = vsel %vm58, %v5004, 0.0
    %5009 = vadd.xlane.f32.xlu0 %v5008
    %v5010 = vpop.xlane.xlu0 %5009
    %v5011 = vmul.f32 %v5007, 0.032258064
    %v5012 = vmul.f32 %v5010, 0.032258064
    %v5013 = vrsqrt.pop %v5011
    %v5014 = vmul.f32 %v5011, %v5013
    %vm5015 = vcmp.eq.f32.partialorder %v5011, inf
    %v5016 = vsel %vm5015, %v5011, %v5014
    %vm5017 = vcmp.eq.f32.partialorder %v5011, 0.0
    %v5018 = vand.u32 %v5011, 2147483648
    %v5019 = vsel %vm5017, %v5018, %v5016
    %v5020 = vrsqrt.pop %v5012
    %v5021 = vmul.f32 %v5012, %v5020
    %vm5022 = vcmp.eq.f32.partialorder %v5012, inf
    %v5023 = vsel %vm5022, %v5012, %v5021
    %vm5024 = vcmp.eq.f32.partialorder %v5012, 0.0
    %v5025 = vand.u32 %v5012, 2147483648
    %v5026 = vsel %vm5024, %v5025, %v5023
    %v5027 = vadd.f32 %v5019, 1e-06
    %v5028 = vadd.f32 %v5026, 1e-06
    %v5029 = vrcp.pop %v5027
    %v5030 = vrcp.pop %v5028
    %v5031 = vlaneseq
    %v5032 = vshrl.u32 %v5031, 7
    %v5033 = vsub.s32 4, %v5032
    %v5034 = vrot.slane %v2758, %v5033
    %v5035 = vmul.f32 %v5034, %v5001
    %v5036 = vmul.f32 %v5034, %v5002
    %v5037 = vmul.f32 %v5035, %v5029
    %v5038 = vmul.f32 %v5036, %v5030
    %5040 = vrot.lane.b32.xlu0 %v5034, 96
    %v5041 = vpop.permute.xlu0 %5040
    %v5043 = vadd.f32 %v5037, %v5041
    %v5044 = vadd.f32 %v5038, %v5041
    %v5045 = vlaneseq
    %v5046 = vshrl.u32 %v5045, 7
    %v5047 = vsub.s32 2, %v5046
    %v5048 = vrot.slane %v2758, %v5047
    %5053 = vrot.lane.b32.xlu0 %v2750, 96
    %v5054 = vpop.permute.xlu0 %5053
    %5055 = vrot.lane.b32.xlu0 %v2751, 96
    %v5056 = vpop.permute.xlu0 %5055
    %5057 = vrot.lane.b32.xlu0 %v2752, 96
    %v5058 = vpop.permute.xlu0 %5057
    %5059 = vrot.lane.b32.xlu0 %v2753, 96
    %v5060 = vpop.permute.xlu0 %5059
    %v5066 = vsel %vm58, %v5043, 0
    %v5069 = vsel %vm58, %v5044, 0
    %5071 = vmatprep.subr.mxu0 0.0
    %5072 = vmatpush1.msra.mxu0 %v5054
    %5073 = vmatprep.subr.mxu0 0.0
    %5074 = vmatpush1.msra.mxu0 %v5056
    %5075 = vmatprep.subr.mxu0 0.0
    %5076 = vmatpush1.msra.mxu0 %v5058
    %5077 = vmatprep.subr.mxu0 0.0
    %5078 = vmatpush1.msra.mxu0 %v5060
    %5079 = vmatprep.subr.mxu0 0.0
    %5080 = vmatpush1.msra.mxu0 0.0
    %5081 = vmatprep.subr.mxu0 0.0
    %5082 = vmatpush1.msra.mxu0 0.0
    %5083 = vmatprep.subr.mxu0 0.0
    %5084 = vmatpush1.msra.mxu0 0.0
    %5085 = vmatprep.subr.mxu0 0.0
    %5086 = vmatpush1.msra.mxu0 0.0
    %5087 = vmatprep.subr.mxu0 0.0
    %5088 = vmatpush1.msra.mxu0 0.0
    %5089 = vmatprep.subr.mxu0 0.0
    %5090 = vmatpush1.msra.mxu0 0.0
    %5091 = vmatprep.subr.mxu0 0.0
    %5092 = vmatpush1.msra.mxu0 0.0
    %5093 = vmatprep.subr.mxu0 0.0
    %5094 = vmatpush1.msra.mxu0 0.0
    %5095 = vmatprep.subr.mxu0 0.0
    %5096 = vmatpush1.msra.mxu0 0.0
    %5097 = vmatprep.subr.mxu0 0.0
    %5098 = vmatpush1.msra.mxu0 0.0
    %5099 = vmatprep.subr.mxu0 0.0
    %5100 = vmatpush1.msra.mxu0 0.0
    %5101 = vmatprep.subr.mxu0 0.0
    %5102 = vmatpush1.msra.mxu0 0.0
    %5103 = vmatprep.subr.mxu0 0.0
    %5104 = vmatpush1.msra.mxu0 0.0
    %5105 = vmatprep.subr.mxu0 0.0
    %5106 = vmatpush1.msra.mxu0 0.0
    %5107 = vmatprep.subr.mxu0 0.0
    %5108 = vmatpush1.msra.mxu0 0.0
    %5109 = vmatprep.subr.mxu0 0.0
    %5110 = vmatpush1.msra.mxu0 0.0
    %5111 = vmatprep.subr.mxu0 0.0
    %5112 = vmatpush1.msra.mxu0 0.0
    %5113 = vmatprep.subr.mxu0 0.0
    %5114 = vmatpush1.msra.mxu0 0.0
    %5115 = vmatprep.subr.mxu0 0.0
    %5116 = vmatpush1.msra.mxu0 0.0
    %5117 = vmatprep.subr.mxu0 0.0
    %5118 = vmatpush1.msra.mxu0 0.0
    %5119 = vmatprep.subr.mxu0 0.0
    %5120 = vmatpush1.msra.mxu0 0.0
    %5121 = vmatprep.subr.mxu0 0.0
    %5122 = vmatpush1.msra.mxu0 0.0
    %5123 = vmatprep.subr.mxu0 0.0
    %5124 = vmatpush1.msra.mxu0 0.0
    %5125 = vmatprep.subr.mxu0 0.0
    %5126 = vmatpush1.msra.mxu0 0.0
    %5127 = vmatprep.subr.mxu0 0.0
    %5128 = vmatpush1.msra.mxu0 0.0
    %5129 = vmatprep.subr.mxu0 0.0
    %5130 = vmatpush1.msra.mxu0 0.0
    %5131 = vmatprep.subr.mxu0 0.0
    %5132 = vmatpush1.msra.mxu0 0.0
    %5133 = vmatprep.subr.mxu0 0.0
    %5134 = vmatpush1.msra.mxu0 0.0
    %5135 = vmatprep.mubr.f32.mxu0 0.0
    %5136 = vmatmul.mubr.f32.gmra.mrb[0].mxu0 %v5066
    %v5137 = vpop.f32.mrb[0].mxu0
    %v5138 = vadd.f32 %v5048, %v5137
    %v5139 = vpop.f32.mrb[0].mxu0
    %5140 = vmatprep.mubr.f32.mxu0 0.0
    %5141 = vmatmul.mubr.f32.gmra.mrb[0].mxu0 %v5069
    %v5142 = vpop.f32.mrb[0].mxu0
    %v5143 = vadd.f32 %v5048, %v5142
    %v5144 = vpop.f32.mrb[0].mxu0
    %5145 = vdwg.mxu0
    %v5146 = vmax.f32 %v5138, 0.0
    %v5147 = vmax.f32 %v5143, 0.0
    %v5149 = vsel %vm1274, %v5146, 0
    %v5152 = vsel %vm1274, %v5147, 0
    %5154 = vmatprep.subr.mxu0 0.0
    %5155 = vmatpush1.msra.mxu0 %v2750
    %5156 = vmatprep.subr.mxu0 0.0
    %5157 = vmatpush1.msra.mxu0 %v2751
    %5158 = vmatprep.subr.mxu0 0.0
    %5159 = vmatpush1.msra.mxu0 %v2752
    %5160 = vmatprep.subr.mxu0 0.0
    %5161 = vmatpush1.msra.mxu0 %v2753
    %5162 = vmatprep.subr.mxu0 0.0
    %5163 = vmatpush1.msra.mxu0 %v2754
    %5164 = vmatprep.subr.mxu0 0.0
    %5165 = vmatpush1.msra.mxu0 %v2755
    %5166 = vmatprep.subr.mxu0 0.0
    %5167 = vmatpush1.msra.mxu0 %v2756
    %5168 = vmatprep.subr.mxu0 0.0
    %5169 = vmatpush1.msra.mxu0 %v2757
    %5170 = vmatprep.subr.mxu0 0.0
    %5171 = vmatpush1.msra.mxu0 0.0
    %5172 = vmatprep.subr.mxu0 0.0
    %5173 = vmatpush1.msra.mxu0 0.0
    %5174 = vmatprep.subr.mxu0 0.0
    %5175 = vmatpush1.msra.mxu0 0.0
    %5176 = vmatprep.subr.mxu0 0.0
    %5177 = vmatpush1.msra.mxu0 0.0
    %5178 = vmatprep.subr.mxu0 0.0
    %5179 = vmatpush1.msra.mxu0 0.0
    %5180 = vmatprep.subr.mxu0 0.0
    %5181 = vmatpush1.msra.mxu0 0.0
    %5182 = vmatprep.subr.mxu0 0.0
    %5183 = vmatpush1.msra.mxu0 0.0
    %5184 = vmatprep.subr.mxu0 0.0
    %5185 = vmatpush1.msra.mxu0 0.0
    %5186 = vmatprep.subr.mxu0 0.0
    %5187 = vmatpush1.msra.mxu0 0.0
    %5188 = vmatprep.subr.mxu0 0.0
    %5189 = vmatpush1.msra.mxu0 0.0
    %5190 = vmatprep.subr.mxu0 0.0
    %5191 = vmatpush1.msra.mxu0 0.0
    %5192 = vmatprep.subr.mxu0 0.0
    %5193 = vmatpush1.msra.mxu0 0.0
    %5194 = vmatprep.subr.mxu0 0.0
    %5195 = vmatpush1.msra.mxu0 0.0
    %5196 = vmatprep.subr.mxu0 0.0
    %5197 = vmatpush1.msra.mxu0 0.0
    %5198 = vmatprep.subr.mxu0 0.0
    %5199 = vmatpush1.msra.mxu0 0.0
    %5200 = vmatprep.subr.mxu0 0.0
    %5201 = vmatpush1.msra.mxu0 0.0
    %5202 = vmatprep.subr.mxu0 0.0
    %5203 = vmatpush1.msra.mxu0 0.0
    %5204 = vmatprep.subr.mxu0 0.0
    %5205 = vmatpush1.msra.mxu0 0.0
    %5206 = vmatprep.subr.mxu0 0.0
    %5207 = vmatpush1.msra.mxu0 0.0
    %5208 = vmatprep.subr.mxu0 0.0
    %5209 = vmatpush1.msra.mxu0 0.0
    %5210 = vmatprep.subr.mxu0 0.0
    %5211 = vmatpush1.msra.mxu0 0.0
    %5212 = vmatprep.subr.mxu0 0.0
    %5213 = vmatpush1.msra.mxu0 0.0
    %5214 = vmatprep.subr.mxu0 0.0
    %5215 = vmatpush1.msra.mxu0 0.0
    %5216 = vmatprep.subr.mxu0 0.0
    %5217 = vmatpush1.msra.mxu0 0.0
    %5218 = vmatprep.mubr.f32.mxu0 0.0
    %5219 = vmatmul.mubr.f32.gmra.mrb[0].mxu0 %v5149
    %v5220 = vpop.f32.mrb[0].mxu0
    %v5221 = vadd.f32 0.0, %v5220
    %v5222 = vpop.f32.mrb[0].mxu0
    %5223 = vmatprep.mubr.f32.mxu0 0.0
    %5224 = vmatmul.mubr.f32.gmra.mrb[0].mxu0 %v5152
    %v5225 = vpop.f32.mrb[0].mxu0
    %v5226 = vadd.f32 0.0, %v5225
    %v5227 = vpop.f32.mrb[0].mxu0
    %5228 = vdwg.mxu0
    %v5229 = vadd.f32 %v4991, %v5221
    %v5230 = vadd.f32 %v4992, %v5226
    %5232 = vrot.lane.b32.xlu0 %v5048, 64
    %v5233 = vpop.permute.xlu0 %5232
    %v5235 = vadd.f32 %v5229, %v5233
    %v5236 = vadd.f32 %v5230, %v5233
    %s5237 = scalar_lea.vmem %s7, 128
    %v5238 = vld [vmem:[%s5237] sm:$0xff]
    %v5239 = vld [vmem:[%s5237 + $0x8] sm:$0xff]
    %v5240 = vld [vmem:[%s5237 + $0x10] sm:$0xff]
    %v5241 = vld [vmem:[%s5237 + $0x18] sm:$0xff]
    %v5242 = vld [vmem:[%s5237 + $0x20] sm:$0xff]
    %v5243 = vld [vmem:[%s5237 + $0x28] sm:$0xff]
    %v5244 = vld [vmem:[%s5237 + $0x30] sm:$0xff]
    %v5245 = vld [vmem:[%s5237 + $0x38] sm:$0xff]
    %v5246 = vld [vmem:[%s5237 + $0x40] sm:$0xff]
    %v5247 = vld [vmem:[%s5237 + $0x48] sm:$0xff]
    %v5248 = vld [vmem:[%s5237 + $0x50] sm:$0xff]
    %v5249 = vld [vmem:[%s5237 + $0x58] sm:$0xff]
    %v5250 = vld [vmem:[%s5237 + $0x60] sm:$0xff]
    %v5251 = vld [vmem:[%s5237 + $0x68] sm:$0xff]
    %v5252 = vld [vmem:[%s5237 + $0x70] sm:$0xff]
    %v5253 = vld [vmem:[%s5237 + $0x78] sm:$0xff]
    %s5254 = scalar_lea.vmem %s8, 8
    %v5255 = vld [vmem:[%s5254] sm:$0xff]
    %v5256 = vsel %vm58, %v5235, 0.0
    %5257 = vadd.xlane.f32.xlu0 %v5256
    %v5258 = vpop.xlane.xlu0 %5257
    %v5259 = vsel %vm58, %v5236, 0.0
    %5260 = vadd.xlane.f32.xlu0 %v5259
    %v5261 = vpop.xlane.xlu0 %5260
    %v5262 = vmul.f32 %v5258, %v65
    %v5263 = vmul.f32 %v5261, %v65
    %v5264 = vsub.f32 %v5235, %v5262
    %v5265 = vsub.f32 %v5236, %v5263
    %v5266 = vmul.f32 %v5264, %v5264
    %v5267 = vmul.f32 %v5265, %v5265
    %v5268 = vsel %vm58, %v5266, 0.0
    %5269 = vadd.xlane.f32.xlu0 %v5268
    %v5270 = vpop.xlane.xlu0 %5269
    %v5271 = vsel %vm58, %v5267, 0.0
    %5272 = vadd.xlane.f32.xlu0 %v5271
    %v5273 = vpop.xlane.xlu0 %5272
    %v5274 = vmul.f32 %v5270, 0.032258064
    %v5275 = vmul.f32 %v5273, 0.032258064
    %v5276 = vrsqrt.pop %v5274
    %v5277 = vmul.f32 %v5274, %v5276
    %vm5278 = vcmp.eq.f32.partialorder %v5274, inf
    %v5279 = vsel %vm5278, %v5274, %v5277
    %vm5280 = vcmp.eq.f32.partialorder %v5274, 0.0
    %v5281 = vand.u32 %v5274, 2147483648
    %v5282 = vsel %vm5280, %v5281, %v5279
    %v5283 = vrsqrt.pop %v5275
    %v5284 = vmul.f32 %v5275, %v5283
    %vm5285 = vcmp.eq.f32.partialorder %v5275, inf
    %v5286 = vsel %vm5285, %v5275, %v5284
    %vm5287 = vcmp.eq.f32.partialorder %v5275, 0.0
    %v5288 = vand.u32 %v5275, 2147483648
    %v5289 = vsel %vm5287, %v5288, %v5286
    %v5290 = vadd.f32 %v5282, 1e-06
    %v5291 = vadd.f32 %v5289, 1e-06
    %v5292 = vrcp.pop %v5290
    %v5293 = vrcp.pop %v5291
    %v5294 = vlaneseq
    %v5295 = vshrl.u32 %v5294, 7
    %v5296 = vsub.s32 3, %v5295
    %v5297 = vrot.slane %v5255, %v5296
    %v5298 = vmul.f32 %v5297, %v5264
    %v5299 = vmul.f32 %v5297, %v5265
    %v5300 = vmul.f32 %v5298, %v5292
    %v5301 = vmul.f32 %v5299, %v5293
    %5303 = vrot.lane.b32.xlu0 %v5297, 96
    %v5304 = vpop.permute.xlu0 %5303
    %v5306 = vadd.f32 %v5300, %v5304
    %v5307 = vadd.f32 %v5301, %v5304
    %v5308 = vlaneseq
    %v5309 = vshrl.u32 %v5308, 7
    %v5310 = vsub.s32 0, %v5309
    %v5311 = vrot.slane %v5255, %v5310
    %v5313 = vsel %vm58, %v5306, 0
    %v5316 = vsel %vm58, %v5307, 0
    %5318 = vmatprep.subr.mxu0 0.0
    %5319 = vmatpush1.msra.mxu0 %v5238
    %5320 = vmatprep.subr.mxu0 0.0
    %5321 = vmatpush1.msra.mxu0 %v5239
    %5322 = vmatprep.subr.mxu0 0.0
    %5323 = vmatpush1.msra.mxu0 %v5240
    %5324 = vmatprep.subr.mxu0 0.0
    %5325 = vmatpush1.msra.mxu0 %v5241
    %5326 = vmatprep.subr.mxu0 0.0
    %5327 = vmatpush1.msra.mxu0 0.0
    %5328 = vmatprep.subr.mxu0 0.0
    %5329 = vmatpush1.msra.mxu0 0.0
    %5330 = vmatprep.subr.mxu0 0.0
    %5331 = vmatpush1.msra.mxu0 0.0
    %5332 = vmatprep.subr.mxu0 0.0
    %5333 = vmatpush1.msra.mxu0 0.0
    %5334 = vmatprep.subr.mxu0 0.0
    %5335 = vmatpush1.msra.mxu0 0.0
    %5336 = vmatprep.subr.mxu0 0.0
    %5337 = vmatpush1.msra.mxu0 0.0
    %5338 = vmatprep.subr.mxu0 0.0
    %5339 = vmatpush1.msra.mxu0 0.0
    %5340 = vmatprep.subr.mxu0 0.0
    %5341 = vmatpush1.msra.mxu0 0.0
    %5342 = vmatprep.subr.mxu0 0.0
    %5343 = vmatpush1.msra.mxu0 0.0
    %5344 = vmatprep.subr.mxu0 0.0
    %5345 = vmatpush1.msra.mxu0 0.0
    %5346 = vmatprep.subr.mxu0 0.0
    %5347 = vmatpush1.msra.mxu0 0.0
    %5348 = vmatprep.subr.mxu0 0.0
    %5349 = vmatpush1.msra.mxu0 0.0
    %5350 = vmatprep.subr.mxu0 0.0
    %5351 = vmatpush1.msra.mxu0 0.0
    %5352 = vmatprep.subr.mxu0 0.0
    %5353 = vmatpush1.msra.mxu0 0.0
    %5354 = vmatprep.subr.mxu0 0.0
    %5355 = vmatpush1.msra.mxu0 0.0
    %5356 = vmatprep.subr.mxu0 0.0
    %5357 = vmatpush1.msra.mxu0 0.0
    %5358 = vmatprep.subr.mxu0 0.0
    %5359 = vmatpush1.msra.mxu0 0.0
    %5360 = vmatprep.subr.mxu0 0.0
    %5361 = vmatpush1.msra.mxu0 0.0
    %5362 = vmatprep.subr.mxu0 0.0
    %5363 = vmatpush1.msra.mxu0 0.0
    %5364 = vmatprep.subr.mxu0 0.0
    %5365 = vmatpush1.msra.mxu0 0.0
    %5366 = vmatprep.subr.mxu0 0.0
    %5367 = vmatpush1.msra.mxu0 0.0
    %5368 = vmatprep.subr.mxu0 0.0
    %5369 = vmatpush1.msra.mxu0 0.0
    %5370 = vmatprep.subr.mxu0 0.0
    %5371 = vmatpush1.msra.mxu0 0.0
    %5372 = vmatprep.subr.mxu0 0.0
    %5373 = vmatpush1.msra.mxu0 0.0
    %5374 = vmatprep.subr.mxu0 0.0
    %5375 = vmatpush1.msra.mxu0 0.0
    %5376 = vmatprep.subr.mxu0 0.0
    %5377 = vmatpush1.msra.mxu0 0.0
    %5378 = vmatprep.subr.mxu0 0.0
    %5379 = vmatpush1.msra.mxu0 0.0
    %5380 = vmatprep.subr.mxu0 0.0
    %5381 = vmatpush1.msra.mxu0 0.0
    %5382 = vmatprep.mubr.f32.mxu0 0.0
    %5383 = vmatmul.mubr.f32.gmra.mrb[0].mxu0 %v5313
    %v5384 = vpop.f32.mrb[0].mxu0
    %v5385 = vadd.f32 %v5311, %v5384
    %v5386 = vpop.f32.mrb[0].mxu0
    %5387 = vmatprep.mubr.f32.mxu0 0.0
    %5388 = vmatmul.mubr.f32.gmra.mrb[0].mxu0 %v5316
    %v5389 = vpop.f32.mrb[0].mxu0
    %v5390 = vadd.f32 %v5311, %v5389
    %v5391 = vpop.f32.mrb[0].mxu0
    %5392 = vdwg.mxu0
    %5395 = vrot.lane.b32.xlu0 %v5385, 96
    %v5396 = vpop.permute.xlu0 %5395
    %5397 = vrot.lane.b32.xlu0 %v5390, 96
    %v5398 = vpop.permute.xlu0 %5397
    %v5399 = vsel %vm203, %v5385, 0
    %v5401 = vsel %vm203, %v5390, 0
    %v5403 = vsel %vm203, %v5396, 0
    %v5405 = vsel %vm203, %v5398, 0
    %5407 = vmatprep.subr.mxu0 0.0
    %5408 = vmatpush1.xpose.msra.mxu0 %v5403
    %5409 = vmatprep.subr.mxu0 0.0
    %5410 = vmatpush1.xpose.msra.mxu0 %v5405
    %5411 = vmatprep.subr.mxu0 0.0
    %5412 = vmatpush1.xpose.msra.mxu0 0.0
    %5413 = vmatprep.subr.mxu0 0.0
    %5414 = vmatpush1.xpose.msra.mxu0 0.0
    %5415 = vmatprep.subr.mxu0 0.0
    %5416 = vmatpush1.xpose.msra.mxu0 0.0
    %5417 = vmatprep.subr.mxu0 0.0
    %5418 = vmatpush1.xpose.msra.mxu0 0.0
    %5419 = vmatprep.subr.mxu0 0.0
    %5420 = vmatpush1.xpose.msra.mxu0 0.0
    %5421 = vmatprep.subr.mxu0 0.0
    %5422 = vmatpush1.xpose.msra.mxu0 0.0
    %5423 = vmatprep.subr.mxu0 0.0
    %5424 = vmatpush1.xpose.msra.mxu0 0.0
    %5425 = vmatprep.subr.mxu0 0.0
    %5426 = vmatpush1.xpose.msra.mxu0 0.0
    %5427 = vmatprep.subr.mxu0 0.0
    %5428 = vmatpush1.xpose.msra.mxu0 0.0
    %5429 = vmatprep.subr.mxu0 0.0
    %5430 = vmatpush1.xpose.msra.mxu0 0.0
    %5431 = vmatprep.subr.mxu0 0.0
    %5432 = vmatpush1.xpose.msra.mxu0 0.0
    %5433 = vmatprep.subr.mxu0 0.0
    %5434 = vmatpush1.xpose.msra.mxu0 0.0
    %5435 = vmatprep.subr.mxu0 0.0
    %5436 = vmatpush1.xpose.msra.mxu0 0.0
    %5437 = vmatprep.subr.mxu0 0.0
    %5438 = vmatpush1.xpose.msra.mxu0 0.0
    %5439 = vmatprep.subr.mxu0 0.0
    %5440 = vmatpush1.xpose.msra.mxu0 0.0
    %5441 = vmatprep.subr.mxu0 0.0
    %5442 = vmatpush1.xpose.msra.mxu0 0.0
    %5443 = vmatprep.subr.mxu0 0.0
    %5444 = vmatpush1.xpose.msra.mxu0 0.0
    %5445 = vmatprep.subr.mxu0 0.0
    %5446 = vmatpush1.xpose.msra.mxu0 0.0
    %5447 = vmatprep.subr.mxu0 0.0
    %5448 = vmatpush1.xpose.msra.mxu0 0.0
    %5449 = vmatprep.subr.mxu0 0.0
    %5450 = vmatpush1.xpose.msra.mxu0 0.0
    %5451 = vmatprep.subr.mxu0 0.0
    %5452 = vmatpush1.xpose.msra.mxu0 0.0
    %5453 = vmatprep.subr.mxu0 0.0
    %5454 = vmatpush1.xpose.msra.mxu0 0.0
    %5455 = vmatprep.subr.mxu0 0.0
    %5456 = vmatpush1.xpose.msra.mxu0 0.0
    %5457 = vmatprep.subr.mxu0 0.0
    %5458 = vmatpush1.xpose.msra.mxu0 0.0
    %5459 = vmatprep.subr.mxu0 0.0
    %5460 = vmatpush1.xpose.msra.mxu0 0.0
    %5461 = vmatprep.subr.mxu0 0.0
    %5462 = vmatpush1.xpose.msra.mxu0 0.0
    %5463 = vmatprep.subr.mxu0 0.0
    %5464 = vmatpush1.xpose.msra.mxu0 0.0
    %5465 = vmatprep.subr.mxu0 0.0
    %5466 = vmatpush1.xpose.msra.mxu0 0.0
    %5467 = vmatprep.subr.mxu0 0.0
    %5468 = vmatpush1.xpose.msra.mxu0 0.0
    %5469 = vmatprep.subr.mxu0 0.0
    %5470 = vmatpush1.xpose.msra.mxu0 0.0
    %5471 = vmatprep.mubr.f32.mxu0 0.0
    %5472 = vmatmul.mubr.f32.gmra.mrb[0].mxu0 %v5399
    %v5473 = vpop.f32.mrb[0].mxu0
    %v5474 = vadd.f32 %v2738, %v5473
    %v5475 = vpop.f32.mrb[0].mxu0
    %5476 = vmatprep.mubr.f32.mxu0 0.0
    %5477 = vmatmul.mubr.f32.gmra.mrb[0].mxu0 %v5401
    %v5478 = vpop.f32.mrb[0].mxu0
    %v5479 = vadd.f32 %v2739, %v5478
    %v5480 = vpop.f32.mrb[0].mxu0
    %5481 = vdwg.mxu0
    %v5482 = vsel %vm287, %v5474, -inf
    %5483 = vmax.xlane.f32.xlu0 %v5482
    %v5484 = vpop.xlane.xlu0 %5483
    %v5485 = vsel %vm287, %v5479, -inf
    %5486 = vmax.xlane.f32.xlu0 %v5485
    %v5487 = vpop.xlane.xlu0 %5486
    %v5488 = vsub.f32 %v5474, %v5484
    %v5489 = vsub.f32 %v5479, %v5487
    %v5490 = vmul.f32 %v5488, 1.442695
    %v5491 = vpow.pop %v5490
    %v5492 = vmul.f32 %v5489, 1.442695
    %v5493 = vpow.pop %v5492
    %v5494 = vsel %vm287, %v5491, 0.0
    %5495 = vadd.xlane.f32.xlu0 %v5494
    %v5496 = vpop.xlane.xlu0 %5495
    %v5497 = vsel %vm287, %v5493, 0.0
    %5498 = vadd.xlane.f32.xlu0 %v5497
    %v5499 = vpop.xlane.xlu0 %5498
    %v5500 = vrcp.pop %v5496
    %v5501 = vrcp.pop %v5499
    %v5502 = vmul.f32 %v5491, %v5500
    %v5503 = vmul.f32 %v5493, %v5501
    %5504 = vrot.lane.b32.xlu0 %v5385, 64
    %v5505 = vpop.permute.xlu0 %5504
    %5506 = vrot.lane.b32.xlu0 %v5390, 64
    %v5507 = vpop.permute.xlu0 %5506
    %v5511 = vsel %vm287, %v5502, 0
    %v5514 = vsel %vm287, %v5503, 0
    %5516 = vmatprep.subr.mxu0 0.0
    %5517 = vmatpush1.msra.mxu0 %v5505
    %5518 = vmatprep.subr.mxu0 0.0
    %5519 = vmatpush1.msra.mxu0 %v5507
    %5520 = vmatprep.subr.mxu0 0.0
    %5521 = vmatpush1.msra.mxu0 0.0
    %5522 = vmatprep.subr.mxu0 0.0
    %5523 = vmatpush1.msra.mxu0 0.0
    %5524 = vmatprep.subr.mxu0 0.0
    %5525 = vmatpush1.msra.mxu0 0.0
    %5526 = vmatprep.subr.mxu0 0.0
    %5527 = vmatpush1.msra.mxu0 0.0
    %5528 = vmatprep.subr.mxu0 0.0
    %5529 = vmatpush1.msra.mxu0 0.0
    %5530 = vmatprep.subr.mxu0 0.0
    %5531 = vmatpush1.msra.mxu0 0.0
    %5532 = vmatprep.subr.mxu0 0.0
    %5533 = vmatpush1.msra.mxu0 0.0
    %5534 = vmatprep.subr.mxu0 0.0
    %5535 = vmatpush1.msra.mxu0 0.0
    %5536 = vmatprep.subr.mxu0 0.0
    %5537 = vmatpush1.msra.mxu0 0.0
    %5538 = vmatprep.subr.mxu0 0.0
    %5539 = vmatpush1.msra.mxu0 0.0
    %5540 = vmatprep.subr.mxu0 0.0
    %5541 = vmatpush1.msra.mxu0 0.0
    %5542 = vmatprep.subr.mxu0 0.0
    %5543 = vmatpush1.msra.mxu0 0.0
    %5544 = vmatprep.subr.mxu0 0.0
    %5545 = vmatpush1.msra.mxu0 0.0
    %5546 = vmatprep.subr.mxu0 0.0
    %5547 = vmatpush1.msra.mxu0 0.0
    %5548 = vmatprep.subr.mxu0 0.0
    %5549 = vmatpush1.msra.mxu0 0.0
    %5550 = vmatprep.subr.mxu0 0.0
    %5551 = vmatpush1.msra.mxu0 0.0
    %5552 = vmatprep.subr.mxu0 0.0
    %5553 = vmatpush1.msra.mxu0 0.0
    %5554 = vmatprep.subr.mxu0 0.0
    %5555 = vmatpush1.msra.mxu0 0.0
    %5556 = vmatprep.subr.mxu0 0.0
    %5557 = vmatpush1.msra.mxu0 0.0
    %5558 = vmatprep.subr.mxu0 0.0
    %5559 = vmatpush1.msra.mxu0 0.0
    %5560 = vmatprep.subr.mxu0 0.0
    %5561 = vmatpush1.msra.mxu0 0.0
    %5562 = vmatprep.subr.mxu0 0.0
    %5563 = vmatpush1.msra.mxu0 0.0
    %5564 = vmatprep.subr.mxu0 0.0
    %5565 = vmatpush1.msra.mxu0 0.0
    %5566 = vmatprep.subr.mxu0 0.0
    %5567 = vmatpush1.msra.mxu0 0.0
    %5568 = vmatprep.subr.mxu0 0.0
    %5569 = vmatpush1.msra.mxu0 0.0
    %5570 = vmatprep.subr.mxu0 0.0
    %5571 = vmatpush1.msra.mxu0 0.0
    %5572 = vmatprep.subr.mxu0 0.0
    %5573 = vmatpush1.msra.mxu0 0.0
    %5574 = vmatprep.subr.mxu0 0.0
    %5575 = vmatpush1.msra.mxu0 0.0
    %5576 = vmatprep.subr.mxu0 0.0
    %5577 = vmatpush1.msra.mxu0 0.0
    %5578 = vmatprep.subr.mxu0 0.0
    %5579 = vmatpush1.msra.mxu0 0.0
    %5580 = vmatprep.mubr.f32.mxu0 0.0
    %5581 = vmatmul.mubr.f32.gmra.mrb[0].mxu0 %v5511
    %v5582 = vpop.f32.mrb[0].mxu0
    %v5583 = vadd.f32 0.0, %v5582
    %v5584 = vpop.f32.mrb[0].mxu0
    %5585 = vmatprep.mubr.f32.mxu0 0.0
    %5586 = vmatmul.mubr.f32.gmra.mrb[0].mxu0 %v5514
    %v5587 = vpop.f32.mrb[0].mxu0
    %v5588 = vadd.f32 0.0, %v5587
    %v5589 = vpop.f32.mrb[0].mxu0
    %5590 = vdwg.mxu0
    %5591 = vrot.lane.b32.xlu0 %v5385, 120
    %v5592 = vpop.permute.xlu0 %5591
    %5593 = vrot.lane.b32.xlu0 %v5390, 120
    %v5594 = vpop.permute.xlu0 %5593
    %5595 = vrot.lane.b32.xlu0 %v5385, 88
    %v5596 = vpop.permute.xlu0 %5595
    %5597 = vrot.lane.b32.xlu0 %v5390, 88
    %v5598 = vpop.permute.xlu0 %5597
    %v5599 = vsel %vm203, %v5592, 0
    %v5601 = vsel %vm203, %v5594, 0
    %v5603 = vsel %vm203, %v5596, 0
    %v5605 = vsel %vm203, %v5598, 0
    %5607 = vmatprep.subr.mxu0 0.0
    %5608 = vmatpush1.xpose.msra.mxu0 %v5603
    %5609 = vmatprep.subr.mxu0 0.0
    %5610 = vmatpush1.xpose.msra.mxu0 %v5605
    %5611 = vmatprep.subr.mxu0 0.0
    %5612 = vmatpush1.xpose.msra.mxu0 0.0
    %5613 = vmatprep.subr.mxu0 0.0
    %5614 = vmatpush1.xpose.msra.mxu0 0.0
    %5615 = vmatprep.subr.mxu0 0.0
    %5616 = vmatpush1.xpose.msra.mxu0 0.0
    %5617 = vmatprep.subr.mxu0 0.0
    %5618 = vmatpush1.xpose.msra.mxu0 0.0
    %5619 = vmatprep.subr.mxu0 0.0
    %5620 = vmatpush1.xpose.msra.mxu0 0.0
    %5621 = vmatprep.subr.mxu0 0.0
    %5622 = vmatpush1.xpose.msra.mxu0 0.0
    %5623 = vmatprep.subr.mxu0 0.0
    %5624 = vmatpush1.xpose.msra.mxu0 0.0
    %5625 = vmatprep.subr.mxu0 0.0
    %5626 = vmatpush1.xpose.msra.mxu0 0.0
    %5627 = vmatprep.subr.mxu0 0.0
    %5628 = vmatpush1.xpose.msra.mxu0 0.0
    %5629 = vmatprep.subr.mxu0 0.0
    %5630 = vmatpush1.xpose.msra.mxu0 0.0
    %5631 = vmatprep.subr.mxu0 0.0
    %5632 = vmatpush1.xpose.msra.mxu0 0.0
    %5633 = vmatprep.subr.mxu0 0.0
    %5634 = vmatpush1.xpose.msra.mxu0 0.0
    %5635 = vmatprep.subr.mxu0 0.0
    %5636 = vmatpush1.xpose.msra.mxu0 0.0
    %5637 = vmatprep.subr.mxu0 0.0
    %5638 = vmatpush1.xpose.msra.mxu0 0.0
    %5639 = vmatprep.subr.mxu0 0.0
    %5640 = vmatpush1.xpose.msra.mxu0 0.0
    %5641 = vmatprep.subr.mxu0 0.0
    %5642 = vmatpush1.xpose.msra.mxu0 0.0
    %5643 = vmatprep.subr.mxu0 0.0
    %5644 = vmatpush1.xpose.msra.mxu0 0.0
    %5645 = vmatprep.subr.mxu0 0.0
    %5646 = vmatpush1.xpose.msra.mxu0 0.0
    %5647 = vmatprep.subr.mxu0 0.0
    %5648 = vmatpush1.xpose.msra.mxu0 0.0
    %5649 = vmatprep.subr.mxu0 0.0
    %5650 = vmatpush1.xpose.msra.mxu0 0.0
    %5651 = vmatprep.subr.mxu0 0.0
    %5652 = vmatpush1.xpose.msra.mxu0 0.0
    %5653 = vmatprep.subr.mxu0 0.0
    %5654 = vmatpush1.xpose.msra.mxu0 0.0
    %5655 = vmatprep.subr.mxu0 0.0
    %5656 = vmatpush1.xpose.msra.mxu0 0.0
    %5657 = vmatprep.subr.mxu0 0.0
    %5658 = vmatpush1.xpose.msra.mxu0 0.0
    %5659 = vmatprep.subr.mxu0 0.0
    %5660 = vmatpush1.xpose.msra.mxu0 0.0
    %5661 = vmatprep.subr.mxu0 0.0
    %5662 = vmatpush1.xpose.msra.mxu0 0.0
    %5663 = vmatprep.subr.mxu0 0.0
    %5664 = vmatpush1.xpose.msra.mxu0 0.0
    %5665 = vmatprep.subr.mxu0 0.0
    %5666 = vmatpush1.xpose.msra.mxu0 0.0
    %5667 = vmatprep.subr.mxu0 0.0
    %5668 = vmatpush1.xpose.msra.mxu0 0.0
    %5669 = vmatprep.subr.mxu0 0.0
    %5670 = vmatpush1.xpose.msra.mxu0 0.0
    %5671 = vmatprep.mubr.f32.mxu0 0.0
    %5672 = vmatmul.mubr.f32.gmra.mrb[0].mxu0 %v5599
    %v5673 = vpop.f32.mrb[0].mxu0
    %v5674 = vadd.f32 %v2738, %v5673
    %v5675 = vpop.f32.mrb[0].mxu0
    %5676 = vmatprep.mubr.f32.mxu0 0.0
    %5677 = vmatmul.mubr.f32.gmra.mrb[0].mxu0 %v5601
    %v5678 = vpop.f32.mrb[0].mxu0
    %v5679 = vadd.f32 %v2739, %v5678
    %v5680 = vpop.f32.mrb[0].mxu0
    %5681 = vdwg.mxu0
    %v5682 = vsel %vm287, %v5674, -inf
    %5683 = vmax.xlane.f32.xlu0 %v5682
    %v5684 = vpop.xlane.xlu0 %5683
    %v5685 = vsel %vm287, %v5679, -inf
    %5686 = vmax.xlane.f32.xlu0 %v5685
    %v5687 = vpop.xlane.xlu0 %5686
    %v5688 = vsub.f32 %v5674, %v5684
    %v5689 = vsub.f32 %v5679, %v5687
    %v5690 = vmul.f32 %v5688, 1.442695
    %v5691 = vpow.pop %v5690
    %v5692 = vmul.f32 %v5689, 1.442695
    %v5693 = vpow.pop %v5692
    %v5694 = vsel %vm287, %v5691, 0.0
    %5695 = vadd.xlane.f32.xlu0 %v5694
    %v5696 = vpop.xlane.xlu0 %5695
    %v5697 = vsel %vm287, %v5693, 0.0
    %5698 = vadd.xlane.f32.xlu0 %v5697
    %v5699 = vpop.xlane.xlu0 %5698
    %v5700 = vrcp.pop %v5696
    %v5701 = vrcp.pop %v5699
    %v5702 = vmul.f32 %v5691, %v5700
    %v5703 = vmul.f32 %v5693, %v5701
    %5704 = vrot.lane.b32.xlu0 %v5385, 56
    %v5705 = vpop.permute.xlu0 %5704
    %5706 = vrot.lane.b32.xlu0 %v5390, 56
    %v5707 = vpop.permute.xlu0 %5706
    %v5711 = vsel %vm287, %v5702, 0
    %v5714 = vsel %vm287, %v5703, 0
    %5716 = vmatprep.subr.mxu0 0.0
    %5717 = vmatpush1.msra.mxu0 %v5705
    %5718 = vmatprep.subr.mxu0 0.0
    %5719 = vmatpush1.msra.mxu0 %v5707
    %5720 = vmatprep.subr.mxu0 0.0
    %5721 = vmatpush1.msra.mxu0 0.0
    %5722 = vmatprep.subr.mxu0 0.0
    %5723 = vmatpush1.msra.mxu0 0.0
    %5724 = vmatprep.subr.mxu0 0.0
    %5725 = vmatpush1.msra.mxu0 0.0
    %5726 = vmatprep.subr.mxu0 0.0
    %5727 = vmatpush1.msra.mxu0 0.0
    %5728 = vmatprep.subr.mxu0 0.0
    %5729 = vmatpush1.msra.mxu0 0.0
    %5730 = vmatprep.subr.mxu0 0.0
    %5731 = vmatpush1.msra.mxu0 0.0
    %5732 = vmatprep.subr.mxu0 0.0
    %5733 = vmatpush1.msra.mxu0 0.0
    %5734 = vmatprep.subr.mxu0 0.0
    %5735 = vmatpush1.msra.mxu0 0.0
    %5736 = vmatprep.subr.mxu0 0.0
    %5737 = vmatpush1.msra.mxu0 0.0
    %5738 = vmatprep.subr.mxu0 0.0
    %5739 = vmatpush1.msra.mxu0 0.0
    %5740 = vmatprep.subr.mxu0 0.0
    %5741 = vmatpush1.msra.mxu0 0.0
    %5742 = vmatprep.subr.mxu0 0.0
    %5743 = vmatpush1.msra.mxu0 0.0
    %5744 = vmatprep.subr.mxu0 0.0
    %5745 = vmatpush1.msra.mxu0 0.0
    %5746 = vmatprep.subr.mxu0 0.0
    %5747 = vmatpush1.msra.mxu0 0.0
    %5748 = vmatprep.subr.mxu0 0.0
    %5749 = vmatpush1.msra.mxu0 0.0
    %5750 = vmatprep.subr.mxu0 0.0
    %5751 = vmatpush1.msra.mxu0 0.0
    %5752 = vmatprep.subr.mxu0 0.0
    %5753 = vmatpush1.msra.mxu0 0.0
    %5754 = vmatprep.subr.mxu0 0.0
    %5755 = vmatpush1.msra.mxu0 0.0
    %5756 = vmatprep.subr.mxu0 0.0
    %5757 = vmatpush1.msra.mxu0 0.0
    %5758 = vmatprep.subr.mxu0 0.0
    %5759 = vmatpush1.msra.mxu0 0.0
    %5760 = vmatprep.subr.mxu0 0.0
    %5761 = vmatpush1.msra.mxu0 0.0
    %5762 = vmatprep.subr.mxu0 0.0
    %5763 = vmatpush1.msra.mxu0 0.0
    %5764 = vmatprep.subr.mxu0 0.0
    %5765 = vmatpush1.msra.mxu0 0.0
    %5766 = vmatprep.subr.mxu0 0.0
    %5767 = vmatpush1.msra.mxu0 0.0
    %5768 = vmatprep.subr.mxu0 0.0
    %5769 = vmatpush1.msra.mxu0 0.0
    %5770 = vmatprep.subr.mxu0 0.0
    %5771 = vmatpush1.msra.mxu0 0.0
    %5772 = vmatprep.subr.mxu0 0.0
    %5773 = vmatpush1.msra.mxu0 0.0
    %5774 = vmatprep.subr.mxu0 0.0
    %5775 = vmatpush1.msra.mxu0 0.0
    %5776 = vmatprep.subr.mxu0 0.0
    %5777 = vmatpush1.msra.mxu0 0.0
    %5778 = vmatprep.subr.mxu0 0.0
    %5779 = vmatpush1.msra.mxu0 0.0
    %5780 = vmatprep.mubr.f32.mxu0 0.0
    %5781 = vmatmul.mubr.f32.gmra.mrb[0].mxu0 %v5711
    %v5782 = vpop.f32.mrb[0].mxu0
    %v5783 = vadd.f32 0.0, %v5782
    %v5784 = vpop.f32.mrb[0].mxu0
    %5785 = vmatprep.mubr.f32.mxu0 0.0
    %5786 = vmatmul.mubr.f32.gmra.mrb[0].mxu0 %v5714
    %v5787 = vpop.f32.mrb[0].mxu0
    %v5788 = vadd.f32 0.0, %v5787
    %v5789 = vpop.f32.mrb[0].mxu0
    %5790 = vdwg.mxu0
    %5791 = vrot.lane.b32.xlu0 %v5385, 112
    %v5792 = vpop.permute.xlu0 %5791
    %5793 = vrot.lane.b32.xlu0 %v5390, 112
    %v5794 = vpop.permute.xlu0 %5793
    %5795 = vrot.lane.b32.xlu0 %v5385, 80
    %v5796 = vpop.permute.xlu0 %5795
    %5797 = vrot.lane.b32.xlu0 %v5390, 80
    %v5798 = vpop.permute.xlu0 %5797
    %v5799 = vsel %vm203, %v5792, 0
    %v5801 = vsel %vm203, %v5794, 0
    %v5803 = vsel %vm203, %v5796, 0
    %v5805 = vsel %vm203, %v5798, 0
    %5807 = vmatprep.subr.mxu0 0.0
    %5808 = vmatpush1.xpose.msra.mxu0 %v5803
    %5809 = vmatprep.subr.mxu0 0.0
    %5810 = vmatpush1.xpose.msra.mxu0 %v5805
    %5811 = vmatprep.subr.mxu0 0.0
    %5812 = vmatpush1.xpose.msra.mxu0 0.0
    %5813 = vmatprep.subr.mxu0 0.0
    %5814 = vmatpush1.xpose.msra.mxu0 0.0
    %5815 = vmatprep.subr.mxu0 0.0
    %5816 = vmatpush1.xpose.msra.mxu0 0.0
    %5817 = vmatprep.subr.mxu0 0.0
    %5818 = vmatpush1.xpose.msra.mxu0 0.0
    %5819 = vmatprep.subr.mxu0 0.0
    %5820 = vmatpush1.xpose.msra.mxu0 0.0
    %5821 = vmatprep.subr.mxu0 0.0
    %5822 = vmatpush1.xpose.msra.mxu0 0.0
    %5823 = vmatprep.subr.mxu0 0.0
    %5824 = vmatpush1.xpose.msra.mxu0 0.0
    %5825 = vmatprep.subr.mxu0 0.0
    %5826 = vmatpush1.xpose.msra.mxu0 0.0
    %5827 = vmatprep.subr.mxu0 0.0
    %5828 = vmatpush1.xpose.msra.mxu0 0.0
    %5829 = vmatprep.subr.mxu0 0.0
    %5830 = vmatpush1.xpose.msra.mxu0 0.0
    %5831 = vmatprep.subr.mxu0 0.0
    %5832 = vmatpush1.xpose.msra.mxu0 0.0
    %5833 = vmatprep.subr.mxu0 0.0
    %5834 = vmatpush1.xpose.msra.mxu0 0.0
    %5835 = vmatprep.subr.mxu0 0.0
    %5836 = vmatpush1.xpose.msra.mxu0 0.0
    %5837 = vmatprep.subr.mxu0 0.0
    %5838 = vmatpush1.xpose.msra.mxu0 0.0
    %5839 = vmatprep.subr.mxu0 0.0
    %5840 = vmatpush1.xpose.msra.mxu0 0.0
    %5841 = vmatprep.subr.mxu0 0.0
    %5842 = vmatpush1.xpose.msra.mxu0 0.0
    %5843 = vmatprep.subr.mxu0 0.0
    %5844 = vmatpush1.xpose.msra.mxu0 0.0
    %5845 = vmatprep.subr.mxu0 0.0
    %5846 = vmatpush1.xpose.msra.mxu0 0.0
    %5847 = vmatprep.subr.mxu0 0.0
    %5848 = vmatpush1.xpose.msra.mxu0 0.0
    %5849 = vmatprep.subr.mxu0 0.0
    %5850 = vmatpush1.xpose.msra.mxu0 0.0
    %5851 = vmatprep.subr.mxu0 0.0
    %5852 = vmatpush1.xpose.msra.mxu0 0.0
    %5853 = vmatprep.subr.mxu0 0.0
    %5854 = vmatpush1.xpose.msra.mxu0 0.0
    %5855 = vmatprep.subr.mxu0 0.0
    %5856 = vmatpush1.xpose.msra.mxu0 0.0
    %5857 = vmatprep.subr.mxu0 0.0
    %5858 = vmatpush1.xpose.msra.mxu0 0.0
    %5859 = vmatprep.subr.mxu0 0.0
    %5860 = vmatpush1.xpose.msra.mxu0 0.0
    %5861 = vmatprep.subr.mxu0 0.0
    %5862 = vmatpush1.xpose.msra.mxu0 0.0
    %5863 = vmatprep.subr.mxu0 0.0
    %5864 = vmatpush1.xpose.msra.mxu0 0.0
    %5865 = vmatprep.subr.mxu0 0.0
    %5866 = vmatpush1.xpose.msra.mxu0 0.0
    %5867 = vmatprep.subr.mxu0 0.0
    %5868 = vmatpush1.xpose.msra.mxu0 0.0
    %5869 = vmatprep.subr.mxu0 0.0
    %5870 = vmatpush1.xpose.msra.mxu0 0.0
    %5871 = vmatprep.mubr.f32.mxu0 0.0
    %5872 = vmatmul.mubr.f32.gmra.mrb[0].mxu0 %v5799
    %v5873 = vpop.f32.mrb[0].mxu0
    %v5874 = vadd.f32 %v2738, %v5873
    %v5875 = vpop.f32.mrb[0].mxu0
    %5876 = vmatprep.mubr.f32.mxu0 0.0
    %5877 = vmatmul.mubr.f32.gmra.mrb[0].mxu0 %v5801
    %v5878 = vpop.f32.mrb[0].mxu0
    %v5879 = vadd.f32 %v2739, %v5878
    %v5880 = vpop.f32.mrb[0].mxu0
    %5881 = vdwg.mxu0
    %v5882 = vsel %vm287, %v5874, -inf
    %5883 = vmax.xlane.f32.xlu0 %v5882
    %v5884 = vpop.xlane.xlu0 %5883
    %v5885 = vsel %vm287, %v5879, -inf
    %5886 = vmax.xlane.f32.xlu0 %v5885
    %v5887 = vpop.xlane.xlu0 %5886
    %v5888 = vsub.f32 %v5874, %v5884
    %v5889 = vsub.f32 %v5879, %v5887
    %v5890 = vmul.f32 %v5888, 1.442695
    %v5891 = vpow.pop %v5890
    %v5892 = vmul.f32 %v5889, 1.442695
    %v5893 = vpow.pop %v5892
    %v5894 = vsel %vm287, %v5891, 0.0
    %5895 = vadd.xlane.f32.xlu0 %v5894
    %v5896 = vpop.xlane.xlu0 %5895
    %v5897 = vsel %vm287, %v5893, 0.0
    %5898 = vadd.xlane.f32.xlu0 %v5897
    %v5899 = vpop.xlane.xlu0 %5898
    %v5900 = vrcp.pop %v5896
    %v5901 = vrcp.pop %v5899
    %v5902 = vmul.f32 %v5891, %v5900
    %v5903 = vmul.f32 %v5893, %v5901
    %5904 = vrot.lane.b32.xlu0 %v5385, 48
    %v5905 = vpop.permute.xlu0 %5904
    %5906 = vrot.lane.b32.xlu0 %v5390, 48
    %v5907 = vpop.permute.xlu0 %5906
    %v5911 = vsel %vm287, %v5902, 0
    %v5914 = vsel %vm287, %v5903, 0
    %5916 = vmatprep.subr.mxu0 0.0
    %5917 = vmatpush1.msra.mxu0 %v5905
    %5918 = vmatprep.subr.mxu0 0.0
    %5919 = vmatpush1.msra.mxu0 %v5907
    %5920 = vmatprep.subr.mxu0 0.0
    %5921 = vmatpush1.msra.mxu0 0.0
    %5922 = vmatprep.subr.mxu0 0.0
    %5923 = vmatpush1.msra.mxu0 0.0
    %5924 = vmatprep.subr.mxu0 0.0
    %5925 = vmatpush1.msra.mxu0 0.0
    %5926 = vmatprep.subr.mxu0 0.0
    %5927 = vmatpush1.msra.mxu0 0.0
    %5928 = vmatprep.subr.mxu0 0.0
    %5929 = vmatpush1.msra.mxu0 0.0
    %5930 = vmatprep.subr.mxu0 0.0
    %5931 = vmatpush1.msra.mxu0 0.0
    %5932 = vmatprep.subr.mxu0 0.0
    %5933 = vmatpush1.msra.mxu0 0.0
    %5934 = vmatprep.subr.mxu0 0.0
    %5935 = vmatpush1.msra.mxu0 0.0
    %5936 = vmatprep.subr.mxu0 0.0
    %5937 = vmatpush1.msra.mxu0 0.0
    %5938 = vmatprep.subr.mxu0 0.0
    %5939 = vmatpush1.msra.mxu0 0.0
    %5940 = vmatprep.subr.mxu0 0.0
    %5941 = vmatpush1.msra.mxu0 0.0
    %5942 = vmatprep.subr.mxu0 0.0
    %5943 = vmatpush1.msra.mxu0 0.0
    %5944 = vmatprep.subr.mxu0 0.0
    %5945 = vmatpush1.msra.mxu0 0.0
    %5946 = vmatprep.subr.mxu0 0.0
    %5947 = vmatpush1.msra.mxu0 0.0
    %5948 = vmatprep.subr.mxu0 0.0
    %5949 = vmatpush1.msra.mxu0 0.0
    %5950 = vmatprep.subr.mxu0 0.0
    %5951 = vmatpush1.msra.mxu0 0.0
    %5952 = vmatprep.subr.mxu0 0.0
    %5953 = vmatpush1.msra.mxu0 0.0
    %5954 = vmatprep.subr.mxu0 0.0
    %5955 = vmatpush1.msra.mxu0 0.0
    %5956 = vmatprep.subr.mxu0 0.0
    %5957 = vmatpush1.msra.mxu0 0.0
    %5958 = vmatprep.subr.mxu0 0.0
    %5959 = vmatpush1.msra.mxu0 0.0
    %5960 = vmatprep.subr.mxu0 0.0
    %5961 = vmatpush1.msra.mxu0 0.0
    %5962 = vmatprep.subr.mxu0 0.0
    %5963 = vmatpush1.msra.mxu0 0.0
    %5964 = vmatprep.subr.mxu0 0.0
    %5965 = vmatpush1.msra.mxu0 0.0
    %5966 = vmatprep.subr.mxu0 0.0
    %5967 = vmatpush1.msra.mxu0 0.0
    %5968 = vmatprep.subr.mxu0 0.0
    %5969 = vmatpush1.msra.mxu0 0.0
    %5970 = vmatprep.subr.mxu0 0.0
    %5971 = vmatpush1.msra.mxu0 0.0
    %5972 = vmatprep.subr.mxu0 0.0
    %5973 = vmatpush1.msra.mxu0 0.0
    %5974 = vmatprep.subr.mxu0 0.0
    %5975 = vmatpush1.msra.mxu0 0.0
    %5976 = vmatprep.subr.mxu0 0.0
    %5977 = vmatpush1.msra.mxu0 0.0
    %5978 = vmatprep.subr.mxu0 0.0
    %5979 = vmatpush1.msra.mxu0 0.0
    %5980 = vmatprep.mubr.f32.mxu0 0.0
    %5981 = vmatmul.mubr.f32.gmra.mrb[0].mxu0 %v5911
    %v5982 = vpop.f32.mrb[0].mxu0
    %v5983 = vadd.f32 0.0, %v5982
    %v5984 = vpop.f32.mrb[0].mxu0
    %5985 = vmatprep.mubr.f32.mxu0 0.0
    %5986 = vmatmul.mubr.f32.gmra.mrb[0].mxu0 %v5914
    %v5987 = vpop.f32.mrb[0].mxu0
    %v5988 = vadd.f32 0.0, %v5987
    %v5989 = vpop.f32.mrb[0].mxu0
    %5990 = vdwg.mxu0
    %5991 = vrot.lane.b32.xlu0 %v5385, 104
    %v5992 = vpop.permute.xlu0 %5991
    %5993 = vrot.lane.b32.xlu0 %v5390, 104
    %v5994 = vpop.permute.xlu0 %5993
    %5995 = vrot.lane.b32.xlu0 %v5385, 72
    %v5996 = vpop.permute.xlu0 %5995
    %5997 = vrot.lane.b32.xlu0 %v5390, 72
    %v5998 = vpop.permute.xlu0 %5997
    %v5999 = vsel %vm203, %v5992, 0
    %v6001 = vsel %vm203, %v5994, 0
    %v6003 = vsel %vm203, %v5996, 0
    %v6005 = vsel %vm203, %v5998, 0
    %6007 = vmatprep.subr.mxu0 0.0
    %6008 = vmatpush1.xpose.msra.mxu0 %v6003
    %6009 = vmatprep.subr.mxu0 0.0
    %6010 = vmatpush1.xpose.msra.mxu0 %v6005
    %6011 = vmatprep.subr.mxu0 0.0
    %6012 = vmatpush1.xpose.msra.mxu0 0.0
    %6013 = vmatprep.subr.mxu0 0.0
    %6014 = vmatpush1.xpose.msra.mxu0 0.0
    %6015 = vmatprep.subr.mxu0 0.0
    %6016 = vmatpush1.xpose.msra.mxu0 0.0
    %6017 = vmatprep.subr.mxu0 0.0
    %6018 = vmatpush1.xpose.msra.mxu0 0.0
    %6019 = vmatprep.subr.mxu0 0.0
    %6020 = vmatpush1.xpose.msra.mxu0 0.0
    %6021 = vmatprep.subr.mxu0 0.0
    %6022 = vmatpush1.xpose.msra.mxu0 0.0
    %6023 = vmatprep.subr.mxu0 0.0
    %6024 = vmatpush1.xpose.msra.mxu0 0.0
    %6025 = vmatprep.subr.mxu0 0.0
    %6026 = vmatpush1.xpose.msra.mxu0 0.0
    %6027 = vmatprep.subr.mxu0 0.0
    %6028 = vmatpush1.xpose.msra.mxu0 0.0
    %6029 = vmatprep.subr.mxu0 0.0
    %6030 = vmatpush1.xpose.msra.mxu0 0.0
    %6031 = vmatprep.subr.mxu0 0.0
    %6032 = vmatpush1.xpose.msra.mxu0 0.0
    %6033 = vmatprep.subr.mxu0 0.0
    %6034 = vmatpush1.xpose.msra.mxu0 0.0
    %6035 = vmatprep.subr.mxu0 0.0
    %6036 = vmatpush1.xpose.msra.mxu0 0.0
    %6037 = vmatprep.subr.mxu0 0.0
    %6038 = vmatpush1.xpose.msra.mxu0 0.0
    %6039 = vmatprep.subr.mxu0 0.0
    %6040 = vmatpush1.xpose.msra.mxu0 0.0
    %6041 = vmatprep.subr.mxu0 0.0
    %6042 = vmatpush1.xpose.msra.mxu0 0.0
    %6043 = vmatprep.subr.mxu0 0.0
    %6044 = vmatpush1.xpose.msra.mxu0 0.0
    %6045 = vmatprep.subr.mxu0 0.0
    %6046 = vmatpush1.xpose.msra.mxu0 0.0
    %6047 = vmatprep.subr.mxu0 0.0
    %6048 = vmatpush1.xpose.msra.mxu0 0.0
    %6049 = vmatprep.subr.mxu0 0.0
    %6050 = vmatpush1.xpose.msra.mxu0 0.0
    %6051 = vmatprep.subr.mxu0 0.0
    %6052 = vmatpush1.xpose.msra.mxu0 0.0
    %6053 = vmatprep.subr.mxu0 0.0
    %6054 = vmatpush1.xpose.msra.mxu0 0.0
    %6055 = vmatprep.subr.mxu0 0.0
    %6056 = vmatpush1.xpose.msra.mxu0 0.0
    %6057 = vmatprep.subr.mxu0 0.0
    %6058 = vmatpush1.xpose.msra.mxu0 0.0
    %6059 = vmatprep.subr.mxu0 0.0
    %6060 = vmatpush1.xpose.msra.mxu0 0.0
    %6061 = vmatprep.subr.mxu0 0.0
    %6062 = vmatpush1.xpose.msra.mxu0 0.0
    %6063 = vmatprep.subr.mxu0 0.0
    %6064 = vmatpush1.xpose.msra.mxu0 0.0
    %6065 = vmatprep.subr.mxu0 0.0
    %6066 = vmatpush1.xpose.msra.mxu0 0.0
    %6067 = vmatprep.subr.mxu0 0.0
    %6068 = vmatpush1.xpose.msra.mxu0 0.0
    %6069 = vmatprep.subr.mxu0 0.0
    %6070 = vmatpush1.xpose.msra.mxu0 0.0
    %6071 = vmatprep.mubr.f32.mxu0 0.0
    %6072 = vmatmul.mubr.f32.gmra.mrb[0].mxu0 %v5999
    %v6073 = vpop.f32.mrb[0].mxu0
    %v6074 = vadd.f32 %v2738, %v6073
    %v6075 = vpop.f32.mrb[0].mxu0
    %6076 = vmatprep.mubr.f32.mxu0 0.0
    %6077 = vmatmul.mubr.f32.gmra.mrb[0].mxu0 %v6001
    %v6078 = vpop.f32.mrb[0].mxu0
    %v6079 = vadd.f32 %v2739, %v6078
    %v6080 = vpop.f32.mrb[0].mxu0
    %6081 = vdwg.mxu0
    %v6082 = vsel %vm287, %v6074, -inf
    %6083 = vmax.xlane.f32.xlu0 %v6082
    %v6084 = vpop.xlane.xlu0 %6083
    %v6085 = vsel %vm287, %v6079, -inf
    %6086 = vmax.xlane.f32.xlu0 %v6085
    %v6087 = vpop.xlane.xlu0 %6086
    %v6088 = vsub.f32 %v6074, %v6084
    %v6089 = vsub.f32 %v6079, %v6087
    %v6090 = vmul.f32 %v6088, 1.442695
    %v6091 = vpow.pop %v6090
    %v6092 = vmul.f32 %v6089, 1.442695
    %v6093 = vpow.pop %v6092
    %v6094 = vsel %vm287, %v6091, 0.0
    %6095 = vadd.xlane.f32.xlu0 %v6094
    %v6096 = vpop.xlane.xlu0 %6095
    %v6097 = vsel %vm287, %v6093, 0.0
    %6098 = vadd.xlane.f32.xlu0 %v6097
    %v6099 = vpop.xlane.xlu0 %6098
    %v6100 = vrcp.pop %v6096
    %v6101 = vrcp.pop %v6099
    %v6102 = vmul.f32 %v6091, %v6100
    %v6103 = vmul.f32 %v6093, %v6101
    %6104 = vrot.lane.b32.xlu0 %v5385, 40
    %v6105 = vpop.permute.xlu0 %6104
    %6106 = vrot.lane.b32.xlu0 %v5390, 40
    %v6107 = vpop.permute.xlu0 %6106
    %v6111 = vsel %vm287, %v6102, 0
    %v6114 = vsel %vm287, %v6103, 0
    %6116 = vmatprep.subr.mxu0 0.0
    %6117 = vmatpush1.msra.mxu0 %v6105
    %6118 = vmatprep.subr.mxu0 0.0
    %6119 = vmatpush1.msra.mxu0 %v6107
    %6120 = vmatprep.subr.mxu0 0.0
    %6121 = vmatpush1.msra.mxu0 0.0
    %6122 = vmatprep.subr.mxu0 0.0
    %6123 = vmatpush1.msra.mxu0 0.0
    %6124 = vmatprep.subr.mxu0 0.0
    %6125 = vmatpush1.msra.mxu0 0.0
    %6126 = vmatprep.subr.mxu0 0.0
    %6127 = vmatpush1.msra.mxu0 0.0
    %6128 = vmatprep.subr.mxu0 0.0
    %6129 = vmatpush1.msra.mxu0 0.0
    %6130 = vmatprep.subr.mxu0 0.0
    %6131 = vmatpush1.msra.mxu0 0.0
    %6132 = vmatprep.subr.mxu0 0.0
    %6133 = vmatpush1.msra.mxu0 0.0
    %6134 = vmatprep.subr.mxu0 0.0
    %6135 = vmatpush1.msra.mxu0 0.0
    %6136 = vmatprep.subr.mxu0 0.0
    %6137 = vmatpush1.msra.mxu0 0.0
    %6138 = vmatprep.subr.mxu0 0.0
    %6139 = vmatpush1.msra.mxu0 0.0
    %6140 = vmatprep.subr.mxu0 0.0
    %6141 = vmatpush1.msra.mxu0 0.0
    %6142 = vmatprep.subr.mxu0 0.0
    %6143 = vmatpush1.msra.mxu0 0.0
    %6144 = vmatprep.subr.mxu0 0.0
    %6145 = vmatpush1.msra.mxu0 0.0
    %6146 = vmatprep.subr.mxu0 0.0
    %6147 = vmatpush1.msra.mxu0 0.0
    %6148 = vmatprep.subr.mxu0 0.0
    %6149 = vmatpush1.msra.mxu0 0.0
    %6150 = vmatprep.subr.mxu0 0.0
    %6151 = vmatpush1.msra.mxu0 0.0
    %6152 = vmatprep.subr.mxu0 0.0
    %6153 = vmatpush1.msra.mxu0 0.0
    %6154 = vmatprep.subr.mxu0 0.0
    %6155 = vmatpush1.msra.mxu0 0.0
    %6156 = vmatprep.subr.mxu0 0.0
    %6157 = vmatpush1.msra.mxu0 0.0
    %6158 = vmatprep.subr.mxu0 0.0
    %6159 = vmatpush1.msra.mxu0 0.0
    %6160 = vmatprep.subr.mxu0 0.0
    %6161 = vmatpush1.msra.mxu0 0.0
    %6162 = vmatprep.subr.mxu0 0.0
    %6163 = vmatpush1.msra.mxu0 0.0
    %6164 = vmatprep.subr.mxu0 0.0
    %6165 = vmatpush1.msra.mxu0 0.0
    %6166 = vmatprep.subr.mxu0 0.0
    %6167 = vmatpush1.msra.mxu0 0.0
    %6168 = vmatprep.subr.mxu0 0.0
    %6169 = vmatpush1.msra.mxu0 0.0
    %6170 = vmatprep.subr.mxu0 0.0
    %6171 = vmatpush1.msra.mxu0 0.0
    %6172 = vmatprep.subr.mxu0 0.0
    %6173 = vmatpush1.msra.mxu0 0.0
    %6174 = vmatprep.subr.mxu0 0.0
    %6175 = vmatpush1.msra.mxu0 0.0
    %6176 = vmatprep.subr.mxu0 0.0
    %6177 = vmatpush1.msra.mxu0 0.0
    %6178 = vmatprep.subr.mxu0 0.0
    %6179 = vmatpush1.msra.mxu0 0.0
    %6180 = vmatprep.mubr.f32.mxu0 0.0
    %6181 = vmatmul.mubr.f32.gmra.mrb[0].mxu0 %v6111
    %v6182 = vpop.f32.mrb[0].mxu0
    %v6183 = vadd.f32 0.0, %v6182
    %v6184 = vpop.f32.mrb[0].mxu0
    %6185 = vmatprep.mubr.f32.mxu0 0.0
    %6186 = vmatmul.mubr.f32.gmra.mrb[0].mxu0 %v6114
    %v6187 = vpop.f32.mrb[0].mxu0
    %v6188 = vadd.f32 0.0, %v6187
    %v6189 = vpop.f32.mrb[0].mxu0
    %6190 = vdwg.mxu0
    %6193 = vrot.lane.b32.xlu0 %v5783, 8
    %v6194 = vpop.permute.xlu0 %6193
    %6195 = vrot.lane.b32.xlu0 %v5788, 8
    %v6196 = vpop.permute.xlu0 %6195
    %6201 = vrot.lane.b32.xlu0 %v5983, 16
    %v6202 = vpop.permute.xlu0 %6201
    %6203 = vrot.lane.b32.xlu0 %v5988, 16
    %v6204 = vpop.permute.xlu0 %6203
    %6209 = vrot.lane.b32.xlu0 %v6183, 24
    %v6210 = vpop.permute.xlu0 %6209
    %6211 = vrot.lane.b32.xlu0 %v6188, 24
    %v6212 = vpop.permute.xlu0 %6211
    %v6215 = vsel %vm203, %v5583, %v6194
    %v6216 = vsel %vm203, %v5588, %v6196
    %v6217 = vsel %vm287, %v6215, %v6202
    %v6218 = vsel %vm287, %v6216, %v6204
    %v6219 = vsel %vm1025, %v6217, %v6210
    %v6220 = vsel %vm1025, %v6218, %v6212
    %6225 = vrot.lane.b32.xlu0 %v5238, 32
    %v6226 = vpop.permute.xlu0 %6225
    %6227 = vrot.lane.b32.xlu0 %v5239, 32
    %v6228 = vpop.permute.xlu0 %6227
    %6229 = vrot.lane.b32.xlu0 %v5240, 32
    %v6230 = vpop.permute.xlu0 %6229
    %6231 = vrot.lane.b32.xlu0 %v5241, 32
    %v6232 = vpop.permute.xlu0 %6231
    %6238 = vrot.lane.b32.xlu0 %v5311, 32
    %v6239 = vpop.permute.xlu0 %6238
    %v6242 = vsel %vm58, %v6219, 0
    %v6245 = vsel %vm58, %v6220, 0
    %6247 = vmatprep.subr.mxu0 0.0
    %6248 = vmatpush1.msra.mxu0 %v6226
    %6249 = vmatprep.subr.mxu0 0.0
    %6250 = vmatpush1.msra.mxu0 %v6228
    %6251 = vmatprep.subr.mxu0 0.0
    %6252 = vmatpush1.msra.mxu0 %v6230
    %6253 = vmatprep.subr.mxu0 0.0
    %6254 = vmatpush1.msra.mxu0 %v6232
    %6255 = vmatprep.subr.mxu0 0.0
    %6256 = vmatpush1.msra.mxu0 0.0
    %6257 = vmatprep.subr.mxu0 0.0
    %6258 = vmatpush1.msra.mxu0 0.0
    %6259 = vmatprep.subr.mxu0 0.0
    %6260 = vmatpush1.msra.mxu0 0.0
    %6261 = vmatprep.subr.mxu0 0.0
    %6262 = vmatpush1.msra.mxu0 0.0
    %6263 = vmatprep.subr.mxu0 0.0
    %6264 = vmatpush1.msra.mxu0 0.0
    %6265 = vmatprep.subr.mxu0 0.0
    %6266 = vmatpush1.msra.mxu0 0.0
    %6267 = vmatprep.subr.mxu0 0.0
    %6268 = vmatpush1.msra.mxu0 0.0
    %6269 = vmatprep.subr.mxu0 0.0
    %6270 = vmatpush1.msra.mxu0 0.0
    %6271 = vmatprep.subr.mxu0 0.0
    %6272 = vmatpush1.msra.mxu0 0.0
    %6273 = vmatprep.subr.mxu0 0.0
    %6274 = vmatpush1.msra.mxu0 0.0
    %6275 = vmatprep.subr.mxu0 0.0
    %6276 = vmatpush1.msra.mxu0 0.0
    %6277 = vmatprep.subr.mxu0 0.0
    %6278 = vmatpush1.msra.mxu0 0.0
    %6279 = vmatprep.subr.mxu0 0.0
    %6280 = vmatpush1.msra.mxu0 0.0
    %6281 = vmatprep.subr.mxu0 0.0
    %6282 = vmatpush1.msra.mxu0 0.0
    %6283 = vmatprep.subr.mxu0 0.0
    %6284 = vmatpush1.msra.mxu0 0.0
    %6285 = vmatprep.subr.mxu0 0.0
    %6286 = vmatpush1.msra.mxu0 0.0
    %6287 = vmatprep.subr.mxu0 0.0
    %6288 = vmatpush1.msra.mxu0 0.0
    %6289 = vmatprep.subr.mxu0 0.0
    %6290 = vmatpush1.msra.mxu0 0.0
    %6291 = vmatprep.subr.mxu0 0.0
    %6292 = vmatpush1.msra.mxu0 0.0
    %6293 = vmatprep.subr.mxu0 0.0
    %6294 = vmatpush1.msra.mxu0 0.0
    %6295 = vmatprep.subr.mxu0 0.0
    %6296 = vmatpush1.msra.mxu0 0.0
    %6297 = vmatprep.subr.mxu0 0.0
    %6298 = vmatpush1.msra.mxu0 0.0
    %6299 = vmatprep.subr.mxu0 0.0
    %6300 = vmatpush1.msra.mxu0 0.0
    %6301 = vmatprep.subr.mxu0 0.0
    %6302 = vmatpush1.msra.mxu0 0.0
    %6303 = vmatprep.subr.mxu0 0.0
    %6304 = vmatpush1.msra.mxu0 0.0
    %6305 = vmatprep.subr.mxu0 0.0
    %6306 = vmatpush1.msra.mxu0 0.0
    %6307 = vmatprep.subr.mxu0 0.0
    %6308 = vmatpush1.msra.mxu0 0.0
    %6309 = vmatprep.subr.mxu0 0.0
    %6310 = vmatpush1.msra.mxu0 0.0
    %6311 = vmatprep.mubr.f32.mxu0 0.0
    %6312 = vmatmul.mubr.f32.gmra.mrb[0].mxu0 %v6242
    %v6313 = vpop.f32.mrb[0].mxu0
    %v6314 = vadd.f32 %v6239, %v6313
    %v6315 = vpop.f32.mrb[0].mxu0
    %6316 = vmatprep.mubr.f32.mxu0 0.0
    %6317 = vmatmul.mubr.f32.gmra.mrb[0].mxu0 %v6245
    %v6318 = vpop.f32.mrb[0].mxu0
    %v6319 = vadd.f32 %v6239, %v6318
    %v6320 = vpop.f32.mrb[0].mxu0
    %6321 = vdwg.mxu0
    %v6322 = vadd.f32 %v5235, %v6314
    %v6323 = vadd.f32 %v5236, %v6319
    %v6324 = vsel %vm58, %v6322, 0.0
    %6325 = vadd.xlane.f32.xlu0 %v6324
    %v6326 = vpop.xlane.xlu0 %6325
    %v6327 = vsel %vm58, %v6323, 0.0
    %6328 = vadd.xlane.f32.xlu0 %v6327
    %v6329 = vpop.xlane.xlu0 %6328
    %v6330 = vmul.f32 %v6326, %v65
    %v6331 = vmul.f32 %v6329, %v65
    %v6332 = vsub.f32 %v6322, %v6330
    %v6333 = vsub.f32 %v6323, %v6331
    %v6334 = vmul.f32 %v6332, %v6332
    %v6335 = vmul.f32 %v6333, %v6333
    %v6336 = vsel %vm58, %v6334, 0.0
    %6337 = vadd.xlane.f32.xlu0 %v6336
    %v6338 = vpop.xlane.xlu0 %6337
    %v6339 = vsel %vm58, %v6335, 0.0
    %6340 = vadd.xlane.f32.xlu0 %v6339
    %v6341 = vpop.xlane.xlu0 %6340
    %v6342 = vmul.f32 %v6338, 0.032258064
    %v6343 = vmul.f32 %v6341, 0.032258064
    %v6344 = vrsqrt.pop %v6342
    %v6345 = vmul.f32 %v6342, %v6344
    %vm6346 = vcmp.eq.f32.partialorder %v6342, inf
    %v6347 = vsel %vm6346, %v6342, %v6345
    %vm6348 = vcmp.eq.f32.partialorder %v6342, 0.0
    %v6349 = vand.u32 %v6342, 2147483648
    %v6350 = vsel %vm6348, %v6349, %v6347
    %v6351 = vrsqrt.pop %v6343
    %v6352 = vmul.f32 %v6343, %v6351
    %vm6353 = vcmp.eq.f32.partialorder %v6343, inf
    %v6354 = vsel %vm6353, %v6343, %v6352
    %vm6355 = vcmp.eq.f32.partialorder %v6343, 0.0
    %v6356 = vand.u32 %v6343, 2147483648
    %v6357 = vsel %vm6355, %v6356, %v6354
    %v6358 = vadd.f32 %v6350, 1e-06
    %v6359 = vadd.f32 %v6357, 1e-06
    %v6360 = vrcp.pop %v6358
    %v6361 = vrcp.pop %v6359
    %6364 = vrot.lane.b32.xlu0 %v6332, 64
    %v6365 = vpop.permute.xlu0 %6364
    %6366 = vrot.lane.b32.xlu0 %v6333, 64
    %v6367 = vpop.permute.xlu0 %6366
    %v6370 = vmul.f32 %v5297, %v6365
    %v6371 = vmul.f32 %v5297, %v6367
    %v6372 = vmul.f32 %v6370, %v6360
    %v6373 = vmul.f32 %v6371, %v6361
    %v6374 = vadd.f32 %v6372, %v5304
    %v6375 = vadd.f32 %v6373, %v5304
    %v6376 = vlaneseq
    %v6377 = vshrl.u32 %v6376, 7
    %v6378 = vsub.s32 1, %v6377
    %v6379 = vrot.slane %v5255, %v6378
    %6382 = vrot.lane.b32.xlu0 %v6374, 64
    %v6383 = vpop.permute.xlu0 %6382
    %6384 = vrot.lane.b32.xlu0 %v6375, 64
    %v6385 = vpop.permute.xlu0 %6384
    %v6386 = vsel %vm58, %v6383, 0
    %v6388 = vsel %vm58, %v6385, 0
    %6390 = vmatprep.subr.mxu0 0.0
    %6391 = vmatpush1.msra.mxu0 %v5242
    %6392 = vmatprep.subr.mxu0 0.0
    %6393 = vmatpush1.msra.mxu0 %v5243
    %6394 = vmatprep.subr.mxu0 0.0
    %6395 = vmatpush1.msra.mxu0 %v5244
    %6396 = vmatprep.subr.mxu0 0.0
    %6397 = vmatpush1.msra.mxu0 %v5245
    %6398 = vmatprep.subr.mxu0 0.0
    %6399 = vmatpush1.msra.mxu0 0.0
    %6400 = vmatprep.subr.mxu0 0.0
    %6401 = vmatpush1.msra.mxu0 0.0
    %6402 = vmatprep.subr.mxu0 0.0
    %6403 = vmatpush1.msra.mxu0 0.0
    %6404 = vmatprep.subr.mxu0 0.0
    %6405 = vmatpush1.msra.mxu0 0.0
    %6406 = vmatprep.subr.mxu0 0.0
    %6407 = vmatpush1.msra.mxu0 0.0
    %6408 = vmatprep.subr.mxu0 0.0
    %6409 = vmatpush1.msra.mxu0 0.0
    %6410 = vmatprep.subr.mxu0 0.0
    %6411 = vmatpush1.msra.mxu0 0.0
    %6412 = vmatprep.subr.mxu0 0.0
    %6413 = vmatpush1.msra.mxu0 0.0
    %6414 = vmatprep.subr.mxu0 0.0
    %6415 = vmatpush1.msra.mxu0 0.0
    %6416 = vmatprep.subr.mxu0 0.0
    %6417 = vmatpush1.msra.mxu0 0.0
    %6418 = vmatprep.subr.mxu0 0.0
    %6419 = vmatpush1.msra.mxu0 0.0
    %6420 = vmatprep.subr.mxu0 0.0
    %6421 = vmatpush1.msra.mxu0 0.0
    %6422 = vmatprep.subr.mxu0 0.0
    %6423 = vmatpush1.msra.mxu0 0.0
    %6424 = vmatprep.subr.mxu0 0.0
    %6425 = vmatpush1.msra.mxu0 0.0
    %6426 = vmatprep.subr.mxu0 0.0
    %6427 = vmatpush1.msra.mxu0 0.0
    %6428 = vmatprep.subr.mxu0 0.0
    %6429 = vmatpush1.msra.mxu0 0.0
    %6430 = vmatprep.subr.mxu0 0.0
    %6431 = vmatpush1.msra.mxu0 0.0
    %6432 = vmatprep.subr.mxu0 0.0
    %6433 = vmatpush1.msra.mxu0 0.0
    %6434 = vmatprep.subr.mxu0 0.0
    %6435 = vmatpush1.msra.mxu0 0.0
    %6436 = vmatprep.subr.mxu0 0.0
    %6437 = vmatpush1.msra.mxu0 0.0
    %6438 = vmatprep.subr.mxu0 0.0
    %6439 = vmatpush1.msra.mxu0 0.0
    %6440 = vmatprep.subr.mxu0 0.0
    %6441 = vmatpush1.msra.mxu0 0.0
    %6442 = vmatprep.subr.mxu0 0.0
    %6443 = vmatpush1.msra.mxu0 0.0
    %6444 = vmatprep.subr.mxu0 0.0
    %6445 = vmatpush1.msra.mxu0 0.0
    %6446 = vmatprep.subr.mxu0 0.0
    %6447 = vmatpush1.msra.mxu0 0.0
    %6448 = vmatprep.subr.mxu0 0.0
    %6449 = vmatpush1.msra.mxu0 0.0
    %6450 = vmatprep.subr.mxu0 0.0
    %6451 = vmatpush1.msra.mxu0 0.0
    %6452 = vmatprep.subr.mxu0 0.0
    %6453 = vmatpush1.msra.mxu0 0.0
    %6454 = vmatprep.mubr.f32.mxu0 0.0
    %6455 = vmatmul.mubr.f32.gmra.mrb[0].mxu0 %v6386
    %v6456 = vpop.f32.mrb[0].mxu0
    %v6457 = vadd.f32 %v6379, %v6456
    %v6458 = vpop.f32.mrb[0].mxu0
    %6459 = vmatprep.mubr.f32.mxu0 0.0
    %6460 = vmatmul.mubr.f32.gmra.mrb[0].mxu0 %v6388
    %v6461 = vpop.f32.mrb[0].mxu0
    %v6462 = vadd.f32 %v6379, %v6461
    %v6463 = vpop.f32.mrb[0].mxu0
    %6464 = vdwg.mxu0
    %6469 = vrot.lane.b32.xlu0 %v5242, 96
    %v6470 = vpop.permute.xlu0 %6469
    %6471 = vrot.lane.b32.xlu0 %v5243, 96
    %v6472 = vpop.permute.xlu0 %6471
    %6473 = vrot.lane.b32.xlu0 %v5244, 96
    %v6474 = vpop.permute.xlu0 %6473
    %6475 = vrot.lane.b32.xlu0 %v5245, 96
    %v6476 = vpop.permute.xlu0 %6475
    %6482 = vrot.lane.b32.xlu0 %v6379, 96
    %v6483 = vpop.permute.xlu0 %6482
    %6485 = vmatprep.subr.mxu0 0.0
    %6486 = vmatpush1.msra.mxu0 %v6470
    %6487 = vmatprep.subr.mxu0 0.0
    %6488 = vmatpush1.msra.mxu0 %v6472
    %6489 = vmatprep.subr.mxu0 0.0
    %6490 = vmatpush1.msra.mxu0 %v6474
    %6491 = vmatprep.subr.mxu0 0.0
    %6492 = vmatpush1.msra.mxu0 %v6476
    %6493 = vmatprep.subr.mxu0 0.0
    %6494 = vmatpush1.msra.mxu0 0.0
    %6495 = vmatprep.subr.mxu0 0.0
    %6496 = vmatpush1.msra.mxu0 0.0
    %6497 = vmatprep.subr.mxu0 0.0
    %6498 = vmatpush1.msra.mxu0 0.0
    %6499 = vmatprep.subr.mxu0 0.0
    %6500 = vmatpush1.msra.mxu0 0.0
    %6501 = vmatprep.subr.mxu0 0.0
    %6502 = vmatpush1.msra.mxu0 0.0
    %6503 = vmatprep.subr.mxu0 0.0
    %6504 = vmatpush1.msra.mxu0 0.0
    %6505 = vmatprep.subr.mxu0 0.0
    %6506 = vmatpush1.msra.mxu0 0.0
    %6507 = vmatprep.subr.mxu0 0.0
    %6508 = vmatpush1.msra.mxu0 0.0
    %6509 = vmatprep.subr.mxu0 0.0
    %6510 = vmatpush1.msra.mxu0 0.0
    %6511 = vmatprep.subr.mxu0 0.0
    %6512 = vmatpush1.msra.mxu0 0.0
    %6513 = vmatprep.subr.mxu0 0.0
    %6514 = vmatpush1.msra.mxu0 0.0
    %6515 = vmatprep.subr.mxu0 0.0
    %6516 = vmatpush1.msra.mxu0 0.0
    %6517 = vmatprep.subr.mxu0 0.0
    %6518 = vmatpush1.msra.mxu0 0.0
    %6519 = vmatprep.subr.mxu0 0.0
    %6520 = vmatpush1.msra.mxu0 0.0
    %6521 = vmatprep.subr.mxu0 0.0
    %6522 = vmatpush1.msra.mxu0 0.0
    %6523 = vmatprep.subr.mxu0 0.0
    %6524 = vmatpush1.msra.mxu0 0.0
    %6525 = vmatprep.subr.mxu0 0.0
    %6526 = vmatpush1.msra.mxu0 0.0
    %6527 = vmatprep.subr.mxu0 0.0
    %6528 = vmatpush1.msra.mxu0 0.0
    %6529 = vmatprep.subr.mxu0 0.0
    %6530 = vmatpush1.msra.mxu0 0.0
    %6531 = vmatprep.subr.mxu0 0.0
    %6532 = vmatpush1.msra.mxu0 0.0
    %6533 = vmatprep.subr.mxu0 0.0
    %6534 = vmatpush1.msra.mxu0 0.0
    %6535 = vmatprep.subr.mxu0 0.0
    %6536 = vmatpush1.msra.mxu0 0.0
    %6537 = vmatprep.subr.mxu0 0.0
    %6538 = vmatpush1.msra.mxu0 0.0
    %6539 = vmatprep.subr.mxu0 0.0
    %6540 = vmatpush1.msra.mxu0 0.0
    %6541 = vmatprep.subr.mxu0 0.0
    %6542 = vmatpush1.msra.mxu0 0.0
    %6543 = vmatprep.subr.mxu0 0.0
    %6544 = vmatpush1.msra.mxu0 0.0
    %6545 = vmatprep.subr.mxu0 0.0
    %6546 = vmatpush1.msra.mxu0 0.0
    %6547 = vmatprep.subr.mxu0 0.0
    %6548 = vmatpush1.msra.mxu0 0.0
    %6549 = vmatprep.mubr.f32.mxu0 0.0
    %6550 = vmatmul.mubr.f32.gmra.mrb[0].mxu0 %v3989
    %v6551 = vpop.f32.mrb[0].mxu0
    %v6552 = vadd.f32 %v6483, %v6551
    %v6553 = vpop.f32.mrb[0].mxu0
    %6554 = vmatprep.mubr.f32.mxu0 0.0
    %6555 = vmatmul.mubr.f32.gmra.mrb[0].mxu0 %v3992
    %v6556 = vpop.f32.mrb[0].mxu0
    %v6557 = vadd.f32 %v6483, %v6556
    %v6558 = vpop.f32.mrb[0].mxu0
    %6559 = vdwg.mxu0
    %v6561 = vsel %vm203, %v6457, 0
    %v6564 = vsel %vm203, %v6462, 0
    %v6567 = vsel %vm203, %v6552, 0
    %v6570 = vsel %vm203, %v6557, 0
    %6572 = vmatprep.subr.mxu0 0.0
    %6573 = vmatpush1.xpose.msra.mxu0 %v6567
    %6574 = vmatprep.subr.mxu0 0.0
    %6575 = vmatpush1.xpose.msra.mxu0 %v6570
    %6576 = vmatprep.subr.mxu0 0.0
    %6577 = vmatpush1.xpose.msra.mxu0 0.0
    %6578 = vmatprep.subr.mxu0 0.0
    %6579 = vmatpush1.xpose.msra.mxu0 0.0
    %6580 = vmatprep.subr.mxu0 0.0
    %6581 = vmatpush1.xpose.msra.mxu0 0.0
    %6582 = vmatprep.subr.mxu0 0.0
    %6583 = vmatpush1.xpose.msra.mxu0 0.0
    %6584 = vmatprep.subr.mxu0 0.0
    %6585 = vmatpush1.xpose.msra.mxu0 0.0
    %6586 = vmatprep.subr.mxu0 0.0
    %6587 = vmatpush1.xpose.msra.mxu0 0.0
    %6588 = vmatprep.subr.mxu0 0.0
    %6589 = vmatpush1.xpose.msra.mxu0 0.0
    %6590 = vmatprep.subr.mxu0 0.0
    %6591 = vmatpush1.xpose.msra.mxu0 0.0
    %6592 = vmatprep.subr.mxu0 0.0
    %6593 = vmatpush1.xpose.msra.mxu0 0.0
    %6594 = vmatprep.subr.mxu0 0.0
    %6595 = vmatpush1.xpose.msra.mxu0 0.0
    %6596 = vmatprep.subr.mxu0 0.0
    %6597 = vmatpush1.xpose.msra.mxu0 0.0
    %6598 = vmatprep.subr.mxu0 0.0
    %6599 = vmatpush1.xpose.msra.mxu0 0.0
    %6600 = vmatprep.subr.mxu0 0.0
    %6601 = vmatpush1.xpose.msra.mxu0 0.0
    %6602 = vmatprep.subr.mxu0 0.0
    %6603 = vmatpush1.xpose.msra.mxu0 0.0
    %6604 = vmatprep.subr.mxu0 0.0
    %6605 = vmatpush1.xpose.msra.mxu0 0.0
    %6606 = vmatprep.subr.mxu0 0.0
    %6607 = vmatpush1.xpose.msra.mxu0 0.0
    %6608 = vmatprep.subr.mxu0 0.0
    %6609 = vmatpush1.xpose.msra.mxu0 0.0
    %6610 = vmatprep.subr.mxu0 0.0
    %6611 = vmatpush1.xpose.msra.mxu0 0.0
    %6612 = vmatprep.subr.mxu0 0.0
    %6613 = vmatpush1.xpose.msra.mxu0 0.0
    %6614 = vmatprep.subr.mxu0 0.0
    %6615 = vmatpush1.xpose.msra.mxu0 0.0
    %6616 = vmatprep.subr.mxu0 0.0
    %6617 = vmatpush1.xpose.msra.mxu0 0.0
    %6618 = vmatprep.subr.mxu0 0.0
    %6619 = vmatpush1.xpose.msra.mxu0 0.0
    %6620 = vmatprep.subr.mxu0 0.0
    %6621 = vmatpush1.xpose.msra.mxu0 0.0
    %6622 = vmatprep.subr.mxu0 0.0
    %6623 = vmatpush1.xpose.msra.mxu0 0.0
    %6624 = vmatprep.subr.mxu0 0.0
    %6625 = vmatpush1.xpose.msra.mxu0 0.0
    %6626 = vmatprep.subr.mxu0 0.0
    %6627 = vmatpush1.xpose.msra.mxu0 0.0
    %6628 = vmatprep.subr.mxu0 0.0
    %6629 = vmatpush1.xpose.msra.mxu0 0.0
    %6630 = vmatprep.subr.mxu0 0.0
    %6631 = vmatpush1.xpose.msra.mxu0 0.0
    %6632 = vmatprep.subr.mxu0 0.0
    %6633 = vmatpush1.xpose.msra.mxu0 0.0
    %6634 = vmatprep.subr.mxu0 0.0
    %6635 = vmatpush1.xpose.msra.mxu0 0.0
    %6636 = vmatprep.mubr.f32.mxu0 0.0
    %6637 = vmatmul.mubr.f32.gmra.mrb[0].mxu0 %v6561
    %v6638 = vpop.f32.mrb[0].mxu0
    %v6639 = vadd.f32 %v2740, %v6638
    %v6640 = vpop.f32.mrb[0].mxu0
    %6641 = vmatprep.mubr.f32.mxu0 0.0
    %6642 = vmatmul.mubr.f32.gmra.mrb[0].mxu0 %v6564
    %v6643 = vpop.f32.mrb[0].mxu0
    %v6644 = vadd.f32 %v2741, %v6643
    %v6645 = vpop.f32.mrb[0].mxu0
    %6646 = vdwg.mxu0
    %v6647 = vsel %vm287, %v6639, -inf
    %6648 = vmax.xlane.f32.xlu0 %v6647
    %v6649 = vpop.xlane.xlu0 %6648
    %v6650 = vsel %vm287, %v6644, -inf
    %6651 = vmax.xlane.f32.xlu0 %v6650
    %v6652 = vpop.xlane.xlu0 %6651
    %v6653 = vsub.f32 %v6639, %v6649
    %v6654 = vsub.f32 %v6644, %v6652
    %v6655 = vmul.f32 %v6653, 1.442695
    %v6656 = vpow.pop %v6655
    %v6657 = vmul.f32 %v6654, 1.442695
    %v6658 = vpow.pop %v6657
    %v6659 = vsel %vm287, %v6656, 0.0
    %6660 = vadd.xlane.f32.xlu0 %v6659
    %v6661 = vpop.xlane.xlu0 %6660
    %v6662 = vsel %vm287, %v6658, 0.0
    %6663 = vadd.xlane.f32.xlu0 %v6662
    %v6664 = vpop.xlane.xlu0 %6663
    %v6665 = vrcp.pop %v6661
    %v6666 = vrcp.pop %v6664
    %v6667 = vmul.f32 %v6656, %v6665
    %v6668 = vmul.f32 %v6658, %v6666
    %6669 = vrot.lane.b32.xlu0 %v6552, 96
    %v6670 = vpop.permute.xlu0 %6669
    %6671 = vrot.lane.b32.xlu0 %v6557, 96
    %v6672 = vpop.permute.xlu0 %6671
    %v6676 = vsel %vm287, %v6667, 0
    %v6679 = vsel %vm287, %v6668, 0
    %6681 = vmatprep.subr.mxu0 0.0
    %6682 = vmatpush1.msra.mxu0 %v6670
    %6683 = vmatprep.subr.mxu0 0.0
    %6684 = vmatpush1.msra.mxu0 %v6672
    %6685 = vmatprep.subr.mxu0 0.0
    %6686 = vmatpush1.msra.mxu0 0.0
    %6687 = vmatprep.subr.mxu0 0.0
    %6688 = vmatpush1.msra.mxu0 0.0
    %6689 = vmatprep.subr.mxu0 0.0
    %6690 = vmatpush1.msra.mxu0 0.0
    %6691 = vmatprep.subr.mxu0 0.0
    %6692 = vmatpush1.msra.mxu0 0.0
    %6693 = vmatprep.subr.mxu0 0.0
    %6694 = vmatpush1.msra.mxu0 0.0
    %6695 = vmatprep.subr.mxu0 0.0
    %6696 = vmatpush1.msra.mxu0 0.0
    %6697 = vmatprep.subr.mxu0 0.0
    %6698 = vmatpush1.msra.mxu0 0.0
    %6699 = vmatprep.subr.mxu0 0.0
    %6700 = vmatpush1.msra.mxu0 0.0
    %6701 = vmatprep.subr.mxu0 0.0
    %6702 = vmatpush1.msra.mxu0 0.0
    %6703 = vmatprep.subr.mxu0 0.0
    %6704 = vmatpush1.msra.mxu0 0.0
    %6705 = vmatprep.subr.mxu0 0.0
    %6706 = vmatpush1.msra.mxu0 0.0
    %6707 = vmatprep.subr.mxu0 0.0
    %6708 = vmatpush1.msra.mxu0 0.0
    %6709 = vmatprep.subr.mxu0 0.0
    %6710 = vmatpush1.msra.mxu0 0.0
    %6711 = vmatprep.subr.mxu0 0.0
    %6712 = vmatpush1.msra.mxu0 0.0
    %6713 = vmatprep.subr.mxu0 0.0
    %6714 = vmatpush1.msra.mxu0 0.0
    %6715 = vmatprep.subr.mxu0 0.0
    %6716 = vmatpush1.msra.mxu0 0.0
    %6717 = vmatprep.subr.mxu0 0.0
    %6718 = vmatpush1.msra.mxu0 0.0
    %6719 = vmatprep.subr.mxu0 0.0
    %6720 = vmatpush1.msra.mxu0 0.0
    %6721 = vmatprep.subr.mxu0 0.0
    %6722 = vmatpush1.msra.mxu0 0.0
    %6723 = vmatprep.subr.mxu0 0.0
    %6724 = vmatpush1.msra.mxu0 0.0
    %6725 = vmatprep.subr.mxu0 0.0
    %6726 = vmatpush1.msra.mxu0 0.0
    %6727 = vmatprep.subr.mxu0 0.0
    %6728 = vmatpush1.msra.mxu0 0.0
    %6729 = vmatprep.subr.mxu0 0.0
    %6730 = vmatpush1.msra.mxu0 0.0
    %6731 = vmatprep.subr.mxu0 0.0
    %6732 = vmatpush1.msra.mxu0 0.0
    %6733 = vmatprep.subr.mxu0 0.0
    %6734 = vmatpush1.msra.mxu0 0.0
    %6735 = vmatprep.subr.mxu0 0.0
    %6736 = vmatpush1.msra.mxu0 0.0
    %6737 = vmatprep.subr.mxu0 0.0
    %6738 = vmatpush1.msra.mxu0 0.0
    %6739 = vmatprep.subr.mxu0 0.0
    %6740 = vmatpush1.msra.mxu0 0.0
    %6741 = vmatprep.subr.mxu0 0.0
    %6742 = vmatpush1.msra.mxu0 0.0
    %6743 = vmatprep.subr.mxu0 0.0
    %6744 = vmatpush1.msra.mxu0 0.0
    %6745 = vmatprep.mubr.f32.mxu0 0.0
    %6746 = vmatmul.mubr.f32.gmra.mrb[0].mxu0 %v6676
    %v6747 = vpop.f32.mrb[0].mxu0
    %v6748 = vadd.f32 0.0, %v6747
    %v6749 = vpop.f32.mrb[0].mxu0
    %6750 = vmatprep.mubr.f32.mxu0 0.0
    %6751 = vmatmul.mubr.f32.gmra.mrb[0].mxu0 %v6679
    %v6752 = vpop.f32.mrb[0].mxu0
    %v6753 = vadd.f32 0.0, %v6752
    %v6754 = vpop.f32.mrb[0].mxu0
    %6755 = vdwg.mxu0
    %6756 = vrot.lane.b32.xlu0 %v6457, 120
    %v6757 = vpop.permute.xlu0 %6756
    %6758 = vrot.lane.b32.xlu0 %v6462, 120
    %v6759 = vpop.permute.xlu0 %6758
    %6760 = vrot.lane.b32.xlu0 %v6552, 120
    %v6761 = vpop.permute.xlu0 %6760
    %6762 = vrot.lane.b32.xlu0 %v6557, 120
    %v6763 = vpop.permute.xlu0 %6762
    %v6764 = vsel %vm203, %v6757, 0
    %v6766 = vsel %vm203, %v6759, 0
    %v6768 = vsel %vm203, %v6761, 0
    %v6770 = vsel %vm203, %v6763, 0
    %6772 = vmatprep.subr.mxu0 0.0
    %6773 = vmatpush1.xpose.msra.mxu0 %v6768
    %6774 = vmatprep.subr.mxu0 0.0
    %6775 = vmatpush1.xpose.msra.mxu0 %v6770
    %6776 = vmatprep.subr.mxu0 0.0
    %6777 = vmatpush1.xpose.msra.mxu0 0.0
    %6778 = vmatprep.subr.mxu0 0.0
    %6779 = vmatpush1.xpose.msra.mxu0 0.0
    %6780 = vmatprep.subr.mxu0 0.0
    %6781 = vmatpush1.xpose.msra.mxu0 0.0
    %6782 = vmatprep.subr.mxu0 0.0
    %6783 = vmatpush1.xpose.msra.mxu0 0.0
    %6784 = vmatprep.subr.mxu0 0.0
    %6785 = vmatpush1.xpose.msra.mxu0 0.0
    %6786 = vmatprep.subr.mxu0 0.0
    %6787 = vmatpush1.xpose.msra.mxu0 0.0
    %6788 = vmatprep.subr.mxu0 0.0
    %6789 = vmatpush1.xpose.msra.mxu0 0.0
    %6790 = vmatprep.subr.mxu0 0.0
    %6791 = vmatpush1.xpose.msra.mxu0 0.0
    %6792 = vmatprep.subr.mxu0 0.0
    %6793 = vmatpush1.xpose.msra.mxu0 0.0
    %6794 = vmatprep.subr.mxu0 0.0
    %6795 = vmatpush1.xpose.msra.mxu0 0.0
    %6796 = vmatprep.subr.mxu0 0.0
    %6797 = vmatpush1.xpose.msra.mxu0 0.0
    %6798 = vmatprep.subr.mxu0 0.0
    %6799 = vmatpush1.xpose.msra.mxu0 0.0
    %6800 = vmatprep.subr.mxu0 0.0
    %6801 = vmatpush1.xpose.msra.mxu0 0.0
    %6802 = vmatprep.subr.mxu0 0.0
    %6803 = vmatpush1.xpose.msra.mxu0 0.0
    %6804 = vmatprep.subr.mxu0 0.0
    %6805 = vmatpush1.xpose.msra.mxu0 0.0
    %6806 = vmatprep.subr.mxu0 0.0
    %6807 = vmatpush1.xpose.msra.mxu0 0.0
    %6808 = vmatprep.subr.mxu0 0.0
    %6809 = vmatpush1.xpose.msra.mxu0 0.0
    %6810 = vmatprep.subr.mxu0 0.0
    %6811 = vmatpush1.xpose.msra.mxu0 0.0
    %6812 = vmatprep.subr.mxu0 0.0
    %6813 = vmatpush1.xpose.msra.mxu0 0.0
    %6814 = vmatprep.subr.mxu0 0.0
    %6815 = vmatpush1.xpose.msra.mxu0 0.0
    %6816 = vmatprep.subr.mxu0 0.0
    %6817 = vmatpush1.xpose.msra.mxu0 0.0
    %6818 = vmatprep.subr.mxu0 0.0
    %6819 = vmatpush1.xpose.msra.mxu0 0.0
    %6820 = vmatprep.subr.mxu0 0.0
    %6821 = vmatpush1.xpose.msra.mxu0 0.0
    %6822 = vmatprep.subr.mxu0 0.0
    %6823 = vmatpush1.xpose.msra.mxu0 0.0
    %6824 = vmatprep.subr.mxu0 0.0
    %6825 = vmatpush1.xpose.msra.mxu0 0.0
    %6826 = vmatprep.subr.mxu0 0.0
    %6827 = vmatpush1.xpose.msra.mxu0 0.0
    %6828 = vmatprep.subr.mxu0 0.0
    %6829 = vmatpush1.xpose.msra.mxu0 0.0
    %6830 = vmatprep.subr.mxu0 0.0
    %6831 = vmatpush1.xpose.msra.mxu0 0.0
    %6832 = vmatprep.subr.mxu0 0.0
    %6833 = vmatpush1.xpose.msra.mxu0 0.0
    %6834 = vmatprep.subr.mxu0 0.0
    %6835 = vmatpush1.xpose.msra.mxu0 0.0
    %6836 = vmatprep.mubr.f32.mxu0 0.0
    %6837 = vmatmul.mubr.f32.gmra.mrb[0].mxu0 %v6764
    %v6838 = vpop.f32.mrb[0].mxu0
    %v6839 = vadd.f32 %v2740, %v6838
    %v6840 = vpop.f32.mrb[0].mxu0
    %6841 = vmatprep.mubr.f32.mxu0 0.0
    %6842 = vmatmul.mubr.f32.gmra.mrb[0].mxu0 %v6766
    %v6843 = vpop.f32.mrb[0].mxu0
    %v6844 = vadd.f32 %v2741, %v6843
    %v6845 = vpop.f32.mrb[0].mxu0
    %6846 = vdwg.mxu0
    %v6847 = vsel %vm287, %v6839, -inf
    %6848 = vmax.xlane.f32.xlu0 %v6847
    %v6849 = vpop.xlane.xlu0 %6848
    %v6850 = vsel %vm287, %v6844, -inf
    %6851 = vmax.xlane.f32.xlu0 %v6850
    %v6852 = vpop.xlane.xlu0 %6851
    %v6853 = vsub.f32 %v6839, %v6849
    %v6854 = vsub.f32 %v6844, %v6852
    %v6855 = vmul.f32 %v6853, 1.442695
    %v6856 = vpow.pop %v6855
    %v6857 = vmul.f32 %v6854, 1.442695
    %v6858 = vpow.pop %v6857
    %v6859 = vsel %vm287, %v6856, 0.0
    %6860 = vadd.xlane.f32.xlu0 %v6859
    %v6861 = vpop.xlane.xlu0 %6860
    %v6862 = vsel %vm287, %v6858, 0.0
    %6863 = vadd.xlane.f32.xlu0 %v6862
    %v6864 = vpop.xlane.xlu0 %6863
    %v6865 = vrcp.pop %v6861
    %v6866 = vrcp.pop %v6864
    %v6867 = vmul.f32 %v6856, %v6865
    %v6868 = vmul.f32 %v6858, %v6866
    %6869 = vrot.lane.b32.xlu0 %v6552, 88
    %v6870 = vpop.permute.xlu0 %6869
    %6871 = vrot.lane.b32.xlu0 %v6557, 88
    %v6872 = vpop.permute.xlu0 %6871
    %v6876 = vsel %vm287, %v6867, 0
    %v6879 = vsel %vm287, %v6868, 0
    %6881 = vmatprep.subr.mxu0 0.0
    %6882 = vmatpush1.msra.mxu0 %v6870
    %6883 = vmatprep.subr.mxu0 0.0
    %6884 = vmatpush1.msra.mxu0 %v6872
    %6885 = vmatprep.subr.mxu0 0.0
    %6886 = vmatpush1.msra.mxu0 0.0
    %6887 = vmatprep.subr.mxu0 0.0
    %6888 = vmatpush1.msra.mxu0 0.0
    %6889 = vmatprep.subr.mxu0 0.0
    %6890 = vmatpush1.msra.mxu0 0.0
    %6891 = vmatprep.subr.mxu0 0.0
    %6892 = vmatpush1.msra.mxu0 0.0
    %6893 = vmatprep.subr.mxu0 0.0
    %6894 = vmatpush1.msra.mxu0 0.0
    %6895 = vmatprep.subr.mxu0 0.0
    %6896 = vmatpush1.msra.mxu0 0.0
    %6897 = vmatprep.subr.mxu0 0.0
    %6898 = vmatpush1.msra.mxu0 0.0
    %6899 = vmatprep.subr.mxu0 0.0
    %6900 = vmatpush1.msra.mxu0 0.0
    %6901 = vmatprep.subr.mxu0 0.0
    %6902 = vmatpush1.msra.mxu0 0.0
    %6903 = vmatprep.subr.mxu0 0.0
    %6904 = vmatpush1.msra.mxu0 0.0
    %6905 = vmatprep.subr.mxu0 0.0
    %6906 = vmatpush1.msra.mxu0 0.0
    %6907 = vmatprep.subr.mxu0 0.0
    %6908 = vmatpush1.msra.mxu0 0.0
    %6909 = vmatprep.subr.mxu0 0.0
    %6910 = vmatpush1.msra.mxu0 0.0
    %6911 = vmatprep.subr.mxu0 0.0
    %6912 = vmatpush1.msra.mxu0 0.0
    %6913 = vmatprep.subr.mxu0 0.0
    %6914 = vmatpush1.msra.mxu0 0.0
    %6915 = vmatprep.subr.mxu0 0.0
    %6916 = vmatpush1.msra.mxu0 0.0
    %6917 = vmatprep.subr.mxu0 0.0
    %6918 = vmatpush1.msra.mxu0 0.0
    %6919 = vmatprep.subr.mxu0 0.0
    %6920 = vmatpush1.msra.mxu0 0.0
    %6921 = vmatprep.subr.mxu0 0.0
    %6922 = vmatpush1.msra.mxu0 0.0
    %6923 = vmatprep.subr.mxu0 0.0
    %6924 = vmatpush1.msra.mxu0 0.0
    %6925 = vmatprep.subr.mxu0 0.0
    %6926 = vmatpush1.msra.mxu0 0.0
    %6927 = vmatprep.subr.mxu0 0.0
    %6928 = vmatpush1.msra.mxu0 0.0
    %6929 = vmatprep.subr.mxu0 0.0
    %6930 = vmatpush1.msra.mxu0 0.0
    %6931 = vmatprep.subr.mxu0 0.0
    %6932 = vmatpush1.msra.mxu0 0.0
    %6933 = vmatprep.subr.mxu0 0.0
    %6934 = vmatpush1.msra.mxu0 0.0
    %6935 = vmatprep.subr.mxu0 0.0
    %6936 = vmatpush1.msra.mxu0 0.0
    %6937 = vmatprep.subr.mxu0 0.0
    %6938 = vmatpush1.msra.mxu0 0.0
    %6939 = vmatprep.subr.mxu0 0.0
    %6940 = vmatpush1.msra.mxu0 0.0
    %6941 = vmatprep.subr.mxu0 0.0
    %6942 = vmatpush1.msra.mxu0 0.0
    %6943 = vmatprep.subr.mxu0 0.0
    %6944 = vmatpush1.msra.mxu0 0.0
    %6945 = vmatprep.mubr.f32.mxu0 0.0
    %6946 = vmatmul.mubr.f32.gmra.mrb[0].mxu0 %v6876
    %v6947 = vpop.f32.mrb[0].mxu0
    %v6948 = vadd.f32 0.0, %v6947
    %v6949 = vpop.f32.mrb[0].mxu0
    %6950 = vmatprep.mubr.f32.mxu0 0.0
    %6951 = vmatmul.mubr.f32.gmra.mrb[0].mxu0 %v6879
    %v6952 = vpop.f32.mrb[0].mxu0
    %v6953 = vadd.f32 0.0, %v6952
    %v6954 = vpop.f32.mrb[0].mxu0
    %6955 = vdwg.mxu0
    %6956 = vrot.lane.b32.xlu0 %v6457, 112
    %v6957 = vpop.permute.xlu0 %6956
    %6958 = vrot.lane.b32.xlu0 %v6462, 112
    %v6959 = vpop.permute.xlu0 %6958
    %6960 = vrot.lane.b32.xlu0 %v6552, 112
    %v6961 = vpop.permute.xlu0 %6960
    %6962 = vrot.lane.b32.xlu0 %v6557, 112
    %v6963 = vpop.permute.xlu0 %6962
    %v6964 = vsel %vm203, %v6957, 0
    %v6966 = vsel %vm203, %v6959, 0
    %v6968 = vsel %vm203, %v6961, 0
    %v6970 = vsel %vm203, %v6963, 0
    %6972 = vmatprep.subr.mxu0 0.0
    %6973 = vmatpush1.xpose.msra.mxu0 %v6968
    %6974 = vmatprep.subr.mxu0 0.0
    %6975 = vmatpush1.xpose.msra.mxu0 %v6970
    %6976 = vmatprep.subr.mxu0 0.0
    %6977 = vmatpush1.xpose.msra.mxu0 0.0
    %6978 = vmatprep.subr.mxu0 0.0
    %6979 = vmatpush1.xpose.msra.mxu0 0.0
    %6980 = vmatprep.subr.mxu0 0.0
    %6981 = vmatpush1.xpose.msra.mxu0 0.0
    %6982 = vmatprep.subr.mxu0 0.0
    %6983 = vmatpush1.xpose.msra.mxu0 0.0
    %6984 = vmatprep.subr.mxu0 0.0
    %6985 = vmatpush1.xpose.msra.mxu0 0.0
    %6986 = vmatprep.subr.mxu0 0.0
    %6987 = vmatpush1.xpose.msra.mxu0 0.0
    %6988 = vmatprep.subr.mxu0 0.0
    %6989 = vmatpush1.xpose.msra.mxu0 0.0
    %6990 = vmatprep.subr.mxu0 0.0
    %6991 = vmatpush1.xpose.msra.mxu0 0.0
    %6992 = vmatprep.subr.mxu0 0.0
    %6993 = vmatpush1.xpose.msra.mxu0 0.0
    %6994 = vmatprep.subr.mxu0 0.0
    %6995 = vmatpush1.xpose.msra.mxu0 0.0
    %6996 = vmatprep.subr.mxu0 0.0
    %6997 = vmatpush1.xpose.msra.mxu0 0.0
    %6998 = vmatprep.subr.mxu0 0.0
    %6999 = vmatpush1.xpose.msra.mxu0 0.0
    %7000 = vmatprep.subr.mxu0 0.0
    %7001 = vmatpush1.xpose.msra.mxu0 0.0
    %7002 = vmatprep.subr.mxu0 0.0
    %7003 = vmatpush1.xpose.msra.mxu0 0.0
    %7004 = vmatprep.subr.mxu0 0.0
    %7005 = vmatpush1.xpose.msra.mxu0 0.0
    %7006 = vmatprep.subr.mxu0 0.0
    %7007 = vmatpush1.xpose.msra.mxu0 0.0
    %7008 = vmatprep.subr.mxu0 0.0
    %7009 = vmatpush1.xpose.msra.mxu0 0.0
    %7010 = vmatprep.subr.mxu0 0.0
    %7011 = vmatpush1.xpose.msra.mxu0 0.0
    %7012 = vmatprep.subr.mxu0 0.0
    %7013 = vmatpush1.xpose.msra.mxu0 0.0
    %7014 = vmatprep.subr.mxu0 0.0
    %7015 = vmatpush1.xpose.msra.mxu0 0.0
    %7016 = vmatprep.subr.mxu0 0.0
    %7017 = vmatpush1.xpose.msra.mxu0 0.0
    %7018 = vmatprep.subr.mxu0 0.0
    %7019 = vmatpush1.xpose.msra.mxu0 0.0
    %7020 = vmatprep.subr.mxu0 0.0
    %7021 = vmatpush1.xpose.msra.mxu0 0.0
    %7022 = vmatprep.subr.mxu0 0.0
    %7023 = vmatpush1.xpose.msra.mxu0 0.0
    %7024 = vmatprep.subr.mxu0 0.0
    %7025 = vmatpush1.xpose.msra.mxu0 0.0
    %7026 = vmatprep.subr.mxu0 0.0
    %7027 = vmatpush1.xpose.msra.mxu0 0.0
    %7028 = vmatprep.subr.mxu0 0.0
    %7029 = vmatpush1.xpose.msra.mxu0 0.0
    %7030 = vmatprep.subr.mxu0 0.0
    %7031 = vmatpush1.xpose.msra.mxu0 0.0
    %7032 = vmatprep.subr.mxu0 0.0
    %7033 = vmatpush1.xpose.msra.mxu0 0.0
    %7034 = vmatprep.subr.mxu0 0.0
    %7035 = vmatpush1.xpose.msra.mxu0 0.0
    %7036 = vmatprep.mubr.f32.mxu0 0.0
    %7037 = vmatmul.mubr.f32.gmra.mrb[0].mxu0 %v6964
    %v7038 = vpop.f32.mrb[0].mxu0
    %v7039 = vadd.f32 %v2740, %v7038
    %v7040 = vpop.f32.mrb[0].mxu0
    %7041 = vmatprep.mubr.f32.mxu0 0.0
    %7042 = vmatmul.mubr.f32.gmra.mrb[0].mxu0 %v6966
    %v7043 = vpop.f32.mrb[0].mxu0
    %v7044 = vadd.f32 %v2741, %v7043
    %v7045 = vpop.f32.mrb[0].mxu0
    %7046 = vdwg.mxu0
    %v7047 = vsel %vm287, %v7039, -inf
    %7048 = vmax.xlane.f32.xlu0 %v7047
    %v7049 = vpop.xlane.xlu0 %7048
    %v7050 = vsel %vm287, %v7044, -inf
    %7051 = vmax.xlane.f32.xlu0 %v7050
    %v7052 = vpop.xlane.xlu0 %7051
    %v7053 = vsub.f32 %v7039, %v7049
    %v7054 = vsub.f32 %v7044, %v7052
    %v7055 = vmul.f32 %v7053, 1.442695
    %v7056 = vpow.pop %v7055
    %v7057 = vmul.f32 %v7054, 1.442695
    %v7058 = vpow.pop %v7057
    %v7059 = vsel %vm287, %v7056, 0.0
    %7060 = vadd.xlane.f32.xlu0 %v7059
    %v7061 = vpop.xlane.xlu0 %7060
    %v7062 = vsel %vm287, %v7058, 0.0
    %7063 = vadd.xlane.f32.xlu0 %v7062
    %v7064 = vpop.xlane.xlu0 %7063
    %v7065 = vrcp.pop %v7061
    %v7066 = vrcp.pop %v7064
    %v7067 = vmul.f32 %v7056, %v7065
    %v7068 = vmul.f32 %v7058, %v7066
    %7069 = vrot.lane.b32.xlu0 %v6552, 80
    %v7070 = vpop.permute.xlu0 %7069
    %7071 = vrot.lane.b32.xlu0 %v6557, 80
    %v7072 = vpop.permute.xlu0 %7071
    %v7076 = vsel %vm287, %v7067, 0
    %v7079 = vsel %vm287, %v7068, 0
    %7081 = vmatprep.subr.mxu0 0.0
    %7082 = vmatpush1.msra.mxu0 %v7070
    %7083 = vmatprep.subr.mxu0 0.0
    %7084 = vmatpush1.msra.mxu0 %v7072
    %7085 = vmatprep.subr.mxu0 0.0
    %7086 = vmatpush1.msra.mxu0 0.0
    %7087 = vmatprep.subr.mxu0 0.0
    %7088 = vmatpush1.msra.mxu0 0.0
    %7089 = vmatprep.subr.mxu0 0.0
    %7090 = vmatpush1.msra.mxu0 0.0
    %7091 = vmatprep.subr.mxu0 0.0
    %7092 = vmatpush1.msra.mxu0 0.0
    %7093 = vmatprep.subr.mxu0 0.0
    %7094 = vmatpush1.msra.mxu0 0.0
    %7095 = vmatprep.subr.mxu0 0.0
    %7096 = vmatpush1.msra.mxu0 0.0
    %7097 = vmatprep.subr.mxu0 0.0
    %7098 = vmatpush1.msra.mxu0 0.0
    %7099 = vmatprep.subr.mxu0 0.0
    %7100 = vmatpush1.msra.mxu0 0.0
    %7101 = vmatprep.subr.mxu0 0.0
    %7102 = vmatpush1.msra.mxu0 0.0
    %7103 = vmatprep.subr.mxu0 0.0
    %7104 = vmatpush1.msra.mxu0 0.0
    %7105 = vmatprep.subr.mxu0 0.0
    %7106 = vmatpush1.msra.mxu0 0.0
    %7107 = vmatprep.subr.mxu0 0.0
    %7108 = vmatpush1.msra.mxu0 0.0
    %7109 = vmatprep.subr.mxu0 0.0
    %7110 = vmatpush1.msra.mxu0 0.0
    %7111 = vmatprep.subr.mxu0 0.0
    %7112 = vmatpush1.msra.mxu0 0.0
    %7113 = vmatprep.subr.mxu0 0.0
    %7114 = vmatpush1.msra.mxu0 0.0
    %7115 = vmatprep.subr.mxu0 0.0
    %7116 = vmatpush1.msra.mxu0 0.0
    %7117 = vmatprep.subr.mxu0 0.0
    %7118 = vmatpush1.msra.mxu0 0.0
    %7119 = vmatprep.subr.mxu0 0.0
    %7120 = vmatpush1.msra.mxu0 0.0
    %7121 = vmatprep.subr.mxu0 0.0
    %7122 = vmatpush1.msra.mxu0 0.0
    %7123 = vmatprep.subr.mxu0 0.0
    %7124 = vmatpush1.msra.mxu0 0.0
    %7125 = vmatprep.subr.mxu0 0.0
    %7126 = vmatpush1.msra.mxu0 0.0
    %7127 = vmatprep.subr.mxu0 0.0
    %7128 = vmatpush1.msra.mxu0 0.0
    %7129 = vmatprep.subr.mxu0 0.0
    %7130 = vmatpush1.msra.mxu0 0.0
    %7131 = vmatprep.subr.mxu0 0.0
    %7132 = vmatpush1.msra.mxu0 0.0
    %7133 = vmatprep.subr.mxu0 0.0
    %7134 = vmatpush1.msra.mxu0 0.0
    %7135 = vmatprep.subr.mxu0 0.0
    %7136 = vmatpush1.msra.mxu0 0.0
    %7137 = vmatprep.subr.mxu0 0.0
    %7138 = vmatpush1.msra.mxu0 0.0
    %7139 = vmatprep.subr.mxu0 0.0
    %7140 = vmatpush1.msra.mxu0 0.0
    %7141 = vmatprep.subr.mxu0 0.0
    %7142 = vmatpush1.msra.mxu0 0.0
    %7143 = vmatprep.subr.mxu0 0.0
    %7144 = vmatpush1.msra.mxu0 0.0
    %7145 = vmatprep.mubr.f32.mxu0 0.0
    %7146 = vmatmul.mubr.f32.gmra.mrb[0].mxu0 %v7076
    %v7147 = vpop.f32.mrb[0].mxu0
    %v7148 = vadd.f32 0.0, %v7147
    %v7149 = vpop.f32.mrb[0].mxu0
    %7150 = vmatprep.mubr.f32.mxu0 0.0
    %7151 = vmatmul.mubr.f32.gmra.mrb[0].mxu0 %v7079
    %v7152 = vpop.f32.mrb[0].mxu0
    %v7153 = vadd.f32 0.0, %v7152
    %v7154 = vpop.f32.mrb[0].mxu0
    %7155 = vdwg.mxu0
    %7156 = vrot.lane.b32.xlu0 %v6457, 104
    %v7157 = vpop.permute.xlu0 %7156
    %7158 = vrot.lane.b32.xlu0 %v6462, 104
    %v7159 = vpop.permute.xlu0 %7158
    %7160 = vrot.lane.b32.xlu0 %v6552, 104
    %v7161 = vpop.permute.xlu0 %7160
    %7162 = vrot.lane.b32.xlu0 %v6557, 104
    %v7163 = vpop.permute.xlu0 %7162
    %v7164 = vsel %vm203, %v7157, 0
    %v7166 = vsel %vm203, %v7159, 0
    %v7168 = vsel %vm203, %v7161, 0
    %v7170 = vsel %vm203, %v7163, 0
    %7172 = vmatprep.subr.mxu0 0.0
    %7173 = vmatpush1.xpose.msra.mxu0 %v7168
    %7174 = vmatprep.subr.mxu0 0.0
    %7175 = vmatpush1.xpose.msra.mxu0 %v7170
    %7176 = vmatprep.subr.mxu0 0.0
    %7177 = vmatpush1.xpose.msra.mxu0 0.0
    %7178 = vmatprep.subr.mxu0 0.0
    %7179 = vmatpush1.xpose.msra.mxu0 0.0
    %7180 = vmatprep.subr.mxu0 0.0
    %7181 = vmatpush1.xpose.msra.mxu0 0.0
    %7182 = vmatprep.subr.mxu0 0.0
    %7183 = vmatpush1.xpose.msra.mxu0 0.0
    %7184 = vmatprep.subr.mxu0 0.0
    %7185 = vmatpush1.xpose.msra.mxu0 0.0
    %7186 = vmatprep.subr.mxu0 0.0
    %7187 = vmatpush1.xpose.msra.mxu0 0.0
    %7188 = vmatprep.subr.mxu0 0.0
    %7189 = vmatpush1.xpose.msra.mxu0 0.0
    %7190 = vmatprep.subr.mxu0 0.0
    %7191 = vmatpush1.xpose.msra.mxu0 0.0
    %7192 = vmatprep.subr.mxu0 0.0
    %7193 = vmatpush1.xpose.msra.mxu0 0.0
    %7194 = vmatprep.subr.mxu0 0.0
    %7195 = vmatpush1.xpose.msra.mxu0 0.0
    %7196 = vmatprep.subr.mxu0 0.0
    %7197 = vmatpush1.xpose.msra.mxu0 0.0
    %7198 = vmatprep.subr.mxu0 0.0
    %7199 = vmatpush1.xpose.msra.mxu0 0.0
    %7200 = vmatprep.subr.mxu0 0.0
    %7201 = vmatpush1.xpose.msra.mxu0 0.0
    %7202 = vmatprep.subr.mxu0 0.0
    %7203 = vmatpush1.xpose.msra.mxu0 0.0
    %7204 = vmatprep.subr.mxu0 0.0
    %7205 = vmatpush1.xpose.msra.mxu0 0.0
    %7206 = vmatprep.subr.mxu0 0.0
    %7207 = vmatpush1.xpose.msra.mxu0 0.0
    %7208 = vmatprep.subr.mxu0 0.0
    %7209 = vmatpush1.xpose.msra.mxu0 0.0
    %7210 = vmatprep.subr.mxu0 0.0
    %7211 = vmatpush1.xpose.msra.mxu0 0.0
    %7212 = vmatprep.subr.mxu0 0.0
    %7213 = vmatpush1.xpose.msra.mxu0 0.0
    %7214 = vmatprep.subr.mxu0 0.0
    %7215 = vmatpush1.xpose.msra.mxu0 0.0
    %7216 = vmatprep.subr.mxu0 0.0
    %7217 = vmatpush1.xpose.msra.mxu0 0.0
    %7218 = vmatprep.subr.mxu0 0.0
    %7219 = vmatpush1.xpose.msra.mxu0 0.0
    %7220 = vmatprep.subr.mxu0 0.0
    %7221 = vmatpush1.xpose.msra.mxu0 0.0
    %7222 = vmatprep.subr.mxu0 0.0
    %7223 = vmatpush1.xpose.msra.mxu0 0.0
    %7224 = vmatprep.subr.mxu0 0.0
    %7225 = vmatpush1.xpose.msra.mxu0 0.0
    %7226 = vmatprep.subr.mxu0 0.0
    %7227 = vmatpush1.xpose.msra.mxu0 0.0
    %7228 = vmatprep.subr.mxu0 0.0
    %7229 = vmatpush1.xpose.msra.mxu0 0.0
    %7230 = vmatprep.subr.mxu0 0.0
    %7231 = vmatpush1.xpose.msra.mxu0 0.0
    %7232 = vmatprep.subr.mxu0 0.0
    %7233 = vmatpush1.xpose.msra.mxu0 0.0
    %7234 = vmatprep.subr.mxu0 0.0
    %7235 = vmatpush1.xpose.msra.mxu0 0.0
    %7236 = vmatprep.mubr.f32.mxu0 0.0
    %7237 = vmatmul.mubr.f32.gmra.mrb[0].mxu0 %v7164
    %v7238 = vpop.f32.mrb[0].mxu0
    %v7239 = vadd.f32 %v2740, %v7238
    %v7240 = vpop.f32.mrb[0].mxu0
    %7241 = vmatprep.mubr.f32.mxu0 0.0
    %7242 = vmatmul.mubr.f32.gmra.mrb[0].mxu0 %v7166
    %v7243 = vpop.f32.mrb[0].mxu0
    %v7244 = vadd.f32 %v2741, %v7243
    %v7245 = vpop.f32.mrb[0].mxu0
    %7246 = vdwg.mxu0
    %v7247 = vsel %vm287, %v7239, -inf
    %7248 = vmax.xlane.f32.xlu0 %v7247
    %v7249 = vpop.xlane.xlu0 %7248
    %v7250 = vsel %vm287, %v7244, -inf
    %7251 = vmax.xlane.f32.xlu0 %v7250
    %v7252 = vpop.xlane.xlu0 %7251
    %v7253 = vsub.f32 %v7239, %v7249
    %v7254 = vsub.f32 %v7244, %v7252
    %v7255 = vmul.f32 %v7253, 1.442695
    %v7256 = vpow.pop %v7255
    %v7257 = vmul.f32 %v7254, 1.442695
    %v7258 = vpow.pop %v7257
    %v7259 = vsel %vm287, %v7256, 0.0
    %7260 = vadd.xlane.f32.xlu0 %v7259
    %v7261 = vpop.xlane.xlu0 %7260
    %v7262 = vsel %vm287, %v7258, 0.0
    %7263 = vadd.xlane.f32.xlu0 %v7262
    %v7264 = vpop.xlane.xlu0 %7263
    %v7265 = vrcp.pop %v7261
    %v7266 = vrcp.pop %v7264
    %v7267 = vmul.f32 %v7256, %v7265
    %v7268 = vmul.f32 %v7258, %v7266
    %7269 = vrot.lane.b32.xlu0 %v6552, 72
    %v7270 = vpop.permute.xlu0 %7269
    %7271 = vrot.lane.b32.xlu0 %v6557, 72
    %v7272 = vpop.permute.xlu0 %7271
    %v7276 = vsel %vm287, %v7267, 0
    %v7279 = vsel %vm287, %v7268, 0
    %7281 = vmatprep.subr.mxu0 0.0
    %7282 = vmatpush1.msra.mxu0 %v7270
    %7283 = vmatprep.subr.mxu0 0.0
    %7284 = vmatpush1.msra.mxu0 %v7272
    %7285 = vmatprep.subr.mxu0 0.0
    %7286 = vmatpush1.msra.mxu0 0.0
    %7287 = vmatprep.subr.mxu0 0.0
    %7288 = vmatpush1.msra.mxu0 0.0
    %7289 = vmatprep.subr.mxu0 0.0
    %7290 = vmatpush1.msra.mxu0 0.0
    %7291 = vmatprep.subr.mxu0 0.0
    %7292 = vmatpush1.msra.mxu0 0.0
    %7293 = vmatprep.subr.mxu0 0.0
    %7294 = vmatpush1.msra.mxu0 0.0
    %7295 = vmatprep.subr.mxu0 0.0
    %7296 = vmatpush1.msra.mxu0 0.0
    %7297 = vmatprep.subr.mxu0 0.0
    %7298 = vmatpush1.msra.mxu0 0.0
    %7299 = vmatprep.subr.mxu0 0.0
    %7300 = vmatpush1.msra.mxu0 0.0
    %7301 = vmatprep.subr.mxu0 0.0
    %7302 = vmatpush1.msra.mxu0 0.0
    %7303 = vmatprep.subr.mxu0 0.0
    %7304 = vmatpush1.msra.mxu0 0.0
    %7305 = vmatprep.subr.mxu0 0.0
    %7306 = vmatpush1.msra.mxu0 0.0
    %7307 = vmatprep.subr.mxu0 0.0
    %7308 = vmatpush1.msra.mxu0 0.0
    %7309 = vmatprep.subr.mxu0 0.0
    %7310 = vmatpush1.msra.mxu0 0.0
    %7311 = vmatprep.subr.mxu0 0.0
    %7312 = vmatpush1.msra.mxu0 0.0
    %7313 = vmatprep.subr.mxu0 0.0
    %7314 = vmatpush1.msra.mxu0 0.0
    %7315 = vmatprep.subr.mxu0 0.0
    %7316 = vmatpush1.msra.mxu0 0.0
    %7317 = vmatprep.subr.mxu0 0.0
    %7318 = vmatpush1.msra.mxu0 0.0
    %7319 = vmatprep.subr.mxu0 0.0
    %7320 = vmatpush1.msra.mxu0 0.0
    %7321 = vmatprep.subr.mxu0 0.0
    %7322 = vmatpush1.msra.mxu0 0.0
    %7323 = vmatprep.subr.mxu0 0.0
    %7324 = vmatpush1.msra.mxu0 0.0
    %7325 = vmatprep.subr.mxu0 0.0
    %7326 = vmatpush1.msra.mxu0 0.0
    %7327 = vmatprep.subr.mxu0 0.0
    %7328 = vmatpush1.msra.mxu0 0.0
    %7329 = vmatprep.subr.mxu0 0.0
    %7330 = vmatpush1.msra.mxu0 0.0
    %7331 = vmatprep.subr.mxu0 0.0
    %7332 = vmatpush1.msra.mxu0 0.0
    %7333 = vmatprep.subr.mxu0 0.0
    %7334 = vmatpush1.msra.mxu0 0.0
    %7335 = vmatprep.subr.mxu0 0.0
    %7336 = vmatpush1.msra.mxu0 0.0
    %7337 = vmatprep.subr.mxu0 0.0
    %7338 = vmatpush1.msra.mxu0 0.0
    %7339 = vmatprep.subr.mxu0 0.0
    %7340 = vmatpush1.msra.mxu0 0.0
    %7341 = vmatprep.subr.mxu0 0.0
    %7342 = vmatpush1.msra.mxu0 0.0
    %7343 = vmatprep.subr.mxu0 0.0
    %7344 = vmatpush1.msra.mxu0 0.0
    %7345 = vmatprep.mubr.f32.mxu0 0.0
    %7346 = vmatmul.mubr.f32.gmra.mrb[0].mxu0 %v7276
    %v7347 = vpop.f32.mrb[0].mxu0
    %v7348 = vadd.f32 0.0, %v7347
    %v7349 = vpop.f32.mrb[0].mxu0
    %7350 = vmatprep.mubr.f32.mxu0 0.0
    %7351 = vmatmul.mubr.f32.gmra.mrb[0].mxu0 %v7279
    %v7352 = vpop.f32.mrb[0].mxu0
    %v7353 = vadd.f32 0.0, %v7352
    %v7354 = vpop.f32.mrb[0].mxu0
    %7355 = vdwg.mxu0
    %7358 = vrot.lane.b32.xlu0 %v6948, 8
    %v7359 = vpop.permute.xlu0 %7358
    %7360 = vrot.lane.b32.xlu0 %v6953, 8
    %v7361 = vpop.permute.xlu0 %7360
    %7366 = vrot.lane.b32.xlu0 %v7148, 16
    %v7367 = vpop.permute.xlu0 %7366
    %7368 = vrot.lane.b32.xlu0 %v7153, 16
    %v7369 = vpop.permute.xlu0 %7368
    %7374 = vrot.lane.b32.xlu0 %v7348, 24
    %v7375 = vpop.permute.xlu0 %7374
    %7376 = vrot.lane.b32.xlu0 %v7353, 24
    %v7377 = vpop.permute.xlu0 %7376
    %v7380 = vsel %vm203, %v6748, %v7359
    %v7381 = vsel %vm203, %v6753, %v7361
    %v7382 = vsel %vm287, %v7380, %v7367
    %v7383 = vsel %vm287, %v7381, %v7369
    %v7384 = vsel %vm1025, %v7382, %v7375
    %v7385 = vsel %vm1025, %v7383, %v7377
    %7386 = vrot.lane.b32.xlu0 %v5242, 32
    %v7387 = vpop.permute.xlu0 %7386
    %7388 = vrot.lane.b32.xlu0 %v5243, 32
    %v7389 = vpop.permute.xlu0 %7388
    %7390 = vrot.lane.b32.xlu0 %v5244, 32
    %v7391 = vpop.permute.xlu0 %7390
    %7392 = vrot.lane.b32.xlu0 %v5245, 32
    %v7393 = vpop.permute.xlu0 %7392
    %7398 = vrot.lane.b32.xlu0 %v6379, 32
    %v7399 = vpop.permute.xlu0 %7398
    %v7402 = vsel %vm58, %v7384, 0
    %v7405 = vsel %vm58, %v7385, 0
    %7407 = vmatprep.subr.mxu0 0.0
    %7408 = vmatpush1.msra.mxu0 %v7387
    %7409 = vmatprep.subr.mxu0 0.0
    %7410 = vmatpush1.msra.mxu0 %v7389
    %7411 = vmatprep.subr.mxu0 0.0
    %7412 = vmatpush1.msra.mxu0 %v7391
    %7413 = vmatprep.subr.mxu0 0.0
    %7414 = vmatpush1.msra.mxu0 %v7393
    %7415 = vmatprep.subr.mxu0 0.0
    %7416 = vmatpush1.msra.mxu0 0.0
    %7417 = vmatprep.subr.mxu0 0.0
    %7418 = vmatpush1.msra.mxu0 0.0
    %7419 = vmatprep.subr.mxu0 0.0
    %7420 = vmatpush1.msra.mxu0 0.0
    %7421 = vmatprep.subr.mxu0 0.0
    %7422 = vmatpush1.msra.mxu0 0.0
    %7423 = vmatprep.subr.mxu0 0.0
    %7424 = vmatpush1.msra.mxu0 0.0
    %7425 = vmatprep.subr.mxu0 0.0
    %7426 = vmatpush1.msra.mxu0 0.0
    %7427 = vmatprep.subr.mxu0 0.0
    %7428 = vmatpush1.msra.mxu0 0.0
    %7429 = vmatprep.subr.mxu0 0.0
    %7430 = vmatpush1.msra.mxu0 0.0
    %7431 = vmatprep.subr.mxu0 0.0
    %7432 = vmatpush1.msra.mxu0 0.0
    %7433 = vmatprep.subr.mxu0 0.0
    %7434 = vmatpush1.msra.mxu0 0.0
    %7435 = vmatprep.subr.mxu0 0.0
    %7436 = vmatpush1.msra.mxu0 0.0
    %7437 = vmatprep.subr.mxu0 0.0
    %7438 = vmatpush1.msra.mxu0 0.0
    %7439 = vmatprep.subr.mxu0 0.0
    %7440 = vmatpush1.msra.mxu0 0.0
    %7441 = vmatprep.subr.mxu0 0.0
    %7442 = vmatpush1.msra.mxu0 0.0
    %7443 = vmatprep.subr.mxu0 0.0
    %7444 = vmatpush1.msra.mxu0 0.0
    %7445 = vmatprep.subr.mxu0 0.0
    %7446 = vmatpush1.msra.mxu0 0.0
    %7447 = vmatprep.subr.mxu0 0.0
    %7448 = vmatpush1.msra.mxu0 0.0
    %7449 = vmatprep.subr.mxu0 0.0
    %7450 = vmatpush1.msra.mxu0 0.0
    %7451 = vmatprep.subr.mxu0 0.0
    %7452 = vmatpush1.msra.mxu0 0.0
    %7453 = vmatprep.subr.mxu0 0.0
    %7454 = vmatpush1.msra.mxu0 0.0
    %7455 = vmatprep.subr.mxu0 0.0
    %7456 = vmatpush1.msra.mxu0 0.0
    %7457 = vmatprep.subr.mxu0 0.0
    %7458 = vmatpush1.msra.mxu0 0.0
    %7459 = vmatprep.subr.mxu0 0.0
    %7460 = vmatpush1.msra.mxu0 0.0
    %7461 = vmatprep.subr.mxu0 0.0
    %7462 = vmatpush1.msra.mxu0 0.0
    %7463 = vmatprep.subr.mxu0 0.0
    %7464 = vmatpush1.msra.mxu0 0.0
    %7465 = vmatprep.subr.mxu0 0.0
    %7466 = vmatpush1.msra.mxu0 0.0
    %7467 = vmatprep.subr.mxu0 0.0
    %7468 = vmatpush1.msra.mxu0 0.0
    %7469 = vmatprep.subr.mxu0 0.0
    %7470 = vmatpush1.msra.mxu0 0.0
    %7471 = vmatprep.mubr.f32.mxu0 0.0
    %7472 = vmatmul.mubr.f32.gmra.mrb[0].mxu0 %v7402
    %v7473 = vpop.f32.mrb[0].mxu0
    %v7474 = vadd.f32 %v7399, %v7473
    %v7475 = vpop.f32.mrb[0].mxu0
    %7476 = vmatprep.mubr.f32.mxu0 0.0
    %7477 = vmatmul.mubr.f32.gmra.mrb[0].mxu0 %v7405
    %v7478 = vpop.f32.mrb[0].mxu0
    %v7479 = vadd.f32 %v7399, %v7478
    %v7480 = vpop.f32.mrb[0].mxu0
    %7481 = vdwg.mxu0
    %v7482 = vadd.f32 %v6322, %v7474
    %v7483 = vadd.f32 %v6323, %v7479
    %v7484 = vsel %vm58, %v7482, 0.0
    %7485 = vadd.xlane.f32.xlu0 %v7484
    %v7486 = vpop.xlane.xlu0 %7485
    %v7487 = vsel %vm58, %v7483, 0.0
    %7488 = vadd.xlane.f32.xlu0 %v7487
    %v7489 = vpop.xlane.xlu0 %7488
    %v7490 = vmul.f32 %v7486, %v65
    %v7491 = vmul.f32 %v7489, %v65
    %v7492 = vsub.f32 %v7482, %v7490
    %v7493 = vsub.f32 %v7483, %v7491
    %v7494 = vmul.f32 %v7492, %v7492
    %v7495 = vmul.f32 %v7493, %v7493
    %v7496 = vsel %vm58, %v7494, 0.0
    %7497 = vadd.xlane.f32.xlu0 %v7496
    %v7498 = vpop.xlane.xlu0 %7497
    %v7499 = vsel %vm58, %v7495, 0.0
    %7500 = vadd.xlane.f32.xlu0 %v7499
    %v7501 = vpop.xlane.xlu0 %7500
    %v7502 = vmul.f32 %v7498, 0.032258064
    %v7503 = vmul.f32 %v7501, 0.032258064
    %v7504 = vrsqrt.pop %v7502
    %v7505 = vmul.f32 %v7502, %v7504
    %vm7506 = vcmp.eq.f32.partialorder %v7502, inf
    %v7507 = vsel %vm7506, %v7502, %v7505
    %vm7508 = vcmp.eq.f32.partialorder %v7502, 0.0
    %v7509 = vand.u32 %v7502, 2147483648
    %v7510 = vsel %vm7508, %v7509, %v7507
    %v7511 = vrsqrt.pop %v7503
    %v7512 = vmul.f32 %v7503, %v7511
    %vm7513 = vcmp.eq.f32.partialorder %v7503, inf
    %v7514 = vsel %vm7513, %v7503, %v7512
    %vm7515 = vcmp.eq.f32.partialorder %v7503, 0.0
    %v7516 = vand.u32 %v7503, 2147483648
    %v7517 = vsel %vm7515, %v7516, %v7514
    %v7518 = vadd.f32 %v7510, 1e-06
    %v7519 = vadd.f32 %v7517, 1e-06
    %v7520 = vrcp.pop %v7518
    %v7521 = vrcp.pop %v7519
    %v7522 = vlaneseq
    %v7523 = vshrl.u32 %v7522, 7
    %v7524 = vsub.s32 4, %v7523
    %v7525 = vrot.slane %v5255, %v7524
    %v7526 = vmul.f32 %v7525, %v7492
    %v7527 = vmul.f32 %v7525, %v7493
    %v7528 = vmul.f32 %v7526, %v7520
    %v7529 = vmul.f32 %v7527, %v7521
    %7531 = vrot.lane.b32.xlu0 %v7525, 96
    %v7532 = vpop.permute.xlu0 %7531
    %v7534 = vadd.f32 %v7528, %v7532
    %v7535 = vadd.f32 %v7529, %v7532
    %v7536 = vlaneseq
    %v7537 = vshrl.u32 %v7536, 7
    %v7538 = vsub.s32 2, %v7537
    %v7539 = vrot.slane %v5255, %v7538
    %7544 = vrot.lane.b32.xlu0 %v5246, 96
    %v7545 = vpop.permute.xlu0 %7544
    %7546 = vrot.lane.b32.xlu0 %v5247, 96
    %v7547 = vpop.permute.xlu0 %7546
    %7548 = vrot.lane.b32.xlu0 %v5248, 96
    %v7549 = vpop.permute.xlu0 %7548
    %7550 = vrot.lane.b32.xlu0 %v5249, 96
    %v7551 = vpop.permute.xlu0 %7550
    %v7557 = vsel %vm58, %v7534, 0
    %v7560 = vsel %vm58, %v7535, 0
    %7562 = vmatprep.subr.mxu0 0.0
    %7563 = vmatpush1.msra.mxu0 %v7545
    %7564 = vmatprep.subr.mxu0 0.0
    %7565 = vmatpush1.msra.mxu0 %v7547
    %7566 = vmatprep.subr.mxu0 0.0
    %7567 = vmatpush1.msra.mxu0 %v7549
    %7568 = vmatprep.subr.mxu0 0.0
    %7569 = vmatpush1.msra.mxu0 %v7551
    %7570 = vmatprep.subr.mxu0 0.0
    %7571 = vmatpush1.msra.mxu0 0.0
    %7572 = vmatprep.subr.mxu0 0.0
    %7573 = vmatpush1.msra.mxu0 0.0
    %7574 = vmatprep.subr.mxu0 0.0
    %7575 = vmatpush1.msra.mxu0 0.0
    %7576 = vmatprep.subr.mxu0 0.0
    %7577 = vmatpush1.msra.mxu0 0.0
    %7578 = vmatprep.subr.mxu0 0.0
    %7579 = vmatpush1.msra.mxu0 0.0
    %7580 = vmatprep.subr.mxu0 0.0
    %7581 = vmatpush1.msra.mxu0 0.0
    %7582 = vmatprep.subr.mxu0 0.0
    %7583 = vmatpush1.msra.mxu0 0.0
    %7584 = vmatprep.subr.mxu0 0.0
    %7585 = vmatpush1.msra.mxu0 0.0
    %7586 = vmatprep.subr.mxu0 0.0
    %7587 = vmatpush1.msra.mxu0 0.0
    %7588 = vmatprep.subr.mxu0 0.0
    %7589 = vmatpush1.msra.mxu0 0.0
    %7590 = vmatprep.subr.mxu0 0.0
    %7591 = vmatpush1.msra.mxu0 0.0
    %7592 = vmatprep.subr.mxu0 0.0
    %7593 = vmatpush1.msra.mxu0 0.0
    %7594 = vmatprep.subr.mxu0 0.0
    %7595 = vmatpush1.msra.mxu0 0.0
    %7596 = vmatprep.subr.mxu0 0.0
    %7597 = vmatpush1.msra.mxu0 0.0
    %7598 = vmatprep.subr.mxu0 0.0
    %7599 = vmatpush1.msra.mxu0 0.0
    %7600 = vmatprep.subr.mxu0 0.0
    %7601 = vmatpush1.msra.mxu0 0.0
    %7602 = vmatprep.subr.mxu0 0.0
    %7603 = vmatpush1.msra.mxu0 0.0
    %7604 = vmatprep.subr.mxu0 0.0
    %7605 = vmatpush1.msra.mxu0 0.0
    %7606 = vmatprep.subr.mxu0 0.0
    %7607 = vmatpush1.msra.mxu0 0.0
    %7608 = vmatprep.subr.mxu0 0.0
    %7609 = vmatpush1.msra.mxu0 0.0
    %7610 = vmatprep.subr.mxu0 0.0
    %7611 = vmatpush1.msra.mxu0 0.0
    %7612 = vmatprep.subr.mxu0 0.0
    %7613 = vmatpush1.msra.mxu0 0.0
    %7614 = vmatprep.subr.mxu0 0.0
    %7615 = vmatpush1.msra.mxu0 0.0
    %7616 = vmatprep.subr.mxu0 0.0
    %7617 = vmatpush1.msra.mxu0 0.0
    %7618 = vmatprep.subr.mxu0 0.0
    %7619 = vmatpush1.msra.mxu0 0.0
    %7620 = vmatprep.subr.mxu0 0.0
    %7621 = vmatpush1.msra.mxu0 0.0
    %7622 = vmatprep.subr.mxu0 0.0
    %7623 = vmatpush1.msra.mxu0 0.0
    %7624 = vmatprep.subr.mxu0 0.0
    %7625 = vmatpush1.msra.mxu0 0.0
    %7626 = vmatprep.mubr.f32.mxu0 0.0
    %7627 = vmatmul.mubr.f32.gmra.mrb[0].mxu0 %v7557
    %v7628 = vpop.f32.mrb[0].mxu0
    %v7629 = vadd.f32 %v7539, %v7628
    %v7630 = vpop.f32.mrb[0].mxu0
    %7631 = vmatprep.mubr.f32.mxu0 0.0
    %7632 = vmatmul.mubr.f32.gmra.mrb[0].mxu0 %v7560
    %v7633 = vpop.f32.mrb[0].mxu0
    %v7634 = vadd.f32 %v7539, %v7633
    %v7635 = vpop.f32.mrb[0].mxu0
    %7636 = vdwg.mxu0
    %v7637 = vmax.f32 %v7629, 0.0
    %v7638 = vmax.f32 %v7634, 0.0
    %v7640 = vsel %vm1274, %v7637, 0
    %v7643 = vsel %vm1274, %v7638, 0
    %7645 = vmatprep.subr.mxu0 0.0
    %7646 = vmatpush1.msra.mxu0 %v5246
    %7647 = vmatprep.subr.mxu0 0.0
    %7648 = vmatpush1.msra.mxu0 %v5247
    %7649 = vmatprep.subr.mxu0 0.0
    %7650 = vmatpush1.msra.mxu0 %v5248
    %7651 = vmatprep.subr.mxu0 0.0
    %7652 = vmatpush1.msra.mxu0 %v5249
    %7653 = vmatprep.subr.mxu0 0.0
    %7654 = vmatpush1.msra.mxu0 %v5250
    %7655 = vmatprep.subr.mxu0 0.0
    %7656 = vmatpush1.msra.mxu0 %v5251
    %7657 = vmatprep.subr.mxu0 0.0
    %7658 = vmatpush1.msra.mxu0 %v5252
    %7659 = vmatprep.subr.mxu0 0.0
    %7660 = vmatpush1.msra.mxu0 %v5253
    %7661 = vmatprep.subr.mxu0 0.0
    %7662 = vmatpush1.msra.mxu0 0.0
    %7663 = vmatprep.subr.mxu0 0.0
    %7664 = vmatpush1.msra.mxu0 0.0
    %7665 = vmatprep.subr.mxu0 0.0
    %7666 = vmatpush1.msra.mxu0 0.0
    %7667 = vmatprep.subr.mxu0 0.0
    %7668 = vmatpush1.msra.mxu0 0.0
    %7669 = vmatprep.subr.mxu0 0.0
    %7670 = vmatpush1.msra.mxu0 0.0
    %7671 = vmatprep.subr.mxu0 0.0
    %7672 = vmatpush1.msra.mxu0 0.0
    %7673 = vmatprep.subr.mxu0 0.0
    %7674 = vmatpush1.msra.mxu0 0.0
    %7675 = vmatprep.subr.mxu0 0.0
    %7676 = vmatpush1.msra.mxu0 0.0
    %7677 = vmatprep.subr.mxu0 0.0
    %7678 = vmatpush1.msra.mxu0 0.0
    %7679 = vmatprep.subr.mxu0 0.0
    %7680 = vmatpush1.msra.mxu0 0.0
    %7681 = vmatprep.subr.mxu0 0.0
    %7682 = vmatpush1.msra.mxu0 0.0
    %7683 = vmatprep.subr.mxu0 0.0
    %7684 = vmatpush1.msra.mxu0 0.0
    %7685 = vmatprep.subr.mxu0 0.0
    %7686 = vmatpush1.msra.mxu0 0.0
    %7687 = vmatprep.subr.mxu0 0.0
    %7688 = vmatpush1.msra.mxu0 0.0
    %7689 = vmatprep.subr.mxu0 0.0
    %7690 = vmatpush1.msra.mxu0 0.0
    %7691 = vmatprep.subr.mxu0 0.0
    %7692 = vmatpush1.msra.mxu0 0.0
    %7693 = vmatprep.subr.mxu0 0.0
    %7694 = vmatpush1.msra.mxu0 0.0
    %7695 = vmatprep.subr.mxu0 0.0
    %7696 = vmatpush1.msra.mxu0 0.0
    %7697 = vmatprep.subr.mxu0 0.0
    %7698 = vmatpush1.msra.mxu0 0.0
    %7699 = vmatprep.subr.mxu0 0.0
    %7700 = vmatpush1.msra.mxu0 0.0
    %7701 = vmatprep.subr.mxu0 0.0
    %7702 = vmatpush1.msra.mxu0 0.0
    %7703 = vmatprep.subr.mxu0 0.0
    %7704 = vmatpush1.msra.mxu0 0.0
    %7705 = vmatprep.subr.mxu0 0.0
    %7706 = vmatpush1.msra.mxu0 0.0
    %7707 = vmatprep.subr.mxu0 0.0
    %7708 = vmatpush1.msra.mxu0 0.0
    %7709 = vmatprep.mubr.f32.mxu0 0.0
    %7710 = vmatmul.mubr.f32.gmra.mrb[0].mxu0 %v7640
    %v7711 = vpop.f32.mrb[0].mxu0
    %v7712 = vadd.f32 0.0, %v7711
    %v7713 = vpop.f32.mrb[0].mxu0
    %7714 = vmatprep.mubr.f32.mxu0 0.0
    %7715 = vmatmul.mubr.f32.gmra.mrb[0].mxu0 %v7643
    %v7716 = vpop.f32.mrb[0].mxu0
    %v7717 = vadd.f32 0.0, %v7716
    %v7718 = vpop.f32.mrb[0].mxu0
    %7719 = vdwg.mxu0
    %v7720 = vadd.f32 %v7482, %v7712
    %v7721 = vadd.f32 %v7483, %v7717
    %7723 = vrot.lane.b32.xlu0 %v7539, 64
    %v7724 = vpop.permute.xlu0 %7723
    %v7726 = vadd.f32 %v7720, %v7724
    %v7727 = vadd.f32 %v7721, %v7724
    %v7728 = vsel %vm58, %v7726, 0.0
    %7729 = vadd.xlane.f32.xlu0 %v7728
    %v7730 = vpop.xlane.xlu0 %7729
    %v7731 = vsel %vm58, %v7727, 0.0
    %7732 = vadd.xlane.f32.xlu0 %v7731
    %v7733 = vpop.xlane.xlu0 %7732
    %v7734 = vmul.f32 %v7730, %v65
    %v7735 = vmul.f32 %v7733, %v65
    %v7736 = vsub.f32 %v7726, %v7734
    %v7737 = vsub.f32 %v7727, %v7735
    %v7738 = vmul.f32 %v7736, %v7736
    %v7739 = vmul.f32 %v7737, %v7737
    %v7740 = vsel %vm58, %v7738, 0.0
    %7741 = vadd.xlane.f32.xlu0 %v7740
    %v7742 = vpop.xlane.xlu0 %7741
    %v7743 = vsel %vm58, %v7739, 0.0
    %7744 = vadd.xlane.f32.xlu0 %v7743
    %v7745 = vpop.xlane.xlu0 %7744
    %v7746 = vmul.f32 %v7742, 0.032258064
    %v7747 = vmul.f32 %v7745, 0.032258064
    %v7748 = vrsqrt.pop %v7746
    %v7749 = vmul.f32 %v7746, %v7748
    %vm7750 = vcmp.eq.f32.partialorder %v7746, inf
    %v7751 = vsel %vm7750, %v7746, %v7749
    %vm7752 = vcmp.eq.f32.partialorder %v7746, 0.0
    %v7753 = vand.u32 %v7746, 2147483648
    %v7754 = vsel %vm7752, %v7753, %v7751
    %v7755 = vrsqrt.pop %v7747
    %v7756 = vmul.f32 %v7747, %v7755
    %vm7757 = vcmp.eq.f32.partialorder %v7747, inf
    %v7758 = vsel %vm7757, %v7747, %v7756
    %vm7759 = vcmp.eq.f32.partialorder %v7747, 0.0
    %v7760 = vand.u32 %v7747, 2147483648
    %v7761 = vsel %vm7759, %v7760, %v7758
    %v7762 = vadd.f32 %v7754, 1e-06
    %v7763 = vadd.f32 %v7761, 1e-06
    %v7764 = vrcp.pop %v7762
    %v7765 = vrcp.pop %v7763
    %7768 = vrot.lane.b32.xlu0 %v7736, 64
    %v7769 = vpop.permute.xlu0 %7768
    %7770 = vrot.lane.b32.xlu0 %v7737, 64
    %v7771 = vpop.permute.xlu0 %7770
    %v7774 = vmul.f32 %v2725, %v7769
    %v7775 = vmul.f32 %v2725, %v7771
    %v7776 = vmul.f32 %v7774, %v7764
    %v7777 = vmul.f32 %v7775, %v7765
    %v7778 = vadd.f32 %v7776, %v2732
    %v7779 = vadd.f32 %v7777, %v2732
    %7782 = vrot.lane.b32.xlu0 %v7778, 64
    %v7783 = vpop.permute.xlu0 %7782
    %7784 = vrot.lane.b32.xlu0 %v7779, 64
    %v7785 = vpop.permute.xlu0 %7784
    %7788 = vst.msk [vmem:[#allocation2] sm:$0xff] %vm58, %v7783
    %7789 = vst.msk [vmem:[#allocation2 + $0x8] sm:$0xff] %vm58, %v7785
    // Predicated region
    $region42: #{encoder_decoder_forward.1} parent=1 // pred_check
      _
    $region43: #{encoder_decoder_forward.1} parent=1 // pred_check_branch
      %7791 = sbr.rel (0) target = $region45
    $region44: #{encoder_decoder_forward.1} parent=1 // pred_region
      %s7793 = ssub.s32 256, 256
      %7794 = vsyncadd [#allocation3], %s7793
      %s7795 = sshll.u32 [#allocation2], 4
      %s7796 = int_to_ptr.vmem [resolvable:$true] %s7795
      %7801 = dma.vmem_to_hbm [thread:$0]  %s7796, 256, %s10, [#allocation3], 128, 128, 8
    $region45: #{encoder_decoder_forward.1} parent=1 // pred_fallthru
      _
    // Predicated region
    $region46: #{encoder_decoder_forward.1} parent=1 // pred_check
      _
    $region47: #{encoder_decoder_forward.1} parent=1 // pred_check_branch
      %7803 = sbr.rel (0) target = $region49
    $region48: #{encoder_decoder_forward.1} parent=1 // pred_region
      %7804 = dma.done [#allocation3], 256
    $region49: #{encoder_decoder_forward.1} parent=1 // pred_fallthru
      _
    %7805 = vsyncpa [#allocation3], 1

</llo_original>
